<compile_context>
chip_gen: v6e
topology: v6e:2x2x1
jax: 0.10.0
libtpu: 0.0.40
codegen_flags: <defaults>
</compile_context>

<pallas_src>
import functools
import math

import jax
import jax.numpy as jnp
from jax.experimental import pallas as pl
from jax.experimental.pallas import tpu as pltpu

FACTOR = 5                                 # configs.factor
LN_EPS = 1e-5                              # torch.nn.LayerNorm default eps
BN_SCALE = 1.0 / math.sqrt(1.0 + 1e-5)     # BatchNorm1d eval with running stats (0, 1), affine (1, 0)


# ----------------------------- in-kernel helpers -----------------------------

def _layer_norm(x, g, b):
    mu = jnp.mean(x, axis=-1, keepdims=True)
    xc = x - mu
    var = jnp.mean(xc * xc, axis=-1, keepdims=True)
    return xc * jax.lax.rsqrt(var + LN_EPS) * g + b


def _bf16_dot(a, b):
    """MXU matmul with bf16 operands and f32 accumulation."""
    return jnp.dot(a.astype(jnp.bfloat16), b.astype(jnp.bfloat16),
                   preferred_element_type=jnp.float32)


def _circular_shift_mats(L):
    """Permutation matrices P_prev, P_next with (P_prev @ x)[l] = x[(l-1) % L] and
    (P_next @ x)[l] = x[(l+1) % L] (robust lowering: iota + compare + matmul)."""
    r = jax.lax.broadcasted_iota(jnp.int32, (L, L), 0)
    c = jax.lax.broadcasted_iota(jnp.int32, (L, L), 1)
    p_prev = jnp.where((c == r - 1) | ((r == 0) & (c == L - 1)), 1.0, 0.0).astype(jnp.float32)
    p_next = jnp.where((c == r + 1) | ((r == L - 1) & (c == 0)), 1.0, 0.0).astype(jnp.float32)
    return p_prev, p_next


def _mha_proj(q, k, v, wo, n_heads, causal):
    """Multi-head scaled-dot-product attention fused with the output projection:
       returns concat_heads(softmax(q_h k_h^T / sqrt(dh)) v_h) @ wo  ==  sum_h o_h @ wo[rows_h].
    q: (Lq, dm), k/v: (Lk, dm), wo: (dm, dm); all f32 (dots run in bf16 with f32 accumulation)."""
    Lq, dm = q.shape
    Lk = k.shape[0]
    dh = dm // n_heads
    scale = 1.0 / math.sqrt(dh)
    if causal:
        qi = jax.lax.broadcasted_iota(jnp.int32, (Lq, Lk), 0)
        ki = jax.lax.broadcasted_iota(jnp.int32, (Lq, Lk), 1)
        masked = ki > qi
    acc = None
    for h in range(n_heads):
        lo, hi = h * dh, (h + 1) * dh
        s = jax.lax.dot_general(q[:, lo:hi].astype(jnp.bfloat16),
                                k[:, lo:hi].astype(jnp.bfloat16),
                                (((1,), (1,)), ((), ())),
                                preferred_element_type=jnp.float32) * scale
        if causal:
            # -1e30 underflows to exactly 0 after exp -> identical to torch's -inf masked_fill
            s = jnp.where(masked, -1e30, s)
        m = jnp.max(s, axis=-1, keepdims=True)
        p = jnp.exp(s - m)
        p = p * pl.reciprocal(jnp.sum(p, axis=-1, keepdims=True), approx=True)
        o_h = _bf16_dot(p, v[:, lo:hi])                       # (Lq, dh)
        proj = _bf16_dot(o_h, wo[lo:hi, :])                   # (Lq, dm)  (wo is f32 -> 8-row aligned slices)
        acc = proj if acc is None else acc + proj
    return acc


# ----------------------------- fused Pallas kernels (one grid step per batch element) -----------------------------

def _embedding_kernel(x_ref, xm_ref, tok_w_ref, time_w_ref, pe_ref, o_ref):
    """DataEmbedding = TokenEmbedding (Conv1d k=3 circular, no bias) + TimeFeatureEmbedding
    (Linear, no bias) + PositionalEmbedding; dropout = identity (eval)."""
    x = x_ref[0].astype(jnp.float32)        # (L, c_in)
    xm = xm_ref[0].astype(jnp.float32)      # (L, mark)
    L = x.shape[0]
    p_prev, p_next = _circular_shift_mats(L)
    x_prev = jnp.dot(p_prev, x, preferred_element_type=jnp.float32)
    x_next = jnp.dot(p_next, x, preferred_element_type=jnp.float32)
    val = (jnp.dot(x_prev, tok_w_ref[0], preferred_element_type=jnp.float32)
           + jnp.dot(x, tok_w_ref[1], preferred_element_type=jnp.float32)
           + jnp.dot(x_next, tok_w_ref[2], preferred_element_type=jnp.float32)
           + jnp.dot(xm, time_w_ref[...], preferred_element_type=jnp.float32)
           + pe_ref[...])
    o_ref[0] = val.astype(o_ref.dtype)


def _encoder_layer_kernel(*refs, n_heads, final_ln):
    """EncoderLayer: self-attn (fused QKV) + residual + LN1 + FFN(relu) + residual + LN2,
    optionally followed by the Encoder's final LayerNorm (fused for the last layer)."""
    if final_ln:
        (x_ref, wqkv_ref, bqkv_ref, wo_ref, bo_ref, ln1g_ref, ln1b_ref,
         w1_ref, b1_ref, w2_ref, b2_ref, ln2g_ref, ln2b_ref,
         lnfg_ref, lnfb_ref, o_ref) = refs
    else:
        (x_ref, wqkv_ref, bqkv_ref, wo_ref, bo_ref, ln1g_ref, ln1b_ref,
         w1_ref, b1_ref, w2_ref, b2_ref, ln2g_ref, ln2b_ref, o_ref) = refs
    x = x_ref[0].astype(jnp.float32)        # (L, dm)
    dm = x.shape[-1]

    qkv = _bf16_dot(x, wqkv_ref[...]) + bqkv_ref[...]            # fused Q/K/V projection (L, 3*dm)
    attn = _mha_proj(qkv[:, 0:dm], qkv[:, dm:2 * dm], qkv[:, 2 * dm:3 * dm],
                     wo_ref[...], n_heads, causal=False) + bo_ref[...]
    x = _layer_norm(x + attn, ln1g_ref[...], ln1b_ref[...])

    y = jnp.maximum(_bf16_dot(x, w1_ref[...]) + b1_ref[...], 0.0)   # conv1 (k=1) + relu
    y = _bf16_dot(y, w2_ref[...]) + b2_ref[...]                     # conv2 (k=1)
    out = _layer_norm(x + y, ln2g_ref[...], ln2b_ref[...])
    if final_ln:
        out = _layer_norm(out, lnfg_ref[...], lnfb_ref[...])        # Encoder's trailing norm
    o_ref[0] = out.astype(o_ref.dtype)


def _distil_conv_kernel(x_ref, w_ref, b_ref, o_ref):
    """ConvLayer: Conv1d(k=3, circular) -> BatchNorm1d(eval, default stats) -> ELU ->
    MaxPool1d(kernel=3, stride=2, padding=1)."""
    x = x_ref[0].astype(jnp.float32)        # (L, C)
    L, C = x.shape
    l_out = o_ref.shape[1]

    p_prev, p_next = _circular_shift_mats(L)
    x_prev = jnp.dot(p_prev, x, preferred_element_type=jnp.float32)
    x_next = jnp.dot(p_next, x, preferred_element_type=jnp.float32)
    y = (_bf16_dot(x_prev, w_ref[0]) + _bf16_dot(x, w_ref[1])
         + _bf16_dot(x_next, w_ref[2]) + b_ref[...])
    y = y * BN_SCALE                                         # BatchNorm1d eval (gamma=1, beta=0, stats (0,1))
    y = jnp.where(y > 0.0, y, jnp.exp(y) - 1.0)              # ELU(alpha=1)

    # MaxPool1d(3, 2, 1): out[t] = max(y[2t-1], y[2t], y[2t+1]) with indices clamped to [0, L-1]
    # (clamping is exactly equivalent to the -inf padding PyTorch uses for max pooling).
    rr = jax.lax.broadcasted_iota(jnp.int32, (l_out, L), 0)
    cc = jax.lax.broadcasted_iota(jnp.int32, (l_out, L), 1)
    s_m1 = jnp.where(cc == jnp.maximum(2 * rr - 1, 0), 1.0, 0.0).astype(jnp.float32)
    s_0 = jnp.where(cc == 2 * rr, 1.0, 0.0).astype(jnp.float32)
    s_p1 = jnp.where(cc == jnp.minimum(2 * rr + 1, L - 1), 1.0, 0.0).astype(jnp.float32)
    pooled = jnp.maximum(
        jnp.maximum(jnp.dot(s_m1, y, preferred_element_type=jnp.float32),
                    jnp.dot(s_0, y, preferred_element_type=jnp.float32)),
        jnp.dot(s_p1, y, preferred_element_type=jnp.float32))
    o_ref[0] = pooled.astype(o_ref.dtype)


def _decoder_layer_kernel(x_ref, cross_ref,
                          s_wqkv_ref, s_bqkv_ref, s_wo_ref, s_bo_ref,
                          c_wq_ref, c_bq_ref, c_wkv_ref, c_bkv_ref, c_wo_ref, c_bo_ref,
                          ln1g_ref, ln1b_ref, ln2g_ref, ln2b_ref,
                          w1_ref, b1_ref, w2_ref, b2_ref, ln3g_ref, ln3b_ref,
                          o_ref, *, n_heads):
    """DecoderLayer: causal self-attn + LN1, cross-attn + LN2, FFN(relu) + LN3 — all fused."""
    x = x_ref[0].astype(jnp.float32)            # (Ld, dm)
    cross = cross_ref[0].astype(jnp.float32)    # (Le, dm)
    dm = x.shape[-1]

    # causal self attention (ProbSparse(mask_flag=True) == causal full attention at these lengths)
    qkv = _bf16_dot(x, s_wqkv_ref[...]) + s_bqkv_ref[...]
    sa = _mha_proj(qkv[:, 0:dm], qkv[:, dm:2 * dm], qkv[:, 2 * dm:3 * dm],
                   s_wo_ref[...], n_heads, causal=True) + s_bo_ref[...]
    x = _layer_norm(x + sa, ln1g_ref[...], ln1b_ref[...])

    # cross attention (fused KV projection of the encoder output)
    q = _bf16_dot(x, c_wq_ref[...]) + c_bq_ref[...]
    kv = _bf16_dot(cross, c_wkv_ref[...]) + c_bkv_ref[...]
    ca = _mha_proj(q, kv[:, 0:dm], kv[:, dm:2 * dm],
                   c_wo_ref[...], n_heads, causal=False) + c_bo_ref[...]
    x = _layer_norm(x + ca, ln2g_ref[...], ln2b_ref[...])

    # FFN
    y = jnp.maximum(_bf16_dot(x, w1_ref[...]) + b1_ref[...], 0.0)
    y = _bf16_dot(y, w2_ref[...]) + b2_ref[...]
    out = _layer_norm(x + y, ln3g_ref[...], ln3b_ref[...])
    o_ref[0] = out.astype(o_ref.dtype)


def _final_head_kernel(x_ref, g_ref, b_ref, wp_ref, bp_ref, o_ref):
    """Decoder final LayerNorm fused with the output projection Linear(d_model -> c_in)."""
    x = _layer_norm(x_ref[0].astype(jnp.float32), g_ref[...], b_ref[...])
    o_ref[0] = (_bf16_dot(x, wp_ref[...]) + bp_ref[...]).astype(o_ref.dtype)


# ----------------------------- pallas_call wrappers -----------------------------

def _row(v):
    return v.reshape(1, -1).astype(jnp.float32)


def _batched_spec(shape):
    nd = len(shape)
    return pl.BlockSpec((1,) + tuple(shape[1:]),
                        lambda b, nd=nd: (b,) + (0,) * (nd - 1))


def _full_spec(a):
    if a.ndim == 2:
        return pl.BlockSpec(a.shape, lambda b: (0, 0))
    return pl.BlockSpec(a.shape, lambda b: (0, 0, 0))


def _run_batched(kernel, batch_inputs, weight_inputs, out_shape):
    """Launch `kernel` with a grid over the batch axis (marked "parallel" so the two v7x
    TensorCores each take a batch element); weights are broadcast (block index fixed at 0)."""
    B = batch_inputs[0].shape[0]
    in_specs = ([_batched_spec(a.shape) for a in batch_inputs]
                + [_full_spec(a) for a in weight_inputs])
    return pl.pallas_call(
        kernel,
        out_shape=jax.ShapeDtypeStruct(out_shape, jnp.float32),
        grid=(B,),
        in_specs=in_specs,
        out_specs=_batched_spec(out_shape),
        compiler_params=pltpu.CompilerParams(dimension_semantics=("parallel",)),
    )(*batch_inputs, *weight_inputs)


def positional_embedding(L, d_model):
    pos = jnp.arange(L, dtype=jnp.float32)[:, None]
    div = jnp.exp(jnp.arange(0, d_model, 2, dtype=jnp.float32) *
                  (-math.log(10000.0) / d_model))
    pe = jnp.zeros((L, d_model), jnp.float32)
    pe = pe.at[:, 0::2].set(jnp.sin(pos * div))
    pe = pe.at[:, 1::2].set(jnp.cos(pos * div))
    return pe


def _prob_sparse_is_full(L):
    return FACTOR * math.ceil(math.log(L)) >= L


def data_embedding(p, x, x_mark):
    B, L, _ = x.shape
    dm = p["time_w"].shape[-1]
    pe = positional_embedding(L, dm)
    return _run_batched(_embedding_kernel,
                        [x.astype(jnp.float32), x_mark.astype(jnp.float32)],
                        [p["token_w"], p["time_w"], pe],
                        (B, L, dm))


def encoder_layer(p, x, n_heads, final_ln=None):
    B, L, dm = x.shape
    # ProbSparse keeps every query / samples every key at this length -> exact full attention.
    assert _prob_sparse_is_full(L)
    a = p["attn"]
    weights = [a["wqkv"].astype(jnp.bfloat16), _row(a["bqkv"]),
               a["wo"].astype(jnp.float32), _row(a["bo"]),      # wo stays f32: aligned per-head row slices
               _row(p["ln1_g"]), _row(p["ln1_b"]),
               p["w1"].astype(jnp.bfloat16), _row(p["b1"]),
               p["w2"].astype(jnp.bfloat16), _row(p["b2"]),
               _row(p["ln2_g"]), _row(p["ln2_b"])]
    if final_ln is not None:
        weights += [_row(final_ln[0]), _row(final_ln[1])]
    kernel = functools.partial(_encoder_layer_kernel, n_heads=n_heads,
                               final_ln=final_ln is not None)
    return _run_batched(kernel, [x], weights, (B, L, dm))


def distil_conv_layer(p, x):
    B, L, C = x.shape
    l_out = (L - 1) // 2 + 1                # MaxPool1d(kernel=3, stride=2, padding=1)
    return _run_batched(_distil_conv_kernel, [x],
                        [p["w"].astype(jnp.bfloat16), _row(p["b"])],
                        (B, l_out, C))


def decoder_layer(p, x, cross, n_heads):
    B, L, dm = x.shape
    assert _prob_sparse_is_full(L) and _prob_sparse_is_full(cross.shape[1])
    sa, ca = p["self_attn"], p["cross_attn"]
    weights = [sa["wqkv"].astype(jnp.bfloat16), _row(sa["bqkv"]),
               sa["wo"].astype(jnp.float32), _row(sa["bo"]),
               ca["wq"].astype(jnp.bfloat16), _row(ca["bq"]),
               ca["wkv"].astype(jnp.bfloat16), _row(ca["bkv"]),
               ca["wo"].astype(jnp.float32), _row(ca["bo"]),
               _row(p["ln1_g"]), _row(p["ln1_b"]), _row(p["ln2_g"]), _row(p["ln2_b"]),
               p["w1"].astype(jnp.bfloat16), _row(p["b1"]),
               p["w2"].astype(jnp.bfloat16), _row(p["b2"]),
               _row(p["ln3_g"]), _row(p["ln3_b"])]
    kernel = functools.partial(_decoder_layer_kernel, n_heads=n_heads)
    return _run_batched(kernel, [x, cross], weights, (B, L, dm))


def final_head(x, g, b, wp, bp):
    B, L, _ = x.shape
    c = wp.shape[-1]
    return _run_batched(_final_head_kernel, [x],
                        [_row(g), _row(b), wp.astype(jnp.bfloat16), _row(bp)],
                        (B, L, c))


# ----------------------------- full forward pass -----------------------------

def informer_forward(params, x_enc, x_mark_enc, x_dec, x_mark_dec, cfg):
    nh = cfg["n_heads"]

    # short_forecast: per-series normalization over the time axis
    mean_enc = jnp.mean(x_enc, axis=1, keepdims=True)
    x_e = x_enc - mean_enc
    std_enc = jnp.sqrt(jnp.var(x_e, axis=1, keepdims=True) + 1e-5)   # unbiased=False
    x_e = x_e / std_enc

    enc_out = data_embedding(params["enc_emb"], x_e, x_mark_enc)
    dec_out = data_embedding(params["dec_emb"], x_dec, x_mark_dec)

    # TODO(synk): general ProbSparse path (random key sampling, sparsity measure M, top-u query
    # selection + scatter into the mean/cumsum context) for the regime factor*ceil(ln L) < L;
    # at the lengths used here it reduces exactly to full attention (asserted in the layer wrappers).

    # Encoder: e_layers with distil=True -> [EncLayer, ConvLayer]*(e_layers-1), EncLayer, LayerNorm
    h = enc_out
    n_enc = len(params["enc_layers"])
    for i, lp in enumerate(params["enc_layers"]):
        last = i == n_enc - 1
        fin = (params["enc_norm_g"], params["enc_norm_b"]) if last else None
        h = encoder_layer(lp, h, nh, final_ln=fin)
        if not last:
            h = distil_conv_layer(params["enc_convs"][i], h)
    enc_out = h

    # Decoder: d_layers, then LayerNorm + Linear(d_model -> c_in) fused in the final head
    d = dec_out
    for lp in params["dec_layers"]:
        d = decoder_layer(lp, d, enc_out, nh)
    d = final_head(d, params["dec_norm_g"], params["dec_norm_b"],
                   params["proj_w"], params["proj_b"])

    d = d * std_enc + mean_enc
    d = d[:, -cfg["pred_len"]:, :][..., None]            # [B, pred_len, c_in, 1]
    return jnp.tile(d, (1, 1, 1, cfg["c_out"]))          # .repeat(1, 1, 1, c_out)


# ----------------------------- deterministic parameter init -----------------------------

def init_params(key, cfg):
    dm, dff = cfg["d_model"], cfg["d_ff"]
    ci, mark, c_in = cfg["enc_in"], cfg["mark_dim"], cfg["c_in"]
    kit = iter(jax.random.split(key, 64))

    def w(shape, s=0.05):
        return jax.random.normal(next(kit), shape, jnp.float32) * s

    def self_attn_p():
        # fused QKV projection: wqkv == concat([wq, wk, wv], axis=1)
        return dict(wqkv=w((dm, 3 * dm)), bqkv=w((3 * dm,), 0.01),
                    wo=w((dm, dm)), bo=w((dm,), 0.01))

    def cross_attn_p():
        return dict(wq=w((dm, dm)), bq=w((dm,), 0.01),
                    wkv=w((dm, 2 * dm)), bkv=w((2 * dm,), 0.01),
                    wo=w((dm, dm)), bo=w((dm,), 0.01))

    def enc_layer_p():
        return dict(attn=self_attn_p(),
                    w1=w((dm, dff)), b1=w((dff,), 0.01),
                    w2=w((dff, dm)), b2=w((dm,), 0.01),
                    ln1_g=jnp.ones((dm,)), ln1_b=jnp.zeros((dm,)),
                    ln2_g=jnp.ones((dm,)), ln2_b=jnp.zeros((dm,)))

    def dec_layer_p():
        return dict(self_attn=self_attn_p(), cross_attn=cross_attn_p(),
                    w1=w((dm, dff)), b1=w((dff,), 0.01),
                    w2=w((dff, dm)), b2=w((dm,), 0.01),
                    ln1_g=jnp.ones((dm,)), ln1_b=jnp.zeros((dm,)),
                    ln2_g=jnp.ones((dm,)), ln2_b=jnp.zeros((dm,)),
                    ln3_g=jnp.ones((dm,)), ln3_b=jnp.zeros((dm,)))

    def emb_p():
        # token_w[j] = tap j of Conv1d(enc_in, d_model, 3, circular, bias=False).
        # NOTE: PyTorch stores Conv1d weights as [C_out, C_in, k]; porting a real checkpoint
        # requires transposing to (k, C_in, C_out).  Random init here, so unaffected.
        return dict(token_w=w((3, ci, dm)), time_w=w((mark, dm)))

    return dict(
        enc_emb=emb_p(), dec_emb=emb_p(),
        enc_layers=[enc_layer_p() for _ in range(cfg["e_layers"])],
        enc_convs=[dict(w=w((3, dm, dm)), b=w((dm,), 0.01))
                   for _ in range(cfg["e_layers"] - 1)],
        enc_norm_g=jnp.ones((dm,)), enc_norm_b=jnp.zeros((dm,)),
        dec_layers=[dec_layer_p() for _ in range(cfg["d_layers"])],
        dec_norm_g=jnp.ones((dm,)), dec_norm_b=jnp.zeros((dm,)),
        proj_w=w((dm, c_in)), proj_b=w((c_in,), 0.01),
    )


# ----------------------------- main -----------------------------

if __name__ == "__main__":
    cfg = dict(enc_in=4, c_in=4, c_out=3,            # c_out == configs.ex_c_out
               d_model=32, n_heads=4, d_ff=64,
               e_layers=2, d_layers=1,
               seq_len=12, label_len=6, pred_len=6,
               mark_dim=4)                            # embed='timeF', freq='h' -> 4 time features

    key = jax.random.PRNGKey(0)
    kp, k1, k2, k3, k4 = jax.random.split(key, 5)
    params = init_params(kp, cfg)

    B = 2
    L_enc = cfg["seq_len"]
    L_dec = cfg["label_len"] + cfg["pred_len"]
    x_enc = jax.random.normal(k1, (B, L_enc, cfg["enc_in"]), jnp.float32)
    x_mark_enc = jax.random.normal(k2, (B, L_enc, cfg["mark_dim"]), jnp.float32)
    x_dec = jax.random.normal(k3, (B, L_dec, cfg["enc_in"]), jnp.float32)
    x_mark_dec = jax.random.normal(k4, (B, L_dec, cfg["mark_dim"]), jnp.float32)

    fwd = jax.jit(functools.partial(informer_forward, cfg=cfg))
    out = jax.block_until_ready(fwd(params, x_enc, x_mark_enc, x_dec, x_mark_dec))

    assert out.shape == (B, cfg["pred_len"], cfg["c_in"], cfg["c_out"]), out.shape
    assert bool(jnp.all(jnp.isfinite(out)))
    print("KERNEL_OK")
</pallas_src>

<mosaic_0001>
module attributes {stable_mosaic.version = 11 : i64} {
  func.func @_embedding_kernel(%arg0: i32, %arg1: memref<1x12x4xf32, #tpu.memory_space<vmem>>, %arg2: memref<1x12x4xf32, #tpu.memory_space<vmem>>, %arg3: memref<3x4x32xf32, #tpu.memory_space<vmem>>, %arg4: memref<4x32xf32, #tpu.memory_space<vmem>>, %arg5: memref<12x32xf32, #tpu.memory_space<vmem>>, %arg6: memref<1x12x32xf32, #tpu.memory_space<vmem>>) attributes {dimension_semantics = [#tpu.dimension_semantics<parallel>], iteration_bounds = array<i64: 2>, scalar_prefetch = 0 : i64, scratch_operands = 0 : i64, tpu.core_type = #tpu.core_type<tc>, window_params = [{transform_indices = @transform_0, window_bounds = array<i64: 1, 12, 4>}, {transform_indices = @transform_1, window_bounds = array<i64: 1, 12, 4>}, {pipeline_mode = #tpu.pipeline_mode<synchronous>, transform_indices = @transform_2, window_bounds = array<i64: 3, 4, 32>}, {pipeline_mode = #tpu.pipeline_mode<synchronous>, transform_indices = @transform_3, window_bounds = array<i64: 4, 32>}, {pipeline_mode = #tpu.pipeline_mode<synchronous>, transform_indices = @transform_4, window_bounds = array<i64: 12, 32>}, {transform_indices = @transform_5, window_bounds = array<i64: 1, 12, 32>}]} {
    %c0 = arith.constant 0 : index
    %c0_0 = arith.constant 0 : index
    %c0_1 = arith.constant 0 : index
    %0 = vector.load %arg1[%c0, %c0_0, %c0_1] : memref<1x12x4xf32, #tpu.memory_space<vmem>>, vector<1x12x4xf32>
    %1 = vector.shape_cast %0 : vector<1x12x4xf32> to vector<12x4xf32>
    %c0_2 = arith.constant 0 : index
    %c0_3 = arith.constant 0 : index
    %c0_4 = arith.constant 0 : index
    %2 = vector.load %arg2[%c0_2, %c0_3, %c0_4] : memref<1x12x4xf32, #tpu.memory_space<vmem>>, vector<1x12x4xf32>
    %3 = vector.shape_cast %2 : vector<1x12x4xf32> to vector<12x4xf32>
    %4 = tpu.iota {dimensions = array<i32: 0>} : vector<12x12xi32>
    %5 = tpu.iota {dimensions = array<i32: 1>} : vector<12x12xi32>
    %c1_i32 = arith.constant 1 : i32
    %6 = vector.broadcast %c1_i32 : i32 to vector<12x12xi32>
    %7 = arith.subi %4, %6 : vector<12x12xi32>
    %8 = arith.cmpi eq, %5, %7 : vector<12x12xi32>
    %c0_i32 = arith.constant 0 : i32
    %9 = vector.broadcast %c0_i32 : i32 to vector<12x12xi32>
    %10 = arith.cmpi eq, %4, %9 : vector<12x12xi32>
    %c11_i32 = arith.constant 11 : i32
    %11 = vector.broadcast %c11_i32 : i32 to vector<12x12xi32>
    %12 = arith.cmpi eq, %5, %11 : vector<12x12xi32>
    %13 = arith.andi %10, %12 : vector<12x12xi1>
    %14 = arith.ori %8, %13 : vector<12x12xi1>
    %cst = arith.constant 1.000000e+00 : f32
    %cst_5 = arith.constant 0.000000e+00 : f32
    %15 = vector.broadcast %cst : f32 to vector<12x12xf32>
    %16 = vector.broadcast %cst_5 : f32 to vector<12x12xf32>
    %17 = arith.select %14, %15, %16 : vector<12x12xi1>, vector<12x12xf32>
    %c1_i32_6 = arith.constant 1 : i32
    %18 = vector.broadcast %c1_i32_6 : i32 to vector<12x12xi32>
    %19 = arith.addi %4, %18 : vector<12x12xi32>
    %20 = arith.cmpi eq, %5, %19 : vector<12x12xi32>
    %c11_i32_7 = arith.constant 11 : i32
    %21 = vector.broadcast %c11_i32_7 : i32 to vector<12x12xi32>
    %22 = arith.cmpi eq, %4, %21 : vector<12x12xi32>
    %c0_i32_8 = arith.constant 0 : i32
    %23 = vector.broadcast %c0_i32_8 : i32 to vector<12x12xi32>
    %24 = arith.cmpi eq, %5, %23 : vector<12x12xi32>
    %25 = arith.andi %22, %24 : vector<12x12xi1>
    %26 = arith.ori %20, %25 : vector<12x12xi1>
    %cst_9 = arith.constant 1.000000e+00 : f32
    %cst_10 = arith.constant 0.000000e+00 : f32
    %27 = vector.broadcast %cst_9 : f32 to vector<12x12xf32>
    %28 = vector.broadcast %cst_10 : f32 to vector<12x12xf32>
    %29 = arith.select %26, %27, %28 : vector<12x12xi1>, vector<12x12xf32>
    %cst_11 = arith.constant dense<0.000000e+00> : vector<12x4xf32>
    %30 = tpu.matmul %17, %1, %cst_11 {dimension_numbers = #tpu.dot_dimension_numbers<[1], [0], [0], [1], [0, 0, 1, 1], [], []>} : vector<12x12xf32>, vector<12x4xf32>, vector<12x4xf32> -> vector<12x4xf32>
    %cst_12 = arith.constant dense<0.000000e+00> : vector<12x4xf32>
    %31 = tpu.matmul %29, %1, %cst_12 {dimension_numbers = #tpu.dot_dimension_numbers<[1], [0], [0], [1], [0, 0, 1, 1], [], []>} : vector<12x12xf32>, vector<12x4xf32>, vector<12x4xf32> -> vector<12x4xf32>
    %c0_13 = arith.constant 0 : index
    %c0_14 = arith.constant 0 : index
    %c0_15 = arith.constant 0 : index
    %32 = vector.load %arg3[%c0_13, %c0_14, %c0_15] : memref<3x4x32xf32, #tpu.memory_space<vmem>>, vector<1x4x32xf32>
    %33 = vector.shape_cast %32 : vector<1x4x32xf32> to vector<4x32xf32>
    %cst_16 = arith.constant dense<0.000000e+00> : vector<12x32xf32>
    %34 = tpu.matmul %30, %33, %cst_16 {dimension_numbers = #tpu.dot_dimension_numbers<[1], [0], [0], [1], [0, 0, 1, 1], [], []>} : vector<12x4xf32>, vector<4x32xf32>, vector<12x32xf32> -> vector<12x32xf32>
    %c1 = arith.constant 1 : index
    %c0_17 = arith.constant 0 : index
    %c0_18 = arith.constant 0 : index
    %35 = vector.load %arg3[%c1, %c0_17, %c0_18] : memref<3x4x32xf32, #tpu.memory_space<vmem>>, vector<1x4x32xf32>
    %36 = vector.shape_cast %35 : vector<1x4x32xf32> to vector<4x32xf32>
    %cst_19 = arith.constant dense<0.000000e+00> : vector<12x32xf32>
    %37 = tpu.matmul %1, %36, %cst_19 {dimension_numbers = #tpu.dot_dimension_numbers<[1], [0], [0], [1], [0, 0, 1, 1], [], []>} : vector<12x4xf32>, vector<4x32xf32>, vector<12x32xf32> -> vector<12x32xf32>
    %38 = arith.addf %34, %37 : vector<12x32xf32>
    %c2 = arith.constant 2 : index
    %c0_20 = arith.constant 0 : index
    %c0_21 = arith.constant 0 : index
    %39 = vector.load %arg3[%c2, %c0_20, %c0_21] : memref<3x4x32xf32, #tpu.memory_space<vmem>>, vector<1x4x32xf32>
    %40 = vector.shape_cast %39 : vector<1x4x32xf32> to vector<4x32xf32>
    %cst_22 = arith.constant dense<0.000000e+00> : vector<12x32xf32>
    %41 = tpu.matmul %31, %40, %cst_22 {dimension_numbers = #tpu.dot_dimension_numbers<[1], [0], [0], [1], [0, 0, 1, 1], [], []>} : vector<12x4xf32>, vector<4x32xf32>, vector<12x32xf32> -> vector<12x32xf32>
    %42 = arith.addf %38, %41 : vector<12x32xf32>
    %c0_23 = arith.constant 0 : index
    %c0_24 = arith.constant 0 : index
    %43 = vector.load %arg4[%c0_23, %c0_24] : memref<4x32xf32, #tpu.memory_space<vmem>>, vector<4x32xf32>
    %cst_25 = arith.constant dense<0.000000e+00> : vector<12x32xf32>
    %44 = tpu.matmul %3, %43, %cst_25 {dimension_numbers = #tpu.dot_dimension_numbers<[1], [0], [0], [1], [0, 0, 1, 1], [], []>} : vector<12x4xf32>, vector<4x32xf32>, vector<12x32xf32> -> vector<12x32xf32>
    %45 = arith.addf %42, %44 : vector<12x32xf32>
    %c0_26 = arith.constant 0 : index
    %c0_27 = arith.constant 0 : index
    %46 = vector.load %arg5[%c0_26, %c0_27] : memref<12x32xf32, #tpu.memory_space<vmem>>, vector<12x32xf32>
    %47 = arith.addf %45, %46 : vector<12x32xf32>
    %c0_28 = arith.constant 0 : index
    %c0_29 = arith.constant 0 : index
    %c0_30 = arith.constant 0 : index
    %48 = vector.load %arg6[%c0_28, %c0_29, %c0_30] : memref<1x12x32xf32, #tpu.memory_space<vmem>>, vector<1x12x32xf32>
    %49 = vector.shape_cast %48 : vector<1x12x32xf32> to vector<12x32xf32>
    %50 = vector.shape_cast %47 : vector<12x32xf32> to vector<1x12x32xf32>
    tpu.vector_store %arg6[%c0_28, %c0_29, %c0_30], %50 {strides = array<i32>} : memref<1x12x32xf32, #tpu.memory_space<vmem>>, vector<1x12x32xf32>,
    return
  }
  func.func @transform_0(%arg0: i32) -> (i32, i32, i32) {
    %c0_i32 = arith.constant 0 : i32
    %c0_i32_0 = arith.constant 0 : i32
    %c0_i32_1 = arith.constant 0 : i32
    return %arg0, %c0_i32, %c0_i32_0 : i32, i32, i32
  }
  func.func @transform_1(%arg0: i32) -> (i32, i32, i32) {
    %c0_i32 = arith.constant 0 : i32
    %c0_i32_0 = arith.constant 0 : i32
    %c0_i32_1 = arith.constant 0 : i32
    return %arg0, %c0_i32, %c0_i32_0 : i32, i32, i32
  }
  func.func @transform_2(%arg0: i32) -> (i32, i32, i32) {
    %c0_i32 = arith.constant 0 : i32
    %c0_i32_0 = arith.constant 0 : i32
    %c0_i32_1 = arith.constant 0 : i32
    %c0_i32_2 = arith.constant 0 : i32
    return %c0_i32, %c0_i32_0, %c0_i32_1 : i32, i32, i32
  }
  func.func @transform_3(%arg0: i32) -> (i32, i32) {
    %c0_i32 = arith.constant 0 : i32
    %c0_i32_0 = arith.constant 0 : i32
    %c0_i32_1 = arith.constant 0 : i32
    return %c0_i32, %c0_i32_0 : i32, i32
  }
  func.func @transform_4(%arg0: i32) -> (i32, i32) {
    %c0_i32 = arith.constant 0 : i32
    %c0_i32_0 = arith.constant 0 : i32
    %c0_i32_1 = arith.constant 0 : i32
    return %c0_i32, %c0_i32_0 : i32, i32
  }
  func.func @transform_5(%arg0: i32) -> (i32, i32, i32) {
    %c0_i32 = arith.constant 0 : i32
    %c0_i32_0 = arith.constant 0 : i32
    %c0_i32_1 = arith.constant 0 : i32
    return %arg0, %c0_i32, %c0_i32_0 : i32, i32, i32
  }
}

module attributes {stable_mosaic.version = 11 : i64} {
  func.func @_distil_conv_kernel(%arg0: i32, %arg1: memref<1x12x32xf32, #tpu.memory_space<vmem>>, %arg2: memref<3x32x32xbf16, #tpu.memory_space<vmem>>, %arg3: memref<1x32xf32, #tpu.memory_space<vmem>>, %arg4: memref<1x6x32xf32, #tpu.memory_space<vmem>>) attributes {dimension_semantics = [#tpu.dimension_semantics<parallel>], iteration_bounds = array<i64: 2>, scalar_prefetch = 0 : i64, scratch_operands = 0 : i64, tpu.core_type = #tpu.core_type<tc>, window_params = [{transform_indices = @transform_0, window_bounds = array<i64: 1, 12, 32>}, {pipeline_mode = #tpu.pipeline_mode<synchronous>, transform_indices = @transform_1, window_bounds = array<i64: 3, 32, 32>}, {pipeline_mode = #tpu.pipeline_mode<synchronous>, transform_indices = @transform_2, window_bounds = array<i64: 1, 32>}, {transform_indices = @transform_3, window_bounds = array<i64: 1, 6, 32>}]} {
    %c0 = arith.constant 0 : index
    %c0_0 = arith.constant 0 : index
    %c0_1 = arith.constant 0 : index
    %0 = vector.load %arg1[%c0, %c0_0, %c0_1] : memref<1x12x32xf32, #tpu.memory_space<vmem>>, vector<1x12x32xf32>
    %1 = vector.shape_cast %0 : vector<1x12x32xf32> to vector<12x32xf32>
    %2 = tpu.iota {dimensions = array<i32: 0>} : vector<12x12xi32>
    %3 = tpu.iota {dimensions = array<i32: 1>} : vector<12x12xi32>
    %c1_i32 = arith.constant 1 : i32
    %4 = vector.broadcast %c1_i32 : i32 to vector<12x12xi32>
    %5 = arith.subi %2, %4 : vector<12x12xi32>
    %6 = arith.cmpi eq, %3, %5 : vector<12x12xi32>
    %c0_i32 = arith.constant 0 : i32
    %7 = vector.broadcast %c0_i32 : i32 to vector<12x12xi32>
    %8 = arith.cmpi eq, %2, %7 : vector<12x12xi32>
    %c11_i32 = arith.constant 11 : i32
    %9 = vector.broadcast %c11_i32 : i32 to vector<12x12xi32>
    %10 = arith.cmpi eq, %3, %9 : vector<12x12xi32>
    %11 = arith.andi %8, %10 : vector<12x12xi1>
    %12 = arith.ori %6, %11 : vector<12x12xi1>
    %cst = arith.constant 1.000000e+00 : f32
    %cst_2 = arith.constant 0.000000e+00 : f32
    %13 = vector.broadcast %cst : f32 to vector<12x12xf32>
    %14 = vector.broadcast %cst_2 : f32 to vector<12x12xf32>
    %15 = arith.select %12, %13, %14 : vector<12x12xi1>, vector<12x12xf32>
    %c1_i32_3 = arith.constant 1 : i32
    %16 = vector.broadcast %c1_i32_3 : i32 to vector<12x12xi32>
    %17 = arith.addi %2, %16 : vector<12x12xi32>
    %18 = arith.cmpi eq, %3, %17 : vector<12x12xi32>
    %c11_i32_4 = arith.constant 11 : i32
    %19 = vector.broadcast %c11_i32_4 : i32 to vector<12x12xi32>
    %20 = arith.cmpi eq, %2, %19 : vector<12x12xi32>
    %c0_i32_5 = arith.constant 0 : i32
    %21 = vector.broadcast %c0_i32_5 : i32 to vector<12x12xi32>
    %22 = arith.cmpi eq, %3, %21 : vector<12x12xi32>
    %23 = arith.andi %20, %22 : vector<12x12xi1>
    %24 = arith.ori %18, %23 : vector<12x12xi1>
    %cst_6 = arith.constant 1.000000e+00 : f32
    %cst_7 = arith.constant 0.000000e+00 : f32
    %25 = vector.broadcast %cst_6 : f32 to vector<12x12xf32>
    %26 = vector.broadcast %cst_7 : f32 to vector<12x12xf32>
    %27 = arith.select %24, %25, %26 : vector<12x12xi1>, vector<12x12xf32>
    %cst_8 = arith.constant dense<0.000000e+00> : vector<12x32xf32>
    %28 = tpu.matmul %15, %1, %cst_8 {dimension_numbers = #tpu.dot_dimension_numbers<[1], [0], [0], [1], [0, 0, 1, 1], [], []>} : vector<12x12xf32>, vector<12x32xf32>, vector<12x32xf32> -> vector<12x32xf32>
    %cst_9 = arith.constant dense<0.000000e+00> : vector<12x32xf32>
    %29 = tpu.matmul %27, %1, %cst_9 {dimension_numbers = #tpu.dot_dimension_numbers<[1], [0], [0], [1], [0, 0, 1, 1], [], []>} : vector<12x12xf32>, vector<12x32xf32>, vector<12x32xf32> -> vector<12x32xf32>
    %c0_10 = arith.constant 0 : index
    %c0_11 = arith.constant 0 : index
    %c0_12 = arith.constant 0 : index
    %30 = vector.load %arg2[%c0_10, %c0_11, %c0_12] : memref<3x32x32xbf16, #tpu.memory_space<vmem>>, vector<1x32x32xbf16>
    %31 = vector.shape_cast %30 : vector<1x32x32xbf16> to vector<32x32xbf16>
    %32 = arith.truncf %28 : vector<12x32xf32> to vector<12x32xbf16>
    %cst_13 = arith.constant dense<0.000000e+00> : vector<12x32xf32>
    %33 = tpu.matmul %32, %31, %cst_13 {dimension_numbers = #tpu.dot_dimension_numbers<[1], [0], [0], [1], [0, 0, 1, 1], [], []>} : vector<12x32xbf16>, vector<32x32xbf16>, vector<12x32xf32> -> vector<12x32xf32>
    %c1 = arith.constant 1 : index
    %c0_14 = arith.constant 0 : index
    %c0_15 = arith.constant 0 : index
    %34 = vector.load %arg2[%c1, %c0_14, %c0_15] : memref<3x32x32xbf16, #tpu.memory_space<vmem>>, vector<1x32x32xbf16>
    %35 = vector.shape_cast %34 : vector<1x32x32xbf16> to vector<32x32xbf16>
    %36 = arith.truncf %1 : vector<12x32xf32> to vector<12x32xbf16>
    %cst_16 = arith.constant dense<0.000000e+00> : vector<12x32xf32>
    %37 = tpu.matmul %36, %35, %cst_16 {dimension_numbers = #tpu.dot_dimension_numbers<[1], [0], [0], [1], [0, 0, 1, 1], [], []>} : vector<12x32xbf16>, vector<32x32xbf16>, vector<12x32xf32> -> vector<12x32xf32>
    %38 = arith.addf %33, %37 : vector<12x32xf32>
    %c2 = arith.constant 2 : index
    %c0_17 = arith.constant 0 : index
    %c0_18 = arith.constant 0 : index
    %39 = vector.load %arg2[%c2, %c0_17, %c0_18] : memref<3x32x32xbf16, #tpu.memory_space<vmem>>, vector<1x32x32xbf16>
    %40 = vector.shape_cast %39 : vector<1x32x32xbf16> to vector<32x32xbf16>
    %41 = arith.truncf %29 : vector<12x32xf32> to vector<12x32xbf16>
    %cst_19 = arith.constant dense<0.000000e+00> : vector<12x32xf32>
    %42 = tpu.matmul %41, %40, %cst_19 {dimension_numbers = #tpu.dot_dimension_numbers<[1], [0], [0], [1], [0, 0, 1, 1], [], []>} : vector<12x32xbf16>, vector<32x32xbf16>, vector<12x32xf32> -> vector<12x32xf32>
    %43 = arith.addf %38, %42 : vector<12x32xf32>
    %c0_20 = arith.constant 0 : index
    %c0_21 = arith.constant 0 : index
    %44 = vector.load %arg3[%c0_20, %c0_21] : memref<1x32xf32, #tpu.memory_space<vmem>>, vector<1x32xf32>
    %45 = vector.broadcast %44 : vector<1x32xf32> to vector<12x32xf32>
    %46 = arith.addf %43, %45 : vector<12x32xf32>
    %cst_22 = arith.constant 0.999994993 : f32
    %47 = vector.broadcast %cst_22 : f32 to vector<12x32xf32>
    %48 = arith.mulf %46, %47 : vector<12x32xf32>
    %cst_23 = arith.constant 0.000000e+00 : f32
    %49 = vector.broadcast %cst_23 : f32 to vector<12x32xf32>
    %50 = arith.cmpf ogt, %48, %49 : vector<12x32xf32>
    %51 = math.exp %48 : vector<12x32xf32>
    %cst_24 = arith.constant 1.000000e+00 : f32
    %52 = vector.broadcast %cst_24 : f32 to vector<12x32xf32>
    %53 = arith.subf %51, %52 : vector<12x32xf32>
    %54 = arith.select %50, %48, %53 : vector<12x32xi1>, vector<12x32xf32>
    %55 = tpu.iota {dimensions = array<i32: 0>} : vector<6x12xi32>
    %56 = tpu.iota {dimensions = array<i32: 1>} : vector<6x12xi32>
    %c2_i32 = arith.constant 2 : i32
    %57 = vector.broadcast %c2_i32 : i32 to vector<6x12xi32>
    %58 = arith.muli %57, %55 : vector<6x12xi32>
    %c1_i32_25 = arith.constant 1 : i32
    %59 = vector.broadcast %c1_i32_25 : i32 to vector<6x12xi32>
    %60 = arith.subi %58, %59 : vector<6x12xi32>
    %c0_i32_26 = arith.constant 0 : i32
    %61 = vector.broadcast %c0_i32_26 : i32 to vector<6x12xi32>
    %62 = arith.maxsi %60, %61 : vector<6x12xi32>
    %63 = arith.cmpi eq, %56, %62 : vector<6x12xi32>
    %cst_27 = arith.constant 1.000000e+00 : f32
    %cst_28 = arith.constant 0.000000e+00 : f32
    %64 = vector.broadcast %cst_27 : f32 to vector<6x12xf32>
    %65 = vector.broadcast %cst_28 : f32 to vector<6x12xf32>
    %66 = arith.select %63, %64, %65 : vector<6x12xi1>, vector<6x12xf32>
    %c2_i32_29 = arith.constant 2 : i32
    %67 = vector.broadcast %c2_i32_29 : i32 to vector<6x12xi32>
    %68 = arith.muli %67, %55 : vector<6x12xi32>
    %69 = arith.cmpi eq, %56, %68 : vector<6x12xi32>
    %cst_30 = arith.constant 1.000000e+00 : f32
    %cst_31 = arith.constant 0.000000e+00 : f32
    %70 = vector.broadcast %cst_30 : f32 to vector<6x12xf32>
    %71 = vector.broadcast %cst_31 : f32 to vector<6x12xf32>
    %72 = arith.select %69, %70, %71 : vector<6x12xi1>, vector<6x12xf32>
    %c2_i32_32 = arith.constant 2 : i32
    %73 = vector.broadcast %c2_i32_32 : i32 to vector<6x12xi32>
    %74 = arith.muli %73, %55 : vector<6x12xi32>
    %c1_i32_33 = arith.constant 1 : i32
    %75 = vector.broadcast %c1_i32_33 : i32 to vector<6x12xi32>
    %76 = arith.addi %74, %75 : vector<6x12xi32>
    %c11_i32_34 = arith.constant 11 : i32
    %77 = vector.broadcast %c11_i32_34 : i32 to vector<6x12xi32>
    %78 = arith.minsi %76, %77 : vector<6x12xi32>
    %79 = arith.cmpi eq, %56, %78 : vector<6x12xi32>
    %cst_35 = arith.constant 1.000000e+00 : f32
    %cst_36 = arith.constant 0.000000e+00 : f32
    %80 = vector.broadcast %cst_35 : f32 to vector<6x12xf32>
    %81 = vector.broadcast %cst_36 : f32 to vector<6x12xf32>
    %82 = arith.select %79, %80, %81 : vector<6x12xi1>, vector<6x12xf32>
    %cst_37 = arith.constant dense<0.000000e+00> : vector<6x32xf32>
    %83 = tpu.matmul %66, %54, %cst_37 {dimension_numbers = #tpu.dot_dimension_numbers<[1], [0], [0], [1], [0, 0, 1, 1], [], []>} : vector<6x12xf32>, vector<12x32xf32>, vector<6x32xf32> -> vector<6x32xf32>
    %cst_38 = arith.constant dense<0.000000e+00> : vector<6x32xf32>
    %84 = tpu.matmul %72, %54, %cst_38 {dimension_numbers = #tpu.dot_dimension_numbers<[1], [0], [0], [1], [0, 0, 1, 1], [], []>} : vector<6x12xf32>, vector<12x32xf32>, vector<6x32xf32> -> vector<6x32xf32>
    %85 = arith.maximumf %83, %84 : vector<6x32xf32>
    %cst_39 = arith.constant dense<0.000000e+00> : vector<6x32xf32>
    %86 = tpu.matmul %82, %54, %cst_39 {dimension_numbers = #tpu.dot_dimension_numbers<[1], [0], [0], [1], [0, 0, 1, 1], [], []>} : vector<6x12xf32>, vector<12x32xf32>, vector<6x32xf32> -> vector<6x32xf32>
    %87 = arith.maximumf %85, %86 : vector<6x32xf32>
    %c0_40 = arith.constant 0 : index
    %c0_41 = arith.constant 0 : index
    %c0_42 = arith.constant 0 : index
    %88 = vector.load %arg4[%c0_40, %c0_41, %c0_42] : memref<1x6x32xf32, #tpu.memory_space<vmem>>, vector<1x6x32xf32>
    %89 = vector.shape_cast %88 : vector<1x6x32xf32> to vector<6x32xf32>
    %90 = vector.shape_cast %87 : vector<6x32xf32> to vector<1x6x32xf32>
    tpu.vector_store %arg4[%c0_40, %c0_41, %c0_42], %90 {strides = array<i32>} : memref<1x6x32xf32, #tpu.memory_space<vmem>>, vector<1x6x32xf32>,
    return
  }
  func.func @transform_0(%arg0: i32) -> (i32, i32, i32) {
    %c0_i32 = arith.constant 0 : i32
    %c0_i32_0 = arith.constant 0 : i32
    %c0_i32_1 = arith.constant 0 : i32
    return %arg0, %c0_i32, %c0_i32_0 : i32, i32, i32
  }
  func.func @transform_1(%arg0: i32) -> (i32, i32, i32) {
    %c0_i32 = arith.constant 0 : i32
    %c0_i32_0 = arith.constant 0 : i32
    %c0_i32_1 = arith.constant 0 : i32
    %c0_i32_2 = arith.constant 0 : i32
    return %c0_i32, %c0_i32_0, %c0_i32_1 : i32, i32, i32
  }
  func.func @transform_2(%arg0: i32) -> (i32, i32) {
    %c0_i32 = arith.constant 0 : i32
    %c0_i32_0 = arith.constant 0 : i32
    %c0_i32_1 = arith.constant 0 : i32
    return %c0_i32, %c0_i32_0 : i32, i32
  }
  func.func @transform_3(%arg0: i32) -> (i32, i32, i32) {
    %c0_i32 = arith.constant 0 : i32
    %c0_i32_0 = arith.constant 0 : i32
    %c0_i32_1 = arith.constant 0 : i32
    return %arg0, %c0_i32, %c0_i32_0 : i32, i32, i32
  }
}

module attributes {stable_mosaic.version = 11 : i64} {
  func.func @_encoder_layer_kernel(%arg0: i32, %arg1: memref<1x12x32xf32, #tpu.memory_space<vmem>>, %arg2: memref<32x96xbf16, #tpu.memory_space<vmem>>, %arg3: memref<1x96xf32, #tpu.memory_space<vmem>>, %arg4: memref<32x32xf32, #tpu.memory_space<vmem>>, %arg5: memref<1x32xf32, #tpu.memory_space<vmem>>, %arg6: memref<1x32xf32, #tpu.memory_space<vmem>>, %arg7: memref<1x32xf32, #tpu.memory_space<vmem>>, %arg8: memref<32x64xbf16, #tpu.memory_space<vmem>>, %arg9: memref<1x64xf32, #tpu.memory_space<vmem>>, %arg10: memref<64x32xbf16, #tpu.memory_space<vmem>>, %arg11: memref<1x32xf32, #tpu.memory_space<vmem>>, %arg12: memref<1x32xf32, #tpu.memory_space<vmem>>, %arg13: memref<1x32xf32, #tpu.memory_space<vmem>>, %arg14: memref<1x12x32xf32, #tpu.memory_space<vmem>>) attributes {dimension_semantics = [#tpu.dimension_semantics<parallel>], iteration_bounds = array<i64: 2>, scalar_prefetch = 0 : i64, scratch_operands = 0 : i64, tpu.core_type = #tpu.core_type<tc>, window_params = [{transform_indices = @transform_0, window_bounds = array<i64: 1, 12, 32>}, {pipeline_mode = #tpu.pipeline_mode<synchronous>, transform_indices = @transform_1, window_bounds = array<i64: 32, 96>}, {pipeline_mode = #tpu.pipeline_mode<synchronous>, transform_indices = @transform_2, window_bounds = array<i64: 1, 96>}, {pipeline_mode = #tpu.pipeline_mode<synchronous>, transform_indices = @transform_3, window_bounds = array<i64: 32, 32>}, {pipeline_mode = #tpu.pipeline_mode<synchronous>, transform_indices = @transform_4, window_bounds = array<i64: 1, 32>}, {pipeline_mode = #tpu.pipeline_mode<synchronous>, transform_indices = @transform_5, window_bounds = array<i64: 1, 32>}, {pipeline_mode = #tpu.pipeline_mode<synchronous>, transform_indices = @transform_6, window_bounds = array<i64: 1, 32>}, {pipeline_mode = #tpu.pipeline_mode<synchronous>, transform_indices = @transform_7, window_bounds = array<i64: 32, 64>}, {pipeline_mode = #tpu.pipeline_mode<synchronous>, transform_indices = @transform_8, window_bounds = array<i64: 1, 64>}, {pipeline_mode = #tpu.pipeline_mode<synchronous>, transform_indices = @transform_9, window_bounds = array<i64: 64, 32>}, {pipeline_mode = #tpu.pipeline_mode<synchronous>, transform_indices = @transform_10, window_bounds = array<i64: 1, 32>}, {pipeline_mode = #tpu.pipeline_mode<synchronous>, transform_indices = @transform_11, window_bounds = array<i64: 1, 32>}, {pipeline_mode = #tpu.pipeline_mode<synchronous>, transform_indices = @transform_12, window_bounds = array<i64: 1, 32>}, {transform_indices = @transform_13, window_bounds = array<i64: 1, 12, 32>}]} {
    %c0 = arith.constant 0 : index
    %c0_0 = arith.constant 0 : index
    %c0_1 = arith.constant 0 : index
    %0 = vector.load %arg1[%c0, %c0_0, %c0_1] : memref<1x12x32xf32, #tpu.memory_space<vmem>>, vector<1x12x32xf32>
    %1 = vector.shape_cast %0 : vector<1x12x32xf32> to vector<12x32xf32>
    %c0_2 = arith.constant 0 : index
    %c0_3 = arith.constant 0 : index
    %2 = vector.load %arg2[%c0_2, %c0_3] : memref<32x96xbf16, #tpu.memory_space<vmem>>, vector<32x96xbf16>
    %3 = arith.truncf %1 : vector<12x32xf32> to vector<12x32xbf16>
    %cst = arith.constant dense<0.000000e+00> : vector<12x96xf32>
    %4 = tpu.matmul %3, %2, %cst {dimension_numbers = #tpu.dot_dimension_numbers<[1], [0], [0], [1], [0, 0, 1, 1], [], []>} : vector<12x32xbf16>, vector<32x96xbf16>, vector<12x96xf32> -> vector<12x96xf32>
    %c0_4 = arith.constant 0 : index
    %c0_5 = arith.constant 0 : index
    %5 = vector.load %arg3[%c0_4, %c0_5] : memref<1x96xf32, #tpu.memory_space<vmem>>, vector<1x96xf32>
    %6 = vector.broadcast %5 : vector<1x96xf32> to vector<12x96xf32>
    %7 = arith.addf %4, %6 : vector<12x96xf32>
    %8 = vector.extract_strided_slice %7 {offsets = [0, 0], sizes = [12, 32], strides = [1, 1]} : vector<12x96xf32> to vector<12x32xf32>
    %9 = vector.extract_strided_slice %7 {offsets = [0, 32], sizes = [12, 32], strides = [1, 1]} : vector<12x96xf32> to vector<12x32xf32>
    %10 = vector.extract_strided_slice %7 {offsets = [0, 64], sizes = [12, 32], strides = [1, 1]} : vector<12x96xf32> to vector<12x32xf32>
    %c0_6 = arith.constant 0 : index
    %c0_7 = arith.constant 0 : index
    %11 = vector.load %arg4[%c0_6, %c0_7] : memref<32x32xf32, #tpu.memory_space<vmem>>, vector<32x32xf32>
    %12 = vector.extract_strided_slice %8 {offsets = [0, 0], sizes = [12, 8], strides = [1, 1]} : vector<12x32xf32> to vector<12x8xf32>
    %13 = arith.truncf %12 : vector<12x8xf32> to vector<12x8xbf16>
    %14 = vector.extract_strided_slice %9 {offsets = [0, 0], sizes = [12, 8], strides = [1, 1]} : vector<12x32xf32> to vector<12x8xf32>
    %15 = arith.truncf %14 : vector<12x8xf32> to vector<12x8xbf16>
    %cst_8 = arith.constant dense<0.000000e+00> : vector<12x12xf32>
    %16 = tpu.matmul %13, %15, %cst_8 {dimension_numbers = #tpu.dot_dimension_numbers<[1], [1], [0], [0], [0, 0, 1, 0], [], []>} : vector<12x8xbf16>, vector<12x8xbf16>, vector<12x12xf32> -> vector<12x12xf32>
    %cst_9 = arith.constant 0.353553385 : f32
    %17 = vector.broadcast %cst_9 : f32 to vector<12x12xf32>
    %18 = arith.mulf %16, %17 : vector<12x12xf32>
    %cst_10 = arith.constant dense<0xFF800000> : vector<12xf32>
    %19 = vector.multi_reduction <maximumf>, %18, %cst_10 [1] : vector<12x12xf32> to vector<12xf32>
    %20 = vector.shape_cast %19 : vector<12xf32> to vector<12x1xf32>
    %21 = vector.broadcast %20 : vector<12x1xf32> to vector<12x12xf32>
    %22 = arith.subf %18, %21 : vector<12x12xf32>
    %23 = math.exp %22 : vector<12x12xf32>
    %cst_11 = arith.constant dense<0.000000e+00> : vector<12xf32>
    %24 = vector.multi_reduction <add>, %23, %cst_11 [1] : vector<12x12xf32> to vector<12xf32>
    %25 = vector.shape_cast %24 : vector<12xf32> to vector<12x1xf32>
    %26 = tpu.reciprocal %25 {approx = true} : vector<12x1xf32> -> vector<12x1xf32>
    %27 = vector.broadcast %26 : vector<12x1xf32> to vector<12x12xf32>
    %28 = arith.mulf %23, %27 : vector<12x12xf32>
    %29 = vector.extract_strided_slice %10 {offsets = [0, 0], sizes = [12, 8], strides = [1, 1]} : vector<12x32xf32> to vector<12x8xf32>
    %30 = arith.truncf %28 : vector<12x12xf32> to vector<12x12xbf16>
    %31 = arith.truncf %29 : vector<12x8xf32> to vector<12x8xbf16>
    %cst_12 = arith.constant dense<0.000000e+00> : vector<12x8xf32>
    %32 = tpu.matmul %30, %31, %cst_12 {dimension_numbers = #tpu.dot_dimension_numbers<[1], [0], [0], [1], [0, 0, 1, 1], [], []>} : vector<12x12xbf16>, vector<12x8xbf16>, vector<12x8xf32> -> vector<12x8xf32>
    %33 = vector.extract_strided_slice %11 {offsets = [0, 0], sizes = [8, 32], strides = [1, 1]} : vector<32x32xf32> to vector<8x32xf32>
    %34 = arith.truncf %32 : vector<12x8xf32> to vector<12x8xbf16>
    %35 = arith.truncf %33 : vector<8x32xf32> to vector<8x32xbf16>
    %cst_13 = arith.constant dense<0.000000e+00> : vector<12x32xf32>
    %36 = tpu.matmul %34, %35, %cst_13 {dimension_numbers = #tpu.dot_dimension_numbers<[1], [0], [0], [1], [0, 0, 1, 1], [], []>} : vector<12x8xbf16>, vector<8x32xbf16>, vector<12x32xf32> -> vector<12x32xf32>
    %37 = vector.extract_strided_slice %8 {offsets = [0, 8], sizes = [12, 8], strides = [1, 1]} : vector<12x32xf32> to vector<12x8xf32>
    %38 = arith.truncf %37 : vector<12x8xf32> to vector<12x8xbf16>
    %39 = vector.extract_strided_slice %9 {offsets = [0, 8], sizes = [12, 8], strides = [1, 1]} : vector<12x32xf32> to vector<12x8xf32>
    %40 = arith.truncf %39 : vector<12x8xf32> to vector<12x8xbf16>
    %cst_14 = arith.constant dense<0.000000e+00> : vector<12x12xf32>
    %41 = tpu.matmul %38, %40, %cst_14 {dimension_numbers = #tpu.dot_dimension_numbers<[1], [1], [0], [0], [0, 0, 1, 0], [], []>} : vector<12x8xbf16>, vector<12x8xbf16>, vector<12x12xf32> -> vector<12x12xf32>
    %cst_15 = arith.constant 0.353553385 : f32
    %42 = vector.broadcast %cst_15 : f32 to vector<12x12xf32>
    %43 = arith.mulf %41, %42 : vector<12x12xf32>
    %cst_16 = arith.constant dense<0xFF800000> : vector<12xf32>
    %44 = vector.multi_reduction <maximumf>, %43, %cst_16 [1] : vector<12x12xf32> to vector<12xf32>
    %45 = vector.shape_cast %44 : vector<12xf32> to vector<12x1xf32>
    %46 = vector.broadcast %45 : vector<12x1xf32> to vector<12x12xf32>
    %47 = arith.subf %43, %46 : vector<12x12xf32>
    %48 = math.exp %47 : vector<12x12xf32>
    %cst_17 = arith.constant dense<0.000000e+00> : vector<12xf32>
    %49 = vector.multi_reduction <add>, %48, %cst_17 [1] : vector<12x12xf32> to vector<12xf32>
    %50 = vector.shape_cast %49 : vector<12xf32> to vector<12x1xf32>
    %51 = tpu.reciprocal %50 {approx = true} : vector<12x1xf32> -> vector<12x1xf32>
    %52 = vector.broadcast %51 : vector<12x1xf32> to vector<12x12xf32>
    %53 = arith.mulf %48, %52 : vector<12x12xf32>
    %54 = vector.extract_strided_slice %10 {offsets = [0, 8], sizes = [12, 8], strides = [1, 1]} : vector<12x32xf32> to vector<12x8xf32>
    %55 = arith.truncf %53 : vector<12x12xf32> to vector<12x12xbf16>
    %56 = arith.truncf %54 : vector<12x8xf32> to vector<12x8xbf16>
    %cst_18 = arith.constant dense<0.000000e+00> : vector<12x8xf32>
    %57 = tpu.matmul %55, %56, %cst_18 {dimension_numbers = #tpu.dot_dimension_numbers<[1], [0], [0], [1], [0, 0, 1, 1], [], []>} : vector<12x12xbf16>, vector<12x8xbf16>, vector<12x8xf32> -> vector<12x8xf32>
    %58 = vector.extract_strided_slice %11 {offsets = [8, 0], sizes = [8, 32], strides = [1, 1]} : vector<32x32xf32> to vector<8x32xf32>
    %59 = arith.truncf %57 : vector<12x8xf32> to vector<12x8xbf16>
    %60 = arith.truncf %58 : vector<8x32xf32> to vector<8x32xbf16>
    %cst_19 = arith.constant dense<0.000000e+00> : vector<12x32xf32>
    %61 = tpu.matmul %59, %60, %cst_19 {dimension_numbers = #tpu.dot_dimension_numbers<[1], [0], [0], [1], [0, 0, 1, 1], [], []>} : vector<12x8xbf16>, vector<8x32xbf16>, vector<12x32xf32> -> vector<12x32xf32>
    %62 = arith.addf %36, %61 : vector<12x32xf32>
    %63 = vector.extract_strided_slice %8 {offsets = [0, 16], sizes = [12, 8], strides = [1, 1]} : vector<12x32xf32> to vector<12x8xf32>
    %64 = arith.truncf %63 : vector<12x8xf32> to vector<12x8xbf16>
    %65 = vector.extract_strided_slice %9 {offsets = [0, 16], sizes = [12, 8], strides = [1, 1]} : vector<12x32xf32> to vector<12x8xf32>
    %66 = arith.truncf %65 : vector<12x8xf32> to vector<12x8xbf16>
    %cst_20 = arith.constant dense<0.000000e+00> : vector<12x12xf32>
    %67 = tpu.matmul %64, %66, %cst_20 {dimension_numbers = #tpu.dot_dimension_numbers<[1], [1], [0], [0], [0, 0, 1, 0], [], []>} : vector<12x8xbf16>, vector<12x8xbf16>, vector<12x12xf32> -> vector<12x12xf32>
    %cst_21 = arith.constant 0.353553385 : f32
    %68 = vector.broadcast %cst_21 : f32 to vector<12x12xf32>
    %69 = arith.mulf %67, %68 : vector<12x12xf32>
    %cst_22 = arith.constant dense<0xFF800000> : vector<12xf32>
    %70 = vector.multi_reduction <maximumf>, %69, %cst_22 [1] : vector<12x12xf32> to vector<12xf32>
    %71 = vector.shape_cast %70 : vector<12xf32> to vector<12x1xf32>
    %72 = vector.broadcast %71 : vector<12x1xf32> to vector<12x12xf32>
    %73 = arith.subf %69, %72 : vector<12x12xf32>
    %74 = math.exp %73 : vector<12x12xf32>
    %cst_23 = arith.constant dense<0.000000e+00> : vector<12xf32>
    %75 = vector.multi_reduction <add>, %74, %cst_23 [1] : vector<12x12xf32> to vector<12xf32>
    %76 = vector.shape_cast %75 : vector<12xf32> to vector<12x1xf32>
    %77 = tpu.reciprocal %76 {approx = true} : vector<12x1xf32> -> vector<12x1xf32>
    %78 = vector.broadcast %77 : vector<12x1xf32> to vector<12x12xf32>
    %79 = arith.mulf %74, %78 : vector<12x12xf32>
    %80 = vector.extract_strided_slice %10 {offsets = [0, 16], sizes = [12, 8], strides = [1, 1]} : vector<12x32xf32> to vector<12x8xf32>
    %81 = arith.truncf %79 : vector<12x12xf32> to vector<12x12xbf16>
    %82 = arith.truncf %80 : vector<12x8xf32> to vector<12x8xbf16>
    %cst_24 = arith.constant dense<0.000000e+00> : vector<12x8xf32>
    %83 = tpu.matmul %81, %82, %cst_24 {dimension_numbers = #tpu.dot_dimension_numbers<[1], [0], [0], [1], [0, 0, 1, 1], [], []>} : vector<12x12xbf16>, vector<12x8xbf16>, vector<12x8xf32> -> vector<12x8xf32>
    %84 = vector.extract_strided_slice %11 {offsets = [16, 0], sizes = [8, 32], strides = [1, 1]} : vector<32x32xf32> to vector<8x32xf32>
    %85 = arith.truncf %83 : vector<12x8xf32> to vector<12x8xbf16>
    %86 = arith.truncf %84 : vector<8x32xf32> to vector<8x32xbf16>
    %cst_25 = arith.constant dense<0.000000e+00> : vector<12x32xf32>
    %87 = tpu.matmul %85, %86, %cst_25 {dimension_numbers = #tpu.dot_dimension_numbers<[1], [0], [0], [1], [0, 0, 1, 1], [], []>} : vector<12x8xbf16>, vector<8x32xbf16>, vector<12x32xf32> -> vector<12x32xf32>
    %88 = arith.addf %62, %87 : vector<12x32xf32>
    %89 = vector.extract_strided_slice %8 {offsets = [0, 24], sizes = [12, 8], strides = [1, 1]} : vector<12x32xf32> to vector<12x8xf32>
    %90 = arith.truncf %89 : vector<12x8xf32> to vector<12x8xbf16>
    %91 = vector.extract_strided_slice %9 {offsets = [0, 24], sizes = [12, 8], strides = [1, 1]} : vector<12x32xf32> to vector<12x8xf32>
    %92 = arith.truncf %91 : vector<12x8xf32> to vector<12x8xbf16>
    %cst_26 = arith.constant dense<0.000000e+00> : vector<12x12xf32>
    %93 = tpu.matmul %90, %92, %cst_26 {dimension_numbers = #tpu.dot_dimension_numbers<[1], [1], [0], [0], [0, 0, 1, 0], [], []>} : vector<12x8xbf16>, vector<12x8xbf16>, vector<12x12xf32> -> vector<12x12xf32>
    %cst_27 = arith.constant 0.353553385 : f32
    %94 = vector.broadcast %cst_27 : f32 to vector<12x12xf32>
    %95 = arith.mulf %93, %94 : vector<12x12xf32>
    %cst_28 = arith.constant dense<0xFF800000> : vector<12xf32>
    %96 = vector.multi_reduction <maximumf>, %95, %cst_28 [1] : vector<12x12xf32> to vector<12xf32>
    %97 = vector.shape_cast %96 : vector<12xf32> to vector<12x1xf32>
    %98 = vector.broadcast %97 : vector<12x1xf32> to vector<12x12xf32>
    %99 = arith.subf %95, %98 : vector<12x12xf32>
    %100 = math.exp %99 : vector<12x12xf32>
    %cst_29 = arith.constant dense<0.000000e+00> : vector<12xf32>
    %101 = vector.multi_reduction <add>, %100, %cst_29 [1] : vector<12x12xf32> to vector<12xf32>
    %102 = vector.shape_cast %101 : vector<12xf32> to vector<12x1xf32>
    %103 = tpu.reciprocal %102 {approx = true} : vector<12x1xf32> -> vector<12x1xf32>
    %104 = vector.broadcast %103 : vector<12x1xf32> to vector<12x12xf32>
    %105 = arith.mulf %100, %104 : vector<12x12xf32>
    %106 = vector.extract_strided_slice %10 {offsets = [0, 24], sizes = [12, 8], strides = [1, 1]} : vector<12x32xf32> to vector<12x8xf32>
    %107 = arith.truncf %105 : vector<12x12xf32> to vector<12x12xbf16>
    %108 = arith.truncf %106 : vector<12x8xf32> to vector<12x8xbf16>
    %cst_30 = arith.constant dense<0.000000e+00> : vector<12x8xf32>
    %109 = tpu.matmul %107, %108, %cst_30 {dimension_numbers = #tpu.dot_dimension_numbers<[1], [0], [0], [1], [0, 0, 1, 1], [], []>} : vector<12x12xbf16>, vector<12x8xbf16>, vector<12x8xf32> -> vector<12x8xf32>
    %110 = vector.extract_strided_slice %11 {offsets = [24, 0], sizes = [8, 32], strides = [1, 1]} : vector<32x32xf32> to vector<8x32xf32>
    %111 = arith.truncf %109 : vector<12x8xf32> to vector<12x8xbf16>
    %112 = arith.truncf %110 : vector<8x32xf32> to vector<8x32xbf16>
    %cst_31 = arith.constant dense<0.000000e+00> : vector<12x32xf32>
    %113 = tpu.matmul %111, %112, %cst_31 {dimension_numbers = #tpu.dot_dimension_numbers<[1], [0], [0], [1], [0, 0, 1, 1], [], []>} : vector<12x8xbf16>, vector<8x32xbf16>, vector<12x32xf32> -> vector<12x32xf32>
    %114 = arith.addf %88, %113 : vector<12x32xf32>
    %c0_32 = arith.constant 0 : index
    %c0_33 = arith.constant 0 : index
    %115 = vector.load %arg5[%c0_32, %c0_33] : memref<1x32xf32, #tpu.memory_space<vmem>>, vector<1x32xf32>
    %116 = vector.broadcast %115 : vector<1x32xf32> to vector<12x32xf32>
    %117 = arith.addf %114, %116 : vector<12x32xf32>
    %118 = arith.addf %1, %117 : vector<12x32xf32>
    %c0_34 = arith.constant 0 : index
    %c0_35 = arith.constant 0 : index
    %119 = vector.load %arg6[%c0_34, %c0_35] : memref<1x32xf32, #tpu.memory_space<vmem>>, vector<1x32xf32>
    %c0_36 = arith.constant 0 : index
    %c0_37 = arith.constant 0 : index
    %120 = vector.load %arg7[%c0_36, %c0_37] : memref<1x32xf32, #tpu.memory_space<vmem>>, vector<1x32xf32>
    %cst_38 = arith.constant dense<0.000000e+00> : vector<12xf32>
    %121 = vector.multi_reduction <add>, %118, %cst_38 [1] : vector<12x32xf32> to vector<12xf32>
    %122 = vector.shape_cast %121 : vector<12xf32> to vector<12x1xf32>
    %cst_39 = arith.constant 3.200000e+01 : f32
    %123 = vector.broadcast %cst_39 : f32 to vector<12x1xf32>
    %124 = arith.divf %122, %123 : vector<12x1xf32>
    %125 = vector.broadcast %124 : vector<12x1xf32> to vector<12x32xf32>
    %126 = arith.subf %118, %125 : vector<12x32xf32>
    %127 = arith.mulf %126, %126 : vector<12x32xf32>
    %cst_40 = arith.constant dense<0.000000e+00> : vector<12xf32>
    %128 = vector.multi_reduction <add>, %127, %cst_40 [1] : vector<12x32xf32> to vector<12xf32>
    %129 = vector.shape_cast %128 : vector<12xf32> to vector<12x1xf32>
    %cst_41 = arith.constant 3.200000e+01 : f32
    %130 = vector.broadcast %cst_41 : f32 to vector<12x1xf32>
    %131 = arith.divf %129, %130 : vector<12x1xf32>
    %cst_42 = arith.constant 9.99999974E-6 : f32
    %132 = vector.broadcast %cst_42 : f32 to vector<12x1xf32>
    %133 = arith.addf %131, %132 : vector<12x1xf32>
    %134 = math.rsqrt %133 : vector<12x1xf32>
    %135 = vector.broadcast %134 : vector<12x1xf32> to vector<12x32xf32>
    %136 = arith.mulf %126, %135 : vector<12x32xf32>
    %137 = vector.broadcast %119 : vector<1x32xf32> to vector<12x32xf32>
    %138 = arith.mulf %136, %137 : vector<12x32xf32>
    %139 = vector.broadcast %120 : vector<1x32xf32> to vector<12x32xf32>
    %140 = arith.addf %138, %139 : vector<12x32xf32>
    %c0_43 = arith.constant 0 : index
    %c0_44 = arith.constant 0 : index
    %141 = vector.load %arg8[%c0_43, %c0_44] : memref<32x64xbf16, #tpu.memory_space<vmem>>, vector<32x64xbf16>
    %142 = arith.truncf %140 : vector<12x32xf32> to vector<12x32xbf16>
    %cst_45 = arith.constant dense<0.000000e+00> : vector<12x64xf32>
    %143 = tpu.matmul %142, %141, %cst_45 {dimension_numbers = #tpu.dot_dimension_numbers<[1], [0], [0], [1], [0, 0, 1, 1], [], []>} : vector<12x32xbf16>, vector<32x64xbf16>, vector<12x64xf32> -> vector<12x64xf32>
    %c0_46 = arith.constant 0 : index
    %c0_47 = arith.constant 0 : index
    %144 = vector.load %arg9[%c0_46, %c0_47] : memref<1x64xf32, #tpu.memory_space<vmem>>, vector<1x64xf32>
    %145 = vector.broadcast %144 : vector<1x64xf32> to vector<12x64xf32>
    %146 = arith.addf %143, %145 : vector<12x64xf32>
    %cst_48 = arith.constant 0.000000e+00 : f32
    %147 = vector.broadcast %cst_48 : f32 to vector<12x64xf32>
    %148 = arith.maximumf %146, %147 : vector<12x64xf32>
    %c0_49 = arith.constant 0 : index
    %c0_50 = arith.constant 0 : index
    %149 = vector.load %arg10[%c0_49, %c0_50] : memref<64x32xbf16, #tpu.memory_space<vmem>>, vector<64x32xbf16>
    %150 = arith.truncf %148 : vector<12x64xf32> to vector<12x64xbf16>
    %cst_51 = arith.constant dense<0.000000e+00> : vector<12x32xf32>
    %151 = tpu.matmul %150, %149, %cst_51 {dimension_numbers = #tpu.dot_dimension_numbers<[1], [0], [0], [1], [0, 0, 1, 1], [], []>} : vector<12x64xbf16>, vector<64x32xbf16>, vector<12x32xf32> -> vector<12x32xf32>
    %c0_52 = arith.constant 0 : index
    %c0_53 = arith.constant 0 : index
    %152 = vector.load %arg11[%c0_52, %c0_53] : memref<1x32xf32, #tpu.memory_space<vmem>>, vector<1x32xf32>
    %153 = vector.broadcast %152 : vector<1x32xf32> to vector<12x32xf32>
    %154 = arith.addf %151, %153 : vector<12x32xf32>
    %155 = arith.addf %140, %154 : vector<12x32xf32>
    %c0_54 = arith.constant 0 : index
    %c0_55 = arith.constant 0 : index
    %156 = vector.load %arg12[%c0_54, %c0_55] : memref<1x32xf32, #tpu.memory_space<vmem>>, vector<1x32xf32>
    %c0_56 = arith.constant 0 : index
    %c0_57 = arith.constant 0 : index
    %157 = vector.load %arg13[%c0_56, %c0_57] : memref<1x32xf32, #tpu.memory_space<vmem>>, vector<1x32xf32>
    %cst_58 = arith.constant dense<0.000000e+00> : vector<12xf32>
    %158 = vector.multi_reduction <add>, %155, %cst_58 [1] : vector<12x32xf32> to vector<12xf32>
    %159 = vector.shape_cast %158 : vector<12xf32> to vector<12x1xf32>
    %cst_59 = arith.constant 3.200000e+01 : f32
    %160 = vector.broadcast %cst_59 : f32 to vector<12x1xf32>
    %161 = arith.divf %159, %160 : vector<12x1xf32>
    %162 = vector.broadcast %161 : vector<12x1xf32> to vector<12x32xf32>
    %163 = arith.subf %155, %162 : vector<12x32xf32>
    %164 = arith.mulf %163, %163 : vector<12x32xf32>
    %cst_60 = arith.constant dense<0.000000e+00> : vector<12xf32>
    %165 = vector.multi_reduction <add>, %164, %cst_60 [1] : vector<12x32xf32> to vector<12xf32>
    %166 = vector.shape_cast %165 : vector<12xf32> to vector<12x1xf32>
    %cst_61 = arith.constant 3.200000e+01 : f32
    %167 = vector.broadcast %cst_61 : f32 to vector<12x1xf32>
    %168 = arith.divf %166, %167 : vector<12x1xf32>
    %cst_62 = arith.constant 9.99999974E-6 : f32
    %169 = vector.broadcast %cst_62 : f32 to vector<12x1xf32>
    %170 = arith.addf %168, %169 : vector<12x1xf32>
    %171 = math.rsqrt %170 : vector<12x1xf32>
    %172 = vector.broadcast %171 : vector<12x1xf32> to vector<12x32xf32>
    %173 = arith.mulf %163, %172 : vector<12x32xf32>
    %174 = vector.broadcast %156 : vector<1x32xf32> to vector<12x32xf32>
    %175 = arith.mulf %173, %174 : vector<12x32xf32>
    %176 = vector.broadcast %157 : vector<1x32xf32> to vector<12x32xf32>
    %177 = arith.addf %175, %176 : vector<12x32xf32>
    %c0_63 = arith.constant 0 : index
    %c0_64 = arith.constant 0 : index
    %c0_65 = arith.constant 0 : index
    %178 = vector.load %arg14[%c0_63, %c0_64, %c0_65] : memref<1x12x32xf32, #tpu.memory_space<vmem>>, vector<1x12x32xf32>
    %179 = vector.shape_cast %178 : vector<1x12x32xf32> to vector<12x32xf32>
    %180 = vector.shape_cast %177 : vector<12x32xf32> to vector<1x12x32xf32>
    tpu.vector_store %arg14[%c0_63, %c0_64, %c0_65], %180 {strides = array<i32>} : memref<1x12x32xf32, #tpu.memory_space<vmem>>, vector<1x12x32xf32>,
    return
  }
  func.func @transform_0(%arg0: i32) -> (i32, i32, i32) {
    %c0_i32 = arith.constant 0 : i32
    %c0_i32_0 = arith.constant 0 : i32
    %c0_i32_1 = arith.constant 0 : i32
    return %arg0, %c0_i32, %c0_i32_0 : i32, i32, i32
  }
  func.func @transform_1(%arg0: i32) -> (i32, i32) {
    %c0_i32 = arith.constant 0 : i32
    %c0_i32_0 = arith.constant 0 : i32
    %c0_i32_1 = arith.constant 0 : i32
    return %c0_i32, %c0_i32_0 : i32, i32
  }
  func.func @transform_2(%arg0: i32) -> (i32, i32) {
    %c0_i32 = arith.constant 0 : i32
    %c0_i32_0 = arith.constant 0 : i32
    %c0_i32_1 = arith.constant 0 : i32
    return %c0_i32, %c0_i32_0 : i32, i32
  }
  func.func @transform_3(%arg0: i32) -> (i32, i32) {
    %c0_i32 = arith.constant 0 : i32
    %c0_i32_0 = arith.constant 0 : i32
    %c0_i32_1 = arith.constant 0 : i32
    return %c0_i32, %c0_i32_0 : i32, i32
  }
  func.func @transform_4(%arg0: i32) -> (i32, i32) {
    %c0_i32 = arith.constant 0 : i32
    %c0_i32_0 = arith.constant 0 : i32
    %c0_i32_1 = arith.constant 0 : i32
    return %c0_i32, %c0_i32_0 : i32, i32
  }
  func.func @transform_5(%arg0: i32) -> (i32, i32) {
    %c0_i32 = arith.constant 0 : i32
    %c0_i32_0 = arith.constant 0 : i32
    %c0_i32_1 = arith.constant 0 : i32
    return %c0_i32, %c0_i32_0 : i32, i32
  }
  func.func @transform_6(%arg0: i32) -> (i32, i32) {
    %c0_i32 = arith.constant 0 : i32
    %c0_i32_0 = arith.constant 0 : i32
    %c0_i32_1 = arith.constant 0 : i32
    return %c0_i32, %c0_i32_0 : i32, i32
  }
  func.func @transform_7(%arg0: i32) -> (i32, i32) {
    %c0_i32 = arith.constant 0 : i32
    %c0_i32_0 = arith.constant 0 : i32
    %c0_i32_1 = arith.constant 0 : i32
    return %c0_i32, %c0_i32_0 : i32, i32
  }
  func.func @transform_8(%arg0: i32) -> (i32, i32) {
    %c0_i32 = arith.constant 0 : i32
    %c0_i32_0 = arith.constant 0 : i32
    %c0_i32_1 = arith.constant 0 : i32
    return %c0_i32, %c0_i32_0 : i32, i32
  }
  func.func @transform_9(%arg0: i32) -> (i32, i32) {
    %c0_i32 = arith.constant 0 : i32
    %c0_i32_0 = arith.constant 0 : i32
    %c0_i32_1 = arith.constant 0 : i32
    return %c0_i32, %c0_i32_0 : i32, i32
  }
  func.func @transform_10(%arg0: i32) -> (i32, i32) {
    %c0_i32 = arith.constant 0 : i32
    %c0_i32_0 = arith.constant 0 : i32
    %c0_i32_1 = arith.constant 0 : i32
    return %c0_i32, %c0_i32_0 : i32, i32
  }
  func.func @transform_11(%arg0: i32) -> (i32, i32) {
    %c0_i32 = arith.constant 0 : i32
    %c0_i32_0 = arith.constant 0 : i32
    %c0_i32_1 = arith.constant 0 : i32
    return %c0_i32, %c0_i32_0 : i32, i32
  }
  func.func @transform_12(%arg0: i32) -> (i32, i32) {
    %c0_i32 = arith.constant 0 : i32
    %c0_i32_0 = arith.constant 0 : i32
    %c0_i32_1 = arith.constant 0 : i32
    return %c0_i32, %c0_i32_0 : i32, i32
  }
  func.func @transform_13(%arg0: i32) -> (i32, i32, i32) {
    %c0_i32 = arith.constant 0 : i32
    %c0_i32_0 = arith.constant 0 : i32
    %c0_i32_1 = arith.constant 0 : i32
    return %arg0, %c0_i32, %c0_i32_0 : i32, i32, i32
  }
}

module attributes {stable_mosaic.version = 11 : i64} {
  func.func @_encoder_layer_kernel(%arg0: i32, %arg1: memref<1x6x32xf32, #tpu.memory_space<vmem>>, %arg2: memref<32x96xbf16, #tpu.memory_space<vmem>>, %arg3: memref<1x96xf32, #tpu.memory_space<vmem>>, %arg4: memref<32x32xf32, #tpu.memory_space<vmem>>, %arg5: memref<1x32xf32, #tpu.memory_space<vmem>>, %arg6: memref<1x32xf32, #tpu.memory_space<vmem>>, %arg7: memref<1x32xf32, #tpu.memory_space<vmem>>, %arg8: memref<32x64xbf16, #tpu.memory_space<vmem>>, %arg9: memref<1x64xf32, #tpu.memory_space<vmem>>, %arg10: memref<64x32xbf16, #tpu.memory_space<vmem>>, %arg11: memref<1x32xf32, #tpu.memory_space<vmem>>, %arg12: memref<1x32xf32, #tpu.memory_space<vmem>>, %arg13: memref<1x32xf32, #tpu.memory_space<vmem>>, %arg14: memref<1x32xf32, #tpu.memory_space<vmem>>, %arg15: memref<1x32xf32, #tpu.memory_space<vmem>>, %arg16: memref<1x6x32xf32, #tpu.memory_space<vmem>>) attributes {dimension_semantics = [#tpu.dimension_semantics<parallel>], iteration_bounds = array<i64: 2>, scalar_prefetch = 0 : i64, scratch_operands = 0 : i64, tpu.core_type = #tpu.core_type<tc>, window_params = [{transform_indices = @transform_0, window_bounds = array<i64: 1, 6, 32>}, {pipeline_mode = #tpu.pipeline_mode<synchronous>, transform_indices = @transform_1, window_bounds = array<i64: 32, 96>}, {pipeline_mode = #tpu.pipeline_mode<synchronous>, transform_indices = @transform_2, window_bounds = array<i64: 1, 96>}, {pipeline_mode = #tpu.pipeline_mode<synchronous>, transform_indices = @transform_3, window_bounds = array<i64: 32, 32>}, {pipeline_mode = #tpu.pipeline_mode<synchronous>, transform_indices = @transform_4, window_bounds = array<i64: 1, 32>}, {pipeline_mode = #tpu.pipeline_mode<synchronous>, transform_indices = @transform_5, window_bounds = array<i64: 1, 32>}, {pipeline_mode = #tpu.pipeline_mode<synchronous>, transform_indices = @transform_6, window_bounds = array<i64: 1, 32>}, {pipeline_mode = #tpu.pipeline_mode<synchronous>, transform_indices = @transform_7, window_bounds = array<i64: 32, 64>}, {pipeline_mode = #tpu.pipeline_mode<synchronous>, transform_indices = @transform_8, window_bounds = array<i64: 1, 64>}, {pipeline_mode = #tpu.pipeline_mode<synchronous>, transform_indices = @transform_9, window_bounds = array<i64: 64, 32>}, {pipeline_mode = #tpu.pipeline_mode<synchronous>, transform_indices = @transform_10, window_bounds = array<i64: 1, 32>}, {pipeline_mode = #tpu.pipeline_mode<synchronous>, transform_indices = @transform_11, window_bounds = array<i64: 1, 32>}, {pipeline_mode = #tpu.pipeline_mode<synchronous>, transform_indices = @transform_12, window_bounds = array<i64: 1, 32>}, {pipeline_mode = #tpu.pipeline_mode<synchronous>, transform_indices = @transform_13, window_bounds = array<i64: 1, 32>}, {pipeline_mode = #tpu.pipeline_mode<synchronous>, transform_indices = @transform_14, window_bounds = array<i64: 1, 32>}, {transform_indices = @transform_15, window_bounds = array<i64: 1, 6, 32>}]} {
    %c0 = arith.constant 0 : index
    %c0_0 = arith.constant 0 : index
    %c0_1 = arith.constant 0 : index
    %0 = vector.load %arg1[%c0, %c0_0, %c0_1] : memref<1x6x32xf32, #tpu.memory_space<vmem>>, vector<1x6x32xf32>
    %1 = vector.shape_cast %0 : vector<1x6x32xf32> to vector<6x32xf32>
    %c0_2 = arith.constant 0 : index
    %c0_3 = arith.constant 0 : index
    %2 = vector.load %arg2[%c0_2, %c0_3] : memref<32x96xbf16, #tpu.memory_space<vmem>>, vector<32x96xbf16>
    %3 = arith.truncf %1 : vector<6x32xf32> to vector<6x32xbf16>
    %cst = arith.constant dense<0.000000e+00> : vector<6x96xf32>
    %4 = tpu.matmul %3, %2, %cst {dimension_numbers = #tpu.dot_dimension_numbers<[1], [0], [0], [1], [0, 0, 1, 1], [], []>} : vector<6x32xbf16>, vector<32x96xbf16>, vector<6x96xf32> -> vector<6x96xf32>
    %c0_4 = arith.constant 0 : index
    %c0_5 = arith.constant 0 : index
    %5 = vector.load %arg3[%c0_4, %c0_5] : memref<1x96xf32, #tpu.memory_space<vmem>>, vector<1x96xf32>
    %6 = vector.broadcast %5 : vector<1x96xf32> to vector<6x96xf32>
    %7 = arith.addf %4, %6 : vector<6x96xf32>
    %8 = vector.extract_strided_slice %7 {offsets = [0, 0], sizes = [6, 32], strides = [1, 1]} : vector<6x96xf32> to vector<6x32xf32>
    %9 = vector.extract_strided_slice %7 {offsets = [0, 32], sizes = [6, 32], strides = [1, 1]} : vector<6x96xf32> to vector<6x32xf32>
    %10 = vector.extract_strided_slice %7 {offsets = [0, 64], sizes = [6, 32], strides = [1, 1]} : vector<6x96xf32> to vector<6x32xf32>
    %c0_6 = arith.constant 0 : index
    %c0_7 = arith.constant 0 : index
    %11 = vector.load %arg4[%c0_6, %c0_7] : memref<32x32xf32, #tpu.memory_space<vmem>>, vector<32x32xf32>
    %12 = vector.extract_strided_slice %8 {offsets = [0, 0], sizes = [6, 8], strides = [1, 1]} : vector<6x32xf32> to vector<6x8xf32>
    %13 = arith.truncf %12 : vector<6x8xf32> to vector<6x8xbf16>
    %14 = vector.extract_strided_slice %9 {offsets = [0, 0], sizes = [6, 8], strides = [1, 1]} : vector<6x32xf32> to vector<6x8xf32>
    %15 = arith.truncf %14 : vector<6x8xf32> to vector<6x8xbf16>
    %cst_8 = arith.constant dense<0.000000e+00> : vector<6x6xf32>
    %16 = tpu.matmul %13, %15, %cst_8 {dimension_numbers = #tpu.dot_dimension_numbers<[1], [1], [0], [0], [0, 0, 1, 0], [], []>} : vector<6x8xbf16>, vector<6x8xbf16>, vector<6x6xf32> -> vector<6x6xf32>
    %cst_9 = arith.constant 0.353553385 : f32
    %17 = vector.broadcast %cst_9 : f32 to vector<6x6xf32>
    %18 = arith.mulf %16, %17 : vector<6x6xf32>
    %cst_10 = arith.constant dense<0xFF800000> : vector<6xf32>
    %19 = vector.multi_reduction <maximumf>, %18, %cst_10 [1] : vector<6x6xf32> to vector<6xf32>
    %20 = vector.shape_cast %19 : vector<6xf32> to vector<6x1xf32>
    %21 = vector.broadcast %20 : vector<6x1xf32> to vector<6x6xf32>
    %22 = arith.subf %18, %21 : vector<6x6xf32>
    %23 = math.exp %22 : vector<6x6xf32>
    %cst_11 = arith.constant dense<0.000000e+00> : vector<6xf32>
    %24 = vector.multi_reduction <add>, %23, %cst_11 [1] : vector<6x6xf32> to vector<6xf32>
    %25 = vector.shape_cast %24 : vector<6xf32> to vector<6x1xf32>
    %26 = tpu.reciprocal %25 {approx = true} : vector<6x1xf32> -> vector<6x1xf32>
    %27 = vector.broadcast %26 : vector<6x1xf32> to vector<6x6xf32>
    %28 = arith.mulf %23, %27 : vector<6x6xf32>
    %29 = vector.extract_strided_slice %10 {offsets = [0, 0], sizes = [6, 8], strides = [1, 1]} : vector<6x32xf32> to vector<6x8xf32>
    %30 = arith.truncf %28 : vector<6x6xf32> to vector<6x6xbf16>
    %31 = arith.truncf %29 : vector<6x8xf32> to vector<6x8xbf16>
    %cst_12 = arith.constant dense<0.000000e+00> : vector<6x8xf32>
    %32 = tpu.matmul %30, %31, %cst_12 {dimension_numbers = #tpu.dot_dimension_numbers<[1], [0], [0], [1], [0, 0, 1, 1], [], []>} : vector<6x6xbf16>, vector<6x8xbf16>, vector<6x8xf32> -> vector<6x8xf32>
    %33 = vector.extract_strided_slice %11 {offsets = [0, 0], sizes = [8, 32], strides = [1, 1]} : vector<32x32xf32> to vector<8x32xf32>
    %34 = arith.truncf %32 : vector<6x8xf32> to vector<6x8xbf16>
    %35 = arith.truncf %33 : vector<8x32xf32> to vector<8x32xbf16>
    %cst_13 = arith.constant dense<0.000000e+00> : vector<6x32xf32>
    %36 = tpu.matmul %34, %35, %cst_13 {dimension_numbers = #tpu.dot_dimension_numbers<[1], [0], [0], [1], [0, 0, 1, 1], [], []>} : vector<6x8xbf16>, vector<8x32xbf16>, vector<6x32xf32> -> vector<6x32xf32>
    %37 = vector.extract_strided_slice %8 {offsets = [0, 8], sizes = [6, 8], strides = [1, 1]} : vector<6x32xf32> to vector<6x8xf32>
    %38 = arith.truncf %37 : vector<6x8xf32> to vector<6x8xbf16>
    %39 = vector.extract_strided_slice %9 {offsets = [0, 8], sizes = [6, 8], strides = [1, 1]} : vector<6x32xf32> to vector<6x8xf32>
    %40 = arith.truncf %39 : vector<6x8xf32> to vector<6x8xbf16>
    %cst_14 = arith.constant dense<0.000000e+00> : vector<6x6xf32>
    %41 = tpu.matmul %38, %40, %cst_14 {dimension_numbers = #tpu.dot_dimension_numbers<[1], [1], [0], [0], [0, 0, 1, 0], [], []>} : vector<6x8xbf16>, vector<6x8xbf16>, vector<6x6xf32> -> vector<6x6xf32>
    %cst_15 = arith.constant 0.353553385 : f32
    %42 = vector.broadcast %cst_15 : f32 to vector<6x6xf32>
    %43 = arith.mulf %41, %42 : vector<6x6xf32>
    %cst_16 = arith.constant dense<0xFF800000> : vector<6xf32>
    %44 = vector.multi_reduction <maximumf>, %43, %cst_16 [1] : vector<6x6xf32> to vector<6xf32>
    %45 = vector.shape_cast %44 : vector<6xf32> to vector<6x1xf32>
    %46 = vector.broadcast %45 : vector<6x1xf32> to vector<6x6xf32>
    %47 = arith.subf %43, %46 : vector<6x6xf32>
    %48 = math.exp %47 : vector<6x6xf32>
    %cst_17 = arith.constant dense<0.000000e+00> : vector<6xf32>
    %49 = vector.multi_reduction <add>, %48, %cst_17 [1] : vector<6x6xf32> to vector<6xf32>
    %50 = vector.shape_cast %49 : vector<6xf32> to vector<6x1xf32>
    %51 = tpu.reciprocal %50 {approx = true} : vector<6x1xf32> -> vector<6x1xf32>
    %52 = vector.broadcast %51 : vector<6x1xf32> to vector<6x6xf32>
    %53 = arith.mulf %48, %52 : vector<6x6xf32>
    %54 = vector.extract_strided_slice %10 {offsets = [0, 8], sizes = [6, 8], strides = [1, 1]} : vector<6x32xf32> to vector<6x8xf32>
    %55 = arith.truncf %53 : vector<6x6xf32> to vector<6x6xbf16>
    %56 = arith.truncf %54 : vector<6x8xf32> to vector<6x8xbf16>
    %cst_18 = arith.constant dense<0.000000e+00> : vector<6x8xf32>
    %57 = tpu.matmul %55, %56, %cst_18 {dimension_numbers = #tpu.dot_dimension_numbers<[1], [0], [0], [1], [0, 0, 1, 1], [], []>} : vector<6x6xbf16>, vector<6x8xbf16>, vector<6x8xf32> -> vector<6x8xf32>
    %58 = vector.extract_strided_slice %11 {offsets = [8, 0], sizes = [8, 32], strides = [1, 1]} : vector<32x32xf32> to vector<8x32xf32>
    %59 = arith.truncf %57 : vector<6x8xf32> to vector<6x8xbf16>
    %60 = arith.truncf %58 : vector<8x32xf32> to vector<8x32xbf16>
    %cst_19 = arith.constant dense<0.000000e+00> : vector<6x32xf32>
    %61 = tpu.matmul %59, %60, %cst_19 {dimension_numbers = #tpu.dot_dimension_numbers<[1], [0], [0], [1], [0, 0, 1, 1], [], []>} : vector<6x8xbf16>, vector<8x32xbf16>, vector<6x32xf32> -> vector<6x32xf32>
    %62 = arith.addf %36, %61 : vector<6x32xf32>
    %63 = vector.extract_strided_slice %8 {offsets = [0, 16], sizes = [6, 8], strides = [1, 1]} : vector<6x32xf32> to vector<6x8xf32>
    %64 = arith.truncf %63 : vector<6x8xf32> to vector<6x8xbf16>
    %65 = vector.extract_strided_slice %9 {offsets = [0, 16], sizes = [6, 8], strides = [1, 1]} : vector<6x32xf32> to vector<6x8xf32>
    %66 = arith.truncf %65 : vector<6x8xf32> to vector<6x8xbf16>
    %cst_20 = arith.constant dense<0.000000e+00> : vector<6x6xf32>
    %67 = tpu.matmul %64, %66, %cst_20 {dimension_numbers = #tpu.dot_dimension_numbers<[1], [1], [0], [0], [0, 0, 1, 0], [], []>} : vector<6x8xbf16>, vector<6x8xbf16>, vector<6x6xf32> -> vector<6x6xf32>
    %cst_21 = arith.constant 0.353553385 : f32
    %68 = vector.broadcast %cst_21 : f32 to vector<6x6xf32>
    %69 = arith.mulf %67, %68 : vector<6x6xf32>
    %cst_22 = arith.constant dense<0xFF800000> : vector<6xf32>
    %70 = vector.multi_reduction <maximumf>, %69, %cst_22 [1] : vector<6x6xf32> to vector<6xf32>
    %71 = vector.shape_cast %70 : vector<6xf32> to vector<6x1xf32>
    %72 = vector.broadcast %71 : vector<6x1xf32> to vector<6x6xf32>
    %73 = arith.subf %69, %72 : vector<6x6xf32>
    %74 = math.exp %73 : vector<6x6xf32>
    %cst_23 = arith.constant dense<0.000000e+00> : vector<6xf32>
    %75 = vector.multi_reduction <add>, %74, %cst_23 [1] : vector<6x6xf32> to vector<6xf32>
    %76 = vector.shape_cast %75 : vector<6xf32> to vector<6x1xf32>
    %77 = tpu.reciprocal %76 {approx = true} : vector<6x1xf32> -> vector<6x1xf32>
    %78 = vector.broadcast %77 : vector<6x1xf32> to vector<6x6xf32>
    %79 = arith.mulf %74, %78 : vector<6x6xf32>
    %80 = vector.extract_strided_slice %10 {offsets = [0, 16], sizes = [6, 8], strides = [1, 1]} : vector<6x32xf32> to vector<6x8xf32>
    %81 = arith.truncf %79 : vector<6x6xf32> to vector<6x6xbf16>
    %82 = arith.truncf %80 : vector<6x8xf32> to vector<6x8xbf16>
    %cst_24 = arith.constant dense<0.000000e+00> : vector<6x8xf32>
    %83 = tpu.matmul %81, %82, %cst_24 {dimension_numbers = #tpu.dot_dimension_numbers<[1], [0], [0], [1], [0, 0, 1, 1], [], []>} : vector<6x6xbf16>, vector<6x8xbf16>, vector<6x8xf32> -> vector<6x8xf32>
    %84 = vector.extract_strided_slice %11 {offsets = [16, 0], sizes = [8, 32], strides = [1, 1]} : vector<32x32xf32> to vector<8x32xf32>
    %85 = arith.truncf %83 : vector<6x8xf32> to vector<6x8xbf16>
    %86 = arith.truncf %84 : vector<8x32xf32> to vector<8x32xbf16>
    %cst_25 = arith.constant dense<0.000000e+00> : vector<6x32xf32>
    %87 = tpu.matmul %85, %86, %cst_25 {dimension_numbers = #tpu.dot_dimension_numbers<[1], [0], [0], [1], [0, 0, 1, 1], [], []>} : vector<6x8xbf16>, vector<8x32xbf16>, vector<6x32xf32> -> vector<6x32xf32>
    %88 = arith.addf %62, %87 : vector<6x32xf32>
    %89 = vector.extract_strided_slice %8 {offsets = [0, 24], sizes = [6, 8], strides = [1, 1]} : vector<6x32xf32> to vector<6x8xf32>
    %90 = arith.truncf %89 : vector<6x8xf32> to vector<6x8xbf16>
    %91 = vector.extract_strided_slice %9 {offsets = [0, 24], sizes = [6, 8], strides = [1, 1]} : vector<6x32xf32> to vector<6x8xf32>
    %92 = arith.truncf %91 : vector<6x8xf32> to vector<6x8xbf16>
    %cst_26 = arith.constant dense<0.000000e+00> : vector<6x6xf32>
    %93 = tpu.matmul %90, %92, %cst_26 {dimension_numbers = #tpu.dot_dimension_numbers<[1], [1], [0], [0], [0, 0, 1, 0], [], []>} : vector<6x8xbf16>, vector<6x8xbf16>, vector<6x6xf32> -> vector<6x6xf32>
    %cst_27 = arith.constant 0.353553385 : f32
    %94 = vector.broadcast %cst_27 : f32 to vector<6x6xf32>
    %95 = arith.mulf %93, %94 : vector<6x6xf32>
    %cst_28 = arith.constant dense<0xFF800000> : vector<6xf32>
    %96 = vector.multi_reduction <maximumf>, %95, %cst_28 [1] : vector<6x6xf32> to vector<6xf32>
    %97 = vector.shape_cast %96 : vector<6xf32> to vector<6x1xf32>
    %98 = vector.broadcast %97 : vector<6x1xf32> to vector<6x6xf32>
    %99 = arith.subf %95, %98 : vector<6x6xf32>
    %100 = math.exp %99 : vector<6x6xf32>
    %cst_29 = arith.constant dense<0.000000e+00> : vector<6xf32>
    %101 = vector.multi_reduction <add>, %100, %cst_29 [1] : vector<6x6xf32> to vector<6xf32>
    %102 = vector.shape_cast %101 : vector<6xf32> to vector<6x1xf32>
    %103 = tpu.reciprocal %102 {approx = true} : vector<6x1xf32> -> vector<6x1xf32>
    %104 = vector.broadcast %103 : vector<6x1xf32> to vector<6x6xf32>
    %105 = arith.mulf %100, %104 : vector<6x6xf32>
    %106 = vector.extract_strided_slice %10 {offsets = [0, 24], sizes = [6, 8], strides = [1, 1]} : vector<6x32xf32> to vector<6x8xf32>
    %107 = arith.truncf %105 : vector<6x6xf32> to vector<6x6xbf16>
    %108 = arith.truncf %106 : vector<6x8xf32> to vector<6x8xbf16>
    %cst_30 = arith.constant dense<0.000000e+00> : vector<6x8xf32>
    %109 = tpu.matmul %107, %108, %cst_30 {dimension_numbers = #tpu.dot_dimension_numbers<[1], [0], [0], [1], [0, 0, 1, 1], [], []>} : vector<6x6xbf16>, vector<6x8xbf16>, vector<6x8xf32> -> vector<6x8xf32>
    %110 = vector.extract_strided_slice %11 {offsets = [24, 0], sizes = [8, 32], strides = [1, 1]} : vector<32x32xf32> to vector<8x32xf32>
    %111 = arith.truncf %109 : vector<6x8xf32> to vector<6x8xbf16>
    %112 = arith.truncf %110 : vector<8x32xf32> to vector<8x32xbf16>
    %cst_31 = arith.constant dense<0.000000e+00> : vector<6x32xf32>
    %113 = tpu.matmul %111, %112, %cst_31 {dimension_numbers = #tpu.dot_dimension_numbers<[1], [0], [0], [1], [0, 0, 1, 1], [], []>} : vector<6x8xbf16>, vector<8x32xbf16>, vector<6x32xf32> -> vector<6x32xf32>
    %114 = arith.addf %88, %113 : vector<6x32xf32>
    %c0_32 = arith.constant 0 : index
    %c0_33 = arith.constant 0 : index
    %115 = vector.load %arg5[%c0_32, %c0_33] : memref<1x32xf32, #tpu.memory_space<vmem>>, vector<1x32xf32>
    %116 = vector.broadcast %115 : vector<1x32xf32> to vector<6x32xf32>
    %117 = arith.addf %114, %116 : vector<6x32xf32>
    %118 = arith.addf %1, %117 : vector<6x32xf32>
    %c0_34 = arith.constant 0 : index
    %c0_35 = arith.constant 0 : index
    %119 = vector.load %arg6[%c0_34, %c0_35] : memref<1x32xf32, #tpu.memory_space<vmem>>, vector<1x32xf32>
    %c0_36 = arith.constant 0 : index
    %c0_37 = arith.constant 0 : index
    %120 = vector.load %arg7[%c0_36, %c0_37] : memref<1x32xf32, #tpu.memory_space<vmem>>, vector<1x32xf32>
    %cst_38 = arith.constant dense<0.000000e+00> : vector<6xf32>
    %121 = vector.multi_reduction <add>, %118, %cst_38 [1] : vector<6x32xf32> to vector<6xf32>
    %122 = vector.shape_cast %121 : vector<6xf32> to vector<6x1xf32>
    %cst_39 = arith.constant 3.200000e+01 : f32
    %123 = vector.broadcast %cst_39 : f32 to vector<6x1xf32>
    %124 = arith.divf %122, %123 : vector<6x1xf32>
    %125 = vector.broadcast %124 : vector<6x1xf32> to vector<6x32xf32>
    %126 = arith.subf %118, %125 : vector<6x32xf32>
    %127 = arith.mulf %126, %126 : vector<6x32xf32>
    %cst_40 = arith.constant dense<0.000000e+00> : vector<6xf32>
    %128 = vector.multi_reduction <add>, %127, %cst_40 [1] : vector<6x32xf32> to vector<6xf32>
    %129 = vector.shape_cast %128 : vector<6xf32> to vector<6x1xf32>
    %cst_41 = arith.constant 3.200000e+01 : f32
    %130 = vector.broadcast %cst_41 : f32 to vector<6x1xf32>
    %131 = arith.divf %129, %130 : vector<6x1xf32>
    %cst_42 = arith.constant 9.99999974E-6 : f32
    %132 = vector.broadcast %cst_42 : f32 to vector<6x1xf32>
    %133 = arith.addf %131, %132 : vector<6x1xf32>
    %134 = math.rsqrt %133 : vector<6x1xf32>
    %135 = vector.broadcast %134 : vector<6x1xf32> to vector<6x32xf32>
    %136 = arith.mulf %126, %135 : vector<6x32xf32>
    %137 = vector.broadcast %119 : vector<1x32xf32> to vector<6x32xf32>
    %138 = arith.mulf %136, %137 : vector<6x32xf32>
    %139 = vector.broadcast %120 : vector<1x32xf32> to vector<6x32xf32>
    %140 = arith.addf %138, %139 : vector<6x32xf32>
    %c0_43 = arith.constant 0 : index
    %c0_44 = arith.constant 0 : index
    %141 = vector.load %arg8[%c0_43, %c0_44] : memref<32x64xbf16, #tpu.memory_space<vmem>>, vector<32x64xbf16>
    %142 = arith.truncf %140 : vector<6x32xf32> to vector<6x32xbf16>
    %cst_45 = arith.constant dense<0.000000e+00> : vector<6x64xf32>
    %143 = tpu.matmul %142, %141, %cst_45 {dimension_numbers = #tpu.dot_dimension_numbers<[1], [0], [0], [1], [0, 0, 1, 1], [], []>} : vector<6x32xbf16>, vector<32x64xbf16>, vector<6x64xf32> -> vector<6x64xf32>
    %c0_46 = arith.constant 0 : index
    %c0_47 = arith.constant 0 : index
    %144 = vector.load %arg9[%c0_46, %c0_47] : memref<1x64xf32, #tpu.memory_space<vmem>>, vector<1x64xf32>
    %145 = vector.broadcast %144 : vector<1x64xf32> to vector<6x64xf32>
    %146 = arith.addf %143, %145 : vector<6x64xf32>
    %cst_48 = arith.constant 0.000000e+00 : f32
    %147 = vector.broadcast %cst_48 : f32 to vector<6x64xf32>
    %148 = arith.maximumf %146, %147 : vector<6x64xf32>
    %c0_49 = arith.constant 0 : index
    %c0_50 = arith.constant 0 : index
    %149 = vector.load %arg10[%c0_49, %c0_50] : memref<64x32xbf16, #tpu.memory_space<vmem>>, vector<64x32xbf16>
    %150 = arith.truncf %148 : vector<6x64xf32> to vector<6x64xbf16>
    %cst_51 = arith.constant dense<0.000000e+00> : vector<6x32xf32>
    %151 = tpu.matmul %150, %149, %cst_51 {dimension_numbers = #tpu.dot_dimension_numbers<[1], [0], [0], [1], [0, 0, 1, 1], [], []>} : vector<6x64xbf16>, vector<64x32xbf16>, vector<6x32xf32> -> vector<6x32xf32>
    %c0_52 = arith.constant 0 : index
    %c0_53 = arith.constant 0 : index
    %152 = vector.load %arg11[%c0_52, %c0_53] : memref<1x32xf32, #tpu.memory_space<vmem>>, vector<1x32xf32>
    %153 = vector.broadcast %152 : vector<1x32xf32> to vector<6x32xf32>
    %154 = arith.addf %151, %153 : vector<6x32xf32>
    %155 = arith.addf %140, %154 : vector<6x32xf32>
    %c0_54 = arith.constant 0 : index
    %c0_55 = arith.constant 0 : index
    %156 = vector.load %arg12[%c0_54, %c0_55] : memref<1x32xf32, #tpu.memory_space<vmem>>, vector<1x32xf32>
    %c0_56 = arith.constant 0 : index
    %c0_57 = arith.constant 0 : index
    %157 = vector.load %arg13[%c0_56, %c0_57] : memref<1x32xf32, #tpu.memory_space<vmem>>, vector<1x32xf32>
    %cst_58 = arith.constant dense<0.000000e+00> : vector<6xf32>
    %158 = vector.multi_reduction <add>, %155, %cst_58 [1] : vector<6x32xf32> to vector<6xf32>
    %159 = vector.shape_cast %158 : vector<6xf32> to vector<6x1xf32>
    %cst_59 = arith.constant 3.200000e+01 : f32
    %160 = vector.broadcast %cst_59 : f32 to vector<6x1xf32>
    %161 = arith.divf %159, %160 : vector<6x1xf32>
    %162 = vector.broadcast %161 : vector<6x1xf32> to vector<6x32xf32>
    %163 = arith.subf %155, %162 : vector<6x32xf32>
    %164 = arith.mulf %163, %163 : vector<6x32xf32>
    %cst_60 = arith.constant dense<0.000000e+00> : vector<6xf32>
    %165 = vector.multi_reduction <add>, %164, %cst_60 [1] : vector<6x32xf32> to vector<6xf32>
    %166 = vector.shape_cast %165 : vector<6xf32> to vector<6x1xf32>
    %cst_61 = arith.constant 3.200000e+01 : f32
    %167 = vector.broadcast %cst_61 : f32 to vector<6x1xf32>
    %168 = arith.divf %166, %167 : vector<6x1xf32>
    %cst_62 = arith.constant 9.99999974E-6 : f32
    %169 = vector.broadcast %cst_62 : f32 to vector<6x1xf32>
    %170 = arith.addf %168, %169 : vector<6x1xf32>
    %171 = math.rsqrt %170 : vector<6x1xf32>
    %172 = vector.broadcast %171 : vector<6x1xf32> to vector<6x32xf32>
    %173 = arith.mulf %163, %172 : vector<6x32xf32>
    %174 = vector.broadcast %156 : vector<1x32xf32> to vector<6x32xf32>
    %175 = arith.mulf %173, %174 : vector<6x32xf32>
    %176 = vector.broadcast %157 : vector<1x32xf32> to vector<6x32xf32>
    %177 = arith.addf %175, %176 : vector<6x32xf32>
    %c0_63 = arith.constant 0 : index
    %c0_64 = arith.constant 0 : index
    %178 = vector.load %arg14[%c0_63, %c0_64] : memref<1x32xf32, #tpu.memory_space<vmem>>, vector<1x32xf32>
    %c0_65 = arith.constant 0 : index
    %c0_66 = arith.constant 0 : index
    %179 = vector.load %arg15[%c0_65, %c0_66] : memref<1x32xf32, #tpu.memory_space<vmem>>, vector<1x32xf32>
    %cst_67 = arith.constant dense<0.000000e+00> : vector<6xf32>
    %180 = vector.multi_reduction <add>, %177, %cst_67 [1] : vector<6x32xf32> to vector<6xf32>
    %181 = vector.shape_cast %180 : vector<6xf32> to vector<6x1xf32>
    %cst_68 = arith.constant 3.200000e+01 : f32
    %182 = vector.broadcast %cst_68 : f32 to vector<6x1xf32>
    %183 = arith.divf %181, %182 : vector<6x1xf32>
    %184 = vector.broadcast %183 : vector<6x1xf32> to vector<6x32xf32>
    %185 = arith.subf %177, %184 : vector<6x32xf32>
    %186 = arith.mulf %185, %185 : vector<6x32xf32>
    %cst_69 = arith.constant dense<0.000000e+00> : vector<6xf32>
    %187 = vector.multi_reduction <add>, %186, %cst_69 [1] : vector<6x32xf32> to vector<6xf32>
    %188 = vector.shape_cast %187 : vector<6xf32> to vector<6x1xf32>
    %cst_70 = arith.constant 3.200000e+01 : f32
    %189 = vector.broadcast %cst_70 : f32 to vector<6x1xf32>
    %190 = arith.divf %188, %189 : vector<6x1xf32>
    %cst_71 = arith.constant 9.99999974E-6 : f32
    %191 = vector.broadcast %cst_71 : f32 to vector<6x1xf32>
    %192 = arith.addf %190, %191 : vector<6x1xf32>
    %193 = math.rsqrt %192 : vector<6x1xf32>
    %194 = vector.broadcast %193 : vector<6x1xf32> to vector<6x32xf32>
    %195 = arith.mulf %185, %194 : vector<6x32xf32>
    %196 = vector.broadcast %178 : vector<1x32xf32> to vector<6x32xf32>
    %197 = arith.mulf %195, %196 : vector<6x32xf32>
    %198 = vector.broadcast %179 : vector<1x32xf32> to vector<6x32xf32>
    %199 = arith.addf %197, %198 : vector<6x32xf32>
    %c0_72 = arith.constant 0 : index
    %c0_73 = arith.constant 0 : index
    %c0_74 = arith.constant 0 : index
    %200 = vector.load %arg16[%c0_72, %c0_73, %c0_74] : memref<1x6x32xf32, #tpu.memory_space<vmem>>, vector<1x6x32xf32>
    %201 = vector.shape_cast %200 : vector<1x6x32xf32> to vector<6x32xf32>
    %202 = vector.shape_cast %199 : vector<6x32xf32> to vector<1x6x32xf32>
    tpu.vector_store %arg16[%c0_72, %c0_73, %c0_74], %202 {strides = array<i32>} : memref<1x6x32xf32, #tpu.memory_space<vmem>>, vector<1x6x32xf32>,
    return
  }
  func.func @transform_0(%arg0: i32) -> (i32, i32, i32) {
    %c0_i32 = arith.constant 0 : i32
    %c0_i32_0 = arith.constant 0 : i32
    %c0_i32_1 = arith.constant 0 : i32
    return %arg0, %c0_i32, %c0_i32_0 : i32, i32, i32
  }
  func.func @transform_1(%arg0: i32) -> (i32, i32) {
    %c0_i32 = arith.constant 0 : i32
    %c0_i32_0 = arith.constant 0 : i32
    %c0_i32_1 = arith.constant 0 : i32
    return %c0_i32, %c0_i32_0 : i32, i32
  }
  func.func @transform_2(%arg0: i32) -> (i32, i32) {
    %c0_i32 = arith.constant 0 : i32
    %c0_i32_0 = arith.constant 0 : i32
    %c0_i32_1 = arith.constant 0 : i32
    return %c0_i32, %c0_i32_0 : i32, i32
  }
  func.func @transform_3(%arg0: i32) -> (i32, i32) {
    %c0_i32 = arith.constant 0 : i32
    %c0_i32_0 = arith.constant 0 : i32
    %c0_i32_1 = arith.constant 0 : i32
    return %c0_i32, %c0_i32_0 : i32, i32
  }
  func.func @transform_4(%arg0: i32) -> (i32, i32) {
    %c0_i32 = arith.constant 0 : i32
    %c0_i32_0 = arith.constant 0 : i32
    %c0_i32_1 = arith.constant 0 : i32
    return %c0_i32, %c0_i32_0 : i32, i32
  }
  func.func @transform_5(%arg0: i32) -> (i32, i32) {
    %c0_i32 = arith.constant 0 : i32
    %c0_i32_0 = arith.constant 0 : i32
    %c0_i32_1 = arith.constant 0 : i32
    return %c0_i32, %c0_i32_0 : i32, i32
  }
  func.func @transform_6(%arg0: i32) -> (i32, i32) {
    %c0_i32 = arith.constant 0 : i32
    %c0_i32_0 = arith.constant 0 : i32
    %c0_i32_1 = arith.constant 0 : i32
    return %c0_i32, %c0_i32_0 : i32, i32
  }
  func.func @transform_7(%arg0: i32) -> (i32, i32) {
    %c0_i32 = arith.constant 0 : i32
    %c0_i32_0 = arith.constant 0 : i32
    %c0_i32_1 = arith.constant 0 : i32
    return %c0_i32, %c0_i32_0 : i32, i32
  }
  func.func @transform_8(%arg0: i32) -> (i32, i32) {
    %c0_i32 = arith.constant 0 : i32
    %c0_i32_0 = arith.constant 0 : i32
    %c0_i32_1 = arith.constant 0 : i32
    return %c0_i32, %c0_i32_0 : i32, i32
  }
  func.func @transform_9(%arg0: i32) -> (i32, i32) {
    %c0_i32 = arith.constant 0 : i32
    %c0_i32_0 = arith.constant 0 : i32
    %c0_i32_1 = arith.constant 0 : i32
    return %c0_i32, %c0_i32_0 : i32, i32
  }
  func.func @transform_10(%arg0: i32) -> (i32, i32) {
    %c0_i32 = arith.constant 0 : i32
    %c0_i32_0 = arith.constant 0 : i32
    %c0_i32_1 = arith.constant 0 : i32
    return %c0_i32, %c0_i32_0 : i32, i32
  }
  func.func @transform_11(%arg0: i32) -> (i32, i32) {
    %c0_i32 = arith.constant 0 : i32
    %c0_i32_0 = arith.constant 0 : i32
    %c0_i32_1 = arith.constant 0 : i32
    return %c0_i32, %c0_i32_0 : i32, i32
  }
  func.func @transform_12(%arg0: i32) -> (i32, i32) {
    %c0_i32 = arith.constant 0 : i32
    %c0_i32_0 = arith.constant 0 : i32
    %c0_i32_1 = arith.constant 0 : i32
    return %c0_i32, %c0_i32_0 : i32, i32
  }
  func.func @transform_13(%arg0: i32) -> (i32, i32) {
    %c0_i32 = arith.constant 0 : i32
    %c0_i32_0 = arith.constant 0 : i32
    %c0_i32_1 = arith.constant 0 : i32
    return %c0_i32, %c0_i32_0 : i32, i32
  }
  func.func @transform_14(%arg0: i32) -> (i32, i32) {
    %c0_i32 = arith.constant 0 : i32
    %c0_i32_0 = arith.constant 0 : i32
    %c0_i32_1 = arith.constant 0 : i32
    return %c0_i32, %c0_i32_0 : i32, i32
  }
  func.func @transform_15(%arg0: i32) -> (i32, i32, i32) {
    %c0_i32 = arith.constant 0 : i32
    %c0_i32_0 = arith.constant 0 : i32
    %c0_i32_1 = arith.constant 0 : i32
    return %arg0, %c0_i32, %c0_i32_0 : i32, i32, i32
  }
}

module attributes {stable_mosaic.version = 11 : i64} {
  func.func @_final_head_kernel(%arg0: i32, %arg1: memref<1x12x32xf32, #tpu.memory_space<vmem>>, %arg2: memref<1x32xf32, #tpu.memory_space<vmem>>, %arg3: memref<1x32xf32, #tpu.memory_space<vmem>>, %arg4: memref<32x4xbf16, #tpu.memory_space<vmem>>, %arg5: memref<1x4xf32, #tpu.memory_space<vmem>>, %arg6: memref<1x12x4xf32, #tpu.memory_space<vmem>>) attributes {dimension_semantics = [#tpu.dimension_semantics<parallel>], iteration_bounds = array<i64: 2>, scalar_prefetch = 0 : i64, scratch_operands = 0 : i64, tpu.core_type = #tpu.core_type<tc>, window_params = [{transform_indices = @transform_0, window_bounds = array<i64: 1, 12, 32>}, {pipeline_mode = #tpu.pipeline_mode<synchronous>, transform_indices = @transform_1, window_bounds = array<i64: 1, 32>}, {pipeline_mode = #tpu.pipeline_mode<synchronous>, transform_indices = @transform_2, window_bounds = array<i64: 1, 32>}, {pipeline_mode = #tpu.pipeline_mode<synchronous>, transform_indices = @transform_3, window_bounds = array<i64: 32, 4>}, {pipeline_mode = #tpu.pipeline_mode<synchronous>, transform_indices = @transform_4, window_bounds = array<i64: 1, 4>}, {transform_indices = @transform_5, window_bounds = array<i64: 1, 12, 4>}]} {
    %c0 = arith.constant 0 : index
    %c0_0 = arith.constant 0 : index
    %c0_1 = arith.constant 0 : index
    %0 = vector.load %arg1[%c0, %c0_0, %c0_1] : memref<1x12x32xf32, #tpu.memory_space<vmem>>, vector<1x12x32xf32>
    %1 = vector.shape_cast %0 : vector<1x12x32xf32> to vector<12x32xf32>
    %c0_2 = arith.constant 0 : index
    %c0_3 = arith.constant 0 : index
    %2 = vector.load %arg2[%c0_2, %c0_3] : memref<1x32xf32, #tpu.memory_space<vmem>>, vector<1x32xf32>
    %c0_4 = arith.constant 0 : index
    %c0_5 = arith.constant 0 : index
    %3 = vector.load %arg3[%c0_4, %c0_5] : memref<1x32xf32, #tpu.memory_space<vmem>>, vector<1x32xf32>
    %cst = arith.constant dense<0.000000e+00> : vector<12xf32>
    %4 = vector.multi_reduction <add>, %1, %cst [1] : vector<12x32xf32> to vector<12xf32>
    %5 = vector.shape_cast %4 : vector<12xf32> to vector<12x1xf32>
    %cst_6 = arith.constant 3.200000e+01 : f32
    %6 = vector.broadcast %cst_6 : f32 to vector<12x1xf32>
    %7 = arith.divf %5, %6 : vector<12x1xf32>
    %8 = vector.broadcast %7 : vector<12x1xf32> to vector<12x32xf32>
    %9 = arith.subf %1, %8 : vector<12x32xf32>
    %10 = arith.mulf %9, %9 : vector<12x32xf32>
    %cst_7 = arith.constant dense<0.000000e+00> : vector<12xf32>
    %11 = vector.multi_reduction <add>, %10, %cst_7 [1] : vector<12x32xf32> to vector<12xf32>
    %12 = vector.shape_cast %11 : vector<12xf32> to vector<12x1xf32>
    %cst_8 = arith.constant 3.200000e+01 : f32
    %13 = vector.broadcast %cst_8 : f32 to vector<12x1xf32>
    %14 = arith.divf %12, %13 : vector<12x1xf32>
    %cst_9 = arith.constant 9.99999974E-6 : f32
    %15 = vector.broadcast %cst_9 : f32 to vector<12x1xf32>
    %16 = arith.addf %14, %15 : vector<12x1xf32>
    %17 = math.rsqrt %16 : vector<12x1xf32>
    %18 = vector.broadcast %17 : vector<12x1xf32> to vector<12x32xf32>
    %19 = arith.mulf %9, %18 : vector<12x32xf32>
    %20 = vector.broadcast %2 : vector<1x32xf32> to vector<12x32xf32>
    %21 = arith.mulf %19, %20 : vector<12x32xf32>
    %22 = vector.broadcast %3 : vector<1x32xf32> to vector<12x32xf32>
    %23 = arith.addf %21, %22 : vector<12x32xf32>
    %c0_10 = arith.constant 0 : index
    %c0_11 = arith.constant 0 : index
    %24 = vector.load %arg4[%c0_10, %c0_11] : memref<32x4xbf16, #tpu.memory_space<vmem>>, vector<32x4xbf16>
    %25 = arith.truncf %23 : vector<12x32xf32> to vector<12x32xbf16>
    %cst_12 = arith.constant dense<0.000000e+00> : vector<12x4xf32>
    %26 = tpu.matmul %25, %24, %cst_12 {dimension_numbers = #tpu.dot_dimension_numbers<[1], [0], [0], [1], [0, 0, 1, 1], [], []>} : vector<12x32xbf16>, vector<32x4xbf16>, vector<12x4xf32> -> vector<12x4xf32>
    %c0_13 = arith.constant 0 : index
    %c0_14 = arith.constant 0 : index
    %27 = vector.load %arg5[%c0_13, %c0_14] : memref<1x4xf32, #tpu.memory_space<vmem>>, vector<1x4xf32>
    %28 = vector.broadcast %27 : vector<1x4xf32> to vector<12x4xf32>
    %29 = arith.addf %26, %28 : vector<12x4xf32>
    %c0_15 = arith.constant 0 : index
    %c0_16 = arith.constant 0 : index
    %c0_17 = arith.constant 0 : index
    %30 = vector.load %arg6[%c0_15, %c0_16, %c0_17] : memref<1x12x4xf32, #tpu.memory_space<vmem>>, vector<1x12x4xf32>
    %31 = vector.shape_cast %30 : vector<1x12x4xf32> to vector<12x4xf32>
    %32 = vector.shape_cast %29 : vector<12x4xf32> to vector<1x12x4xf32>
    tpu.vector_store %arg6[%c0_15, %c0_16, %c0_17], %32 {strides = array<i32>} : memref<1x12x4xf32, #tpu.memory_space<vmem>>, vector<1x12x4xf32>,
    return
  }
  func.func @transform_0(%arg0: i32) -> (i32, i32, i32) {
    %c0_i32 = arith.constant 0 : i32
    %c0_i32_0 = arith.constant 0 : i32
    %c0_i32_1 = arith.constant 0 : i32
    return %arg0, %c0_i32, %c0_i32_0 : i32, i32, i32
  }
  func.func @transform_1(%arg0: i32) -> (i32, i32) {
    %c0_i32 = arith.constant 0 : i32
    %c0_i32_0 = arith.constant 0 : i32
    %c0_i32_1 = arith.constant 0 : i32
    return %c0_i32, %c0_i32_0 : i32, i32
  }
  func.func @transform_2(%arg0: i32) -> (i32, i32) {
    %c0_i32 = arith.constant 0 : i32
    %c0_i32_0 = arith.constant 0 : i32
    %c0_i32_1 = arith.constant 0 : i32
    return %c0_i32, %c0_i32_0 : i32, i32
  }
  func.func @transform_3(%arg0: i32) -> (i32, i32) {
    %c0_i32 = arith.constant 0 : i32
    %c0_i32_0 = arith.constant 0 : i32
    %c0_i32_1 = arith.constant 0 : i32
    return %c0_i32, %c0_i32_0 : i32, i32
  }
  func.func @transform_4(%arg0: i32) -> (i32, i32) {
    %c0_i32 = arith.constant 0 : i32
    %c0_i32_0 = arith.constant 0 : i32
    %c0_i32_1 = arith.constant 0 : i32
    return %c0_i32, %c0_i32_0 : i32, i32
  }
  func.func @transform_5(%arg0: i32) -> (i32, i32, i32) {
    %c0_i32 = arith.constant 0 : i32
    %c0_i32_0 = arith.constant 0 : i32
    %c0_i32_1 = arith.constant 0 : i32
    return %arg0, %c0_i32, %c0_i32_0 : i32, i32, i32
  }
}

module attributes {stable_mosaic.version = 11 : i64} {
  func.func @_decoder_layer_kernel(%arg0: i32, %arg1: memref<1x12x32xf32, #tpu.memory_space<vmem>>, %arg2: memref<1x6x32xf32, #tpu.memory_space<vmem>>, %arg3: memref<32x96xbf16, #tpu.memory_space<vmem>>, %arg4: memref<1x96xf32, #tpu.memory_space<vmem>>, %arg5: memref<32x32xf32, #tpu.memory_space<vmem>>, %arg6: memref<1x32xf32, #tpu.memory_space<vmem>>, %arg7: memref<32x32xbf16, #tpu.memory_space<vmem>>, %arg8: memref<1x32xf32, #tpu.memory_space<vmem>>, %arg9: memref<32x64xbf16, #tpu.memory_space<vmem>>, %arg10: memref<1x64xf32, #tpu.memory_space<vmem>>, %arg11: memref<32x32xf32, #tpu.memory_space<vmem>>, %arg12: memref<1x32xf32, #tpu.memory_space<vmem>>, %arg13: memref<1x32xf32, #tpu.memory_space<vmem>>, %arg14: memref<1x32xf32, #tpu.memory_space<vmem>>, %arg15: memref<1x32xf32, #tpu.memory_space<vmem>>, %arg16: memref<1x32xf32, #tpu.memory_space<vmem>>, %arg17: memref<32x64xbf16, #tpu.memory_space<vmem>>, %arg18: memref<1x64xf32, #tpu.memory_space<vmem>>, %arg19: memref<64x32xbf16, #tpu.memory_space<vmem>>, %arg20: memref<1x32xf32, #tpu.memory_space<vmem>>, %arg21: memref<1x32xf32, #tpu.memory_space<vmem>>, %arg22: memref<1x32xf32, #tpu.memory_space<vmem>>, %arg23: memref<1x12x32xf32, #tpu.memory_space<vmem>>) attributes {dimension_semantics = [#tpu.dimension_semantics<parallel>], iteration_bounds = array<i64: 2>, scalar_prefetch = 0 : i64, scratch_operands = 0 : i64, tpu.core_type = #tpu.core_type<tc>, window_params = [{transform_indices = @transform_0, window_bounds = array<i64: 1, 12, 32>}, {transform_indices = @transform_1, window_bounds = array<i64: 1, 6, 32>}, {pipeline_mode = #tpu.pipeline_mode<synchronous>, transform_indices = @transform_2, window_bounds = array<i64: 32, 96>}, {pipeline_mode = #tpu.pipeline_mode<synchronous>, transform_indices = @transform_3, window_bounds = array<i64: 1, 96>}, {pipeline_mode = #tpu.pipeline_mode<synchronous>, transform_indices = @transform_4, window_bounds = array<i64: 32, 32>}, {pipeline_mode = #tpu.pipeline_mode<synchronous>, transform_indices = @transform_5, window_bounds = array<i64: 1, 32>}, {pipeline_mode = #tpu.pipeline_mode<synchronous>, transform_indices = @transform_6, window_bounds = array<i64: 32, 32>}, {pipeline_mode = #tpu.pipeline_mode<synchronous>, transform_indices = @transform_7, window_bounds = array<i64: 1, 32>}, {pipeline_mode = #tpu.pipeline_mode<synchronous>, transform_indices = @transform_8, window_bounds = array<i64: 32, 64>}, {pipeline_mode = #tpu.pipeline_mode<synchronous>, transform_indices = @transform_9, window_bounds = array<i64: 1, 64>}, {pipeline_mode = #tpu.pipeline_mode<synchronous>, transform_indices = @transform_10, window_bounds = array<i64: 32, 32>}, {pipeline_mode = #tpu.pipeline_mode<synchronous>, transform_indices = @transform_11, window_bounds = array<i64: 1, 32>}, {pipeline_mode = #tpu.pipeline_mode<synchronous>, transform_indices = @transform_12, window_bounds = array<i64: 1, 32>}, {pipeline_mode = #tpu.pipeline_mode<synchronous>, transform_indices = @transform_13, window_bounds = array<i64: 1, 32>}, {pipeline_mode = #tpu.pipeline_mode<synchronous>, transform_indices = @transform_14, window_bounds = array<i64: 1, 32>}, {pipeline_mode = #tpu.pipeline_mode<synchronous>, transform_indices = @transform_15, window_bounds = array<i64: 1, 32>}, {pipeline_mode = #tpu.pipeline_mode<synchronous>, transform_indices = @transform_16, window_bounds = array<i64: 32, 64>}, {pipeline_mode = #tpu.pipeline_mode<synchronous>, transform_indices = @transform_17, window_bounds = array<i64: 1, 64>}, {pipeline_mode = #tpu.pipeline_mode<synchronous>, transform_indices = @transform_18, window_bounds = array<i64: 64, 32>}, {pipeline_mode = #tpu.pipeline_mode<synchronous>, transform_indices = @transform_19, window_bounds = array<i64: 1, 32>}, {pipeline_mode = #tpu.pipeline_mode<synchronous>, transform_indices = @transform_20, window_bounds = array<i64: 1, 32>}, {pipeline_mode = #tpu.pipeline_mode<synchronous>, transform_indices = @transform_21, window_bounds = array<i64: 1, 32>}, {transform_indices = @transform_22, window_bounds = array<i64: 1, 12, 32>}]} {
    %c0 = arith.constant 0 : index
    %c0_0 = arith.constant 0 : index
    %c0_1 = arith.constant 0 : index
    %0 = vector.load %arg1[%c0, %c0_0, %c0_1] : memref<1x12x32xf32, #tpu.memory_space<vmem>>, vector<1x12x32xf32>
    %1 = vector.shape_cast %0 : vector<1x12x32xf32> to vector<12x32xf32>
    %c0_2 = arith.constant 0 : index
    %c0_3 = arith.constant 0 : index
    %c0_4 = arith.constant 0 : index
    %2 = vector.load %arg2[%c0_2, %c0_3, %c0_4] : memref<1x6x32xf32, #tpu.memory_space<vmem>>, vector<1x6x32xf32>
    %3 = vector.shape_cast %2 : vector<1x6x32xf32> to vector<6x32xf32>
    %c0_5 = arith.constant 0 : index
    %c0_6 = arith.constant 0 : index
    %4 = vector.load %arg3[%c0_5, %c0_6] : memref<32x96xbf16, #tpu.memory_space<vmem>>, vector<32x96xbf16>
    %5 = arith.truncf %1 : vector<12x32xf32> to vector<12x32xbf16>
    %cst = arith.constant dense<0.000000e+00> : vector<12x96xf32>
    %6 = tpu.matmul %5, %4, %cst {dimension_numbers = #tpu.dot_dimension_numbers<[1], [0], [0], [1], [0, 0, 1, 1], [], []>} : vector<12x32xbf16>, vector<32x96xbf16>, vector<12x96xf32> -> vector<12x96xf32>
    %c0_7 = arith.constant 0 : index
    %c0_8 = arith.constant 0 : index
    %7 = vector.load %arg4[%c0_7, %c0_8] : memref<1x96xf32, #tpu.memory_space<vmem>>, vector<1x96xf32>
    %8 = vector.broadcast %7 : vector<1x96xf32> to vector<12x96xf32>
    %9 = arith.addf %6, %8 : vector<12x96xf32>
    %10 = vector.extract_strided_slice %9 {offsets = [0, 0], sizes = [12, 32], strides = [1, 1]} : vector<12x96xf32> to vector<12x32xf32>
    %11 = vector.extract_strided_slice %9 {offsets = [0, 32], sizes = [12, 32], strides = [1, 1]} : vector<12x96xf32> to vector<12x32xf32>
    %12 = vector.extract_strided_slice %9 {offsets = [0, 64], sizes = [12, 32], strides = [1, 1]} : vector<12x96xf32> to vector<12x32xf32>
    %c0_9 = arith.constant 0 : index
    %c0_10 = arith.constant 0 : index
    %13 = vector.load %arg5[%c0_9, %c0_10] : memref<32x32xf32, #tpu.memory_space<vmem>>, vector<32x32xf32>
    %14 = tpu.iota {dimensions = array<i32: 0>} : vector<12x12xi32>
    %15 = tpu.iota {dimensions = array<i32: 1>} : vector<12x12xi32>
    %16 = arith.cmpi sgt, %15, %14 : vector<12x12xi32>
    %17 = vector.extract_strided_slice %10 {offsets = [0, 0], sizes = [12, 8], strides = [1, 1]} : vector<12x32xf32> to vector<12x8xf32>
    %18 = arith.truncf %17 : vector<12x8xf32> to vector<12x8xbf16>
    %19 = vector.extract_strided_slice %11 {offsets = [0, 0], sizes = [12, 8], strides = [1, 1]} : vector<12x32xf32> to vector<12x8xf32>
    %20 = arith.truncf %19 : vector<12x8xf32> to vector<12x8xbf16>
    %cst_11 = arith.constant dense<0.000000e+00> : vector<12x12xf32>
    %21 = tpu.matmul %18, %20, %cst_11 {dimension_numbers = #tpu.dot_dimension_numbers<[1], [1], [0], [0], [0, 0, 1, 0], [], []>} : vector<12x8xbf16>, vector<12x8xbf16>, vector<12x12xf32> -> vector<12x12xf32>
    %cst_12 = arith.constant 0.353553385 : f32
    %22 = vector.broadcast %cst_12 : f32 to vector<12x12xf32>
    %23 = arith.mulf %21, %22 : vector<12x12xf32>
    %cst_13 = arith.constant -1.000000e+30 : f32
    %24 = vector.broadcast %cst_13 : f32 to vector<12x12xf32>
    %25 = arith.select %16, %24, %23 : vector<12x12xi1>, vector<12x12xf32>
    %cst_14 = arith.constant dense<0xFF800000> : vector<12xf32>
    %26 = vector.multi_reduction <maximumf>, %25, %cst_14 [1] : vector<12x12xf32> to vector<12xf32>
    %27 = vector.shape_cast %26 : vector<12xf32> to vector<12x1xf32>
    %28 = vector.broadcast %27 : vector<12x1xf32> to vector<12x12xf32>
    %29 = arith.subf %25, %28 : vector<12x12xf32>
    %30 = math.exp %29 : vector<12x12xf32>
    %cst_15 = arith.constant dense<0.000000e+00> : vector<12xf32>
    %31 = vector.multi_reduction <add>, %30, %cst_15 [1] : vector<12x12xf32> to vector<12xf32>
    %32 = vector.shape_cast %31 : vector<12xf32> to vector<12x1xf32>
    %33 = tpu.reciprocal %32 {approx = true} : vector<12x1xf32> -> vector<12x1xf32>
    %34 = vector.broadcast %33 : vector<12x1xf32> to vector<12x12xf32>
    %35 = arith.mulf %30, %34 : vector<12x12xf32>
    %36 = vector.extract_strided_slice %12 {offsets = [0, 0], sizes = [12, 8], strides = [1, 1]} : vector<12x32xf32> to vector<12x8xf32>
    %37 = arith.truncf %35 : vector<12x12xf32> to vector<12x12xbf16>
    %38 = arith.truncf %36 : vector<12x8xf32> to vector<12x8xbf16>
    %cst_16 = arith.constant dense<0.000000e+00> : vector<12x8xf32>
    %39 = tpu.matmul %37, %38, %cst_16 {dimension_numbers = #tpu.dot_dimension_numbers<[1], [0], [0], [1], [0, 0, 1, 1], [], []>} : vector<12x12xbf16>, vector<12x8xbf16>, vector<12x8xf32> -> vector<12x8xf32>
    %40 = vector.extract_strided_slice %13 {offsets = [0, 0], sizes = [8, 32], strides = [1, 1]} : vector<32x32xf32> to vector<8x32xf32>
    %41 = arith.truncf %39 : vector<12x8xf32> to vector<12x8xbf16>
    %42 = arith.truncf %40 : vector<8x32xf32> to vector<8x32xbf16>
    %cst_17 = arith.constant dense<0.000000e+00> : vector<12x32xf32>
    %43 = tpu.matmul %41, %42, %cst_17 {dimension_numbers = #tpu.dot_dimension_numbers<[1], [0], [0], [1], [0, 0, 1, 1], [], []>} : vector<12x8xbf16>, vector<8x32xbf16>, vector<12x32xf32> -> vector<12x32xf32>
    %44 = vector.extract_strided_slice %10 {offsets = [0, 8], sizes = [12, 8], strides = [1, 1]} : vector<12x32xf32> to vector<12x8xf32>
    %45 = arith.truncf %44 : vector<12x8xf32> to vector<12x8xbf16>
    %46 = vector.extract_strided_slice %11 {offsets = [0, 8], sizes = [12, 8], strides = [1, 1]} : vector<12x32xf32> to vector<12x8xf32>
    %47 = arith.truncf %46 : vector<12x8xf32> to vector<12x8xbf16>
    %cst_18 = arith.constant dense<0.000000e+00> : vector<12x12xf32>
    %48 = tpu.matmul %45, %47, %cst_18 {dimension_numbers = #tpu.dot_dimension_numbers<[1], [1], [0], [0], [0, 0, 1, 0], [], []>} : vector<12x8xbf16>, vector<12x8xbf16>, vector<12x12xf32> -> vector<12x12xf32>
    %cst_19 = arith.constant 0.353553385 : f32
    %49 = vector.broadcast %cst_19 : f32 to vector<12x12xf32>
    %50 = arith.mulf %48, %49 : vector<12x12xf32>
    %cst_20 = arith.constant -1.000000e+30 : f32
    %51 = vector.broadcast %cst_20 : f32 to vector<12x12xf32>
    %52 = arith.select %16, %51, %50 : vector<12x12xi1>, vector<12x12xf32>
    %cst_21 = arith.constant dense<0xFF800000> : vector<12xf32>
    %53 = vector.multi_reduction <maximumf>, %52, %cst_21 [1] : vector<12x12xf32> to vector<12xf32>
    %54 = vector.shape_cast %53 : vector<12xf32> to vector<12x1xf32>
    %55 = vector.broadcast %54 : vector<12x1xf32> to vector<12x12xf32>
    %56 = arith.subf %52, %55 : vector<12x12xf32>
    %57 = math.exp %56 : vector<12x12xf32>
    %cst_22 = arith.constant dense<0.000000e+00> : vector<12xf32>
    %58 = vector.multi_reduction <add>, %57, %cst_22 [1] : vector<12x12xf32> to vector<12xf32>
    %59 = vector.shape_cast %58 : vector<12xf32> to vector<12x1xf32>
    %60 = tpu.reciprocal %59 {approx = true} : vector<12x1xf32> -> vector<12x1xf32>
    %61 = vector.broadcast %60 : vector<12x1xf32> to vector<12x12xf32>
    %62 = arith.mulf %57, %61 : vector<12x12xf32>
    %63 = vector.extract_strided_slice %12 {offsets = [0, 8], sizes = [12, 8], strides = [1, 1]} : vector<12x32xf32> to vector<12x8xf32>
    %64 = arith.truncf %62 : vector<12x12xf32> to vector<12x12xbf16>
    %65 = arith.truncf %63 : vector<12x8xf32> to vector<12x8xbf16>
    %cst_23 = arith.constant dense<0.000000e+00> : vector<12x8xf32>
    %66 = tpu.matmul %64, %65, %cst_23 {dimension_numbers = #tpu.dot_dimension_numbers<[1], [0], [0], [1], [0, 0, 1, 1], [], []>} : vector<12x12xbf16>, vector<12x8xbf16>, vector<12x8xf32> -> vector<12x8xf32>
    %67 = vector.extract_strided_slice %13 {offsets = [8, 0], sizes = [8, 32], strides = [1, 1]} : vector<32x32xf32> to vector<8x32xf32>
    %68 = arith.truncf %66 : vector<12x8xf32> to vector<12x8xbf16>
    %69 = arith.truncf %67 : vector<8x32xf32> to vector<8x32xbf16>
    %cst_24 = arith.constant dense<0.000000e+00> : vector<12x32xf32>
    %70 = tpu.matmul %68, %69, %cst_24 {dimension_numbers = #tpu.dot_dimension_numbers<[1], [0], [0], [1], [0, 0, 1, 1], [], []>} : vector<12x8xbf16>, vector<8x32xbf16>, vector<12x32xf32> -> vector<12x32xf32>
    %71 = arith.addf %43, %70 : vector<12x32xf32>
    %72 = vector.extract_strided_slice %10 {offsets = [0, 16], sizes = [12, 8], strides = [1, 1]} : vector<12x32xf32> to vector<12x8xf32>
    %73 = arith.truncf %72 : vector<12x8xf32> to vector<12x8xbf16>
    %74 = vector.extract_strided_slice %11 {offsets = [0, 16], sizes = [12, 8], strides = [1, 1]} : vector<12x32xf32> to vector<12x8xf32>
    %75 = arith.truncf %74 : vector<12x8xf32> to vector<12x8xbf16>
    %cst_25 = arith.constant dense<0.000000e+00> : vector<12x12xf32>
    %76 = tpu.matmul %73, %75, %cst_25 {dimension_numbers = #tpu.dot_dimension_numbers<[1], [1], [0], [0], [0, 0, 1, 0], [], []>} : vector<12x8xbf16>, vector<12x8xbf16>, vector<12x12xf32> -> vector<12x12xf32>
    %cst_26 = arith.constant 0.353553385 : f32
    %77 = vector.broadcast %cst_26 : f32 to vector<12x12xf32>
    %78 = arith.mulf %76, %77 : vector<12x12xf32>
    %cst_27 = arith.constant -1.000000e+30 : f32
    %79 = vector.broadcast %cst_27 : f32 to vector<12x12xf32>
    %80 = arith.select %16, %79, %78 : vector<12x12xi1>, vector<12x12xf32>
    %cst_28 = arith.constant dense<0xFF800000> : vector<12xf32>
    %81 = vector.multi_reduction <maximumf>, %80, %cst_28 [1] : vector<12x12xf32> to vector<12xf32>
    %82 = vector.shape_cast %81 : vector<12xf32> to vector<12x1xf32>
    %83 = vector.broadcast %82 : vector<12x1xf32> to vector<12x12xf32>
    %84 = arith.subf %80, %83 : vector<12x12xf32>
    %85 = math.exp %84 : vector<12x12xf32>
    %cst_29 = arith.constant dense<0.000000e+00> : vector<12xf32>
    %86 = vector.multi_reduction <add>, %85, %cst_29 [1] : vector<12x12xf32> to vector<12xf32>
    %87 = vector.shape_cast %86 : vector<12xf32> to vector<12x1xf32>
    %88 = tpu.reciprocal %87 {approx = true} : vector<12x1xf32> -> vector<12x1xf32>
    %89 = vector.broadcast %88 : vector<12x1xf32> to vector<12x12xf32>
    %90 = arith.mulf %85, %89 : vector<12x12xf32>
    %91 = vector.extract_strided_slice %12 {offsets = [0, 16], sizes = [12, 8], strides = [1, 1]} : vector<12x32xf32> to vector<12x8xf32>
    %92 = arith.truncf %90 : vector<12x12xf32> to vector<12x12xbf16>
    %93 = arith.truncf %91 : vector<12x8xf32> to vector<12x8xbf16>
    %cst_30 = arith.constant dense<0.000000e+00> : vector<12x8xf32>
    %94 = tpu.matmul %92, %93, %cst_30 {dimension_numbers = #tpu.dot_dimension_numbers<[1], [0], [0], [1], [0, 0, 1, 1], [], []>} : vector<12x12xbf16>, vector<12x8xbf16>, vector<12x8xf32> -> vector<12x8xf32>
    %95 = vector.extract_strided_slice %13 {offsets = [16, 0], sizes = [8, 32], strides = [1, 1]} : vector<32x32xf32> to vector<8x32xf32>
    %96 = arith.truncf %94 : vector<12x8xf32> to vector<12x8xbf16>
    %97 = arith.truncf %95 : vector<8x32xf32> to vector<8x32xbf16>
    %cst_31 = arith.constant dense<0.000000e+00> : vector<12x32xf32>
    %98 = tpu.matmul %96, %97, %cst_31 {dimension_numbers = #tpu.dot_dimension_numbers<[1], [0], [0], [1], [0, 0, 1, 1], [], []>} : vector<12x8xbf16>, vector<8x32xbf16>, vector<12x32xf32> -> vector<12x32xf32>
    %99 = arith.addf %71, %98 : vector<12x32xf32>
    %100 = vector.extract_strided_slice %10 {offsets = [0, 24], sizes = [12, 8], strides = [1, 1]} : vector<12x32xf32> to vector<12x8xf32>
    %101 = arith.truncf %100 : vector<12x8xf32> to vector<12x8xbf16>
    %102 = vector.extract_strided_slice %11 {offsets = [0, 24], sizes = [12, 8], strides = [1, 1]} : vector<12x32xf32> to vector<12x8xf32>
    %103 = arith.truncf %102 : vector<12x8xf32> to vector<12x8xbf16>
    %cst_32 = arith.constant dense<0.000000e+00> : vector<12x12xf32>
    %104 = tpu.matmul %101, %103, %cst_32 {dimension_numbers = #tpu.dot_dimension_numbers<[1], [1], [0], [0], [0, 0, 1, 0], [], []>} : vector<12x8xbf16>, vector<12x8xbf16>, vector<12x12xf32> -> vector<12x12xf32>
    %cst_33 = arith.constant 0.353553385 : f32
    %105 = vector.broadcast %cst_33 : f32 to vector<12x12xf32>
    %106 = arith.mulf %104, %105 : vector<12x12xf32>
    %cst_34 = arith.constant -1.000000e+30 : f32
    %107 = vector.broadcast %cst_34 : f32 to vector<12x12xf32>
    %108 = arith.select %16, %107, %106 : vector<12x12xi1>, vector<12x12xf32>
    %cst_35 = arith.constant dense<0xFF800000> : vector<12xf32>
    %109 = vector.multi_reduction <maximumf>, %108, %cst_35 [1] : vector<12x12xf32> to vector<12xf32>
    %110 = vector.shape_cast %109 : vector<12xf32> to vector<12x1xf32>
    %111 = vector.broadcast %110 : vector<12x1xf32> to vector<12x12xf32>
    %112 = arith.subf %108, %111 : vector<12x12xf32>
    %113 = math.exp %112 : vector<12x12xf32>
    %cst_36 = arith.constant dense<0.000000e+00> : vector<12xf32>
    %114 = vector.multi_reduction <add>, %113, %cst_36 [1] : vector<12x12xf32> to vector<12xf32>
    %115 = vector.shape_cast %114 : vector<12xf32> to vector<12x1xf32>
    %116 = tpu.reciprocal %115 {approx = true} : vector<12x1xf32> -> vector<12x1xf32>
    %117 = vector.broadcast %116 : vector<12x1xf32> to vector<12x12xf32>
    %118 = arith.mulf %113, %117 : vector<12x12xf32>
    %119 = vector.extract_strided_slice %12 {offsets = [0, 24], sizes = [12, 8], strides = [1, 1]} : vector<12x32xf32> to vector<12x8xf32>
    %120 = arith.truncf %118 : vector<12x12xf32> to vector<12x12xbf16>
    %121 = arith.truncf %119 : vector<12x8xf32> to vector<12x8xbf16>
    %cst_37 = arith.constant dense<0.000000e+00> : vector<12x8xf32>
    %122 = tpu.matmul %120, %121, %cst_37 {dimension_numbers = #tpu.dot_dimension_numbers<[1], [0], [0], [1], [0, 0, 1, 1], [], []>} : vector<12x12xbf16>, vector<12x8xbf16>, vector<12x8xf32> -> vector<12x8xf32>
    %123 = vector.extract_strided_slice %13 {offsets = [24, 0], sizes = [8, 32], strides = [1, 1]} : vector<32x32xf32> to vector<8x32xf32>
    %124 = arith.truncf %122 : vector<12x8xf32> to vector<12x8xbf16>
    %125 = arith.truncf %123 : vector<8x32xf32> to vector<8x32xbf16>
    %cst_38 = arith.constant dense<0.000000e+00> : vector<12x32xf32>
    %126 = tpu.matmul %124, %125, %cst_38 {dimension_numbers = #tpu.dot_dimension_numbers<[1], [0], [0], [1], [0, 0, 1, 1], [], []>} : vector<12x8xbf16>, vector<8x32xbf16>, vector<12x32xf32> -> vector<12x32xf32>
    %127 = arith.addf %99, %126 : vector<12x32xf32>
    %c0_39 = arith.constant 0 : index
    %c0_40 = arith.constant 0 : index
    %128 = vector.load %arg6[%c0_39, %c0_40] : memref<1x32xf32, #tpu.memory_space<vmem>>, vector<1x32xf32>
    %129 = vector.broadcast %128 : vector<1x32xf32> to vector<12x32xf32>
    %130 = arith.addf %127, %129 : vector<12x32xf32>
    %131 = arith.addf %1, %130 : vector<12x32xf32>
    %c0_41 = arith.constant 0 : index
    %c0_42 = arith.constant 0 : index
    %132 = vector.load %arg13[%c0_41, %c0_42] : memref<1x32xf32, #tpu.memory_space<vmem>>, vector<1x32xf32>
    %c0_43 = arith.constant 0 : index
    %c0_44 = arith.constant 0 : index
    %133 = vector.load %arg14[%c0_43, %c0_44] : memref<1x32xf32, #tpu.memory_space<vmem>>, vector<1x32xf32>
    %cst_45 = arith.constant dense<0.000000e+00> : vector<12xf32>
    %134 = vector.multi_reduction <add>, %131, %cst_45 [1] : vector<12x32xf32> to vector<12xf32>
    %135 = vector.shape_cast %134 : vector<12xf32> to vector<12x1xf32>
    %cst_46 = arith.constant 3.200000e+01 : f32
    %136 = vector.broadcast %cst_46 : f32 to vector<12x1xf32>
    %137 = arith.divf %135, %136 : vector<12x1xf32>
    %138 = vector.broadcast %137 : vector<12x1xf32> to vector<12x32xf32>
    %139 = arith.subf %131, %138 : vector<12x32xf32>
    %140 = arith.mulf %139, %139 : vector<12x32xf32>
    %cst_47 = arith.constant dense<0.000000e+00> : vector<12xf32>
    %141 = vector.multi_reduction <add>, %140, %cst_47 [1] : vector<12x32xf32> to vector<12xf32>
    %142 = vector.shape_cast %141 : vector<12xf32> to vector<12x1xf32>
    %cst_48 = arith.constant 3.200000e+01 : f32
    %143 = vector.broadcast %cst_48 : f32 to vector<12x1xf32>
    %144 = arith.divf %142, %143 : vector<12x1xf32>
    %cst_49 = arith.constant 9.99999974E-6 : f32
    %145 = vector.broadcast %cst_49 : f32 to vector<12x1xf32>
    %146 = arith.addf %144, %145 : vector<12x1xf32>
    %147 = math.rsqrt %146 : vector<12x1xf32>
    %148 = vector.broadcast %147 : vector<12x1xf32> to vector<12x32xf32>
    %149 = arith.mulf %139, %148 : vector<12x32xf32>
    %150 = vector.broadcast %132 : vector<1x32xf32> to vector<12x32xf32>
    %151 = arith.mulf %149, %150 : vector<12x32xf32>
    %152 = vector.broadcast %133 : vector<1x32xf32> to vector<12x32xf32>
    %153 = arith.addf %151, %152 : vector<12x32xf32>
    %c0_50 = arith.constant 0 : index
    %c0_51 = arith.constant 0 : index
    %154 = vector.load %arg7[%c0_50, %c0_51] : memref<32x32xbf16, #tpu.memory_space<vmem>>, vector<32x32xbf16>
    %155 = arith.truncf %153 : vector<12x32xf32> to vector<12x32xbf16>
    %cst_52 = arith.constant dense<0.000000e+00> : vector<12x32xf32>
    %156 = tpu.matmul %155, %154, %cst_52 {dimension_numbers = #tpu.dot_dimension_numbers<[1], [0], [0], [1], [0, 0, 1, 1], [], []>} : vector<12x32xbf16>, vector<32x32xbf16>, vector<12x32xf32> -> vector<12x32xf32>
    %c0_53 = arith.constant 0 : index
    %c0_54 = arith.constant 0 : index
    %157 = vector.load %arg8[%c0_53, %c0_54] : memref<1x32xf32, #tpu.memory_space<vmem>>, vector<1x32xf32>
    %158 = vector.broadcast %157 : vector<1x32xf32> to vector<12x32xf32>
    %159 = arith.addf %156, %158 : vector<12x32xf32>
    %c0_55 = arith.constant 0 : index
    %c0_56 = arith.constant 0 : index
    %160 = vector.load %arg9[%c0_55, %c0_56] : memref<32x64xbf16, #tpu.memory_space<vmem>>, vector<32x64xbf16>
    %161 = arith.truncf %3 : vector<6x32xf32> to vector<6x32xbf16>
    %cst_57 = arith.constant dense<0.000000e+00> : vector<6x64xf32>
    %162 = tpu.matmul %161, %160, %cst_57 {dimension_numbers = #tpu.dot_dimension_numbers<[1], [0], [0], [1], [0, 0, 1, 1], [], []>} : vector<6x32xbf16>, vector<32x64xbf16>, vector<6x64xf32> -> vector<6x64xf32>
    %c0_58 = arith.constant 0 : index
    %c0_59 = arith.constant 0 : index
    %163 = vector.load %arg10[%c0_58, %c0_59] : memref<1x64xf32, #tpu.memory_space<vmem>>, vector<1x64xf32>
    %164 = vector.broadcast %163 : vector<1x64xf32> to vector<6x64xf32>
    %165 = arith.addf %162, %164 : vector<6x64xf32>
    %166 = vector.extract_strided_slice %165 {offsets = [0, 0], sizes = [6, 32], strides = [1, 1]} : vector<6x64xf32> to vector<6x32xf32>
    %167 = vector.extract_strided_slice %165 {offsets = [0, 32], sizes = [6, 32], strides = [1, 1]} : vector<6x64xf32> to vector<6x32xf32>
    %c0_60 = arith.constant 0 : index
    %c0_61 = arith.constant 0 : index
    %168 = vector.load %arg11[%c0_60, %c0_61] : memref<32x32xf32, #tpu.memory_space<vmem>>, vector<32x32xf32>
    %169 = vector.extract_strided_slice %159 {offsets = [0, 0], sizes = [12, 8], strides = [1, 1]} : vector<12x32xf32> to vector<12x8xf32>
    %170 = arith.truncf %169 : vector<12x8xf32> to vector<12x8xbf16>
    %171 = vector.extract_strided_slice %166 {offsets = [0, 0], sizes = [6, 8], strides = [1, 1]} : vector<6x32xf32> to vector<6x8xf32>
    %172 = arith.truncf %171 : vector<6x8xf32> to vector<6x8xbf16>
    %cst_62 = arith.constant dense<0.000000e+00> : vector<12x6xf32>
    %173 = tpu.matmul %170, %172, %cst_62 {dimension_numbers = #tpu.dot_dimension_numbers<[1], [1], [0], [0], [0, 0, 1, 0], [], []>} : vector<12x8xbf16>, vector<6x8xbf16>, vector<12x6xf32> -> vector<12x6xf32>
    %cst_63 = arith.constant 0.353553385 : f32
    %174 = vector.broadcast %cst_63 : f32 to vector<12x6xf32>
    %175 = arith.mulf %173, %174 : vector<12x6xf32>
    %cst_64 = arith.constant dense<0xFF800000> : vector<12xf32>
    %176 = vector.multi_reduction <maximumf>, %175, %cst_64 [1] : vector<12x6xf32> to vector<12xf32>
    %177 = vector.shape_cast %176 : vector<12xf32> to vector<12x1xf32>
    %178 = vector.broadcast %177 : vector<12x1xf32> to vector<12x6xf32>
    %179 = arith.subf %175, %178 : vector<12x6xf32>
    %180 = math.exp %179 : vector<12x6xf32>
    %cst_65 = arith.constant dense<0.000000e+00> : vector<12xf32>
    %181 = vector.multi_reduction <add>, %180, %cst_65 [1] : vector<12x6xf32> to vector<12xf32>
    %182 = vector.shape_cast %181 : vector<12xf32> to vector<12x1xf32>
    %183 = tpu.reciprocal %182 {approx = true} : vector<12x1xf32> -> vector<12x1xf32>
    %184 = vector.broadcast %183 : vector<12x1xf32> to vector<12x6xf32>
    %185 = arith.mulf %180, %184 : vector<12x6xf32>
    %186 = vector.extract_strided_slice %167 {offsets = [0, 0], sizes = [6, 8], strides = [1, 1]} : vector<6x32xf32> to vector<6x8xf32>
    %187 = arith.truncf %185 : vector<12x6xf32> to vector<12x6xbf16>
    %188 = arith.truncf %186 : vector<6x8xf32> to vector<6x8xbf16>
    %cst_66 = arith.constant dense<0.000000e+00> : vector<12x8xf32>
    %189 = tpu.matmul %187, %188, %cst_66 {dimension_numbers = #tpu.dot_dimension_numbers<[1], [0], [0], [1], [0, 0, 1, 1], [], []>} : vector<12x6xbf16>, vector<6x8xbf16>, vector<12x8xf32> -> vector<12x8xf32>
    %190 = vector.extract_strided_slice %168 {offsets = [0, 0], sizes = [8, 32], strides = [1, 1]} : vector<32x32xf32> to vector<8x32xf32>
    %191 = arith.truncf %189 : vector<12x8xf32> to vector<12x8xbf16>
    %192 = arith.truncf %190 : vector<8x32xf32> to vector<8x32xbf16>
    %cst_67 = arith.constant dense<0.000000e+00> : vector<12x32xf32>
    %193 = tpu.matmul %191, %192, %cst_67 {dimension_numbers = #tpu.dot_dimension_numbers<[1], [0], [0], [1], [0, 0, 1, 1], [], []>} : vector<12x8xbf16>, vector<8x32xbf16>, vector<12x32xf32> -> vector<12x32xf32>
    %194 = vector.extract_strided_slice %159 {offsets = [0, 8], sizes = [12, 8], strides = [1, 1]} : vector<12x32xf32> to vector<12x8xf32>
    %195 = arith.truncf %194 : vector<12x8xf32> to vector<12x8xbf16>
    %196 = vector.extract_strided_slice %166 {offsets = [0, 8], sizes = [6, 8], strides = [1, 1]} : vector<6x32xf32> to vector<6x8xf32>
    %197 = arith.truncf %196 : vector<6x8xf32> to vector<6x8xbf16>
    %cst_68 = arith.constant dense<0.000000e+00> : vector<12x6xf32>
    %198 = tpu.matmul %195, %197, %cst_68 {dimension_numbers = #tpu.dot_dimension_numbers<[1], [1], [0], [0], [0, 0, 1, 0], [], []>} : vector<12x8xbf16>, vector<6x8xbf16>, vector<12x6xf32> -> vector<12x6xf32>
    %cst_69 = arith.constant 0.353553385 : f32
    %199 = vector.broadcast %cst_69 : f32 to vector<12x6xf32>
    %200 = arith.mulf %198, %199 : vector<12x6xf32>
    %cst_70 = arith.constant dense<0xFF800000> : vector<12xf32>
    %201 = vector.multi_reduction <maximumf>, %200, %cst_70 [1] : vector<12x6xf32> to vector<12xf32>
    %202 = vector.shape_cast %201 : vector<12xf32> to vector<12x1xf32>
    %203 = vector.broadcast %202 : vector<12x1xf32> to vector<12x6xf32>
    %204 = arith.subf %200, %203 : vector<12x6xf32>
    %205 = math.exp %204 : vector<12x6xf32>
    %cst_71 = arith.constant dense<0.000000e+00> : vector<12xf32>
    %206 = vector.multi_reduction <add>, %205, %cst_71 [1] : vector<12x6xf32> to vector<12xf32>
    %207 = vector.shape_cast %206 : vector<12xf32> to vector<12x1xf32>
    %208 = tpu.reciprocal %207 {approx = true} : vector<12x1xf32> -> vector<12x1xf32>
    %209 = vector.broadcast %208 : vector<12x1xf32> to vector<12x6xf32>
    %210 = arith.mulf %205, %209 : vector<12x6xf32>
    %211 = vector.extract_strided_slice %167 {offsets = [0, 8], sizes = [6, 8], strides = [1, 1]} : vector<6x32xf32> to vector<6x8xf32>
    %212 = arith.truncf %210 : vector<12x6xf32> to vector<12x6xbf16>
    %213 = arith.truncf %211 : vector<6x8xf32> to vector<6x8xbf16>
    %cst_72 = arith.constant dense<0.000000e+00> : vector<12x8xf32>
    %214 = tpu.matmul %212, %213, %cst_72 {dimension_numbers = #tpu.dot_dimension_numbers<[1], [0], [0], [1], [0, 0, 1, 1], [], []>} : vector<12x6xbf16>, vector<6x8xbf16>, vector<12x8xf32> -> vector<12x8xf32>
    %215 = vector.extract_strided_slice %168 {offsets = [8, 0], sizes = [8, 32], strides = [1, 1]} : vector<32x32xf32> to vector<8x32xf32>
    %216 = arith.truncf %214 : vector<12x8xf32> to vector<12x8xbf16>
    %217 = arith.truncf %215 : vector<8x32xf32> to vector<8x32xbf16>
    %cst_73 = arith.constant dense<0.000000e+00> : vector<12x32xf32>
    %218 = tpu.matmul %216, %217, %cst_73 {dimension_numbers = #tpu.dot_dimension_numbers<[1], [0], [0], [1], [0, 0, 1, 1], [], []>} : vector<12x8xbf16>, vector<8x32xbf16>, vector<12x32xf32> -> vector<12x32xf32>
    %219 = arith.addf %193, %218 : vector<12x32xf32>
    %220 = vector.extract_strided_slice %159 {offsets = [0, 16], sizes = [12, 8], strides = [1, 1]} : vector<12x32xf32> to vector<12x8xf32>
    %221 = arith.truncf %220 : vector<12x8xf32> to vector<12x8xbf16>
    %222 = vector.extract_strided_slice %166 {offsets = [0, 16], sizes = [6, 8], strides = [1, 1]} : vector<6x32xf32> to vector<6x8xf32>
    %223 = arith.truncf %222 : vector<6x8xf32> to vector<6x8xbf16>
    %cst_74 = arith.constant dense<0.000000e+00> : vector<12x6xf32>
    %224 = tpu.matmul %221, %223, %cst_74 {dimension_numbers = #tpu.dot_dimension_numbers<[1], [1], [0], [0], [0, 0, 1, 0], [], []>} : vector<12x8xbf16>, vector<6x8xbf16>, vector<12x6xf32> -> vector<12x6xf32>
    %cst_75 = arith.constant 0.353553385 : f32
    %225 = vector.broadcast %cst_75 : f32 to vector<12x6xf32>
    %226 = arith.mulf %224, %225 : vector<12x6xf32>
    %cst_76 = arith.constant dense<0xFF800000> : vector<12xf32>
    %227 = vector.multi_reduction <maximumf>, %226, %cst_76 [1] : vector<12x6xf32> to vector<12xf32>
    %228 = vector.shape_cast %227 : vector<12xf32> to vector<12x1xf32>
    %229 = vector.broadcast %228 : vector<12x1xf32> to vector<12x6xf32>
    %230 = arith.subf %226, %229 : vector<12x6xf32>
    %231 = math.exp %230 : vector<12x6xf32>
    %cst_77 = arith.constant dense<0.000000e+00> : vector<12xf32>
    %232 = vector.multi_reduction <add>, %231, %cst_77 [1] : vector<12x6xf32> to vector<12xf32>
    %233 = vector.shape_cast %232 : vector<12xf32> to vector<12x1xf32>
    %234 = tpu.reciprocal %233 {approx = true} : vector<12x1xf32> -> vector<12x1xf32>
    %235 = vector.broadcast %234 : vector<12x1xf32> to vector<12x6xf32>
    %236 = arith.mulf %231, %235 : vector<12x6xf32>
    %237 = vector.extract_strided_slice %167 {offsets = [0, 16], sizes = [6, 8], strides = [1, 1]} : vector<6x32xf32> to vector<6x8xf32>
    %238 = arith.truncf %236 : vector<12x6xf32> to vector<12x6xbf16>
    %239 = arith.truncf %237 : vector<6x8xf32> to vector<6x8xbf16>
    %cst_78 = arith.constant dense<0.000000e+00> : vector<12x8xf32>
    %240 = tpu.matmul %238, %239, %cst_78 {dimension_numbers = #tpu.dot_dimension_numbers<[1], [0], [0], [1], [0, 0, 1, 1], [], []>} : vector<12x6xbf16>, vector<6x8xbf16>, vector<12x8xf32> -> vector<12x8xf32>
    %241 = vector.extract_strided_slice %168 {offsets = [16, 0], sizes = [8, 32], strides = [1, 1]} : vector<32x32xf32> to vector<8x32xf32>
    %242 = arith.truncf %240 : vector<12x8xf32> to vector<12x8xbf16>
    %243 = arith.truncf %241 : vector<8x32xf32> to vector<8x32xbf16>
    %cst_79 = arith.constant dense<0.000000e+00> : vector<12x32xf32>
    %244 = tpu.matmul %242, %243, %cst_79 {dimension_numbers = #tpu.dot_dimension_numbers<[1], [0], [0], [1], [0, 0, 1, 1], [], []>} : vector<12x8xbf16>, vector<8x32xbf16>, vector<12x32xf32> -> vector<12x32xf32>
    %245 = arith.addf %219, %244 : vector<12x32xf32>
    %246 = vector.extract_strided_slice %159 {offsets = [0, 24], sizes = [12, 8], strides = [1, 1]} : vector<12x32xf32> to vector<12x8xf32>
    %247 = arith.truncf %246 : vector<12x8xf32> to vector<12x8xbf16>
    %248 = vector.extract_strided_slice %166 {offsets = [0, 24], sizes = [6, 8], strides = [1, 1]} : vector<6x32xf32> to vector<6x8xf32>
    %249 = arith.truncf %248 : vector<6x8xf32> to vector<6x8xbf16>
    %cst_80 = arith.constant dense<0.000000e+00> : vector<12x6xf32>
    %250 = tpu.matmul %247, %249, %cst_80 {dimension_numbers = #tpu.dot_dimension_numbers<[1], [1], [0], [0], [0, 0, 1, 0], [], []>} : vector<12x8xbf16>, vector<6x8xbf16>, vector<12x6xf32> -> vector<12x6xf32>
    %cst_81 = arith.constant 0.353553385 : f32
    %251 = vector.broadcast %cst_81 : f32 to vector<12x6xf32>
    %252 = arith.mulf %250, %251 : vector<12x6xf32>
    %cst_82 = arith.constant dense<0xFF800000> : vector<12xf32>
    %253 = vector.multi_reduction <maximumf>, %252, %cst_82 [1] : vector<12x6xf32> to vector<12xf32>
    %254 = vector.shape_cast %253 : vector<12xf32> to vector<12x1xf32>
    %255 = vector.broadcast %254 : vector<12x1xf32> to vector<12x6xf32>
    %256 = arith.subf %252, %255 : vector<12x6xf32>
    %257 = math.exp %256 : vector<12x6xf32>
    %cst_83 = arith.constant dense<0.000000e+00> : vector<12xf32>
    %258 = vector.multi_reduction <add>, %257, %cst_83 [1] : vector<12x6xf32> to vector<12xf32>
    %259 = vector.shape_cast %258 : vector<12xf32> to vector<12x1xf32>
    %260 = tpu.reciprocal %259 {approx = true} : vector<12x1xf32> -> vector<12x1xf32>
    %261 = vector.broadcast %260 : vector<12x1xf32> to vector<12x6xf32>
    %262 = arith.mulf %257, %261 : vector<12x6xf32>
    %263 = vector.extract_strided_slice %167 {offsets = [0, 24], sizes = [6, 8], strides = [1, 1]} : vector<6x32xf32> to vector<6x8xf32>
    %264 = arith.truncf %262 : vector<12x6xf32> to vector<12x6xbf16>
    %265 = arith.truncf %263 : vector<6x8xf32> to vector<6x8xbf16>
    %cst_84 = arith.constant dense<0.000000e+00> : vector<12x8xf32>
    %266 = tpu.matmul %264, %265, %cst_84 {dimension_numbers = #tpu.dot_dimension_numbers<[1], [0], [0], [1], [0, 0, 1, 1], [], []>} : vector<12x6xbf16>, vector<6x8xbf16>, vector<12x8xf32> -> vector<12x8xf32>
    %267 = vector.extract_strided_slice %168 {offsets = [24, 0], sizes = [8, 32], strides = [1, 1]} : vector<32x32xf32> to vector<8x32xf32>
    %268 = arith.truncf %266 : vector<12x8xf32> to vector<12x8xbf16>
    %269 = arith.truncf %267 : vector<8x32xf32> to vector<8x32xbf16>
    %cst_85 = arith.constant dense<0.000000e+00> : vector<12x32xf32>
    %270 = tpu.matmul %268, %269, %cst_85 {dimension_numbers = #tpu.dot_dimension_numbers<[1], [0], [0], [1], [0, 0, 1, 1], [], []>} : vector<12x8xbf16>, vector<8x32xbf16>, vector<12x32xf32> -> vector<12x32xf32>
    %271 = arith.addf %245, %270 : vector<12x32xf32>
    %c0_86 = arith.constant 0 : index
    %c0_87 = arith.constant 0 : index
    %272 = vector.load %arg12[%c0_86, %c0_87] : memref<1x32xf32, #tpu.memory_space<vmem>>, vector<1x32xf32>
    %273 = vector.broadcast %272 : vector<1x32xf32> to vector<12x32xf32>
    %274 = arith.addf %271, %273 : vector<12x32xf32>
    %275 = arith.addf %153, %274 : vector<12x32xf32>
    %c0_88 = arith.constant 0 : index
    %c0_89 = arith.constant 0 : index
    %276 = vector.load %arg15[%c0_88, %c0_89] : memref<1x32xf32, #tpu.memory_space<vmem>>, vector<1x32xf32>
    %c0_90 = arith.constant 0 : index
    %c0_91 = arith.constant 0 : index
    %277 = vector.load %arg16[%c0_90, %c0_91] : memref<1x32xf32, #tpu.memory_space<vmem>>, vector<1x32xf32>
    %cst_92 = arith.constant dense<0.000000e+00> : vector<12xf32>
    %278 = vector.multi_reduction <add>, %275, %cst_92 [1] : vector<12x32xf32> to vector<12xf32>
    %279 = vector.shape_cast %278 : vector<12xf32> to vector<12x1xf32>
    %cst_93 = arith.constant 3.200000e+01 : f32
    %280 = vector.broadcast %cst_93 : f32 to vector<12x1xf32>
    %281 = arith.divf %279, %280 : vector<12x1xf32>
    %282 = vector.broadcast %281 : vector<12x1xf32> to vector<12x32xf32>
    %283 = arith.subf %275, %282 : vector<12x32xf32>
    %284 = arith.mulf %283, %283 : vector<12x32xf32>
    %cst_94 = arith.constant dense<0.000000e+00> : vector<12xf32>
    %285 = vector.multi_reduction <add>, %284, %cst_94 [1] : vector<12x32xf32> to vector<12xf32>
    %286 = vector.shape_cast %285 : vector<12xf32> to vector<12x1xf32>
    %cst_95 = arith.constant 3.200000e+01 : f32
    %287 = vector.broadcast %cst_95 : f32 to vector<12x1xf32>
    %288 = arith.divf %286, %287 : vector<12x1xf32>
    %cst_96 = arith.constant 9.99999974E-6 : f32
    %289 = vector.broadcast %cst_96 : f32 to vector<12x1xf32>
    %290 = arith.addf %288, %289 : vector<12x1xf32>
    %291 = math.rsqrt %290 : vector<12x1xf32>
    %292 = vector.broadcast %291 : vector<12x1xf32> to vector<12x32xf32>
    %293 = arith.mulf %283, %292 : vector<12x32xf32>
    %294 = vector.broadcast %276 : vector<1x32xf32> to vector<12x32xf32>
    %295 = arith.mulf %293, %294 : vector<12x32xf32>
    %296 = vector.broadcast %277 : vector<1x32xf32> to vector<12x32xf32>
    %297 = arith.addf %295, %296 : vector<12x32xf32>
    %c0_97 = arith.constant 0 : index
    %c0_98 = arith.constant 0 : index
    %298 = vector.load %arg17[%c0_97, %c0_98] : memref<32x64xbf16, #tpu.memory_space<vmem>>, vector<32x64xbf16>
    %299 = arith.truncf %297 : vector<12x32xf32> to vector<12x32xbf16>
    %cst_99 = arith.constant dense<0.000000e+00> : vector<12x64xf32>
    %300 = tpu.matmul %299, %298, %cst_99 {dimension_numbers = #tpu.dot_dimension_numbers<[1], [0], [0], [1], [0, 0, 1, 1], [], []>} : vector<12x32xbf16>, vector<32x64xbf16>, vector<12x64xf32> -> vector<12x64xf32>
    %c0_100 = arith.constant 0 : index
    %c0_101 = arith.constant 0 : index
    %301 = vector.load %arg18[%c0_100, %c0_101] : memref<1x64xf32, #tpu.memory_space<vmem>>, vector<1x64xf32>
    %302 = vector.broadcast %301 : vector<1x64xf32> to vector<12x64xf32>
    %303 = arith.addf %300, %302 : vector<12x64xf32>
    %cst_102 = arith.constant 0.000000e+00 : f32
    %304 = vector.broadcast %cst_102 : f32 to vector<12x64xf32>
    %305 = arith.maximumf %303, %304 : vector<12x64xf32>
    %c0_103 = arith.constant 0 : index
    %c0_104 = arith.constant 0 : index
    %306 = vector.load %arg19[%c0_103, %c0_104] : memref<64x32xbf16, #tpu.memory_space<vmem>>, vector<64x32xbf16>
    %307 = arith.truncf %305 : vector<12x64xf32> to vector<12x64xbf16>
    %cst_105 = arith.constant dense<0.000000e+00> : vector<12x32xf32>
    %308 = tpu.matmul %307, %306, %cst_105 {dimension_numbers = #tpu.dot_dimension_numbers<[1], [0], [0], [1], [0, 0, 1, 1], [], []>} : vector<12x64xbf16>, vector<64x32xbf16>, vector<12x32xf32> -> vector<12x32xf32>
    %c0_106 = arith.constant 0 : index
    %c0_107 = arith.constant 0 : index
    %309 = vector.load %arg20[%c0_106, %c0_107] : memref<1x32xf32, #tpu.memory_space<vmem>>, vector<1x32xf32>
    %310 = vector.broadcast %309 : vector<1x32xf32> to vector<12x32xf32>
    %311 = arith.addf %308, %310 : vector<12x32xf32>
    %312 = arith.addf %297, %311 : vector<12x32xf32>
    %c0_108 = arith.constant 0 : index
    %c0_109 = arith.constant 0 : index
    %313 = vector.load %arg21[%c0_108, %c0_109] : memref<1x32xf32, #tpu.memory_space<vmem>>, vector<1x32xf32>
    %c0_110 = arith.constant 0 : index
    %c0_111 = arith.constant 0 : index
    %314 = vector.load %arg22[%c0_110, %c0_111] : memref<1x32xf32, #tpu.memory_space<vmem>>, vector<1x32xf32>
    %cst_112 = arith.constant dense<0.000000e+00> : vector<12xf32>
    %315 = vector.multi_reduction <add>, %312, %cst_112 [1] : vector<12x32xf32> to vector<12xf32>
    %316 = vector.shape_cast %315 : vector<12xf32> to vector<12x1xf32>
    %cst_113 = arith.constant 3.200000e+01 : f32
    %317 = vector.broadcast %cst_113 : f32 to vector<12x1xf32>
    %318 = arith.divf %316, %317 : vector<12x1xf32>
    %319 = vector.broadcast %318 : vector<12x1xf32> to vector<12x32xf32>
    %320 = arith.subf %312, %319 : vector<12x32xf32>
    %321 = arith.mulf %320, %320 : vector<12x32xf32>
    %cst_114 = arith.constant dense<0.000000e+00> : vector<12xf32>
    %322 = vector.multi_reduction <add>, %321, %cst_114 [1] : vector<12x32xf32> to vector<12xf32>
    %323 = vector.shape_cast %322 : vector<12xf32> to vector<12x1xf32>
    %cst_115 = arith.constant 3.200000e+01 : f32
    %324 = vector.broadcast %cst_115 : f32 to vector<12x1xf32>
    %325 = arith.divf %323, %324 : vector<12x1xf32>
    %cst_116 = arith.constant 9.99999974E-6 : f32
    %326 = vector.broadcast %cst_116 : f32 to vector<12x1xf32>
    %327 = arith.addf %325, %326 : vector<12x1xf32>
    %328 = math.rsqrt %327 : vector<12x1xf32>
    %329 = vector.broadcast %328 : vector<12x1xf32> to vector<12x32xf32>
    %330 = arith.mulf %320, %329 : vector<12x32xf32>
    %331 = vector.broadcast %313 : vector<1x32xf32> to vector<12x32xf32>
    %332 = arith.mulf %330, %331 : vector<12x32xf32>
    %333 = vector.broadcast %314 : vector<1x32xf32> to vector<12x32xf32>
    %334 = arith.addf %332, %333 : vector<12x32xf32>
    %c0_117 = arith.constant 0 : index
    %c0_118 = arith.constant 0 : index
    %c0_119 = arith.constant 0 : index
    %335 = vector.load %arg23[%c0_117, %c0_118, %c0_119] : memref<1x12x32xf32, #tpu.memory_space<vmem>>, vector<1x12x32xf32>
    %336 = vector.shape_cast %335 : vector<1x12x32xf32> to vector<12x32xf32>
    %337 = vector.shape_cast %334 : vector<12x32xf32> to vector<1x12x32xf32>
    tpu.vector_store %arg23[%c0_117, %c0_118, %c0_119], %337 {strides = array<i32>} : memref<1x12x32xf32, #tpu.memory_space<vmem>>, vector<1x12x32xf32>,
    return
  }
  func.func @transform_0(%arg0: i32) -> (i32, i32, i32) {
    %c0_i32 = arith.constant 0 : i32
    %c0_i32_0 = arith.constant 0 : i32
    %c0_i32_1 = arith.constant 0 : i32
    return %arg0, %c0_i32, %c0_i32_0 : i32, i32, i32
  }
  func.func @transform_1(%arg0: i32) -> (i32, i32, i32) {
    %c0_i32 = arith.constant 0 : i32
    %c0_i32_0 = arith.constant 0 : i32
    %c0_i32_1 = arith.constant 0 : i32
    return %arg0, %c0_i32, %c0_i32_0 : i32, i32, i32
  }
  func.func @transform_2(%arg0: i32) -> (i32, i32) {
    %c0_i32 = arith.constant 0 : i32
    %c0_i32_0 = arith.constant 0 : i32
    %c0_i32_1 = arith.constant 0 : i32
    return %c0_i32, %c0_i32_0 : i32, i32
  }
  func.func @transform_3(%arg0: i32) -> (i32, i32) {
    %c0_i32 = arith.constant 0 : i32
    %c0_i32_0 = arith.constant 0 : i32
    %c0_i32_1 = arith.constant 0 : i32
    return %c0_i32, %c0_i32_0 : i32, i32
  }
  func.func @transform_4(%arg0: i32) -> (i32, i32) {
    %c0_i32 = arith.constant 0 : i32
    %c0_i32_0 = arith.constant 0 : i32
    %c0_i32_1 = arith.constant 0 : i32
    return %c0_i32, %c0_i32_0 : i32, i32
  }
  func.func @transform_5(%arg0: i32) -> (i32, i32) {
    %c0_i32 = arith.constant 0 : i32
    %c0_i32_0 = arith.constant 0 : i32
    %c0_i32_1 = arith.constant 0 : i32
    return %c0_i32, %c0_i32_0 : i32, i32
  }
  func.func @transform_6(%arg0: i32) -> (i32, i32) {
    %c0_i32 = arith.constant 0 : i32
    %c0_i32_0 = arith.constant 0 : i32
    %c0_i32_1 = arith.constant 0 : i32
    return %c0_i32, %c0_i32_0 : i32, i32
  }
  func.func @transform_7(%arg0: i32) -> (i32, i32) {
    %c0_i32 = arith.constant 0 : i32
    %c0_i32_0 = arith.constant 0 : i32
    %c0_i32_1 = arith.constant 0 : i32
    return %c0_i32, %c0_i32_0 : i32, i32
  }
  func.func @transform_8(%arg0: i32) -> (i32, i32) {
    %c0_i32 = arith.constant 0 : i32
    %c0_i32_0 = arith.constant 0 : i32
    %c0_i32_1 = arith.constant 0 : i32
    return %c0_i32, %c0_i32_0 : i32, i32
  }
  func.func @transform_9(%arg0: i32) -> (i32, i32) {
    %c0_i32 = arith.constant 0 : i32
    %c0_i32_0 = arith.constant 0 : i32
    %c0_i32_1 = arith.constant 0 : i32
    return %c0_i32, %c0_i32_0 : i32, i32
  }
  func.func @transform_10(%arg0: i32) -> (i32, i32) {
    %c0_i32 = arith.constant 0 : i32
    %c0_i32_0 = arith.constant 0 : i32
    %c0_i32_1 = arith.constant 0 : i32
    return %c0_i32, %c0_i32_0 : i32, i32
  }
  func.func @transform_11(%arg0: i32) -> (i32, i32) {
    %c0_i32 = arith.constant 0 : i32
    %c0_i32_0 = arith.constant 0 : i32
    %c0_i32_1 = arith.constant 0 : i32
    return %c0_i32, %c0_i32_0 : i32, i32
  }
  func.func @transform_12(%arg0: i32) -> (i32, i32) {
    %c0_i32 = arith.constant 0 : i32
    %c0_i32_0 = arith.constant 0 : i32
    %c0_i32_1 = arith.constant 0 : i32
    return %c0_i32, %c0_i32_0 : i32, i32
  }
  func.func @transform_13(%arg0: i32) -> (i32, i32) {
    %c0_i32 = arith.constant 0 : i32
    %c0_i32_0 = arith.constant 0 : i32
    %c0_i32_1 = arith.constant 0 : i32
    return %c0_i32, %c0_i32_0 : i32, i32
  }
  func.func @transform_14(%arg0: i32) -> (i32, i32) {
    %c0_i32 = arith.constant 0 : i32
    %c0_i32_0 = arith.constant 0 : i32
    %c0_i32_1 = arith.constant 0 : i32
    return %c0_i32, %c0_i32_0 : i32, i32
  }
  func.func @transform_15(%arg0: i32) -> (i32, i32) {
    %c0_i32 = arith.constant 0 : i32
    %c0_i32_0 = arith.constant 0 : i32
    %c0_i32_1 = arith.constant 0 : i32
    return %c0_i32, %c0_i32_0 : i32, i32
  }
  func.func @transform_16(%arg0: i32) -> (i32, i32) {
    %c0_i32 = arith.constant 0 : i32
    %c0_i32_0 = arith.constant 0 : i32
    %c0_i32_1 = arith.constant 0 : i32
    return %c0_i32, %c0_i32_0 : i32, i32
  }
  func.func @transform_17(%arg0: i32) -> (i32, i32) {
    %c0_i32 = arith.constant 0 : i32
    %c0_i32_0 = arith.constant 0 : i32
    %c0_i32_1 = arith.constant 0 : i32
    return %c0_i32, %c0_i32_0 : i32, i32
  }
  func.func @transform_18(%arg0: i32) -> (i32, i32) {
    %c0_i32 = arith.constant 0 : i32
    %c0_i32_0 = arith.constant 0 : i32
    %c0_i32_1 = arith.constant 0 : i32
    return %c0_i32, %c0_i32_0 : i32, i32
  }
  func.func @transform_19(%arg0: i32) -> (i32, i32) {
    %c0_i32 = arith.constant 0 : i32
    %c0_i32_0 = arith.constant 0 : i32
    %c0_i32_1 = arith.constant 0 : i32
    return %c0_i32, %c0_i32_0 : i32, i32
  }
  func.func @transform_20(%arg0: i32) -> (i32, i32) {
    %c0_i32 = arith.constant 0 : i32
    %c0_i32_0 = arith.constant 0 : i32
    %c0_i32_1 = arith.constant 0 : i32
    return %c0_i32, %c0_i32_0 : i32, i32
  }
  func.func @transform_21(%arg0: i32) -> (i32, i32) {
    %c0_i32 = arith.constant 0 : i32
    %c0_i32_0 = arith.constant 0 : i32
    %c0_i32_1 = arith.constant 0 : i32
    return %c0_i32, %c0_i32_0 : i32, i32
  }
  func.func @transform_22(%arg0: i32) -> (i32, i32, i32) {
    %c0_i32 = arith.constant 0 : i32
    %c0_i32_0 = arith.constant 0 : i32
    %c0_i32_1 = arith.constant 0 : i32
    return %arg0, %c0_i32, %c0_i32_0 : i32, i32, i32
  }
}

</mosaic_0001>

<llo_original>
// kernel: informer_forward.10
$region0: #{informer_forward.10}
  #allocation0 [shape = 'u32[]', space=smem, size = 0x4, offset = 0x4, fixed_abs, tag = 'smem constant byte address 0x4 - core index']
  #allocation1 [shape = 'u32[144,128]{1,0:T(1,128)}', space=vmem, size = 0x12000, scoped, tag = 'internal scratch']
  %s0 = inlined_call_operand.vmem [shape: f32[2,12,32], index: 0, kind: input, shape index: {}]
  %s1 = inlined_call_operand.vmem [shape: bf16[3,32,32], index: 1, kind: input, shape index: {}]
  %s2 = inlined_call_operand.vmem [shape: f32[1,32], index: 2, kind: input, shape index: {}]
  %s3 = inlined_call_operand.vmem [shape: f32[2,6,32], index: 3, kind: output, shape index: {}]
  %s4 = sld [smem:[#allocation0]]
  $region45: #{informer_forward.10} parent=0
    _
  %s6 = ssub.s32 1, %s4
  %s7 = scalar_select 0, %s6, %s4
  loop: start=0, step=1, limit=4
  $region2: #{informer_forward.10} parent=0 // loop_pre_header
    _
  $region3: #{informer_forward.10} parent=0 // loop_header
    %s9 = sphi 0, %s13
    %p10 = scmp.ge.s32.totalorder %s9, 4
    %s19 = sphi 0, %s21
    %s22 = sphi 0, %s19
    %s23 = sphi 0, %s22
    %s39 = sphi 0, %s23
    %s43 = sphi 0, %s43
    %s45 = sphi 0, %s43
    %s46 = sphi 0, %s45
    %s60 = sphi 0, %s46
    %s64 = sphi 0, %s64
    %s66 = sphi 0, %s64
    %s67 = sphi 0, %s66
    %s81 = sphi 0, %s67
    %s87 = sphi 0, %s89
    %s90 = sphi 0, %s87
    %s91 = sphi 0, %s90
    %s107 = sphi 0, %s91
  $region4: #{informer_forward.10} parent=0 // loop_header_branch
    %12 = sbr.rel (%p10) target = $region8
  $region5: #{informer_forward.10} parent=0 // loop_body
    %s14 = ssub.s32 %s9, 1
    %s15 = ssub.s32 %s9, 2
    %s16 = sadd.s32 %s9, 1
    %s17 = ssub.s32 %s9, %s16
    %p18 = scmp.eq.s32.totalorder %s17, 0
    %s20 = sadd.s32 %s19, 1
    %s21 = scalar_select %p18, %s19, %s20
    %p24 = pneg %p18
    %p25 = scmp.eq.s32.totalorder %s9, 1
    %p26 = por %p24, %p25
    %p27 = scmp.ne.s32.totalorder %s19, %s22
    %p28 = scmp.eq.s32.totalorder %s9, 0
    %p29 = por %p27, %p28
    %p30 = scmp.ne.s32.totalorder %s19, %s22
    %p31 = scmp.eq.s32.totalorder %s14, 1
    %p32 = por %p30, %p31
    %p33 = scmp.ne.s32.totalorder %s22, %s23
    %p34 = scmp.eq.s32.totalorder %s14, 0
    %p35 = por %p33, %p34
    %p36 = scmp.ne.s32.totalorder %s22, %s23
    %p37 = scmp.eq.s32.totalorder %s15, 1
    %p38 = por %p36, %p37
    %p40 = scmp.ne.s32.totalorder %s23, %s39
    %p41 = scmp.eq.s32.totalorder %s15, 0
    %p42 = por %p40, %p41
    %s44 = sadd.s32 %s43, 1
    %p47 = scmp.eq.s32.totalorder %s9, 1
    %p48 = scmp.ne.s32.totalorder %s43, %s45
    %p49 = scmp.eq.s32.totalorder %s9, 0
    %p50 = por %p48, %p49
    %p51 = scmp.ne.s32.totalorder %s43, %s45
    %p52 = scmp.eq.s32.totalorder %s14, 1
    %p53 = por %p51, %p52
    %p54 = scmp.ne.s32.totalorder %s45, %s46
    %p55 = scmp.eq.s32.totalorder %s14, 0
    %p56 = por %p54, %p55
    %p57 = scmp.ne.s32.totalorder %s45, %s46
    %p58 = scmp.eq.s32.totalorder %s15, 1
    %p59 = por %p57, %p58
    %p61 = scmp.ne.s32.totalorder %s46, %s60
    %p62 = scmp.eq.s32.totalorder %s15, 0
    %p63 = por %p61, %p62
    %s65 = sadd.s32 %s64, 1
    %p68 = scmp.eq.s32.totalorder %s9, 1
    %p69 = scmp.ne.s32.totalorder %s64, %s66
    %p70 = scmp.eq.s32.totalorder %s9, 0
    %p71 = por %p69, %p70
    %p72 = scmp.ne.s32.totalorder %s64, %s66
    %p73 = scmp.eq.s32.totalorder %s14, 1
    %p74 = por %p72, %p73
    %p75 = scmp.ne.s32.totalorder %s66, %s67
    %p76 = scmp.eq.s32.totalorder %s14, 0
    %p77 = por %p75, %p76
    %p78 = scmp.ne.s32.totalorder %s66, %s67
    %p79 = scmp.eq.s32.totalorder %s15, 1
    %p80 = por %p78, %p79
    %p82 = scmp.ne.s32.totalorder %s67, %s81
    %p83 = scmp.eq.s32.totalorder %s15, 0
    %p84 = por %p82, %p83
    %s85 = ssub.s32 %s9, %s16
    %p86 = scmp.eq.s32.totalorder %s85, 0
    %s88 = sadd.s32 %s87, 1
    %s89 = scalar_select %p86, %s87, %s88
    %p92 = pneg %p86
    %p93 = scmp.eq.s32.totalorder %s9, 1
    %p94 = por %p92, %p93
    %p95 = scmp.ne.s32.totalorder %s87, %s90
    %p96 = scmp.eq.s32.totalorder %s9, 0
    %p97 = por %p95, %p96
    %p98 = scmp.ne.s32.totalorder %s87, %s90
    %p99 = scmp.eq.s32.totalorder %s14, 1
    %p100 = por %p98, %p99
    %p101 = scmp.ne.s32.totalorder %s90, %s91
    %p102 = scmp.eq.s32.totalorder %s14, 0
    %p103 = por %p101, %p102
    %p104 = scmp.ne.s32.totalorder %s90, %s91
    %p105 = scmp.eq.s32.totalorder %s15, 1
    %p106 = por %p104, %p105
    %p108 = scmp.ne.s32.totalorder %s91, %s107
    %p109 = scmp.eq.s32.totalorder %s15, 0
    %p110 = por %p108, %p109
    %p111 = scmp.le.s32.totalorder 1, %s9
    %p112 = scmp.lt.s32.totalorder %s9, 3
    %p113 = pnand %p111, %p112
    %p114 = pneg %p113
    // Predicated region
    $region9: #{informer_forward.10} parent=5 // pred_check
      _
    $region10: #{informer_forward.10} parent=5 // pred_check_branch
      %116 = sbr.rel (%p113) target = $region12
    $region11: #{informer_forward.10} parent=5 // pred_region
      %s117 = ssub.s32 %s9, 1
      // Predicated region
      $region13: #{informer_forward.10} parent=11 // pred_check
        %p118 = pneg %p56
      $region14: #{informer_forward.10} parent=11 // pred_check_branch
        %120 = sbr.rel (%p118) target = $region16
      $region15: #{informer_forward.10} parent=11 // pred_region
        _
      $region16: #{informer_forward.10} parent=11 // pred_fallthru
        _
      // Predicated region
      $region17: #{informer_forward.10} parent=11 // pred_check
        %p121 = pneg %p77
      $region18: #{informer_forward.10} parent=11 // pred_check_branch
        %123 = sbr.rel (%p121) target = $region20
      $region19: #{informer_forward.10} parent=11 // pred_region
        _
      $region20: #{informer_forward.10} parent=11 // pred_fallthru
        _
    $region12: #{informer_forward.10} parent=5 // pred_fallthru
      _
    %p124 = scmp.lt.s32.totalorder %s9, 2
    // Predicated region
    $region21: #{informer_forward.10} parent=5 // pred_check
      %p125 = pneg %p124
    $region22: #{informer_forward.10} parent=5 // pred_check_branch
      %127 = sbr.rel (%p125) target = $region24
    $region23: #{informer_forward.10} parent=5 // pred_region
      // Predicated region
      $region25: #{informer_forward.10} parent=23 // pred_check
        %p128 = pneg %p29
      $region26: #{informer_forward.10} parent=23 // pred_check_branch
        %130 = sbr.rel (%p128) target = $region28
      $region27: #{informer_forward.10} parent=23 // pred_region
        %p131 = scmp.lt.s32.totalorder %s9, 1
        %s132 = scalar_select %p131, %s9, 1
        %s133 = smul.addr %s132, 2
        %s134 = smul.addr %s133, 8
        %s135 = scalar_lea.vmem %s0, %s134
      $region28: #{informer_forward.10} parent=23 // pred_fallthru
        _
    $region24: #{informer_forward.10} parent=5 // pred_fallthru
      _
    %p136 = scmp.le.s32.totalorder 1, %s9
    %p137 = scmp.lt.s32.totalorder %s9, 3
    %p138 = pnand %p136, %p137
    %p139 = pneg %p138
    // Predicated region
    $region29: #{informer_forward.10} parent=5 // pred_check
      _
    $region30: #{informer_forward.10} parent=5 // pred_check_branch
      %141 = sbr.rel (%p138) target = $region32
    $region31: #{informer_forward.10} parent=5 // pred_region
      %s142 = ssub.s32 %s9, 1
      %p143 = scmp.lt.s32.totalorder %s14, 1
      %s144 = scalar_select %p143, %s14, 1
      %s145 = smul.addr %s144, 2
      %s146 = smul.addr %s145, 8
      %s147 = scalar_lea.vmem %s0, %s146
      %p148 = pneg %p35
      %p149 = pneg %p32
      %p150 = pneg %p56
      %p151 = pneg %p53
      %p152 = pneg %p77
      %p153 = pneg %p74
      %p154 = pneg %p103
      %p155 = pneg %p100
      %p156 = scmp.lt.s32.totalorder %s14, 1
      %s157 = scalar_select %p156, %s14, 1
      %s158 = smul.addr %s157, 8
      %s159 = scalar_lea.vmem %s3, %s158
      %p160 = scmp.lt.s32.totalorder %s14, 1
      %s161 = scalar_select %p160, %s14, 1
      %s162 = smul.addr %s161, 2
      %s163 = smul.addr %s162, 8
      %s164 = scalar_lea.vmem %s0, %s163
      %p165 = scmp.lt.s32.totalorder %s14, 1
      %s166 = scalar_select %p165, %s14, 1
      %s167 = smul.addr %s166, 8
      %s168 = scalar_lea.vmem %s3, %s167
      %v170 = vld [vmem:[%s164] sm:$0xff]
      %v171 = vld [vmem:[%s164 + $0x8] sm:$0xf]
      %v172 = vlaneseq
      %v173 = vshrl.u32 %v172, 7
      %v174 = vadd.s32 %v173, 8
      %v175 = vlaneseq
      %v176 = vand.u32 %v175, 127
      %v177 = vsub.s32 %v173, 1
      %v178 = vsub.s32 %v174, 1
      %vm179 = vcmp.eq.s32.totalorder %v176, %v177
      %vm180 = vcmp.eq.s32.totalorder %v176, %v178
      %vm181 = vcmp.eq.s32.totalorder %v173, 0
      %vm182 = vcmp.eq.s32.totalorder %v174, 0
      %vm183 = vcmp.eq.s32.totalorder %v176, 11
      %vm184 = vmand %vm181, %vm183
      %vm185 = vmand %vm182, %vm183
      %vm186 = vmor %vm179, %vm184
      %vm187 = vmor %vm180, %vm185
      %v188 = vsel %vm186, 1.0, 0.0
      %v189 = vsel %vm187, 1.0, 0.0
      %v190 = vadd.s32 %v173, 1
      %v191 = vadd.s32 %v174, 1
      %vm192 = vcmp.eq.s32.totalorder %v176, %v190
      %vm193 = vcmp.eq.s32.totalorder %v176, %v191
      %vm194 = vcmp.eq.s32.totalorder %v173, 11
      %vm195 = vcmp.eq.s32.totalorder %v174, 11
      %vm196 = vcmp.eq.s32.totalorder %v176, 0
      %vm197 = vmand %vm194, %vm196
      %vm198 = vmand %vm195, %vm196
      %vm199 = vmor %vm192, %vm197
      %vm200 = vmor %vm193, %vm198
      %v201 = vsel %vm199, 1.0, 0.0
      %v202 = vsel %vm200, 1.0, 0.0
      %vm203 = vcmask 97280
      %v205 = vsel %vm203, %v188, 0
      %v208 = vsel %vm203, %v189, 0
      %vm210 = vcmask 1043456
      %v212 = vsel %vm210, %v171, 0
      %214 = vmatprep.subr.mxu0 0.0
      %215 = vmatpush1.msra.mxu0 0.0
      %216 = vmatprep.subr.mxu0 0.0
      %217 = vmatpush1.msra.mxu0 0.0
      %218 = vmatprep.subr.mxu0 0.0
      %219 = vmatpush1.msra.mxu0 0.0
      %220 = vmatprep.subr.mxu0 0.0
      %221 = vmatpush1.msra.mxu0 0.0
      %222 = vmatprep.subr.mxu0 0.0
      %223 = vmatpush1.msra.mxu0 0.0
      %224 = vmatprep.subr.mxu0 0.0
      %225 = vmatpush1.msra.mxu0 0.0
      %226 = vmatprep.subr.mxu0 0.0
      %227 = vmatpush1.msra.mxu0 0.0
      %228 = vmatprep.subr.mxu0 0.0
      %229 = vmatpush1.msra.mxu0 0.0
      %230 = vmatprep.subr.mxu0 0.0
      %231 = vmatpush1.msra.mxu0 0.0
      %232 = vmatprep.subr.mxu0 0.0
      %233 = vmatpush1.msra.mxu0 0.0
      %234 = vmatprep.subr.mxu0 0.0
      %235 = vmatpush1.msra.mxu0 0.0
      %236 = vmatprep.subr.mxu0 0.0
      %237 = vmatpush1.msra.mxu0 0.0
      %238 = vmatprep.subr.mxu0 0.0
      %239 = vmatpush1.msra.mxu0 0.0
      %240 = vmatprep.subr.mxu0 0.0
      %241 = vmatpush1.msra.mxu0 0.0
      %242 = vmatprep.subr.mxu0 0.0
      %243 = vmatpush1.msra.mxu0 %v212
      %244 = vmatprep.subr.mxu0 0.0
      %245 = vmatpush1.msra.mxu0 %v170
      %246 = vmatprep.subr.mxu0 0.0
      %247 = vmatpush2.msra.mxu0 0.0
      %248 = vmatprep.subr.mxu0 0.0
      %249 = vmatpush2.msra.mxu0 0.0
      %250 = vmatprep.subr.mxu0 0.0
      %251 = vmatpush2.msra.mxu0 0.0
      %252 = vmatprep.subr.mxu0 0.0
      %253 = vmatpush2.msra.mxu0 0.0
      %254 = vmatprep.subr.mxu0 0.0
      %255 = vmatpush2.msra.mxu0 0.0
      %256 = vmatprep.subr.mxu0 0.0
      %257 = vmatpush2.msra.mxu0 0.0
      %258 = vmatprep.subr.mxu0 0.0
      %259 = vmatpush2.msra.mxu0 0.0
      %260 = vmatprep.subr.mxu0 0.0
      %261 = vmatpush2.msra.mxu0 0.0
      %262 = vmatprep.subr.mxu0 0.0
      %263 = vmatpush2.msra.mxu0 0.0
      %264 = vmatprep.subr.mxu0 0.0
      %265 = vmatpush2.msra.mxu0 0.0
      %266 = vmatprep.subr.mxu0 0.0
      %267 = vmatpush2.msra.mxu0 0.0
      %268 = vmatprep.subr.mxu0 0.0
      %269 = vmatpush2.msra.mxu0 0.0
      %270 = vmatprep.subr.mxu0 0.0
      %271 = vmatpush2.msra.mxu0 0.0
      %272 = vmatprep.subr.mxu0 0.0
      %273 = vmatpush2.msra.mxu0 0.0
      %274 = vmatprep.subr.mxu0 0.0
      %275 = vmatpush2.msra.mxu0 0.0
      %276 = vmatprep.subr.mxu0 0.0
      %277 = vmatpush2.msra.mxu0 0.0
      %278 = vmatprep.mubr.f32.mxu0 0.0
      %279 = vmatmul.mubr.f32.gmra.mxu0 %v205
      %v280 = vpop.f32.mrf.mxu0
      %v281 = vadd.f32 0.0, %v280
      %v282 = vpop.f32.mrf.mxu0
      %283 = vmatprep.mubr.f32.mxu0 0.0
      %284 = vmatmul.mubr.f32.gmra.mxu0 %v208
      %v285 = vpop.f32.mrf.mxu0
      %v286 = vadd.f32 0.0, %v285
      %v287 = vpop.f32.mrf.mxu0
      %288 = vdwg.mxu0
      %v290 = vsel %vm203, %v201, 0
      %v293 = vsel %vm203, %v202, 0
      %295 = vmatprep.subr.mxu0 0.0
      %296 = vmatpush1.msra.mxu0 0.0
      %297 = vmatprep.subr.mxu0 0.0
      %298 = vmatpush1.msra.mxu0 0.0
      %299 = vmatprep.subr.mxu0 0.0
      %300 = vmatpush1.msra.mxu0 0.0
      %301 = vmatprep.subr.mxu0 0.0
      %302 = vmatpush1.msra.mxu0 0.0
      %303 = vmatprep.subr.mxu0 0.0
      %304 = vmatpush1.msra.mxu0 0.0
      %305 = vmatprep.subr.mxu0 0.0
      %306 = vmatpush1.msra.mxu0 0.0
      %307 = vmatprep.subr.mxu0 0.0
      %308 = vmatpush1.msra.mxu0 0.0
      %309 = vmatprep.subr.mxu0 0.0
      %310 = vmatpush1.msra.mxu0 0.0
      %311 = vmatprep.subr.mxu0 0.0
      %312 = vmatpush1.msra.mxu0 0.0
      %313 = vmatprep.subr.mxu0 0.0
      %314 = vmatpush1.msra.mxu0 0.0
      %315 = vmatprep.subr.mxu0 0.0
      %316 = vmatpush1.msra.mxu0 0.0
      %317 = vmatprep.subr.mxu0 0.0
      %318 = vmatpush1.msra.mxu0 0.0
      %319 = vmatprep.subr.mxu0 0.0
      %320 = vmatpush1.msra.mxu0 0.0
      %321 = vmatprep.subr.mxu0 0.0
      %322 = vmatpush1.msra.mxu0 0.0
      %323 = vmatprep.subr.mxu0 0.0
      %324 = vmatpush1.msra.mxu0 %v212
      %325 = vmatprep.subr.mxu0 0.0
      %326 = vmatpush1.msra.mxu0 %v170
      %327 = vmatprep.subr.mxu0 0.0
      %328 = vmatpush2.msra.mxu0 0.0
      %329 = vmatprep.subr.mxu0 0.0
      %330 = vmatpush2.msra.mxu0 0.0
      %331 = vmatprep.subr.mxu0 0.0
      %332 = vmatpush2.msra.mxu0 0.0
      %333 = vmatprep.subr.mxu0 0.0
      %334 = vmatpush2.msra.mxu0 0.0
      %335 = vmatprep.subr.mxu0 0.0
      %336 = vmatpush2.msra.mxu0 0.0
      %337 = vmatprep.subr.mxu0 0.0
      %338 = vmatpush2.msra.mxu0 0.0
      %339 = vmatprep.subr.mxu0 0.0
      %340 = vmatpush2.msra.mxu0 0.0
      %341 = vmatprep.subr.mxu0 0.0
      %342 = vmatpush2.msra.mxu0 0.0
      %343 = vmatprep.subr.mxu0 0.0
      %344 = vmatpush2.msra.mxu0 0.0
      %345 = vmatprep.subr.mxu0 0.0
      %346 = vmatpush2.msra.mxu0 0.0
      %347 = vmatprep.subr.mxu0 0.0
      %348 = vmatpush2.msra.mxu0 0.0
      %349 = vmatprep.subr.mxu0 0.0
      %350 = vmatpush2.msra.mxu0 0.0
      %351 = vmatprep.subr.mxu0 0.0
      %352 = vmatpush2.msra.mxu0 0.0
      %353 = vmatprep.subr.mxu0 0.0
      %354 = vmatpush2.msra.mxu0 0.0
      %355 = vmatprep.subr.mxu0 0.0
      %356 = vmatpush2.msra.mxu0 0.0
      %357 = vmatprep.subr.mxu0 0.0
      %358 = vmatpush2.msra.mxu0 0.0
      %359 = vmatprep.mubr.f32.mxu0 0.0
      %360 = vmatmul.mubr.f32.gmra.mxu0 %v290
      %v361 = vpop.f32.mrf.mxu0
      %v362 = vadd.f32 0.0, %v361
      %v363 = vpop.f32.mrf.mxu0
      %364 = vmatprep.mubr.f32.mxu0 0.0
      %365 = vmatmul.mubr.f32.gmra.mxu0 %v293
      %v366 = vpop.f32.mrf.mxu0
      %v367 = vadd.f32 0.0, %v366
      %v368 = vpop.f32.mrf.mxu0
      %369 = vdwg.mxu0
      %v370 = vld [vmem:[%s1] sm:$0xf]
      %v371 = vld [vmem:[%s1 + $0x4] sm:$0xf]
      %v372 = vld [vmem:[%s1 + $0x8] sm:$0xf]
      %v373 = vld [vmem:[%s1 + $0xc] sm:$0xf]
      %v374 = vpack.c.bf16 %v286, %v281
      %s375 = scalar_lea.vmem %s1, 16
      %v376 = vld [vmem:[%s375] sm:$0xf]
      %v377 = vld [vmem:[%s375 + $0x4] sm:$0xf]
      %v378 = vld [vmem:[%s375 + $0x8] sm:$0xf]
      %v379 = vld [vmem:[%s375 + $0xc] sm:$0xf]
      %v380 = vpack.c.bf16 %v171, %v170
      %v385 = vunpack.c.l.b16 %v376
      %v386 = vunpack.c.l.b16 %v377
      %v387 = vunpack.c.l.b16 %v378
      %v388 = vunpack.c.l.b16 %v379
      %v389 = vpack.c.b16 %v386, %v385
      %v390 = vpack.c.b16 %v388, %v387
      %vm393 = vcmask 261120
      %v395 = vsel %vm393, %v380, 0
      %397 = vmatprep.subr.bf16.mxu0 0
      %398 = vmatpush1.bf16.msra.mxu0 0
      %399 = vmatprep.subr.bf16.mxu0 0
      %400 = vmatpush1.bf16.msra.mxu0 0
      %401 = vmatprep.subr.bf16.mxu0 0
      %402 = vmatpush1.bf16.msra.mxu0 0
      %403 = vmatprep.subr.bf16.mxu0 0
      %404 = vmatpush1.bf16.msra.mxu0 0
      %405 = vmatprep.subr.bf16.mxu0 0
      %406 = vmatpush1.bf16.msra.mxu0 0
      %407 = vmatprep.subr.bf16.mxu0 0
      %408 = vmatpush1.bf16.msra.mxu0 0
      %409 = vmatprep.subr.bf16.mxu0 0
      %410 = vmatpush1.bf16.msra.mxu0 %v390
      %411 = vmatprep.subr.bf16.mxu0 0
      %412 = vmatpush1.bf16.msra.mxu0 %v389
      %413 = vmatprep.subr.bf16.mxu0 0
      %414 = vmatpush2.bf16.msra.mxu0 0
      %415 = vmatprep.subr.bf16.mxu0 0
      %416 = vmatpush2.bf16.msra.mxu0 0
      %417 = vmatprep.subr.bf16.mxu0 0
      %418 = vmatpush2.bf16.msra.mxu0 0
      %419 = vmatprep.subr.bf16.mxu0 0
      %420 = vmatpush2.bf16.msra.mxu0 0
      %421 = vmatprep.subr.bf16.mxu0 0
      %422 = vmatpush2.bf16.msra.mxu0 0
      %423 = vmatprep.subr.bf16.mxu0 0
      %424 = vmatpush2.bf16.msra.mxu0 0
      %425 = vmatprep.subr.bf16.mxu0 0
      %426 = vmatpush2.bf16.msra.mxu0 0
      %427 = vmatprep.subr.bf16.mxu0 0
      %428 = vmatpush2.bf16.msra.mxu0 0
      %429 = vmatprep.mubr.bf16.mxu0 0
      %430 = vmatmul.mubr.bf16.gmra.mxu0 %v395
      %v431 = vpop.f32.mrf.mxu0
      %v432 = vadd.f32 0.0, %v431
      %v433 = vpop.f32.mrf.mxu0
      %v434 = vpop.f32.mrf.mxu0
      %v435 = vadd.f32 0.0, %v434
      %v436 = vpop.f32.mrf.mxu0
      %437 = vdwg.mxu0
      %v442 = vunpack.c.l.b16 %v370
      %v443 = vunpack.c.l.b16 %v371
      %v444 = vunpack.c.l.b16 %v372
      %v445 = vunpack.c.l.b16 %v373
      %v446 = vpack.c.b16 %v443, %v442
      %v447 = vpack.c.b16 %v445, %v444
      %v451 = vsel %vm393, %v374, 0
      %453 = vmatprep.subr.bf16.mxu0 0
      %454 = vmatpush1.bf16.msra.mxu0 0
      %455 = vmatprep.subr.bf16.mxu0 0
      %456 = vmatpush1.bf16.msra.mxu0 0
      %457 = vmatprep.subr.bf16.mxu0 0
      %458 = vmatpush1.bf16.msra.mxu0 0
      %459 = vmatprep.subr.bf16.mxu0 0
      %460 = vmatpush1.bf16.msra.mxu0 0
      %461 = vmatprep.subr.bf16.mxu0 0
      %462 = vmatpush1.bf16.msra.mxu0 0
      %463 = vmatprep.subr.bf16.mxu0 0
      %464 = vmatpush1.bf16.msra.mxu0 0
      %465 = vmatprep.subr.bf16.mxu0 0
      %466 = vmatpush1.bf16.msra.mxu0 %v447
      %467 = vmatprep.subr.bf16.mxu0 0
      %468 = vmatpush1.bf16.msra.mxu0 %v446
      %469 = vmatprep.subr.bf16.mxu0 0
      %470 = vmatpush2.bf16.msra.mxu0 0
      %471 = vmatprep.subr.bf16.mxu0 0
      %472 = vmatpush2.bf16.msra.mxu0 0
      %473 = vmatprep.subr.bf16.mxu0 0
      %474 = vmatpush2.bf16.msra.mxu0 0
      %475 = vmatprep.subr.bf16.mxu0 0
      %476 = vmatpush2.bf16.msra.mxu0 0
      %477 = vmatprep.subr.bf16.mxu0 0
      %478 = vmatpush2.bf16.msra.mxu0 0
      %479 = vmatprep.subr.bf16.mxu0 0
      %480 = vmatpush2.bf16.msra.mxu0 0
      %481 = vmatprep.subr.bf16.mxu0 0
      %482 = vmatpush2.bf16.msra.mxu0 0
      %483 = vmatprep.subr.bf16.mxu0 0
      %484 = vmatpush2.bf16.msra.mxu0 0
      %485 = vmatprep.mubr.bf16.mxu0 0
      %486 = vmatmul.mubr.bf16.gmra.mxu0 %v451
      %v487 = vpop.f32.mrf.mxu0
      %v488 = vadd.f32 %v432, %v487
      %v489 = vpop.f32.mrf.mxu0
      %v490 = vpop.f32.mrf.mxu0
      %v491 = vadd.f32 %v435, %v490
      %v492 = vpop.f32.mrf.mxu0
      %493 = vdwg.mxu0
      %s494 = scalar_lea.vmem %s1, 32
      %v495 = vld [vmem:[%s494] sm:$0xf]
      %v496 = vld [vmem:[%s494 + $0x4] sm:$0xf]
      %v497 = vld [vmem:[%s494 + $0x8] sm:$0xf]
      %v498 = vld [vmem:[%s494 + $0xc] sm:$0xf]
      %v499 = vpack.c.bf16 %v367, %v362
      %v504 = vunpack.c.l.b16 %v495
      %v505 = vunpack.c.l.b16 %v496
      %v506 = vunpack.c.l.b16 %v497
      %v507 = vunpack.c.l.b16 %v498
      %v508 = vpack.c.b16 %v505, %v504
      %v509 = vpack.c.b16 %v507, %v506
      %v513 = vsel %vm393, %v499, 0
      %515 = vmatprep.subr.bf16.mxu0 0
      %516 = vmatpush1.bf16.msra.mxu0 0
      %517 = vmatprep.subr.bf16.mxu0 0
      %518 = vmatpush1.bf16.msra.mxu0 0
      %519 = vmatprep.subr.bf16.mxu0 0
      %520 = vmatpush1.bf16.msra.mxu0 0
      %521 = vmatprep.subr.bf16.mxu0 0
      %522 = vmatpush1.bf16.msra.mxu0 0
      %523 = vmatprep.subr.bf16.mxu0 0
      %524 = vmatpush1.bf16.msra.mxu0 0
      %525 = vmatprep.subr.bf16.mxu0 0
      %526 = vmatpush1.bf16.msra.mxu0 0
      %527 = vmatprep.subr.bf16.mxu0 0
      %528 = vmatpush1.bf16.msra.mxu0 %v509
      %529 = vmatprep.subr.bf16.mxu0 0
      %530 = vmatpush1.bf16.msra.mxu0 %v508
      %531 = vmatprep.subr.bf16.mxu0 0
      %532 = vmatpush2.bf16.msra.mxu0 0
      %533 = vmatprep.subr.bf16.mxu0 0
      %534 = vmatpush2.bf16.msra.mxu0 0
      %535 = vmatprep.subr.bf16.mxu0 0
      %536 = vmatpush2.bf16.msra.mxu0 0
      %537 = vmatprep.subr.bf16.mxu0 0
      %538 = vmatpush2.bf16.msra.mxu0 0
      %539 = vmatprep.subr.bf16.mxu0 0
      %540 = vmatpush2.bf16.msra.mxu0 0
      %541 = vmatprep.subr.bf16.mxu0 0
      %542 = vmatpush2.bf16.msra.mxu0 0
      %543 = vmatprep.subr.bf16.mxu0 0
      %544 = vmatpush2.bf16.msra.mxu0 0
      %545 = vmatprep.subr.bf16.mxu0 0
      %546 = vmatpush2.bf16.msra.mxu0 0
      %547 = vmatprep.mubr.bf16.mxu0 0
      %548 = vmatmul.mubr.bf16.gmra.mxu0 %v513
      %v549 = vpop.f32.mrf.mxu0
      %v550 = vadd.f32 0.0, %v549
      %v551 = vpop.f32.mrf.mxu0
      %v552 = vpop.f32.mrf.mxu0
      %v553 = vadd.f32 0.0, %v552
      %v554 = vpop.f32.mrf.mxu0
      %555 = vdwg.mxu0
      %v556 = vadd.f32 %v488, %v550
      %v557 = vadd.f32 %v491, %v553
      %v558 = vld [vmem:[%s2] sm:$0x1]
      %v560 = vlaneseq
      %v561 = vshrl.u32 %v560, 7
      %v562 = vsub.s32 0, %v561
      %v563 = vrot.slane %v558, %v562
      %v565 = vadd.f32 %v556, %v563
      %v566 = vadd.f32 %v557, %v563
      %v567 = vmul.f32 %v565, 0.999995
      %v568 = vmul.f32 %v566, 0.999995
      %vm569 = vcmp.gt.f32.partialorder %v567, 0.0
      %vm570 = vcmp.gt.f32.partialorder %v568, 0.0
      %v571 = vmul.f32 %v567, 1.442695
      %v572 = vpow.pop %v571
      %v573 = vmul.f32 %v568, 1.442695
      %v574 = vpow.pop %v573
      %v575 = vsub.f32 %v572, 1.0
      %v576 = vsub.f32 %v574, 1.0
      %v577 = vsel %vm569, %v567, %v575
      %v578 = vsel %vm570, %v568, %v576
      %v579 = vmul.u32 %v173, 2
      %v580 = vsub.s32 %v579, 1
      %vm581 = vcmp.gt.s32.totalorder %v580, 0
      %v582 = vsel %vm581, %v580, 0
      %vm583 = vcmp.eq.s32.totalorder %v176, %v582
      %v584 = vsel %vm583, 1.0, 0.0
      %vm585 = vcmp.eq.s32.totalorder %v176, %v579
      %v586 = vsel %vm585, 1.0, 0.0
      %v587 = vadd.s32 %v579, 1
      %vm588 = vcmp.lt.s32.totalorder %v587, 11
      %v589 = vsel %vm588, %v587, 11
      %vm590 = vcmp.eq.s32.totalorder %v176, %v589
      %v591 = vsel %vm590, 1.0, 0.0
      %v593 = vsel %vm203, %v584, 0
      %v596 = vsel %vm210, %v578, 0
      %598 = vmatprep.subr.mxu0 0.0
      %599 = vmatpush1.msra.mxu0 0.0
      %600 = vmatprep.subr.mxu0 0.0
      %601 = vmatpush1.msra.mxu0 0.0
      %602 = vmatprep.subr.mxu0 0.0
      %603 = vmatpush1.msra.mxu0 0.0
      %604 = vmatprep.subr.mxu0 0.0
      %605 = vmatpush1.msra.mxu0 0.0
      %606 = vmatprep.subr.mxu0 0.0
      %607 = vmatpush1.msra.mxu0 0.0
      %608 = vmatprep.subr.mxu0 0.0
      %609 = vmatpush1.msra.mxu0 0.0
      %610 = vmatprep.subr.mxu0 0.0
      %611 = vmatpush1.msra.mxu0 0.0
      %612 = vmatprep.subr.mxu0 0.0
      %613 = vmatpush1.msra.mxu0 0.0
      %614 = vmatprep.subr.mxu0 0.0
      %615 = vmatpush1.msra.mxu0 0.0
      %616 = vmatprep.subr.mxu0 0.0
      %617 = vmatpush1.msra.mxu0 0.0
      %618 = vmatprep.subr.mxu0 0.0
      %619 = vmatpush1.msra.mxu0 0.0
      %620 = vmatprep.subr.mxu0 0.0
      %621 = vmatpush1.msra.mxu0 0.0
      %622 = vmatprep.subr.mxu0 0.0
      %623 = vmatpush1.msra.mxu0 0.0
      %624 = vmatprep.subr.mxu0 0.0
      %625 = vmatpush1.msra.mxu0 0.0
      %626 = vmatprep.subr.mxu0 0.0
      %627 = vmatpush1.msra.mxu0 %v596
      %628 = vmatprep.subr.mxu0 0.0
      %629 = vmatpush1.msra.mxu0 %v577
      %630 = vmatprep.subr.mxu0 0.0
      %631 = vmatpush2.msra.mxu0 0.0
      %632 = vmatprep.subr.mxu0 0.0
      %633 = vmatpush2.msra.mxu0 0.0
      %634 = vmatprep.subr.mxu0 0.0
      %635 = vmatpush2.msra.mxu0 0.0
      %636 = vmatprep.subr.mxu0 0.0
      %637 = vmatpush2.msra.mxu0 0.0
      %638 = vmatprep.subr.mxu0 0.0
      %639 = vmatpush2.msra.mxu0 0.0
      %640 = vmatprep.subr.mxu0 0.0
      %641 = vmatpush2.msra.mxu0 0.0
      %642 = vmatprep.subr.mxu0 0.0
      %643 = vmatpush2.msra.mxu0 0.0
      %644 = vmatprep.subr.mxu0 0.0
      %645 = vmatpush2.msra.mxu0 0.0
      %646 = vmatprep.subr.mxu0 0.0
      %647 = vmatpush2.msra.mxu0 0.0
      %648 = vmatprep.subr.mxu0 0.0
      %649 = vmatpush2.msra.mxu0 0.0
      %650 = vmatprep.subr.mxu0 0.0
      %651 = vmatpush2.msra.mxu0 0.0
      %652 = vmatprep.subr.mxu0 0.0
      %653 = vmatpush2.msra.mxu0 0.0
      %654 = vmatprep.subr.mxu0 0.0
      %655 = vmatpush2.msra.mxu0 0.0
      %656 = vmatprep.subr.mxu0 0.0
      %657 = vmatpush2.msra.mxu0 0.0
      %658 = vmatprep.subr.mxu0 0.0
      %659 = vmatpush2.msra.mxu0 0.0
      %660 = vmatprep.subr.mxu0 0.0
      %661 = vmatpush2.msra.mxu0 0.0
      %662 = vmatprep.mubr.f32.mxu0 0.0
      %663 = vmatmul.mubr.f32.gmra.mxu0 %v593
      %v664 = vpop.f32.mrf.mxu0
      %v665 = vadd.f32 0.0, %v664
      %v666 = vpop.f32.mrf.mxu0
      %667 = vdwg.mxu0
      %v669 = vsel %vm203, %v586, 0
      %671 = vmatprep.subr.mxu0 0.0
      %672 = vmatpush1.msra.mxu0 0.0
      %673 = vmatprep.subr.mxu0 0.0
      %674 = vmatpush1.msra.mxu0 0.0
      %675 = vmatprep.subr.mxu0 0.0
      %676 = vmatpush1.msra.mxu0 0.0
      %677 = vmatprep.subr.mxu0 0.0
      %678 = vmatpush1.msra.mxu0 0.0
      %679 = vmatprep.subr.mxu0 0.0
      %680 = vmatpush1.msra.mxu0 0.0
      %681 = vmatprep.subr.mxu0 0.0
      %682 = vmatpush1.msra.mxu0 0.0
      %683 = vmatprep.subr.mxu0 0.0
      %684 = vmatpush1.msra.mxu0 0.0
      %685 = vmatprep.subr.mxu0 0.0
      %686 = vmatpush1.msra.mxu0 0.0
      %687 = vmatprep.subr.mxu0 0.0
      %688 = vmatpush1.msra.mxu0 0.0
      %689 = vmatprep.subr.mxu0 0.0
      %690 = vmatpush1.msra.mxu0 0.0
      %691 = vmatprep.subr.mxu0 0.0
      %692 = vmatpush1.msra.mxu0 0.0
      %693 = vmatprep.subr.mxu0 0.0
      %694 = vmatpush1.msra.mxu0 0.0
      %695 = vmatprep.subr.mxu0 0.0
      %696 = vmatpush1.msra.mxu0 0.0
      %697 = vmatprep.subr.mxu0 0.0
      %698 = vmatpush1.msra.mxu0 0.0
      %699 = vmatprep.subr.mxu0 0.0
      %700 = vmatpush1.msra.mxu0 %v596
      %701 = vmatprep.subr.mxu0 0.0
      %702 = vmatpush1.msra.mxu0 %v577
      %703 = vmatprep.subr.mxu0 0.0
      %704 = vmatpush2.msra.mxu0 0.0
      %705 = vmatprep.subr.mxu0 0.0
      %706 = vmatpush2.msra.mxu0 0.0
      %707 = vmatprep.subr.mxu0 0.0
      %708 = vmatpush2.msra.mxu0 0.0
      %709 = vmatprep.subr.mxu0 0.0
      %710 = vmatpush2.msra.mxu0 0.0
      %711 = vmatprep.subr.mxu0 0.0
      %712 = vmatpush2.msra.mxu0 0.0
      %713 = vmatprep.subr.mxu0 0.0
      %714 = vmatpush2.msra.mxu0 0.0
      %715 = vmatprep.subr.mxu0 0.0
      %716 = vmatpush2.msra.mxu0 0.0
      %717 = vmatprep.subr.mxu0 0.0
      %718 = vmatpush2.msra.mxu0 0.0
      %719 = vmatprep.subr.mxu0 0.0
      %720 = vmatpush2.msra.mxu0 0.0
      %721 = vmatprep.subr.mxu0 0.0
      %722 = vmatpush2.msra.mxu0 0.0
      %723 = vmatprep.subr.mxu0 0.0
      %724 = vmatpush2.msra.mxu0 0.0
      %725 = vmatprep.subr.mxu0 0.0
      %726 = vmatpush2.msra.mxu0 0.0
      %727 = vmatprep.subr.mxu0 0.0
      %728 = vmatpush2.msra.mxu0 0.0
      %729 = vmatprep.subr.mxu0 0.0
      %730 = vmatpush2.msra.mxu0 0.0
      %731 = vmatprep.subr.mxu0 0.0
      %732 = vmatpush2.msra.mxu0 0.0
      %733 = vmatprep.subr.mxu0 0.0
      %734 = vmatpush2.msra.mxu0 0.0
      %735 = vmatprep.mubr.f32.mxu0 0.0
      %736 = vmatmul.mubr.f32.gmra.mxu0 %v669
      %v737 = vpop.f32.mrf.mxu0
      %v738 = vadd.f32 0.0, %v737
      %v739 = vpop.f32.mrf.mxu0
      %740 = vdwg.mxu0
      %v741 = vmax.f32 %v665, %v738
      %v743 = vsel %vm203, %v591, 0
      %745 = vmatprep.subr.mxu0 0.0
      %746 = vmatpush1.msra.mxu0 0.0
      %747 = vmatprep.subr.mxu0 0.0
      %748 = vmatpush1.msra.mxu0 0.0
      %749 = vmatprep.subr.mxu0 0.0
      %750 = vmatpush1.msra.mxu0 0.0
      %751 = vmatprep.subr.mxu0 0.0
      %752 = vmatpush1.msra.mxu0 0.0
      %753 = vmatprep.subr.mxu0 0.0
      %754 = vmatpush1.msra.mxu0 0.0
      %755 = vmatprep.subr.mxu0 0.0
      %756 = vmatpush1.msra.mxu0 0.0
      %757 = vmatprep.subr.mxu0 0.0
      %758 = vmatpush1.msra.mxu0 0.0
      %759 = vmatprep.subr.mxu0 0.0
      %760 = vmatpush1.msra.mxu0 0.0
      %761 = vmatprep.subr.mxu0 0.0
      %762 = vmatpush1.msra.mxu0 0.0
      %763 = vmatprep.subr.mxu0 0.0
      %764 = vmatpush1.msra.mxu0 0.0
      %765 = vmatprep.subr.mxu0 0.0
      %766 = vmatpush1.msra.mxu0 0.0
      %767 = vmatprep.subr.mxu0 0.0
      %768 = vmatpush1.msra.mxu0 0.0
      %769 = vmatprep.subr.mxu0 0.0
      %770 = vmatpush1.msra.mxu0 0.0
      %771 = vmatprep.subr.mxu0 0.0
      %772 = vmatpush1.msra.mxu0 0.0
      %773 = vmatprep.subr.mxu0 0.0
      %774 = vmatpush1.msra.mxu0 %v596
      %775 = vmatprep.subr.mxu0 0.0
      %776 = vmatpush1.msra.mxu0 %v577
      %777 = vmatprep.subr.mxu0 0.0
      %778 = vmatpush2.msra.mxu0 0.0
      %779 = vmatprep.subr.mxu0 0.0
      %780 = vmatpush2.msra.mxu0 0.0
      %781 = vmatprep.subr.mxu0 0.0
      %782 = vmatpush2.msra.mxu0 0.0
      %783 = vmatprep.subr.mxu0 0.0
      %784 = vmatpush2.msra.mxu0 0.0
      %785 = vmatprep.subr.mxu0 0.0
      %786 = vmatpush2.msra.mxu0 0.0
      %787 = vmatprep.subr.mxu0 0.0
      %788 = vmatpush2.msra.mxu0 0.0
      %789 = vmatprep.subr.mxu0 0.0
      %790 = vmatpush2.msra.mxu0 0.0
      %791 = vmatprep.subr.mxu0 0.0
      %792 = vmatpush2.msra.mxu0 0.0
      %793 = vmatprep.subr.mxu0 0.0
      %794 = vmatpush2.msra.mxu0 0.0
      %795 = vmatprep.subr.mxu0 0.0
      %796 = vmatpush2.msra.mxu0 0.0
      %797 = vmatprep.subr.mxu0 0.0
      %798 = vmatpush2.msra.mxu0 0.0
      %799 = vmatprep.subr.mxu0 0.0
      %800 = vmatpush2.msra.mxu0 0.0
      %801 = vmatprep.subr.mxu0 0.0
      %802 = vmatpush2.msra.mxu0 0.0
      %803 = vmatprep.subr.mxu0 0.0
      %804 = vmatpush2.msra.mxu0 0.0
      %805 = vmatprep.subr.mxu0 0.0
      %806 = vmatpush2.msra.mxu0 0.0
      %807 = vmatprep.subr.mxu0 0.0
      %808 = vmatpush2.msra.mxu0 0.0
      %809 = vmatprep.mubr.f32.mxu0 0.0
      %810 = vmatmul.mubr.f32.gmra.mxu0 %v743
      %v811 = vpop.f32.mrf.mxu0
      %v812 = vadd.f32 0.0, %v811
      %v813 = vpop.f32.mrf.mxu0
      %814 = vdwg.mxu0
      %v815 = vmax.f32 %v741, %v812
      %vm816 = vcmask 259072
      %817 = vst.msk [vmem:[%s168] sm:$0x3f] %vm816, %v815
      %p818 = scmp.lt.s32.totalorder %s14, 1
      %s819 = scalar_select %p818, %s14, 1
      %s820 = smul.addr %s819, 8
      %s821 = scalar_lea.vmem %s3, %s820
      // Predicated region
      $region33: #{informer_forward.10} parent=31 // pred_check
        %p822 = pneg %p100
      $region34: #{informer_forward.10} parent=31 // pred_check_branch
        %824 = sbr.rel (%p822) target = $region36
      $region35: #{informer_forward.10} parent=31 // pred_region
        _
      $region36: #{informer_forward.10} parent=31 // pred_fallthru
        _
    $region32: #{informer_forward.10} parent=5 // pred_fallthru
      _
    %p825 = scmp.le.s32.totalorder 2, %s9
    // Predicated region
    $region37: #{informer_forward.10} parent=5 // pred_check
      %p826 = pneg %p825
    $region38: #{informer_forward.10} parent=5 // pred_check_branch
      %828 = sbr.rel (%p826) target = $region40
    $region39: #{informer_forward.10} parent=5 // pred_region
      %s829 = ssub.s32 %s9, 2
      // Predicated region
      $region41: #{informer_forward.10} parent=39 // pred_check
        %p830 = pneg %p106
      $region42: #{informer_forward.10} parent=39 // pred_check_branch
        %832 = sbr.rel (%p830) target = $region44
      $region43: #{informer_forward.10} parent=39 // pred_region
        %p833 = scmp.lt.s32.totalorder %s15, 1
        %s834 = scalar_select %p833, %s15, 1
        %s835 = smul.addr %s834, 8
        %s836 = scalar_lea.vmem %s3, %s835
      $region44: #{informer_forward.10} parent=39 // pred_fallthru
        _
    $region40: #{informer_forward.10} parent=5 // pred_fallthru
      _
  $region6: #{informer_forward.10} parent=0 // loop_footer
    %s13 = sadd.s32 1, %s9
  $region7: #{informer_forward.10} parent=0 // loop_footer_branch
    %8 = sbr.rel target = $region3
  $region8: #{informer_forward.10} parent=0 // loop_exit
    _

// kernel: informer_forward.7
$region0: #{informer_forward.7}
  #allocation0 [shape = 'u32[]', space=smem, size = 0x4, offset = 0x4, fixed_abs, tag = 'smem constant byte address 0x4 - core index']
  #allocation1 [shape = 'u32[144,128]{1,0:T(1,128)}', space=vmem, size = 0x12000, scoped, tag = 'internal scratch']
  %s0 = inlined_call_operand.vmem [shape: f32[2,12,4], index: 0, kind: input, shape index: {}]
  %s1 = inlined_call_operand.vmem [shape: f32[2,12,4], index: 1, kind: input, shape index: {}]
  %s2 = inlined_call_operand.vmem [shape: f32[3,4,32], index: 2, kind: input, shape index: {}]
  %s3 = inlined_call_operand.vmem [shape: f32[4,32], index: 3, kind: input, shape index: {}]
  %s4 = inlined_call_operand.vmem [shape: f32[12,32], index: 4, kind: input, shape index: {}]
  %s5 = inlined_call_operand.vmem [shape: f32[2,12,32], index: 5, kind: output, shape index: {}]
  %s6 = sld [smem:[#allocation0]]
  $region53: #{informer_forward.7} parent=0
    _
  %s8 = ssub.s32 1, %s6
  %s9 = scalar_select 0, %s8, %s6
  loop: start=0, step=1, limit=4
  $region2: #{informer_forward.7} parent=0 // loop_pre_header
    _
  $region3: #{informer_forward.7} parent=0 // loop_header
    %s11 = sphi 0, %s15
    %p12 = scmp.ge.s32.totalorder %s11, 4
    %s21 = sphi 0, %s23
    %s24 = sphi 0, %s21
    %s25 = sphi 0, %s24
    %s41 = sphi 0, %s25
    %s47 = sphi 0, %s49
    %s50 = sphi 0, %s47
    %s51 = sphi 0, %s50
    %s67 = sphi 0, %s51
    %s71 = sphi 0, %s71
    %s73 = sphi 0, %s71
    %s74 = sphi 0, %s73
    %s88 = sphi 0, %s74
    %s92 = sphi 0, %s92
    %s94 = sphi 0, %s92
    %s95 = sphi 0, %s94
    %s109 = sphi 0, %s95
    %s113 = sphi 0, %s113
    %s115 = sphi 0, %s113
    %s116 = sphi 0, %s115
    %s130 = sphi 0, %s116
    %s136 = sphi 0, %s138
    %s139 = sphi 0, %s136
    %s140 = sphi 0, %s139
    %s156 = sphi 0, %s140
  $region4: #{informer_forward.7} parent=0 // loop_header_branch
    %14 = sbr.rel (%p12) target = $region8
  $region5: #{informer_forward.7} parent=0 // loop_body
    %s16 = ssub.s32 %s11, 1
    %s17 = ssub.s32 %s11, 2
    %s18 = sadd.s32 %s11, 1
    %s19 = ssub.s32 %s11, %s18
    %p20 = scmp.eq.s32.totalorder %s19, 0
    %s22 = sadd.s32 %s21, 1
    %s23 = scalar_select %p20, %s21, %s22
    %p26 = pneg %p20
    %p27 = scmp.eq.s32.totalorder %s11, 1
    %p28 = por %p26, %p27
    %p29 = scmp.ne.s32.totalorder %s21, %s24
    %p30 = scmp.eq.s32.totalorder %s11, 0
    %p31 = por %p29, %p30
    %p32 = scmp.ne.s32.totalorder %s21, %s24
    %p33 = scmp.eq.s32.totalorder %s16, 1
    %p34 = por %p32, %p33
    %p35 = scmp.ne.s32.totalorder %s24, %s25
    %p36 = scmp.eq.s32.totalorder %s16, 0
    %p37 = por %p35, %p36
    %p38 = scmp.ne.s32.totalorder %s24, %s25
    %p39 = scmp.eq.s32.totalorder %s17, 1
    %p40 = por %p38, %p39
    %p42 = scmp.ne.s32.totalorder %s25, %s41
    %p43 = scmp.eq.s32.totalorder %s17, 0
    %p44 = por %p42, %p43
    %s45 = ssub.s32 %s11, %s18
    %p46 = scmp.eq.s32.totalorder %s45, 0
    %s48 = sadd.s32 %s47, 1
    %s49 = scalar_select %p46, %s47, %s48
    %p52 = pneg %p46
    %p53 = scmp.eq.s32.totalorder %s11, 1
    %p54 = por %p52, %p53
    %p55 = scmp.ne.s32.totalorder %s47, %s50
    %p56 = scmp.eq.s32.totalorder %s11, 0
    %p57 = por %p55, %p56
    %p58 = scmp.ne.s32.totalorder %s47, %s50
    %p59 = scmp.eq.s32.totalorder %s16, 1
    %p60 = por %p58, %p59
    %p61 = scmp.ne.s32.totalorder %s50, %s51
    %p62 = scmp.eq.s32.totalorder %s16, 0
    %p63 = por %p61, %p62
    %p64 = scmp.ne.s32.totalorder %s50, %s51
    %p65 = scmp.eq.s32.totalorder %s17, 1
    %p66 = por %p64, %p65
    %p68 = scmp.ne.s32.totalorder %s51, %s67
    %p69 = scmp.eq.s32.totalorder %s17, 0
    %p70 = por %p68, %p69
    %s72 = sadd.s32 %s71, 1
    %p75 = scmp.eq.s32.totalorder %s11, 1
    %p76 = scmp.ne.s32.totalorder %s71, %s73
    %p77 = scmp.eq.s32.totalorder %s11, 0
    %p78 = por %p76, %p77
    %p79 = scmp.ne.s32.totalorder %s71, %s73
    %p80 = scmp.eq.s32.totalorder %s16, 1
    %p81 = por %p79, %p80
    %p82 = scmp.ne.s32.totalorder %s73, %s74
    %p83 = scmp.eq.s32.totalorder %s16, 0
    %p84 = por %p82, %p83
    %p85 = scmp.ne.s32.totalorder %s73, %s74
    %p86 = scmp.eq.s32.totalorder %s17, 1
    %p87 = por %p85, %p86
    %p89 = scmp.ne.s32.totalorder %s74, %s88
    %p90 = scmp.eq.s32.totalorder %s17, 0
    %p91 = por %p89, %p90
    %s93 = sadd.s32 %s92, 1
    %p96 = scmp.eq.s32.totalorder %s11, 1
    %p97 = scmp.ne.s32.totalorder %s92, %s94
    %p98 = scmp.eq.s32.totalorder %s11, 0
    %p99 = por %p97, %p98
    %p100 = scmp.ne.s32.totalorder %s92, %s94
    %p101 = scmp.eq.s32.totalorder %s16, 1
    %p102 = por %p100, %p101
    %p103 = scmp.ne.s32.totalorder %s94, %s95
    %p104 = scmp.eq.s32.totalorder %s16, 0
    %p105 = por %p103, %p104
    %p106 = scmp.ne.s32.totalorder %s94, %s95
    %p107 = scmp.eq.s32.totalorder %s17, 1
    %p108 = por %p106, %p107
    %p110 = scmp.ne.s32.totalorder %s95, %s109
    %p111 = scmp.eq.s32.totalorder %s17, 0
    %p112 = por %p110, %p111
    %s114 = sadd.s32 %s113, 1
    %p117 = scmp.eq.s32.totalorder %s11, 1
    %p118 = scmp.ne.s32.totalorder %s113, %s115
    %p119 = scmp.eq.s32.totalorder %s11, 0
    %p120 = por %p118, %p119
    %p121 = scmp.ne.s32.totalorder %s113, %s115
    %p122 = scmp.eq.s32.totalorder %s16, 1
    %p123 = por %p121, %p122
    %p124 = scmp.ne.s32.totalorder %s115, %s116
    %p125 = scmp.eq.s32.totalorder %s16, 0
    %p126 = por %p124, %p125
    %p127 = scmp.ne.s32.totalorder %s115, %s116
    %p128 = scmp.eq.s32.totalorder %s17, 1
    %p129 = por %p127, %p128
    %p131 = scmp.ne.s32.totalorder %s116, %s130
    %p132 = scmp.eq.s32.totalorder %s17, 0
    %p133 = por %p131, %p132
    %s134 = ssub.s32 %s11, %s18
    %p135 = scmp.eq.s32.totalorder %s134, 0
    %s137 = sadd.s32 %s136, 1
    %s138 = scalar_select %p135, %s136, %s137
    %p141 = pneg %p135
    %p142 = scmp.eq.s32.totalorder %s11, 1
    %p143 = por %p141, %p142
    %p144 = scmp.ne.s32.totalorder %s136, %s139
    %p145 = scmp.eq.s32.totalorder %s11, 0
    %p146 = por %p144, %p145
    %p147 = scmp.ne.s32.totalorder %s136, %s139
    %p148 = scmp.eq.s32.totalorder %s16, 1
    %p149 = por %p147, %p148
    %p150 = scmp.ne.s32.totalorder %s139, %s140
    %p151 = scmp.eq.s32.totalorder %s16, 0
    %p152 = por %p150, %p151
    %p153 = scmp.ne.s32.totalorder %s139, %s140
    %p154 = scmp.eq.s32.totalorder %s17, 1
    %p155 = por %p153, %p154
    %p157 = scmp.ne.s32.totalorder %s140, %s156
    %p158 = scmp.eq.s32.totalorder %s17, 0
    %p159 = por %p157, %p158
    %p160 = scmp.le.s32.totalorder 1, %s11
    %p161 = scmp.lt.s32.totalorder %s11, 3
    %p162 = pnand %p160, %p161
    %p163 = pneg %p162
    // Predicated region
    $region9: #{informer_forward.7} parent=5 // pred_check
      _
    $region10: #{informer_forward.7} parent=5 // pred_check_branch
      %165 = sbr.rel (%p162) target = $region12
    $region11: #{informer_forward.7} parent=5 // pred_region
      %s166 = ssub.s32 %s11, 1
      // Predicated region
      $region13: #{informer_forward.7} parent=11 // pred_check
        %p167 = pneg %p84
      $region14: #{informer_forward.7} parent=11 // pred_check_branch
        %169 = sbr.rel (%p167) target = $region16
      $region15: #{informer_forward.7} parent=11 // pred_region
        _
      $region16: #{informer_forward.7} parent=11 // pred_fallthru
        _
      // Predicated region
      $region17: #{informer_forward.7} parent=11 // pred_check
        %p170 = pneg %p105
      $region18: #{informer_forward.7} parent=11 // pred_check_branch
        %172 = sbr.rel (%p170) target = $region20
      $region19: #{informer_forward.7} parent=11 // pred_region
        _
      $region20: #{informer_forward.7} parent=11 // pred_fallthru
        _
      // Predicated region
      $region21: #{informer_forward.7} parent=11 // pred_check
        %p173 = pneg %p126
      $region22: #{informer_forward.7} parent=11 // pred_check_branch
        %175 = sbr.rel (%p173) target = $region24
      $region23: #{informer_forward.7} parent=11 // pred_region
        _
      $region24: #{informer_forward.7} parent=11 // pred_fallthru
        _
    $region12: #{informer_forward.7} parent=5 // pred_fallthru
      _
    %p176 = scmp.lt.s32.totalorder %s11, 2
    // Predicated region
    $region25: #{informer_forward.7} parent=5 // pred_check
      %p177 = pneg %p176
    $region26: #{informer_forward.7} parent=5 // pred_check_branch
      %179 = sbr.rel (%p177) target = $region28
    $region27: #{informer_forward.7} parent=5 // pred_region
      // Predicated region
      $region29: #{informer_forward.7} parent=27 // pred_check
        %p180 = pneg %p31
      $region30: #{informer_forward.7} parent=27 // pred_check_branch
        %182 = sbr.rel (%p180) target = $region32
      $region31: #{informer_forward.7} parent=27 // pred_region
        %p183 = scmp.lt.s32.totalorder %s11, 1
        %s184 = scalar_select %p183, %s11, 1
        %s185 = smul.addr %s184, 2
        %s186 = smul.addr %s185, 8
        %s187 = scalar_lea.vmem %s0, %s186
      $region32: #{informer_forward.7} parent=27 // pred_fallthru
        _
      // Predicated region
      $region33: #{informer_forward.7} parent=27 // pred_check
        %p188 = pneg %p57
      $region34: #{informer_forward.7} parent=27 // pred_check_branch
        %190 = sbr.rel (%p188) target = $region36
      $region35: #{informer_forward.7} parent=27 // pred_region
        %p191 = scmp.lt.s32.totalorder %s11, 1
        %s192 = scalar_select %p191, %s11, 1
        %s193 = smul.addr %s192, 2
        %s194 = smul.addr %s193, 8
        %s195 = scalar_lea.vmem %s1, %s194
      $region36: #{informer_forward.7} parent=27 // pred_fallthru
        _
    $region28: #{informer_forward.7} parent=5 // pred_fallthru
      _
    %p196 = scmp.le.s32.totalorder 1, %s11
    %p197 = scmp.lt.s32.totalorder %s11, 3
    %p198 = pnand %p196, %p197
    %p199 = pneg %p198
    // Predicated region
    $region37: #{informer_forward.7} parent=5 // pred_check
      _
    $region38: #{informer_forward.7} parent=5 // pred_check_branch
      %201 = sbr.rel (%p198) target = $region40
    $region39: #{informer_forward.7} parent=5 // pred_region
      %s202 = ssub.s32 %s11, 1
      %p203 = scmp.lt.s32.totalorder %s16, 1
      %s204 = scalar_select %p203, %s16, 1
      %s205 = smul.addr %s204, 2
      %s206 = smul.addr %s205, 8
      %s207 = scalar_lea.vmem %s0, %s206
      %p208 = pneg %p37
      %p209 = pneg %p34
      %p210 = scmp.lt.s32.totalorder %s16, 1
      %s211 = scalar_select %p210, %s16, 1
      %s212 = smul.addr %s211, 2
      %s213 = smul.addr %s212, 8
      %s214 = scalar_lea.vmem %s1, %s213
      %p215 = pneg %p63
      %p216 = pneg %p60
      %p217 = pneg %p84
      %p218 = pneg %p81
      %p219 = pneg %p105
      %p220 = pneg %p102
      %p221 = pneg %p126
      %p222 = pneg %p123
      %p223 = pneg %p152
      %p224 = pneg %p149
      %p225 = scmp.lt.s32.totalorder %s16, 1
      %s226 = scalar_select %p225, %s16, 1
      %s227 = smul.addr %s226, 2
      %s228 = smul.addr %s227, 8
      %s229 = scalar_lea.vmem %s5, %s228
      %p230 = scmp.lt.s32.totalorder %s16, 1
      %s231 = scalar_select %p230, %s16, 1
      %s232 = smul.addr %s231, 2
      %s233 = smul.addr %s232, 8
      %s234 = scalar_lea.vmem %s0, %s233
      %p235 = scmp.lt.s32.totalorder %s16, 1
      %s236 = scalar_select %p235, %s16, 1
      %s237 = smul.addr %s236, 2
      %s238 = smul.addr %s237, 8
      %s239 = scalar_lea.vmem %s1, %s238
      %p240 = scmp.lt.s32.totalorder %s16, 1
      %s241 = scalar_select %p240, %s16, 1
      %s242 = smul.addr %s241, 2
      %s243 = smul.addr %s242, 8
      %s244 = scalar_lea.vmem %s5, %s243
      %v245 = vld [vmem:[%s234] sm:$0xff]
      %v246 = vld [vmem:[%s234 + $0x8] sm:$0xf]
      %v247 = vld [vmem:[%s239] sm:$0xff]
      %v248 = vld [vmem:[%s239 + $0x8] sm:$0xf]
      %v249 = vlaneseq
      %v250 = vshrl.u32 %v249, 7
      %v251 = vadd.s32 %v250, 8
      %v252 = vlaneseq
      %v253 = vand.u32 %v252, 127
      %v254 = vsub.s32 %v250, 1
      %v255 = vsub.s32 %v251, 1
      %vm256 = vcmp.eq.s32.totalorder %v253, %v254
      %vm257 = vcmp.eq.s32.totalorder %v253, %v255
      %vm258 = vcmp.eq.s32.totalorder %v250, 0
      %vm259 = vcmp.eq.s32.totalorder %v251, 0
      %vm260 = vcmp.eq.s32.totalorder %v253, 11
      %vm261 = vmand %vm258, %vm260
      %vm262 = vmand %vm259, %vm260
      %vm263 = vmor %vm256, %vm261
      %vm264 = vmor %vm257, %vm262
      %v265 = vsel %vm263, 1.0, 0.0
      %v266 = vsel %vm264, 1.0, 0.0
      %v267 = vadd.s32 %v250, 1
      %v268 = vadd.s32 %v251, 1
      %vm269 = vcmp.eq.s32.totalorder %v253, %v267
      %vm270 = vcmp.eq.s32.totalorder %v253, %v268
      %vm271 = vcmp.eq.s32.totalorder %v250, 11
      %vm272 = vcmp.eq.s32.totalorder %v251, 11
      %vm273 = vcmp.eq.s32.totalorder %v253, 0
      %vm274 = vmand %vm271, %vm273
      %vm275 = vmand %vm272, %vm273
      %vm276 = vmor %vm269, %vm274
      %vm277 = vmor %vm270, %vm275
      %v278 = vsel %vm276, 1.0, 0.0
      %v279 = vsel %vm277, 1.0, 0.0
      %vm280 = vcmask 97280
      %v282 = vsel %vm280, %v265, 0
      %v285 = vsel %vm280, %v266, 0
      %vm287 = vcmask 1043456
      %v289 = vsel %vm287, %v246, 0
      %291 = vmatprep.subr.mxu0 0.0
      %292 = vmatpush1.msra.mxu0 0.0
      %293 = vmatprep.subr.mxu0 0.0
      %294 = vmatpush1.msra.mxu0 0.0
      %295 = vmatprep.subr.mxu0 0.0
      %296 = vmatpush1.msra.mxu0 0.0
      %297 = vmatprep.subr.mxu0 0.0
      %298 = vmatpush1.msra.mxu0 0.0
      %299 = vmatprep.subr.mxu0 0.0
      %300 = vmatpush1.msra.mxu0 0.0
      %301 = vmatprep.subr.mxu0 0.0
      %302 = vmatpush1.msra.mxu0 0.0
      %303 = vmatprep.subr.mxu0 0.0
      %304 = vmatpush1.msra.mxu0 0.0
      %305 = vmatprep.subr.mxu0 0.0
      %306 = vmatpush1.msra.mxu0 0.0
      %307 = vmatprep.subr.mxu0 0.0
      %308 = vmatpush1.msra.mxu0 0.0
      %309 = vmatprep.subr.mxu0 0.0
      %310 = vmatpush1.msra.mxu0 0.0
      %311 = vmatprep.subr.mxu0 0.0
      %312 = vmatpush1.msra.mxu0 0.0
      %313 = vmatprep.subr.mxu0 0.0
      %314 = vmatpush1.msra.mxu0 0.0
      %315 = vmatprep.subr.mxu0 0.0
      %316 = vmatpush1.msra.mxu0 0.0
      %317 = vmatprep.subr.mxu0 0.0
      %318 = vmatpush1.msra.mxu0 0.0
      %319 = vmatprep.subr.mxu0 0.0
      %320 = vmatpush1.msra.mxu0 %v289
      %321 = vmatprep.subr.mxu0 0.0
      %322 = vmatpush1.msra.mxu0 %v245
      %323 = vmatprep.subr.mxu0 0.0
      %324 = vmatpush2.msra.mxu0 0.0
      %325 = vmatprep.subr.mxu0 0.0
      %326 = vmatpush2.msra.mxu0 0.0
      %327 = vmatprep.subr.mxu0 0.0
      %328 = vmatpush2.msra.mxu0 0.0
      %329 = vmatprep.subr.mxu0 0.0
      %330 = vmatpush2.msra.mxu0 0.0
      %331 = vmatprep.subr.mxu0 0.0
      %332 = vmatpush2.msra.mxu0 0.0
      %333 = vmatprep.subr.mxu0 0.0
      %334 = vmatpush2.msra.mxu0 0.0
      %335 = vmatprep.subr.mxu0 0.0
      %336 = vmatpush2.msra.mxu0 0.0
      %337 = vmatprep.subr.mxu0 0.0
      %338 = vmatpush2.msra.mxu0 0.0
      %339 = vmatprep.subr.mxu0 0.0
      %340 = vmatpush2.msra.mxu0 0.0
      %341 = vmatprep.subr.mxu0 0.0
      %342 = vmatpush2.msra.mxu0 0.0
      %343 = vmatprep.subr.mxu0 0.0
      %344 = vmatpush2.msra.mxu0 0.0
      %345 = vmatprep.subr.mxu0 0.0
      %346 = vmatpush2.msra.mxu0 0.0
      %347 = vmatprep.subr.mxu0 0.0
      %348 = vmatpush2.msra.mxu0 0.0
      %349 = vmatprep.subr.mxu0 0.0
      %350 = vmatpush2.msra.mxu0 0.0
      %351 = vmatprep.subr.mxu0 0.0
      %352 = vmatpush2.msra.mxu0 0.0
      %353 = vmatprep.subr.mxu0 0.0
      %354 = vmatpush2.msra.mxu0 0.0
      %355 = vmatprep.mubr.f32.mxu0 0.0
      %356 = vmatmul.mubr.f32.gmra.mxu0 %v282
      %v357 = vpop.f32.mrf.mxu0
      %v358 = vadd.f32 0.0, %v357
      %v359 = vpop.f32.mrf.mxu0
      %360 = vmatprep.mubr.f32.mxu0 0.0
      %361 = vmatmul.mubr.f32.gmra.mxu0 %v285
      %v362 = vpop.f32.mrf.mxu0
      %v363 = vadd.f32 0.0, %v362
      %v364 = vpop.f32.mrf.mxu0
      %365 = vdwg.mxu0
      %v367 = vsel %vm280, %v278, 0
      %v370 = vsel %vm280, %v279, 0
      %372 = vmatprep.subr.mxu0 0.0
      %373 = vmatpush1.msra.mxu0 0.0
      %374 = vmatprep.subr.mxu0 0.0
      %375 = vmatpush1.msra.mxu0 0.0
      %376 = vmatprep.subr.mxu0 0.0
      %377 = vmatpush1.msra.mxu0 0.0
      %378 = vmatprep.subr.mxu0 0.0
      %379 = vmatpush1.msra.mxu0 0.0
      %380 = vmatprep.subr.mxu0 0.0
      %381 = vmatpush1.msra.mxu0 0.0
      %382 = vmatprep.subr.mxu0 0.0
      %383 = vmatpush1.msra.mxu0 0.0
      %384 = vmatprep.subr.mxu0 0.0
      %385 = vmatpush1.msra.mxu0 0.0
      %386 = vmatprep.subr.mxu0 0.0
      %387 = vmatpush1.msra.mxu0 0.0
      %388 = vmatprep.subr.mxu0 0.0
      %389 = vmatpush1.msra.mxu0 0.0
      %390 = vmatprep.subr.mxu0 0.0
      %391 = vmatpush1.msra.mxu0 0.0
      %392 = vmatprep.subr.mxu0 0.0
      %393 = vmatpush1.msra.mxu0 0.0
      %394 = vmatprep.subr.mxu0 0.0
      %395 = vmatpush1.msra.mxu0 0.0
      %396 = vmatprep.subr.mxu0 0.0
      %397 = vmatpush1.msra.mxu0 0.0
      %398 = vmatprep.subr.mxu0 0.0
      %399 = vmatpush1.msra.mxu0 0.0
      %400 = vmatprep.subr.mxu0 0.0
      %401 = vmatpush1.msra.mxu0 %v289
      %402 = vmatprep.subr.mxu0 0.0
      %403 = vmatpush1.msra.mxu0 %v245
      %404 = vmatprep.subr.mxu0 0.0
      %405 = vmatpush2.msra.mxu0 0.0
      %406 = vmatprep.subr.mxu0 0.0
      %407 = vmatpush2.msra.mxu0 0.0
      %408 = vmatprep.subr.mxu0 0.0
      %409 = vmatpush2.msra.mxu0 0.0
      %410 = vmatprep.subr.mxu0 0.0
      %411 = vmatpush2.msra.mxu0 0.0
      %412 = vmatprep.subr.mxu0 0.0
      %413 = vmatpush2.msra.mxu0 0.0
      %414 = vmatprep.subr.mxu0 0.0
      %415 = vmatpush2.msra.mxu0 0.0
      %416 = vmatprep.subr.mxu0 0.0
      %417 = vmatpush2.msra.mxu0 0.0
      %418 = vmatprep.subr.mxu0 0.0
      %419 = vmatpush2.msra.mxu0 0.0
      %420 = vmatprep.subr.mxu0 0.0
      %421 = vmatpush2.msra.mxu0 0.0
      %422 = vmatprep.subr.mxu0 0.0
      %423 = vmatpush2.msra.mxu0 0.0
      %424 = vmatprep.subr.mxu0 0.0
      %425 = vmatpush2.msra.mxu0 0.0
      %426 = vmatprep.subr.mxu0 0.0
      %427 = vmatpush2.msra.mxu0 0.0
      %428 = vmatprep.subr.mxu0 0.0
      %429 = vmatpush2.msra.mxu0 0.0
      %430 = vmatprep.subr.mxu0 0.0
      %431 = vmatpush2.msra.mxu0 0.0
      %432 = vmatprep.subr.mxu0 0.0
      %433 = vmatpush2.msra.mxu0 0.0
      %434 = vmatprep.subr.mxu0 0.0
      %435 = vmatpush2.msra.mxu0 0.0
      %436 = vmatprep.mubr.f32.mxu0 0.0
      %437 = vmatmul.mubr.f32.gmra.mxu0 %v367
      %v438 = vpop.f32.mrf.mxu0
      %v439 = vadd.f32 0.0, %v438
      %v440 = vpop.f32.mrf.mxu0
      %441 = vmatprep.mubr.f32.mxu0 0.0
      %442 = vmatmul.mubr.f32.gmra.mxu0 %v370
      %v443 = vpop.f32.mrf.mxu0
      %v444 = vadd.f32 0.0, %v443
      %v445 = vpop.f32.mrf.mxu0
      %446 = vdwg.mxu0
      %v447 = vld [vmem:[%s2] sm:$0xf]
      %s448 = scalar_lea.vmem %s2, 4
      %v449 = vld [vmem:[%s448] sm:$0xf]
      %vm450 = vcmask 31744
      %v452 = vsel %vm450, %v245, 0
      %v454 = vsel %vm450, %v246, 0
      %v457 = vsel %vm287, %v449, 0
      %459 = vmatprep.subr.mxu0 0.0
      %460 = vmatpush1.msra.mxu0 0.0
      %461 = vmatprep.subr.mxu0 0.0
      %462 = vmatpush1.msra.mxu0 0.0
      %463 = vmatprep.subr.mxu0 0.0
      %464 = vmatpush1.msra.mxu0 0.0
      %465 = vmatprep.subr.mxu0 0.0
      %466 = vmatpush1.msra.mxu0 0.0
      %467 = vmatprep.subr.mxu0 0.0
      %468 = vmatpush1.msra.mxu0 0.0
      %469 = vmatprep.subr.mxu0 0.0
      %470 = vmatpush1.msra.mxu0 0.0
      %471 = vmatprep.subr.mxu0 0.0
      %472 = vmatpush1.msra.mxu0 0.0
      %473 = vmatprep.subr.mxu0 0.0
      %474 = vmatpush1.msra.mxu0 0.0
      %475 = vmatprep.subr.mxu0 0.0
      %476 = vmatpush1.msra.mxu0 0.0
      %477 = vmatprep.subr.mxu0 0.0
      %478 = vmatpush1.msra.mxu0 0.0
      %479 = vmatprep.subr.mxu0 0.0
      %480 = vmatpush1.msra.mxu0 0.0
      %481 = vmatprep.subr.mxu0 0.0
      %482 = vmatpush1.msra.mxu0 0.0
      %483 = vmatprep.subr.mxu0 0.0
      %484 = vmatpush1.msra.mxu0 0.0
      %485 = vmatprep.subr.mxu0 0.0
      %486 = vmatpush1.msra.mxu0 0.0
      %487 = vmatprep.subr.mxu0 0.0
      %488 = vmatpush1.msra.mxu0 0.0
      %489 = vmatprep.subr.mxu0 0.0
      %490 = vmatpush1.msra.mxu0 %v457
      %491 = vmatprep.subr.mxu0 0.0
      %492 = vmatpush2.msra.mxu0 0.0
      %493 = vmatprep.subr.mxu0 0.0
      %494 = vmatpush2.msra.mxu0 0.0
      %495 = vmatprep.subr.mxu0 0.0
      %496 = vmatpush2.msra.mxu0 0.0
      %497 = vmatprep.subr.mxu0 0.0
      %498 = vmatpush2.msra.mxu0 0.0
      %499 = vmatprep.subr.mxu0 0.0
      %500 = vmatpush2.msra.mxu0 0.0
      %501 = vmatprep.subr.mxu0 0.0
      %502 = vmatpush2.msra.mxu0 0.0
      %503 = vmatprep.subr.mxu0 0.0
      %504 = vmatpush2.msra.mxu0 0.0
      %505 = vmatprep.subr.mxu0 0.0
      %506 = vmatpush2.msra.mxu0 0.0
      %507 = vmatprep.subr.mxu0 0.0
      %508 = vmatpush2.msra.mxu0 0.0
      %509 = vmatprep.subr.mxu0 0.0
      %510 = vmatpush2.msra.mxu0 0.0
      %511 = vmatprep.subr.mxu0 0.0
      %512 = vmatpush2.msra.mxu0 0.0
      %513 = vmatprep.subr.mxu0 0.0
      %514 = vmatpush2.msra.mxu0 0.0
      %515 = vmatprep.subr.mxu0 0.0
      %516 = vmatpush2.msra.mxu0 0.0
      %517 = vmatprep.subr.mxu0 0.0
      %518 = vmatpush2.msra.mxu0 0.0
      %519 = vmatprep.subr.mxu0 0.0
      %520 = vmatpush2.msra.mxu0 0.0
      %521 = vmatprep.subr.mxu0 0.0
      %522 = vmatpush2.msra.mxu0 0.0
      %523 = vmatprep.mubr.f32.mxu0 0.0
      %524 = vmatmul.mubr.f32.gmra.mxu0 %v452
      %v525 = vpop.f32.mrf.mxu0
      %v526 = vadd.f32 0.0, %v525
      %v527 = vpop.f32.mrf.mxu0
      %528 = vmatprep.mubr.f32.mxu0 0.0
      %529 = vmatmul.mubr.f32.gmra.mxu0 %v454
      %v530 = vpop.f32.mrf.mxu0
      %v531 = vadd.f32 0.0, %v530
      %v532 = vpop.f32.mrf.mxu0
      %533 = vdwg.mxu0
      %v535 = vsel %vm450, %v358, 0
      %v538 = vsel %vm450, %v363, 0
      %v541 = vsel %vm287, %v447, 0
      %543 = vmatprep.subr.mxu0 0.0
      %544 = vmatpush1.msra.mxu0 0.0
      %545 = vmatprep.subr.mxu0 0.0
      %546 = vmatpush1.msra.mxu0 0.0
      %547 = vmatprep.subr.mxu0 0.0
      %548 = vmatpush1.msra.mxu0 0.0
      %549 = vmatprep.subr.mxu0 0.0
      %550 = vmatpush1.msra.mxu0 0.0
      %551 = vmatprep.subr.mxu0 0.0
      %552 = vmatpush1.msra.mxu0 0.0
      %553 = vmatprep.subr.mxu0 0.0
      %554 = vmatpush1.msra.mxu0 0.0
      %555 = vmatprep.subr.mxu0 0.0
      %556 = vmatpush1.msra.mxu0 0.0
      %557 = vmatprep.subr.mxu0 0.0
      %558 = vmatpush1.msra.mxu0 0.0
      %559 = vmatprep.subr.mxu0 0.0
      %560 = vmatpush1.msra.mxu0 0.0
      %561 = vmatprep.subr.mxu0 0.0
      %562 = vmatpush1.msra.mxu0 0.0
      %563 = vmatprep.subr.mxu0 0.0
      %564 = vmatpush1.msra.mxu0 0.0
      %565 = vmatprep.subr.mxu0 0.0
      %566 = vmatpush1.msra.mxu0 0.0
      %567 = vmatprep.subr.mxu0 0.0
      %568 = vmatpush1.msra.mxu0 0.0
      %569 = vmatprep.subr.mxu0 0.0
      %570 = vmatpush1.msra.mxu0 0.0
      %571 = vmatprep.subr.mxu0 0.0
      %572 = vmatpush1.msra.mxu0 0.0
      %573 = vmatprep.subr.mxu0 0.0
      %574 = vmatpush1.msra.mxu0 %v541
      %575 = vmatprep.subr.mxu0 0.0
      %576 = vmatpush2.msra.mxu0 0.0
      %577 = vmatprep.subr.mxu0 0.0
      %578 = vmatpush2.msra.mxu0 0.0
      %579 = vmatprep.subr.mxu0 0.0
      %580 = vmatpush2.msra.mxu0 0.0
      %581 = vmatprep.subr.mxu0 0.0
      %582 = vmatpush2.msra.mxu0 0.0
      %583 = vmatprep.subr.mxu0 0.0
      %584 = vmatpush2.msra.mxu0 0.0
      %585 = vmatprep.subr.mxu0 0.0
      %586 = vmatpush2.msra.mxu0 0.0
      %587 = vmatprep.subr.mxu0 0.0
      %588 = vmatpush2.msra.mxu0 0.0
      %589 = vmatprep.subr.mxu0 0.0
      %590 = vmatpush2.msra.mxu0 0.0
      %591 = vmatprep.subr.mxu0 0.0
      %592 = vmatpush2.msra.mxu0 0.0
      %593 = vmatprep.subr.mxu0 0.0
      %594 = vmatpush2.msra.mxu0 0.0
      %595 = vmatprep.subr.mxu0 0.0
      %596 = vmatpush2.msra.mxu0 0.0
      %597 = vmatprep.subr.mxu0 0.0
      %598 = vmatpush2.msra.mxu0 0.0
      %599 = vmatprep.subr.mxu0 0.0
      %600 = vmatpush2.msra.mxu0 0.0
      %601 = vmatprep.subr.mxu0 0.0
      %602 = vmatpush2.msra.mxu0 0.0
      %603 = vmatprep.subr.mxu0 0.0
      %604 = vmatpush2.msra.mxu0 0.0
      %605 = vmatprep.subr.mxu0 0.0
      %606 = vmatpush2.msra.mxu0 0.0
      %607 = vmatprep.mubr.f32.mxu0 0.0
      %608 = vmatmul.mubr.f32.gmra.mxu0 %v535
      %v609 = vpop.f32.mrf.mxu0
      %v610 = vadd.f32 %v526, %v609
      %v611 = vpop.f32.mrf.mxu0
      %612 = vmatprep.mubr.f32.mxu0 0.0
      %613 = vmatmul.mubr.f32.gmra.mxu0 %v538
      %v614 = vpop.f32.mrf.mxu0
      %v615 = vadd.f32 %v531, %v614
      %v616 = vpop.f32.mrf.mxu0
      %617 = vdwg.mxu0
      %s618 = scalar_lea.vmem %s2, 8
      %v619 = vld [vmem:[%s618] sm:$0xf]
      %v621 = vsel %vm450, %v439, 0
      %v624 = vsel %vm450, %v444, 0
      %v627 = vsel %vm287, %v619, 0
      %629 = vmatprep.subr.mxu0 0.0
      %630 = vmatpush1.msra.mxu0 0.0
      %631 = vmatprep.subr.mxu0 0.0
      %632 = vmatpush1.msra.mxu0 0.0
      %633 = vmatprep.subr.mxu0 0.0
      %634 = vmatpush1.msra.mxu0 0.0
      %635 = vmatprep.subr.mxu0 0.0
      %636 = vmatpush1.msra.mxu0 0.0
      %637 = vmatprep.subr.mxu0 0.0
      %638 = vmatpush1.msra.mxu0 0.0
      %639 = vmatprep.subr.mxu0 0.0
      %640 = vmatpush1.msra.mxu0 0.0
      %641 = vmatprep.subr.mxu0 0.0
      %642 = vmatpush1.msra.mxu0 0.0
      %643 = vmatprep.subr.mxu0 0.0
      %644 = vmatpush1.msra.mxu0 0.0
      %645 = vmatprep.subr.mxu0 0.0
      %646 = vmatpush1.msra.mxu0 0.0
      %647 = vmatprep.subr.mxu0 0.0
      %648 = vmatpush1.msra.mxu0 0.0
      %649 = vmatprep.subr.mxu0 0.0
      %650 = vmatpush1.msra.mxu0 0.0
      %651 = vmatprep.subr.mxu0 0.0
      %652 = vmatpush1.msra.mxu0 0.0
      %653 = vmatprep.subr.mxu0 0.0
      %654 = vmatpush1.msra.mxu0 0.0
      %655 = vmatprep.subr.mxu0 0.0
      %656 = vmatpush1.msra.mxu0 0.0
      %657 = vmatprep.subr.mxu0 0.0
      %658 = vmatpush1.msra.mxu0 0.0
      %659 = vmatprep.subr.mxu0 0.0
      %660 = vmatpush1.msra.mxu0 %v627
      %661 = vmatprep.subr.mxu0 0.0
      %662 = vmatpush2.msra.mxu0 0.0
      %663 = vmatprep.subr.mxu0 0.0
      %664 = vmatpush2.msra.mxu0 0.0
      %665 = vmatprep.subr.mxu0 0.0
      %666 = vmatpush2.msra.mxu0 0.0
      %667 = vmatprep.subr.mxu0 0.0
      %668 = vmatpush2.msra.mxu0 0.0
      %669 = vmatprep.subr.mxu0 0.0
      %670 = vmatpush2.msra.mxu0 0.0
      %671 = vmatprep.subr.mxu0 0.0
      %672 = vmatpush2.msra.mxu0 0.0
      %673 = vmatprep.subr.mxu0 0.0
      %674 = vmatpush2.msra.mxu0 0.0
      %675 = vmatprep.subr.mxu0 0.0
      %676 = vmatpush2.msra.mxu0 0.0
      %677 = vmatprep.subr.mxu0 0.0
      %678 = vmatpush2.msra.mxu0 0.0
      %679 = vmatprep.subr.mxu0 0.0
      %680 = vmatpush2.msra.mxu0 0.0
      %681 = vmatprep.subr.mxu0 0.0
      %682 = vmatpush2.msra.mxu0 0.0
      %683 = vmatprep.subr.mxu0 0.0
      %684 = vmatpush2.msra.mxu0 0.0
      %685 = vmatprep.subr.mxu0 0.0
      %686 = vmatpush2.msra.mxu0 0.0
      %687 = vmatprep.subr.mxu0 0.0
      %688 = vmatpush2.msra.mxu0 0.0
      %689 = vmatprep.subr.mxu0 0.0
      %690 = vmatpush2.msra.mxu0 0.0
      %691 = vmatprep.subr.mxu0 0.0
      %692 = vmatpush2.msra.mxu0 0.0
      %693 = vmatprep.mubr.f32.mxu0 0.0
      %694 = vmatmul.mubr.f32.gmra.mxu0 %v621
      %v695 = vpop.f32.mrf.mxu0
      %v696 = vadd.f32 0.0, %v695
      %v697 = vpop.f32.mrf.mxu0
      %698 = vmatprep.mubr.f32.mxu0 0.0
      %699 = vmatmul.mubr.f32.gmra.mxu0 %v624
      %v700 = vpop.f32.mrf.mxu0
      %v701 = vadd.f32 0.0, %v700
      %v702 = vpop.f32.mrf.mxu0
      %703 = vdwg.mxu0
      %v704 = vadd.f32 %v610, %v696
      %v705 = vadd.f32 %v615, %v701
      %v706 = vld [vmem:[%s3] sm:$0xf]
      %v708 = vsel %vm450, %v247, 0
      %v711 = vsel %vm450, %v248, 0
      %v714 = vsel %vm287, %v706, 0
      %716 = vmatprep.subr.mxu0 0.0
      %717 = vmatpush1.msra.mxu0 0.0
      %718 = vmatprep.subr.mxu0 0.0
      %719 = vmatpush1.msra.mxu0 0.0
      %720 = vmatprep.subr.mxu0 0.0
      %721 = vmatpush1.msra.mxu0 0.0
      %722 = vmatprep.subr.mxu0 0.0
      %723 = vmatpush1.msra.mxu0 0.0
      %724 = vmatprep.subr.mxu0 0.0
      %725 = vmatpush1.msra.mxu0 0.0
      %726 = vmatprep.subr.mxu0 0.0
      %727 = vmatpush1.msra.mxu0 0.0
      %728 = vmatprep.subr.mxu0 0.0
      %729 = vmatpush1.msra.mxu0 0.0
      %730 = vmatprep.subr.mxu0 0.0
      %731 = vmatpush1.msra.mxu0 0.0
      %732 = vmatprep.subr.mxu0 0.0
      %733 = vmatpush1.msra.mxu0 0.0
      %734 = vmatprep.subr.mxu0 0.0
      %735 = vmatpush1.msra.mxu0 0.0
      %736 = vmatprep.subr.mxu0 0.0
      %737 = vmatpush1.msra.mxu0 0.0
      %738 = vmatprep.subr.mxu0 0.0
      %739 = vmatpush1.msra.mxu0 0.0
      %740 = vmatprep.subr.mxu0 0.0
      %741 = vmatpush1.msra.mxu0 0.0
      %742 = vmatprep.subr.mxu0 0.0
      %743 = vmatpush1.msra.mxu0 0.0
      %744 = vmatprep.subr.mxu0 0.0
      %745 = vmatpush1.msra.mxu0 0.0
      %746 = vmatprep.subr.mxu0 0.0
      %747 = vmatpush1.msra.mxu0 %v714
      %748 = vmatprep.subr.mxu0 0.0
      %749 = vmatpush2.msra.mxu0 0.0
      %750 = vmatprep.subr.mxu0 0.0
      %751 = vmatpush2.msra.mxu0 0.0
      %752 = vmatprep.subr.mxu0 0.0
      %753 = vmatpush2.msra.mxu0 0.0
      %754 = vmatprep.subr.mxu0 0.0
      %755 = vmatpush2.msra.mxu0 0.0
      %756 = vmatprep.subr.mxu0 0.0
      %757 = vmatpush2.msra.mxu0 0.0
      %758 = vmatprep.subr.mxu0 0.0
      %759 = vmatpush2.msra.mxu0 0.0
      %760 = vmatprep.subr.mxu0 0.0
      %761 = vmatpush2.msra.mxu0 0.0
      %762 = vmatprep.subr.mxu0 0.0
      %763 = vmatpush2.msra.mxu0 0.0
      %764 = vmatprep.subr.mxu0 0.0
      %765 = vmatpush2.msra.mxu0 0.0
      %766 = vmatprep.subr.mxu0 0.0
      %767 = vmatpush2.msra.mxu0 0.0
      %768 = vmatprep.subr.mxu0 0.0
      %769 = vmatpush2.msra.mxu0 0.0
      %770 = vmatprep.subr.mxu0 0.0
      %771 = vmatpush2.msra.mxu0 0.0
      %772 = vmatprep.subr.mxu0 0.0
      %773 = vmatpush2.msra.mxu0 0.0
      %774 = vmatprep.subr.mxu0 0.0
      %775 = vmatpush2.msra.mxu0 0.0
      %776 = vmatprep.subr.mxu0 0.0
      %777 = vmatpush2.msra.mxu0 0.0
      %778 = vmatprep.subr.mxu0 0.0
      %779 = vmatpush2.msra.mxu0 0.0
      %780 = vmatprep.mubr.f32.mxu0 0.0
      %781 = vmatmul.mubr.f32.gmra.mxu0 %v708
      %v782 = vpop.f32.mrf.mxu0
      %v783 = vadd.f32 0.0, %v782
      %v784 = vpop.f32.mrf.mxu0
      %785 = vmatprep.mubr.f32.mxu0 0.0
      %786 = vmatmul.mubr.f32.gmra.mxu0 %v711
      %v787 = vpop.f32.mrf.mxu0
      %v788 = vadd.f32 0.0, %v787
      %v789 = vpop.f32.mrf.mxu0
      %790 = vdwg.mxu0
      %v791 = vadd.f32 %v704, %v783
      %v792 = vadd.f32 %v705, %v788
      %v793 = vld [vmem:[%s4] sm:$0xff]
      %v794 = vld [vmem:[%s4 + $0x8] sm:$0xf]
      %v795 = vadd.f32 %v791, %v793
      %v796 = vadd.f32 %v792, %v794
      %vm797 = vcmask 261120
      %798 = vst.msk [vmem:[%s244] sm:$0xff] %vm797, %v795
      %vm799 = vcmask 257024
      %800 = vst.msk [vmem:[%s244 + $0x8] sm:$0xf] %vm799, %v796
      %p801 = scmp.lt.s32.totalorder %s16, 1
      %s802 = scalar_select %p801, %s16, 1
      %s803 = smul.addr %s802, 2
      %s804 = smul.addr %s803, 8
      %s805 = scalar_lea.vmem %s5, %s804
      // Predicated region
      $region41: #{informer_forward.7} parent=39 // pred_check
        %p806 = pneg %p149
      $region42: #{informer_forward.7} parent=39 // pred_check_branch
        %808 = sbr.rel (%p806) target = $region44
      $region43: #{informer_forward.7} parent=39 // pred_region
        _
      $region44: #{informer_forward.7} parent=39 // pred_fallthru
        _
    $region40: #{informer_forward.7} parent=5 // pred_fallthru
      _
    %p809 = scmp.le.s32.totalorder 2, %s11
    // Predicated region
    $region45: #{informer_forward.7} parent=5 // pred_check
      %p810 = pneg %p809
    $region46: #{informer_forward.7} parent=5 // pred_check_branch
      %812 = sbr.rel (%p810) target = $region48
    $region47: #{informer_forward.7} parent=5 // pred_region
      %s813 = ssub.s32 %s11, 2
      // Predicated region
      $region49: #{informer_forward.7} parent=47 // pred_check
        %p814 = pneg %p155
      $region50: #{informer_forward.7} parent=47 // pred_check_branch
        %816 = sbr.rel (%p814) target = $region52
      $region51: #{informer_forward.7} parent=47 // pred_region
        %p817 = scmp.lt.s32.totalorder %s17, 1
        %s818 = scalar_select %p817, %s17, 1
        %s819 = smul.addr %s818, 2
        %s820 = smul.addr %s819, 8
        %s821 = scalar_lea.vmem %s5, %s820
      $region52: #{informer_forward.7} parent=47 // pred_fallthru
        _
    $region48: #{informer_forward.7} parent=5 // pred_fallthru
      _
  $region6: #{informer_forward.7} parent=0 // loop_footer
    %s15 = sadd.s32 1, %s11
  $region7: #{informer_forward.7} parent=0 // loop_footer_branch
    %10 = sbr.rel target = $region3
  $region8: #{informer_forward.7} parent=0 // loop_exit
    _

// kernel: informer_forward.9
$region0: #{informer_forward.9}
  #allocation0 [shape = 'u32[]', space=smem, size = 0x4, offset = 0x4, fixed_abs, tag = 'smem constant byte address 0x4 - core index']
  #allocation1 [shape = 'u32[144,128]{1,0:T(1,128)}', space=vmem, size = 0x12000, scoped, tag = 'internal scratch']
  %s0 = inlined_call_operand.vmem [shape: f32[2,12,32], index: 0, kind: input, shape index: {}]
  %s1 = inlined_call_operand.vmem [shape: bf16[32,96], index: 1, kind: input, shape index: {}]
  %s2 = inlined_call_operand.vmem [shape: f32[1,96], index: 2, kind: input, shape index: {}]
  %s3 = inlined_call_operand.vmem [shape: f32[32,32], index: 3, kind: input, shape index: {}]
  %s4 = inlined_call_operand.vmem [shape: f32[1,32], index: 4, kind: input, shape index: {}]
  %s5 = inlined_call_operand.vmem [shape: f32[1,32], index: 5, kind: input, shape index: {}]
  %s6 = inlined_call_operand.vmem [shape: f32[1,32], index: 6, kind: input, shape index: {}]
  %s7 = inlined_call_operand.vmem [shape: bf16[32,64], index: 7, kind: input, shape index: {}]
  %s8 = inlined_call_operand.vmem [shape: f32[1,64], index: 8, kind: input, shape index: {}]
  %s9 = inlined_call_operand.vmem [shape: bf16[64,32], index: 9, kind: input, shape index: {}]
  %s10 = inlined_call_operand.vmem [shape: f32[1,32], index: 10, kind: input, shape index: {}]
  %s11 = inlined_call_operand.vmem [shape: f32[1,32], index: 11, kind: input, shape index: {}]
  %s12 = inlined_call_operand.vmem [shape: f32[1,32], index: 12, kind: input, shape index: {}]
  %s13 = inlined_call_operand.vmem [shape: f32[2,12,32], index: 13, kind: output, shape index: {}]
  %s14 = sld [smem:[#allocation0]]
  $region85: #{informer_forward.9} parent=0
    _
  %s16 = ssub.s32 1, %s14
  %s17 = scalar_select 0, %s16, %s14
  loop: start=0, step=1, limit=4
  $region2: #{informer_forward.9} parent=0 // loop_pre_header
    _
  $region3: #{informer_forward.9} parent=0 // loop_header
    %s19 = sphi 0, %s23
    %p20 = scmp.ge.s32.totalorder %s19, 4
    %s29 = sphi 0, %s31
    %s32 = sphi 0, %s29
    %s33 = sphi 0, %s32
    %s49 = sphi 0, %s33
    %s53 = sphi 0, %s53
    %s55 = sphi 0, %s53
    %s56 = sphi 0, %s55
    %s70 = sphi 0, %s56
    %s74 = sphi 0, %s74
    %s76 = sphi 0, %s74
    %s77 = sphi 0, %s76
    %s91 = sphi 0, %s77
    %s95 = sphi 0, %s95
    %s97 = sphi 0, %s95
    %s98 = sphi 0, %s97
    %s112 = sphi 0, %s98
    %s116 = sphi 0, %s116
    %s118 = sphi 0, %s116
    %s119 = sphi 0, %s118
    %s133 = sphi 0, %s119
    %s137 = sphi 0, %s137
    %s139 = sphi 0, %s137
    %s140 = sphi 0, %s139
    %s154 = sphi 0, %s140
    %s158 = sphi 0, %s158
    %s160 = sphi 0, %s158
    %s161 = sphi 0, %s160
    %s175 = sphi 0, %s161
    %s179 = sphi 0, %s179
    %s181 = sphi 0, %s179
    %s182 = sphi 0, %s181
    %s196 = sphi 0, %s182
    %s200 = sphi 0, %s200
    %s202 = sphi 0, %s200
    %s203 = sphi 0, %s202
    %s217 = sphi 0, %s203
    %s221 = sphi 0, %s221
    %s223 = sphi 0, %s221
    %s224 = sphi 0, %s223
    %s238 = sphi 0, %s224
    %s242 = sphi 0, %s242
    %s244 = sphi 0, %s242
    %s245 = sphi 0, %s244
    %s259 = sphi 0, %s245
    %s263 = sphi 0, %s263
    %s265 = sphi 0, %s263
    %s266 = sphi 0, %s265
    %s280 = sphi 0, %s266
    %s284 = sphi 0, %s284
    %s286 = sphi 0, %s284
    %s287 = sphi 0, %s286
    %s301 = sphi 0, %s287
    %s307 = sphi 0, %s309
    %s310 = sphi 0, %s307
    %s311 = sphi 0, %s310
    %s327 = sphi 0, %s311
  $region4: #{informer_forward.9} parent=0 // loop_header_branch
    %22 = sbr.rel (%p20) target = $region8
  $region5: #{informer_forward.9} parent=0 // loop_body
    %s24 = ssub.s32 %s19, 1
    %s25 = ssub.s32 %s19, 2
    %s26 = sadd.s32 %s19, 1
    %s27 = ssub.s32 %s19, %s26
    %p28 = scmp.eq.s32.totalorder %s27, 0
    %s30 = sadd.s32 %s29, 1
    %s31 = scalar_select %p28, %s29, %s30
    %p34 = pneg %p28
    %p35 = scmp.eq.s32.totalorder %s19, 1
    %p36 = por %p34, %p35
    %p37 = scmp.ne.s32.totalorder %s29, %s32
    %p38 = scmp.eq.s32.totalorder %s19, 0
    %p39 = por %p37, %p38
    %p40 = scmp.ne.s32.totalorder %s29, %s32
    %p41 = scmp.eq.s32.totalorder %s24, 1
    %p42 = por %p40, %p41
    %p43 = scmp.ne.s32.totalorder %s32, %s33
    %p44 = scmp.eq.s32.totalorder %s24, 0
    %p45 = por %p43, %p44
    %p46 = scmp.ne.s32.totalorder %s32, %s33
    %p47 = scmp.eq.s32.totalorder %s25, 1
    %p48 = por %p46, %p47
    %p50 = scmp.ne.s32.totalorder %s33, %s49
    %p51 = scmp.eq.s32.totalorder %s25, 0
    %p52 = por %p50, %p51
    %s54 = sadd.s32 %s53, 1
    %p57 = scmp.eq.s32.totalorder %s19, 1
    %p58 = scmp.ne.s32.totalorder %s53, %s55
    %p59 = scmp.eq.s32.totalorder %s19, 0
    %p60 = por %p58, %p59
    %p61 = scmp.ne.s32.totalorder %s53, %s55
    %p62 = scmp.eq.s32.totalorder %s24, 1
    %p63 = por %p61, %p62
    %p64 = scmp.ne.s32.totalorder %s55, %s56
    %p65 = scmp.eq.s32.totalorder %s24, 0
    %p66 = por %p64, %p65
    %p67 = scmp.ne.s32.totalorder %s55, %s56
    %p68 = scmp.eq.s32.totalorder %s25, 1
    %p69 = por %p67, %p68
    %p71 = scmp.ne.s32.totalorder %s56, %s70
    %p72 = scmp.eq.s32.totalorder %s25, 0
    %p73 = por %p71, %p72
    %s75 = sadd.s32 %s74, 1
    %p78 = scmp.eq.s32.totalorder %s19, 1
    %p79 = scmp.ne.s32.totalorder %s74, %s76
    %p80 = scmp.eq.s32.totalorder %s19, 0
    %p81 = por %p79, %p80
    %p82 = scmp.ne.s32.totalorder %s74, %s76
    %p83 = scmp.eq.s32.totalorder %s24, 1
    %p84 = por %p82, %p83
    %p85 = scmp.ne.s32.totalorder %s76, %s77
    %p86 = scmp.eq.s32.totalorder %s24, 0
    %p87 = por %p85, %p86
    %p88 = scmp.ne.s32.totalorder %s76, %s77
    %p89 = scmp.eq.s32.totalorder %s25, 1
    %p90 = por %p88, %p89
    %p92 = scmp.ne.s32.totalorder %s77, %s91
    %p93 = scmp.eq.s32.totalorder %s25, 0
    %p94 = por %p92, %p93
    %s96 = sadd.s32 %s95, 1
    %p99 = scmp.eq.s32.totalorder %s19, 1
    %p100 = scmp.ne.s32.totalorder %s95, %s97
    %p101 = scmp.eq.s32.totalorder %s19, 0
    %p102 = por %p100, %p101
    %p103 = scmp.ne.s32.totalorder %s95, %s97
    %p104 = scmp.eq.s32.totalorder %s24, 1
    %p105 = por %p103, %p104
    %p106 = scmp.ne.s32.totalorder %s97, %s98
    %p107 = scmp.eq.s32.totalorder %s24, 0
    %p108 = por %p106, %p107
    %p109 = scmp.ne.s32.totalorder %s97, %s98
    %p110 = scmp.eq.s32.totalorder %s25, 1
    %p111 = por %p109, %p110
    %p113 = scmp.ne.s32.totalorder %s98, %s112
    %p114 = scmp.eq.s32.totalorder %s25, 0
    %p115 = por %p113, %p114
    %s117 = sadd.s32 %s116, 1
    %p120 = scmp.eq.s32.totalorder %s19, 1
    %p121 = scmp.ne.s32.totalorder %s116, %s118
    %p122 = scmp.eq.s32.totalorder %s19, 0
    %p123 = por %p121, %p122
    %p124 = scmp.ne.s32.totalorder %s116, %s118
    %p125 = scmp.eq.s32.totalorder %s24, 1
    %p126 = por %p124, %p125
    %p127 = scmp.ne.s32.totalorder %s118, %s119
    %p128 = scmp.eq.s32.totalorder %s24, 0
    %p129 = por %p127, %p128
    %p130 = scmp.ne.s32.totalorder %s118, %s119
    %p131 = scmp.eq.s32.totalorder %s25, 1
    %p132 = por %p130, %p131
    %p134 = scmp.ne.s32.totalorder %s119, %s133
    %p135 = scmp.eq.s32.totalorder %s25, 0
    %p136 = por %p134, %p135
    %s138 = sadd.s32 %s137, 1
    %p141 = scmp.eq.s32.totalorder %s19, 1
    %p142 = scmp.ne.s32.totalorder %s137, %s139
    %p143 = scmp.eq.s32.totalorder %s19, 0
    %p144 = por %p142, %p143
    %p145 = scmp.ne.s32.totalorder %s137, %s139
    %p146 = scmp.eq.s32.totalorder %s24, 1
    %p147 = por %p145, %p146
    %p148 = scmp.ne.s32.totalorder %s139, %s140
    %p149 = scmp.eq.s32.totalorder %s24, 0
    %p150 = por %p148, %p149
    %p151 = scmp.ne.s32.totalorder %s139, %s140
    %p152 = scmp.eq.s32.totalorder %s25, 1
    %p153 = por %p151, %p152
    %p155 = scmp.ne.s32.totalorder %s140, %s154
    %p156 = scmp.eq.s32.totalorder %s25, 0
    %p157 = por %p155, %p156
    %s159 = sadd.s32 %s158, 1
    %p162 = scmp.eq.s32.totalorder %s19, 1
    %p163 = scmp.ne.s32.totalorder %s158, %s160
    %p164 = scmp.eq.s32.totalorder %s19, 0
    %p165 = por %p163, %p164
    %p166 = scmp.ne.s32.totalorder %s158, %s160
    %p167 = scmp.eq.s32.totalorder %s24, 1
    %p168 = por %p166, %p167
    %p169 = scmp.ne.s32.totalorder %s160, %s161
    %p170 = scmp.eq.s32.totalorder %s24, 0
    %p171 = por %p169, %p170
    %p172 = scmp.ne.s32.totalorder %s160, %s161
    %p173 = scmp.eq.s32.totalorder %s25, 1
    %p174 = por %p172, %p173
    %p176 = scmp.ne.s32.totalorder %s161, %s175
    %p177 = scmp.eq.s32.totalorder %s25, 0
    %p178 = por %p176, %p177
    %s180 = sadd.s32 %s179, 1
    %p183 = scmp.eq.s32.totalorder %s19, 1
    %p184 = scmp.ne.s32.totalorder %s179, %s181
    %p185 = scmp.eq.s32.totalorder %s19, 0
    %p186 = por %p184, %p185
    %p187 = scmp.ne.s32.totalorder %s179, %s181
    %p188 = scmp.eq.s32.totalorder %s24, 1
    %p189 = por %p187, %p188
    %p190 = scmp.ne.s32.totalorder %s181, %s182
    %p191 = scmp.eq.s32.totalorder %s24, 0
    %p192 = por %p190, %p191
    %p193 = scmp.ne.s32.totalorder %s181, %s182
    %p194 = scmp.eq.s32.totalorder %s25, 1
    %p195 = por %p193, %p194
    %p197 = scmp.ne.s32.totalorder %s182, %s196
    %p198 = scmp.eq.s32.totalorder %s25, 0
    %p199 = por %p197, %p198
    %s201 = sadd.s32 %s200, 1
    %p204 = scmp.eq.s32.totalorder %s19, 1
    %p205 = scmp.ne.s32.totalorder %s200, %s202
    %p206 = scmp.eq.s32.totalorder %s19, 0
    %p207 = por %p205, %p206
    %p208 = scmp.ne.s32.totalorder %s200, %s202
    %p209 = scmp.eq.s32.totalorder %s24, 1
    %p210 = por %p208, %p209
    %p211 = scmp.ne.s32.totalorder %s202, %s203
    %p212 = scmp.eq.s32.totalorder %s24, 0
    %p213 = por %p211, %p212
    %p214 = scmp.ne.s32.totalorder %s202, %s203
    %p215 = scmp.eq.s32.totalorder %s25, 1
    %p216 = por %p214, %p215
    %p218 = scmp.ne.s32.totalorder %s203, %s217
    %p219 = scmp.eq.s32.totalorder %s25, 0
    %p220 = por %p218, %p219
    %s222 = sadd.s32 %s221, 1
    %p225 = scmp.eq.s32.totalorder %s19, 1
    %p226 = scmp.ne.s32.totalorder %s221, %s223
    %p227 = scmp.eq.s32.totalorder %s19, 0
    %p228 = por %p226, %p227
    %p229 = scmp.ne.s32.totalorder %s221, %s223
    %p230 = scmp.eq.s32.totalorder %s24, 1
    %p231 = por %p229, %p230
    %p232 = scmp.ne.s32.totalorder %s223, %s224
    %p233 = scmp.eq.s32.totalorder %s24, 0
    %p234 = por %p232, %p233
    %p235 = scmp.ne.s32.totalorder %s223, %s224
    %p236 = scmp.eq.s32.totalorder %s25, 1
    %p237 = por %p235, %p236
    %p239 = scmp.ne.s32.totalorder %s224, %s238
    %p240 = scmp.eq.s32.totalorder %s25, 0
    %p241 = por %p239, %p240
    %s243 = sadd.s32 %s242, 1
    %p246 = scmp.eq.s32.totalorder %s19, 1
    %p247 = scmp.ne.s32.totalorder %s242, %s244
    %p248 = scmp.eq.s32.totalorder %s19, 0
    %p249 = por %p247, %p248
    %p250 = scmp.ne.s32.totalorder %s242, %s244
    %p251 = scmp.eq.s32.totalorder %s24, 1
    %p252 = por %p250, %p251
    %p253 = scmp.ne.s32.totalorder %s244, %s245
    %p254 = scmp.eq.s32.totalorder %s24, 0
    %p255 = por %p253, %p254
    %p256 = scmp.ne.s32.totalorder %s244, %s245
    %p257 = scmp.eq.s32.totalorder %s25, 1
    %p258 = por %p256, %p257
    %p260 = scmp.ne.s32.totalorder %s245, %s259
    %p261 = scmp.eq.s32.totalorder %s25, 0
    %p262 = por %p260, %p261
    %s264 = sadd.s32 %s263, 1
    %p267 = scmp.eq.s32.totalorder %s19, 1
    %p268 = scmp.ne.s32.totalorder %s263, %s265
    %p269 = scmp.eq.s32.totalorder %s19, 0
    %p270 = por %p268, %p269
    %p271 = scmp.ne.s32.totalorder %s263, %s265
    %p272 = scmp.eq.s32.totalorder %s24, 1
    %p273 = por %p271, %p272
    %p274 = scmp.ne.s32.totalorder %s265, %s266
    %p275 = scmp.eq.s32.totalorder %s24, 0
    %p276 = por %p274, %p275
    %p277 = scmp.ne.s32.totalorder %s265, %s266
    %p278 = scmp.eq.s32.totalorder %s25, 1
    %p279 = por %p277, %p278
    %p281 = scmp.ne.s32.totalorder %s266, %s280
    %p282 = scmp.eq.s32.totalorder %s25, 0
    %p283 = por %p281, %p282
    %s285 = sadd.s32 %s284, 1
    %p288 = scmp.eq.s32.totalorder %s19, 1
    %p289 = scmp.ne.s32.totalorder %s284, %s286
    %p290 = scmp.eq.s32.totalorder %s19, 0
    %p291 = por %p289, %p290
    %p292 = scmp.ne.s32.totalorder %s284, %s286
    %p293 = scmp.eq.s32.totalorder %s24, 1
    %p294 = por %p292, %p293
    %p295 = scmp.ne.s32.totalorder %s286, %s287
    %p296 = scmp.eq.s32.totalorder %s24, 0
    %p297 = por %p295, %p296
    %p298 = scmp.ne.s32.totalorder %s286, %s287
    %p299 = scmp.eq.s32.totalorder %s25, 1
    %p300 = por %p298, %p299
    %p302 = scmp.ne.s32.totalorder %s287, %s301
    %p303 = scmp.eq.s32.totalorder %s25, 0
    %p304 = por %p302, %p303
    %s305 = ssub.s32 %s19, %s26
    %p306 = scmp.eq.s32.totalorder %s305, 0
    %s308 = sadd.s32 %s307, 1
    %s309 = scalar_select %p306, %s307, %s308
    %p312 = pneg %p306
    %p313 = scmp.eq.s32.totalorder %s19, 1
    %p314 = por %p312, %p313
    %p315 = scmp.ne.s32.totalorder %s307, %s310
    %p316 = scmp.eq.s32.totalorder %s19, 0
    %p317 = por %p315, %p316
    %p318 = scmp.ne.s32.totalorder %s307, %s310
    %p319 = scmp.eq.s32.totalorder %s24, 1
    %p320 = por %p318, %p319
    %p321 = scmp.ne.s32.totalorder %s310, %s311
    %p322 = scmp.eq.s32.totalorder %s24, 0
    %p323 = por %p321, %p322
    %p324 = scmp.ne.s32.totalorder %s310, %s311
    %p325 = scmp.eq.s32.totalorder %s25, 1
    %p326 = por %p324, %p325
    %p328 = scmp.ne.s32.totalorder %s311, %s327
    %p329 = scmp.eq.s32.totalorder %s25, 0
    %p330 = por %p328, %p329
    %p331 = scmp.le.s32.totalorder 1, %s19
    %p332 = scmp.lt.s32.totalorder %s19, 3
    %p333 = pnand %p331, %p332
    %p334 = pneg %p333
    // Predicated region
    $region9: #{informer_forward.9} parent=5 // pred_check
      _
    $region10: #{informer_forward.9} parent=5 // pred_check_branch
      %336 = sbr.rel (%p333) target = $region12
    $region11: #{informer_forward.9} parent=5 // pred_region
      %s337 = ssub.s32 %s19, 1
      // Predicated region
      $region13: #{informer_forward.9} parent=11 // pred_check
        %p338 = pneg %p66
      $region14: #{informer_forward.9} parent=11 // pred_check_branch
        %340 = sbr.rel (%p338) target = $region16
      $region15: #{informer_forward.9} parent=11 // pred_region
        _
      $region16: #{informer_forward.9} parent=11 // pred_fallthru
        _
      // Predicated region
      $region17: #{informer_forward.9} parent=11 // pred_check
        %p341 = pneg %p87
      $region18: #{informer_forward.9} parent=11 // pred_check_branch
        %343 = sbr.rel (%p341) target = $region20
      $region19: #{informer_forward.9} parent=11 // pred_region
        _
      $region20: #{informer_forward.9} parent=11 // pred_fallthru
        _
      // Predicated region
      $region21: #{informer_forward.9} parent=11 // pred_check
        %p344 = pneg %p108
      $region22: #{informer_forward.9} parent=11 // pred_check_branch
        %346 = sbr.rel (%p344) target = $region24
      $region23: #{informer_forward.9} parent=11 // pred_region
        _
      $region24: #{informer_forward.9} parent=11 // pred_fallthru
        _
      // Predicated region
      $region25: #{informer_forward.9} parent=11 // pred_check
        %p347 = pneg %p129
      $region26: #{informer_forward.9} parent=11 // pred_check_branch
        %349 = sbr.rel (%p347) target = $region28
      $region27: #{informer_forward.9} parent=11 // pred_region
        _
      $region28: #{informer_forward.9} parent=11 // pred_fallthru
        _
      // Predicated region
      $region29: #{informer_forward.9} parent=11 // pred_check
        %p350 = pneg %p150
      $region30: #{informer_forward.9} parent=11 // pred_check_branch
        %352 = sbr.rel (%p350) target = $region32
      $region31: #{informer_forward.9} parent=11 // pred_region
        _
      $region32: #{informer_forward.9} parent=11 // pred_fallthru
        _
      // Predicated region
      $region33: #{informer_forward.9} parent=11 // pred_check
        %p353 = pneg %p171
      $region34: #{informer_forward.9} parent=11 // pred_check_branch
        %355 = sbr.rel (%p353) target = $region36
      $region35: #{informer_forward.9} parent=11 // pred_region
        _
      $region36: #{informer_forward.9} parent=11 // pred_fallthru
        _
      // Predicated region
      $region37: #{informer_forward.9} parent=11 // pred_check
        %p356 = pneg %p192
      $region38: #{informer_forward.9} parent=11 // pred_check_branch
        %358 = sbr.rel (%p356) target = $region40
      $region39: #{informer_forward.9} parent=11 // pred_region
        _
      $region40: #{informer_forward.9} parent=11 // pred_fallthru
        _
      // Predicated region
      $region41: #{informer_forward.9} parent=11 // pred_check
        %p359 = pneg %p213
      $region42: #{informer_forward.9} parent=11 // pred_check_branch
        %361 = sbr.rel (%p359) target = $region44
      $region43: #{informer_forward.9} parent=11 // pred_region
        _
      $region44: #{informer_forward.9} parent=11 // pred_fallthru
        _
      // Predicated region
      $region45: #{informer_forward.9} parent=11 // pred_check
        %p362 = pneg %p234
      $region46: #{informer_forward.9} parent=11 // pred_check_branch
        %364 = sbr.rel (%p362) target = $region48
      $region47: #{informer_forward.9} parent=11 // pred_region
        _
      $region48: #{informer_forward.9} parent=11 // pred_fallthru
        _
      // Predicated region
      $region49: #{informer_forward.9} parent=11 // pred_check
        %p365 = pneg %p255
      $region50: #{informer_forward.9} parent=11 // pred_check_branch
        %367 = sbr.rel (%p365) target = $region52
      $region51: #{informer_forward.9} parent=11 // pred_region
        _
      $region52: #{informer_forward.9} parent=11 // pred_fallthru
        _
      // Predicated region
      $region53: #{informer_forward.9} parent=11 // pred_check
        %p368 = pneg %p276
      $region54: #{informer_forward.9} parent=11 // pred_check_branch
        %370 = sbr.rel (%p368) target = $region56
      $region55: #{informer_forward.9} parent=11 // pred_region
        _
      $region56: #{informer_forward.9} parent=11 // pred_fallthru
        _
      // Predicated region
      $region57: #{informer_forward.9} parent=11 // pred_check
        %p371 = pneg %p297
      $region58: #{informer_forward.9} parent=11 // pred_check_branch
        %373 = sbr.rel (%p371) target = $region60
      $region59: #{informer_forward.9} parent=11 // pred_region
        _
      $region60: #{informer_forward.9} parent=11 // pred_fallthru
        _
    $region12: #{informer_forward.9} parent=5 // pred_fallthru
      _
    %p374 = scmp.lt.s32.totalorder %s19, 2
    // Predicated region
    $region61: #{informer_forward.9} parent=5 // pred_check
      %p375 = pneg %p374
    $region62: #{informer_forward.9} parent=5 // pred_check_branch
      %377 = sbr.rel (%p375) target = $region64
    $region63: #{informer_forward.9} parent=5 // pred_region
      // Predicated region
      $region65: #{informer_forward.9} parent=63 // pred_check
        %p378 = pneg %p39
      $region66: #{informer_forward.9} parent=63 // pred_check_branch
        %380 = sbr.rel (%p378) target = $region68
      $region67: #{informer_forward.9} parent=63 // pred_region
        %p381 = scmp.lt.s32.totalorder %s19, 1
        %s382 = scalar_select %p381, %s19, 1
        %s383 = smul.addr %s382, 2
        %s384 = smul.addr %s383, 8
        %s385 = scalar_lea.vmem %s0, %s384
      $region68: #{informer_forward.9} parent=63 // pred_fallthru
        _
    $region64: #{informer_forward.9} parent=5 // pred_fallthru
      _
    %p386 = scmp.le.s32.totalorder 1, %s19
    %p387 = scmp.lt.s32.totalorder %s19, 3
    %p388 = pnand %p386, %p387
    %p389 = pneg %p388
    // Predicated region
    $region69: #{informer_forward.9} parent=5 // pred_check
      _
    $region70: #{informer_forward.9} parent=5 // pred_check_branch
      %391 = sbr.rel (%p388) target = $region72
    $region71: #{informer_forward.9} parent=5 // pred_region
      %s392 = ssub.s32 %s19, 1
      %p393 = scmp.lt.s32.totalorder %s24, 1
      %s394 = scalar_select %p393, %s24, 1
      %s395 = smul.addr %s394, 2
      %s396 = smul.addr %s395, 8
      %s397 = scalar_lea.vmem %s0, %s396
      %p398 = pneg %p45
      %p399 = pneg %p42
      %p400 = pneg %p66
      %p401 = pneg %p63
      %p402 = pneg %p87
      %p403 = pneg %p84
      %p404 = pneg %p108
      %p405 = pneg %p105
      %p406 = pneg %p129
      %p407 = pneg %p126
      %p408 = pneg %p150
      %p409 = pneg %p147
      %p410 = pneg %p171
      %p411 = pneg %p168
      %p412 = pneg %p192
      %p413 = pneg %p189
      %p414 = pneg %p213
      %p415 = pneg %p210
      %p416 = pneg %p234
      %p417 = pneg %p231
      %p418 = pneg %p255
      %p419 = pneg %p252
      %p420 = pneg %p276
      %p421 = pneg %p273
      %p422 = pneg %p297
      %p423 = pneg %p294
      %p424 = pneg %p323
      %p425 = pneg %p320
      %p426 = scmp.lt.s32.totalorder %s24, 1
      %s427 = scalar_select %p426, %s24, 1
      %s428 = smul.addr %s427, 2
      %s429 = smul.addr %s428, 8
      %s430 = scalar_lea.vmem %s13, %s429
      %p431 = scmp.lt.s32.totalorder %s24, 1
      %s432 = scalar_select %p431, %s24, 1
      %s433 = smul.addr %s432, 2
      %s434 = smul.addr %s433, 8
      %s435 = scalar_lea.vmem %s0, %s434
      %p436 = scmp.lt.s32.totalorder %s24, 1
      %s437 = scalar_select %p436, %s24, 1
      %s438 = smul.addr %s437, 2
      %s439 = smul.addr %s438, 8
      %s440 = scalar_lea.vmem %s13, %s439
      %v442 = vld [vmem:[%s435] sm:$0xff]
      %v443 = vld [vmem:[%s435 + $0x8] sm:$0xf]
      %v444 = vld [vmem:[%s1] sm:$0xf]
      %v445 = vld [vmem:[%s1 + $0x4] sm:$0xf]
      %v446 = vld [vmem:[%s1 + $0x8] sm:$0xf]
      %v447 = vld [vmem:[%s1 + $0xc] sm:$0xf]
      %v448 = vpack.c.bf16 %v443, %v442
      %v449 = vld [vmem:[%s2] sm:$0x1]
      %v451 = vlaneseq
      %v452 = vshrl.u32 %v451, 7
      %v453 = vsub.s32 0, %v452
      %v454 = vrot.slane %v449, %v453
      %v460 = vunpack.c.l.b16 %v444
      %v461 = vunpack.c.l.b16 %v445
      %v462 = vunpack.c.l.b16 %v446
      %v463 = vunpack.c.l.b16 %v447
      %v464 = vpack.c.b16 %v461, %v460
      %v465 = vpack.c.b16 %v463, %v462
      %vm468 = vcmask 261120
      %v470 = vsel %vm468, %v448, 0
      %472 = vmatprep.subr.bf16.mxu0 0
      %473 = vmatpush1.bf16.msra.mxu0 0
      %474 = vmatprep.subr.bf16.mxu0 0
      %475 = vmatpush1.bf16.msra.mxu0 0
      %476 = vmatprep.subr.bf16.mxu0 0
      %477 = vmatpush1.bf16.msra.mxu0 0
      %478 = vmatprep.subr.bf16.mxu0 0
      %479 = vmatpush1.bf16.msra.mxu0 0
      %480 = vmatprep.subr.bf16.mxu0 0
      %481 = vmatpush1.bf16.msra.mxu0 0
      %482 = vmatprep.subr.bf16.mxu0 0
      %483 = vmatpush1.bf16.msra.mxu0 0
      %484 = vmatprep.subr.bf16.mxu0 0
      %485 = vmatpush1.bf16.msra.mxu0 %v465
      %486 = vmatprep.subr.bf16.mxu0 0
      %487 = vmatpush1.bf16.msra.mxu0 %v464
      %488 = vmatprep.subr.bf16.mxu0 0
      %489 = vmatpush2.bf16.msra.mxu0 0
      %490 = vmatprep.subr.bf16.mxu0 0
      %491 = vmatpush2.bf16.msra.mxu0 0
      %492 = vmatprep.subr.bf16.mxu0 0
      %493 = vmatpush2.bf16.msra.mxu0 0
      %494 = vmatprep.subr.bf16.mxu0 0
      %495 = vmatpush2.bf16.msra.mxu0 0
      %496 = vmatprep.subr.bf16.mxu0 0
      %497 = vmatpush2.bf16.msra.mxu0 0
      %498 = vmatprep.subr.bf16.mxu0 0
      %499 = vmatpush2.bf16.msra.mxu0 0
      %500 = vmatprep.subr.bf16.mxu0 0
      %501 = vmatpush2.bf16.msra.mxu0 0
      %502 = vmatprep.subr.bf16.mxu0 0
      %503 = vmatpush2.bf16.msra.mxu0 0
      %504 = vmatprep.mubr.bf16.mxu0 0
      %505 = vmatmul.mubr.bf16.gmra.mxu0 %v470
      %v506 = vpop.f32.mrf.mxu0
      %v507 = vadd.f32 %v454, %v506
      %v508 = vpop.f32.mrf.mxu0
      %v509 = vpop.f32.mrf.mxu0
      %v510 = vadd.f32 %v454, %v509
      %v511 = vpop.f32.mrf.mxu0
      %512 = vdwg.mxu0
      %v513 = vld [vmem:[%s3] sm:$0xff]
      %v514 = vld [vmem:[%s3 + $0x8] sm:$0xff]
      %v515 = vld [vmem:[%s3 + $0x10] sm:$0xff]
      %v516 = vld [vmem:[%s3 + $0x18] sm:$0xff]
      %v517 = vpack.c.bf16 %v510, %v507
      %519 = vrot.lane.b32.xlu0 %v517, 96
      %v520 = vpop.permute.xlu0 %519
      %vm521 = vcmask 64512
      %v523 = vsel %vm521, %v517, 0
      %v526 = vsel %vm521, %v520, 0
      %528 = vmatprep.subr.bf16.mxu0 0
      %529 = vmatpush1.bf16.xpose.msra.mxu0 0
      %530 = vmatprep.subr.bf16.mxu0 0
      %531 = vmatpush1.bf16.xpose.msra.mxu0 0
      %532 = vmatprep.subr.bf16.mxu0 0
      %533 = vmatpush1.bf16.xpose.msra.mxu0 0
      %534 = vmatprep.subr.bf16.mxu0 0
      %535 = vmatpush1.bf16.xpose.msra.mxu0 0
      %536 = vmatprep.subr.bf16.mxu0 0
      %537 = vmatpush1.bf16.xpose.msra.mxu0 0
      %538 = vmatprep.subr.bf16.mxu0 0
      %539 = vmatpush1.bf16.xpose.msra.mxu0 0
      %540 = vmatprep.subr.bf16.mxu0 0
      %541 = vmatpush1.bf16.xpose.msra.mxu0 0
      %542 = vmatprep.subr.bf16.mxu0 0
      %543 = vmatpush1.bf16.xpose.msra.mxu0 %v526
      %544 = vmatprep.subr.bf16.mxu0 0
      %545 = vmatpush2.bf16.xpose.msra.mxu0 0
      %546 = vmatprep.subr.bf16.mxu0 0
      %547 = vmatpush2.bf16.xpose.msra.mxu0 0
      %548 = vmatprep.subr.bf16.mxu0 0
      %549 = vmatpush2.bf16.xpose.msra.mxu0 0
      %550 = vmatprep.subr.bf16.mxu0 0
      %551 = vmatpush2.bf16.xpose.msra.mxu0 0
      %552 = vmatprep.subr.bf16.mxu0 0
      %553 = vmatpush2.bf16.xpose.msra.mxu0 0
      %554 = vmatprep.subr.bf16.mxu0 0
      %555 = vmatpush2.bf16.xpose.msra.mxu0 0
      %556 = vmatprep.subr.bf16.mxu0 0
      %557 = vmatpush2.bf16.xpose.msra.mxu0 0
      %558 = vmatprep.subr.bf16.mxu0 0
      %559 = vmatpush2.bf16.xpose.msra.mxu0 0
      %560 = vmatprep.mubr.bf16.mxu0 0
      %561 = vmatmul.mubr.bf16.gmra.mxu0 %v523
      %v562 = vpop.f32.mrf.mxu0
      %v563 = vadd.f32 0.0, %v562
      %v564 = vpop.f32.mrf.mxu0
      %v565 = vpop.f32.mrf.mxu0
      %v566 = vadd.f32 0.0, %v565
      %v567 = vpop.f32.mrf.mxu0
      %568 = vdwg.mxu0
      %v569 = vmul.f32 %v563, 0.35355338
      %v570 = vmul.f32 %v566, 0.35355338
      %vm571 = vcmask 97280
      %v572 = vsel %vm571, %v569, -inf
      %573 = vmax.xlane.f32.xlu0 %v572
      %v574 = vpop.xlane.xlu0 %573
      %vm575 = vcmask 93184
      %v576 = vsel %vm575, %v570, -inf
      %577 = vmax.xlane.f32.xlu0 %v576
      %v578 = vpop.xlane.xlu0 %577
      %v579 = vsub.f32 %v569, %v574
      %v580 = vsub.f32 %v570, %v578
      %v581 = vmul.f32 %v579, 1.442695
      %v582 = vpow.pop %v581
      %v583 = vmul.f32 %v580, 1.442695
      %v584 = vpow.pop %v583
      %v585 = vsel %vm571, %v582, 0.0
      %586 = vadd.xlane.f32.xlu0 %v585
      %v587 = vpop.xlane.xlu0 %586
      %v588 = vsel %vm575, %v584, 0.0
      %589 = vadd.xlane.f32.xlu0 %v588
      %v590 = vpop.xlane.xlu0 %589
      %v591 = vrcp.pop %v587
      %v592 = vrcp.pop %v590
      %v593 = vmul.f32 %v582, %v591
      %v594 = vmul.f32 %v584, %v592
      %v595 = vpack.c.bf16 %v594, %v593
      %596 = vrot.lane.b32.xlu0 %v517, 64
      %v597 = vpop.permute.xlu0 %596
      %v599 = vsel %vm571, %v595, 0
      %vm601 = vcmask 1045504
      %v603 = vsel %vm601, %v597, 0
      %605 = vmatprep.subr.bf16.mxu0 0
      %606 = vmatpush1.bf16.msra.mxu0 0
      %607 = vmatprep.subr.bf16.mxu0 0
      %608 = vmatpush1.bf16.msra.mxu0 0
      %609 = vmatprep.subr.bf16.mxu0 0
      %610 = vmatpush1.bf16.msra.mxu0 0
      %611 = vmatprep.subr.bf16.mxu0 0
      %612 = vmatpush1.bf16.msra.mxu0 0
      %613 = vmatprep.subr.bf16.mxu0 0
      %614 = vmatpush1.bf16.msra.mxu0 0
      %615 = vmatprep.subr.bf16.mxu0 0
      %616 = vmatpush1.bf16.msra.mxu0 0
      %617 = vmatprep.subr.bf16.mxu0 0
      %618 = vmatpush1.bf16.msra.mxu0 0
      %619 = vmatprep.subr.bf16.mxu0 0
      %620 = vmatpush1.bf16.msra.mxu0 %v603
      %621 = vmatprep.subr.bf16.mxu0 0
      %622 = vmatpush2.bf16.msra.mxu0 0
      %623 = vmatprep.subr.bf16.mxu0 0
      %624 = vmatpush2.bf16.msra.mxu0 0
      %625 = vmatprep.subr.bf16.mxu0 0
      %626 = vmatpush2.bf16.msra.mxu0 0
      %627 = vmatprep.subr.bf16.mxu0 0
      %628 = vmatpush2.bf16.msra.mxu0 0
      %629 = vmatprep.subr.bf16.mxu0 0
      %630 = vmatpush2.bf16.msra.mxu0 0
      %631 = vmatprep.subr.bf16.mxu0 0
      %632 = vmatpush2.bf16.msra.mxu0 0
      %633 = vmatprep.subr.bf16.mxu0 0
      %634 = vmatpush2.bf16.msra.mxu0 0
      %635 = vmatprep.subr.bf16.mxu0 0
      %636 = vmatpush2.bf16.msra.mxu0 0
      %637 = vmatprep.mubr.bf16.mxu0 0
      %638 = vmatmul.mubr.bf16.gmra.mxu0 %v599
      %v639 = vpop.f32.mrf.mxu0
      %v640 = vadd.f32 0.0, %v639
      %v641 = vpop.f32.mrf.mxu0
      %v642 = vpop.f32.mrf.mxu0
      %v643 = vadd.f32 0.0, %v642
      %v644 = vpop.f32.mrf.mxu0
      %645 = vdwg.mxu0
      %v646 = vpack.c.bf16 %v643, %v640
      %v647 = vpack.c.bf16 %v513, %v513
      %648 = vrot.lane.b32.xlu0 %v517, 120
      %v649 = vpop.permute.xlu0 %648
      %650 = vrot.lane.b32.xlu0 %v517, 88
      %v651 = vpop.permute.xlu0 %650
      %v653 = vsel %vm521, %v649, 0
      %v656 = vsel %vm521, %v651, 0
      %658 = vmatprep.subr.bf16.mxu0 0
      %659 = vmatpush1.bf16.xpose.msra.mxu0 0
      %660 = vmatprep.subr.bf16.mxu0 0
      %661 = vmatpush1.bf16.xpose.msra.mxu0 0
      %662 = vmatprep.subr.bf16.mxu0 0
      %663 = vmatpush1.bf16.xpose.msra.mxu0 0
      %664 = vmatprep.subr.bf16.mxu0 0
      %665 = vmatpush1.bf16.xpose.msra.mxu0 0
      %666 = vmatprep.subr.bf16.mxu0 0
      %667 = vmatpush1.bf16.xpose.msra.mxu0 0
      %668 = vmatprep.subr.bf16.mxu0 0
      %669 = vmatpush1.bf16.xpose.msra.mxu0 0
      %670 = vmatprep.subr.bf16.mxu0 0
      %671 = vmatpush1.bf16.xpose.msra.mxu0 0
      %672 = vmatprep.subr.bf16.mxu0 0
      %673 = vmatpush1.bf16.xpose.msra.mxu0 %v656
      %674 = vmatprep.subr.bf16.mxu0 0
      %675 = vmatpush2.bf16.xpose.msra.mxu0 0
      %676 = vmatprep.subr.bf16.mxu0 0
      %677 = vmatpush2.bf16.xpose.msra.mxu0 0
      %678 = vmatprep.subr.bf16.mxu0 0
      %679 = vmatpush2.bf16.xpose.msra.mxu0 0
      %680 = vmatprep.subr.bf16.mxu0 0
      %681 = vmatpush2.bf16.xpose.msra.mxu0 0
      %682 = vmatprep.subr.bf16.mxu0 0
      %683 = vmatpush2.bf16.xpose.msra.mxu0 0
      %684 = vmatprep.subr.bf16.mxu0 0
      %685 = vmatpush2.bf16.xpose.msra.mxu0 0
      %686 = vmatprep.subr.bf16.mxu0 0
      %687 = vmatpush2.bf16.xpose.msra.mxu0 0
      %688 = vmatprep.subr.bf16.mxu0 0
      %689 = vmatpush2.bf16.xpose.msra.mxu0 0
      %690 = vmatprep.mubr.bf16.mxu0 0
      %691 = vmatmul.mubr.bf16.gmra.mxu0 %v653
      %v692 = vpop.f32.mrf.mxu0
      %v693 = vadd.f32 0.0, %v692
      %v694 = vpop.f32.mrf.mxu0
      %v695 = vpop.f32.mrf.mxu0
      %v696 = vadd.f32 0.0, %v695
      %v697 = vpop.f32.mrf.mxu0
      %698 = vdwg.mxu0
      %v699 = vmul.f32 %v693, 0.35355338
      %v700 = vmul.f32 %v696, 0.35355338
      %v701 = vsel %vm571, %v699, -inf
      %702 = vmax.xlane.f32.xlu0 %v701
      %v703 = vpop.xlane.xlu0 %702
      %v704 = vsel %vm575, %v700, -inf
      %705 = vmax.xlane.f32.xlu0 %v704
      %v706 = vpop.xlane.xlu0 %705
      %v707 = vsub.f32 %v699, %v703
      %v708 = vsub.f32 %v700, %v706
      %v709 = vmul.f32 %v707, 1.442695
      %v710 = vpow.pop %v709
      %v711 = vmul.f32 %v708, 1.442695
      %v712 = vpow.pop %v711
      %v713 = vsel %vm571, %v710, 0.0
      %714 = vadd.xlane.f32.xlu0 %v713
      %v715 = vpop.xlane.xlu0 %714
      %v716 = vsel %vm575, %v712, 0.0
      %717 = vadd.xlane.f32.xlu0 %v716
      %v718 = vpop.xlane.xlu0 %717
      %v719 = vrcp.pop %v715
      %v720 = vrcp.pop %v718
      %v721 = vmul.f32 %v710, %v719
      %v722 = vmul.f32 %v712, %v720
      %v723 = vpack.c.bf16 %v722, %v721
      %724 = vrot.lane.b32.xlu0 %v517, 56
      %v725 = vpop.permute.xlu0 %724
      %v727 = vsel %vm571, %v723, 0
      %v730 = vsel %vm601, %v725, 0
      %732 = vmatprep.subr.bf16.mxu0 0
      %733 = vmatpush1.bf16.msra.mxu0 0
      %734 = vmatprep.subr.bf16.mxu0 0
      %735 = vmatpush1.bf16.msra.mxu0 0
      %736 = vmatprep.subr.bf16.mxu0 0
      %737 = vmatpush1.bf16.msra.mxu0 0
      %738 = vmatprep.subr.bf16.mxu0 0
      %739 = vmatpush1.bf16.msra.mxu0 0
      %740 = vmatprep.subr.bf16.mxu0 0
      %741 = vmatpush1.bf16.msra.mxu0 0
      %742 = vmatprep.subr.bf16.mxu0 0
      %743 = vmatpush1.bf16.msra.mxu0 0
      %744 = vmatprep.subr.bf16.mxu0 0
      %745 = vmatpush1.bf16.msra.mxu0 0
      %746 = vmatprep.subr.bf16.mxu0 0
      %747 = vmatpush1.bf16.msra.mxu0 %v730
      %748 = vmatprep.subr.bf16.mxu0 0
      %749 = vmatpush2.bf16.msra.mxu0 0
      %750 = vmatprep.subr.bf16.mxu0 0
      %751 = vmatpush2.bf16.msra.mxu0 0
      %752 = vmatprep.subr.bf16.mxu0 0
      %753 = vmatpush2.bf16.msra.mxu0 0
      %754 = vmatprep.subr.bf16.mxu0 0
      %755 = vmatpush2.bf16.msra.mxu0 0
      %756 = vmatprep.subr.bf16.mxu0 0
      %757 = vmatpush2.bf16.msra.mxu0 0
      %758 = vmatprep.subr.bf16.mxu0 0
      %759 = vmatpush2.bf16.msra.mxu0 0
      %760 = vmatprep.subr.bf16.mxu0 0
      %761 = vmatpush2.bf16.msra.mxu0 0
      %762 = vmatprep.subr.bf16.mxu0 0
      %763 = vmatpush2.bf16.msra.mxu0 0
      %764 = vmatprep.mubr.bf16.mxu0 0
      %765 = vmatmul.mubr.bf16.gmra.mxu0 %v727
      %v766 = vpop.f32.mrf.mxu0
      %v767 = vadd.f32 0.0, %v766
      %v768 = vpop.f32.mrf.mxu0
      %v769 = vpop.f32.mrf.mxu0
      %v770 = vadd.f32 0.0, %v769
      %v771 = vpop.f32.mrf.mxu0
      %772 = vdwg.mxu0
      %v773 = vpack.c.bf16 %v770, %v767
      %v774 = vpack.c.bf16 %v514, %v514
      %v776 = vsel %vm521, %v773, 0
      %vm778 = vcmask 1043456
      %v780 = vsel %vm778, %v774, 0
      %782 = vmatprep.subr.bf16.mxu0 0
      %783 = vmatpush1.bf16.msra.mxu0 0
      %784 = vmatprep.subr.bf16.mxu0 0
      %785 = vmatpush1.bf16.msra.mxu0 0
      %786 = vmatprep.subr.bf16.mxu0 0
      %787 = vmatpush1.bf16.msra.mxu0 0
      %788 = vmatprep.subr.bf16.mxu0 0
      %789 = vmatpush1.bf16.msra.mxu0 0
      %790 = vmatprep.subr.bf16.mxu0 0
      %791 = vmatpush1.bf16.msra.mxu0 0
      %792 = vmatprep.subr.bf16.mxu0 0
      %793 = vmatpush1.bf16.msra.mxu0 0
      %794 = vmatprep.subr.bf16.mxu0 0
      %795 = vmatpush1.bf16.msra.mxu0 0
      %796 = vmatprep.subr.bf16.mxu0 0
      %797 = vmatpush1.bf16.msra.mxu0 %v780
      %798 = vmatprep.subr.bf16.mxu0 0
      %799 = vmatpush2.bf16.msra.mxu0 0
      %800 = vmatprep.subr.bf16.mxu0 0
      %801 = vmatpush2.bf16.msra.mxu0 0
      %802 = vmatprep.subr.bf16.mxu0 0
      %803 = vmatpush2.bf16.msra.mxu0 0
      %804 = vmatprep.subr.bf16.mxu0 0
      %805 = vmatpush2.bf16.msra.mxu0 0
      %806 = vmatprep.subr.bf16.mxu0 0
      %807 = vmatpush2.bf16.msra.mxu0 0
      %808 = vmatprep.subr.bf16.mxu0 0
      %809 = vmatpush2.bf16.msra.mxu0 0
      %810 = vmatprep.subr.bf16.mxu0 0
      %811 = vmatpush2.bf16.msra.mxu0 0
      %812 = vmatprep.subr.bf16.mxu0 0
      %813 = vmatpush2.bf16.msra.mxu0 0
      %814 = vmatprep.mubr.bf16.mxu0 0
      %815 = vmatmul.mubr.bf16.gmra.mxu0 %v776
      %v816 = vpop.f32.mrf.mxu0
      %v817 = vadd.f32 0.0, %v816
      %v818 = vpop.f32.mrf.mxu0
      %v819 = vpop.f32.mrf.mxu0
      %v820 = vadd.f32 0.0, %v819
      %v821 = vpop.f32.mrf.mxu0
      %822 = vdwg.mxu0
      %v824 = vsel %vm521, %v646, 0
      %v827 = vsel %vm778, %v647, 0
      %829 = vmatprep.subr.bf16.mxu0 0
      %830 = vmatpush1.bf16.msra.mxu0 0
      %831 = vmatprep.subr.bf16.mxu0 0
      %832 = vmatpush1.bf16.msra.mxu0 0
      %833 = vmatprep.subr.bf16.mxu0 0
      %834 = vmatpush1.bf16.msra.mxu0 0
      %835 = vmatprep.subr.bf16.mxu0 0
      %836 = vmatpush1.bf16.msra.mxu0 0
      %837 = vmatprep.subr.bf16.mxu0 0
      %838 = vmatpush1.bf16.msra.mxu0 0
      %839 = vmatprep.subr.bf16.mxu0 0
      %840 = vmatpush1.bf16.msra.mxu0 0
      %841 = vmatprep.subr.bf16.mxu0 0
      %842 = vmatpush1.bf16.msra.mxu0 0
      %843 = vmatprep.subr.bf16.mxu0 0
      %844 = vmatpush1.bf16.msra.mxu0 %v827
      %845 = vmatprep.subr.bf16.mxu0 0
      %846 = vmatpush2.bf16.msra.mxu0 0
      %847 = vmatprep.subr.bf16.mxu0 0
      %848 = vmatpush2.bf16.msra.mxu0 0
      %849 = vmatprep.subr.bf16.mxu0 0
      %850 = vmatpush2.bf16.msra.mxu0 0
      %851 = vmatprep.subr.bf16.mxu0 0
      %852 = vmatpush2.bf16.msra.mxu0 0
      %853 = vmatprep.subr.bf16.mxu0 0
      %854 = vmatpush2.bf16.msra.mxu0 0
      %855 = vmatprep.subr.bf16.mxu0 0
      %856 = vmatpush2.bf16.msra.mxu0 0
      %857 = vmatprep.subr.bf16.mxu0 0
      %858 = vmatpush2.bf16.msra.mxu0 0
      %859 = vmatprep.subr.bf16.mxu0 0
      %860 = vmatpush2.bf16.msra.mxu0 0
      %861 = vmatprep.mubr.bf16.mxu0 0
      %862 = vmatmul.mubr.bf16.gmra.mxu0 %v824
      %v863 = vpop.f32.mrf.mxu0
      %v864 = vadd.f32 %v817, %v863
      %v865 = vpop.f32.mrf.mxu0
      %v866 = vpop.f32.mrf.mxu0
      %v867 = vadd.f32 %v820, %v866
      %v868 = vpop.f32.mrf.mxu0
      %869 = vdwg.mxu0
      %870 = vrot.lane.b32.xlu0 %v517, 112
      %v871 = vpop.permute.xlu0 %870
      %872 = vrot.lane.b32.xlu0 %v517, 80
      %v873 = vpop.permute.xlu0 %872
      %v875 = vsel %vm521, %v871, 0
      %v878 = vsel %vm521, %v873, 0
      %880 = vmatprep.subr.bf16.mxu0 0
      %881 = vmatpush1.bf16.xpose.msra.mxu0 0
      %882 = vmatprep.subr.bf16.mxu0 0
      %883 = vmatpush1.bf16.xpose.msra.mxu0 0
      %884 = vmatprep.subr.bf16.mxu0 0
      %885 = vmatpush1.bf16.xpose.msra.mxu0 0
      %886 = vmatprep.subr.bf16.mxu0 0
      %887 = vmatpush1.bf16.xpose.msra.mxu0 0
      %888 = vmatprep.subr.bf16.mxu0 0
      %889 = vmatpush1.bf16.xpose.msra.mxu0 0
      %890 = vmatprep.subr.bf16.mxu0 0
      %891 = vmatpush1.bf16.xpose.msra.mxu0 0
      %892 = vmatprep.subr.bf16.mxu0 0
      %893 = vmatpush1.bf16.xpose.msra.mxu0 0
      %894 = vmatprep.subr.bf16.mxu0 0
      %895 = vmatpush1.bf16.xpose.msra.mxu0 %v878
      %896 = vmatprep.subr.bf16.mxu0 0
      %897 = vmatpush2.bf16.xpose.msra.mxu0 0
      %898 = vmatprep.subr.bf16.mxu0 0
      %899 = vmatpush2.bf16.xpose.msra.mxu0 0
      %900 = vmatprep.subr.bf16.mxu0 0
      %901 = vmatpush2.bf16.xpose.msra.mxu0 0
      %902 = vmatprep.subr.bf16.mxu0 0
      %903 = vmatpush2.bf16.xpose.msra.mxu0 0
      %904 = vmatprep.subr.bf16.mxu0 0
      %905 = vmatpush2.bf16.xpose.msra.mxu0 0
      %906 = vmatprep.subr.bf16.mxu0 0
      %907 = vmatpush2.bf16.xpose.msra.mxu0 0
      %908 = vmatprep.subr.bf16.mxu0 0
      %909 = vmatpush2.bf16.xpose.msra.mxu0 0
      %910 = vmatprep.subr.bf16.mxu0 0
      %911 = vmatpush2.bf16.xpose.msra.mxu0 0
      %912 = vmatprep.mubr.bf16.mxu0 0
      %913 = vmatmul.mubr.bf16.gmra.mxu0 %v875
      %v914 = vpop.f32.mrf.mxu0
      %v915 = vadd.f32 0.0, %v914
      %v916 = vpop.f32.mrf.mxu0
      %v917 = vpop.f32.mrf.mxu0
      %v918 = vadd.f32 0.0, %v917
      %v919 = vpop.f32.mrf.mxu0
      %920 = vdwg.mxu0
      %v921 = vmul.f32 %v915, 0.35355338
      %v922 = vmul.f32 %v918, 0.35355338
      %v923 = vsel %vm571, %v921, -inf
      %924 = vmax.xlane.f32.xlu0 %v923
      %v925 = vpop.xlane.xlu0 %924
      %v926 = vsel %vm575, %v922, -inf
      %927 = vmax.xlane.f32.xlu0 %v926
      %v928 = vpop.xlane.xlu0 %927
      %v929 = vsub.f32 %v921, %v925
      %v930 = vsub.f32 %v922, %v928
      %v931 = vmul.f32 %v929, 1.442695
      %v932 = vpow.pop %v931
      %v933 = vmul.f32 %v930, 1.442695
      %v934 = vpow.pop %v933
      %v935 = vsel %vm571, %v932, 0.0
      %936 = vadd.xlane.f32.xlu0 %v935
      %v937 = vpop.xlane.xlu0 %936
      %v938 = vsel %vm575, %v934, 0.0
      %939 = vadd.xlane.f32.xlu0 %v938
      %v940 = vpop.xlane.xlu0 %939
      %v941 = vrcp.pop %v937
      %v942 = vrcp.pop %v940
      %v943 = vmul.f32 %v932, %v941
      %v944 = vmul.f32 %v934, %v942
      %v945 = vpack.c.bf16 %v944, %v943
      %946 = vrot.lane.b32.xlu0 %v517, 48
      %v947 = vpop.permute.xlu0 %946
      %v949 = vsel %vm571, %v945, 0
      %v952 = vsel %vm601, %v947, 0
      %954 = vmatprep.subr.bf16.mxu0 0
      %955 = vmatpush1.bf16.msra.mxu0 0
      %956 = vmatprep.subr.bf16.mxu0 0
      %957 = vmatpush1.bf16.msra.mxu0 0
      %958 = vmatprep.subr.bf16.mxu0 0
      %959 = vmatpush1.bf16.msra.mxu0 0
      %960 = vmatprep.subr.bf16.mxu0 0
      %961 = vmatpush1.bf16.msra.mxu0 0
      %962 = vmatprep.subr.bf16.mxu0 0
      %963 = vmatpush1.bf16.msra.mxu0 0
      %964 = vmatprep.subr.bf16.mxu0 0
      %965 = vmatpush1.bf16.msra.mxu0 0
      %966 = vmatprep.subr.bf16.mxu0 0
      %967 = vmatpush1.bf16.msra.mxu0 0
      %968 = vmatprep.subr.bf16.mxu0 0
      %969 = vmatpush1.bf16.msra.mxu0 %v952
      %970 = vmatprep.subr.bf16.mxu0 0
      %971 = vmatpush2.bf16.msra.mxu0 0
      %972 = vmatprep.subr.bf16.mxu0 0
      %973 = vmatpush2.bf16.msra.mxu0 0
      %974 = vmatprep.subr.bf16.mxu0 0
      %975 = vmatpush2.bf16.msra.mxu0 0
      %976 = vmatprep.subr.bf16.mxu0 0
      %977 = vmatpush2.bf16.msra.mxu0 0
      %978 = vmatprep.subr.bf16.mxu0 0
      %979 = vmatpush2.bf16.msra.mxu0 0
      %980 = vmatprep.subr.bf16.mxu0 0
      %981 = vmatpush2.bf16.msra.mxu0 0
      %982 = vmatprep.subr.bf16.mxu0 0
      %983 = vmatpush2.bf16.msra.mxu0 0
      %984 = vmatprep.subr.bf16.mxu0 0
      %985 = vmatpush2.bf16.msra.mxu0 0
      %986 = vmatprep.mubr.bf16.mxu0 0
      %987 = vmatmul.mubr.bf16.gmra.mxu0 %v949
      %v988 = vpop.f32.mrf.mxu0
      %v989 = vadd.f32 0.0, %v988
      %v990 = vpop.f32.mrf.mxu0
      %v991 = vpop.f32.mrf.mxu0
      %v992 = vadd.f32 0.0, %v991
      %v993 = vpop.f32.mrf.mxu0
      %994 = vdwg.mxu0
      %v995 = vpack.c.bf16 %v992, %v989
      %v996 = vpack.c.bf16 %v515, %v515
      %v998 = vsel %vm521, %v995, 0
      %v1001 = vsel %vm778, %v996, 0
      %1003 = vmatprep.subr.bf16.mxu0 0
      %1004 = vmatpush1.bf16.msra.mxu0 0
      %1005 = vmatprep.subr.bf16.mxu0 0
      %1006 = vmatpush1.bf16.msra.mxu0 0
      %1007 = vmatprep.subr.bf16.mxu0 0
      %1008 = vmatpush1.bf16.msra.mxu0 0
      %1009 = vmatprep.subr.bf16.mxu0 0
      %1010 = vmatpush1.bf16.msra.mxu0 0
      %1011 = vmatprep.subr.bf16.mxu0 0
      %1012 = vmatpush1.bf16.msra.mxu0 0
      %1013 = vmatprep.subr.bf16.mxu0 0
      %1014 = vmatpush1.bf16.msra.mxu0 0
      %1015 = vmatprep.subr.bf16.mxu0 0
      %1016 = vmatpush1.bf16.msra.mxu0 0
      %1017 = vmatprep.subr.bf16.mxu0 0
      %1018 = vmatpush1.bf16.msra.mxu0 %v1001
      %1019 = vmatprep.subr.bf16.mxu0 0
      %1020 = vmatpush2.bf16.msra.mxu0 0
      %1021 = vmatprep.subr.bf16.mxu0 0
      %1022 = vmatpush2.bf16.msra.mxu0 0
      %1023 = vmatprep.subr.bf16.mxu0 0
      %1024 = vmatpush2.bf16.msra.mxu0 0
      %1025 = vmatprep.subr.bf16.mxu0 0
      %1026 = vmatpush2.bf16.msra.mxu0 0
      %1027 = vmatprep.subr.bf16.mxu0 0
      %1028 = vmatpush2.bf16.msra.mxu0 0
      %1029 = vmatprep.subr.bf16.mxu0 0
      %1030 = vmatpush2.bf16.msra.mxu0 0
      %1031 = vmatprep.subr.bf16.mxu0 0
      %1032 = vmatpush2.bf16.msra.mxu0 0
      %1033 = vmatprep.subr.bf16.mxu0 0
      %1034 = vmatpush2.bf16.msra.mxu0 0
      %1035 = vmatprep.mubr.bf16.mxu0 0
      %1036 = vmatmul.mubr.bf16.gmra.mxu0 %v998
      %v1037 = vpop.f32.mrf.mxu0
      %v1038 = vadd.f32 0.0, %v1037
      %v1039 = vpop.f32.mrf.mxu0
      %v1040 = vpop.f32.mrf.mxu0
      %v1041 = vadd.f32 0.0, %v1040
      %v1042 = vpop.f32.mrf.mxu0
      %1043 = vdwg.mxu0
      %v1044 = vadd.f32 %v864, %v1038
      %v1045 = vadd.f32 %v867, %v1041
      %1046 = vrot.lane.b32.xlu0 %v517, 104
      %v1047 = vpop.permute.xlu0 %1046
      %1048 = vrot.lane.b32.xlu0 %v517, 72
      %v1049 = vpop.permute.xlu0 %1048
      %v1051 = vsel %vm521, %v1047, 0
      %v1054 = vsel %vm521, %v1049, 0
      %1056 = vmatprep.subr.bf16.mxu0 0
      %1057 = vmatpush1.bf16.xpose.msra.mxu0 0
      %1058 = vmatprep.subr.bf16.mxu0 0
      %1059 = vmatpush1.bf16.xpose.msra.mxu0 0
      %1060 = vmatprep.subr.bf16.mxu0 0
      %1061 = vmatpush1.bf16.xpose.msra.mxu0 0
      %1062 = vmatprep.subr.bf16.mxu0 0
      %1063 = vmatpush1.bf16.xpose.msra.mxu0 0
      %1064 = vmatprep.subr.bf16.mxu0 0
      %1065 = vmatpush1.bf16.xpose.msra.mxu0 0
      %1066 = vmatprep.subr.bf16.mxu0 0
      %1067 = vmatpush1.bf16.xpose.msra.mxu0 0
      %1068 = vmatprep.subr.bf16.mxu0 0
      %1069 = vmatpush1.bf16.xpose.msra.mxu0 0
      %1070 = vmatprep.subr.bf16.mxu0 0
      %1071 = vmatpush1.bf16.xpose.msra.mxu0 %v1054
      %1072 = vmatprep.subr.bf16.mxu0 0
      %1073 = vmatpush2.bf16.xpose.msra.mxu0 0
      %1074 = vmatprep.subr.bf16.mxu0 0
      %1075 = vmatpush2.bf16.xpose.msra.mxu0 0
      %1076 = vmatprep.subr.bf16.mxu0 0
      %1077 = vmatpush2.bf16.xpose.msra.mxu0 0
      %1078 = vmatprep.subr.bf16.mxu0 0
      %1079 = vmatpush2.bf16.xpose.msra.mxu0 0
      %1080 = vmatprep.subr.bf16.mxu0 0
      %1081 = vmatpush2.bf16.xpose.msra.mxu0 0
      %1082 = vmatprep.subr.bf16.mxu0 0
      %1083 = vmatpush2.bf16.xpose.msra.mxu0 0
      %1084 = vmatprep.subr.bf16.mxu0 0
      %1085 = vmatpush2.bf16.xpose.msra.mxu0 0
      %1086 = vmatprep.subr.bf16.mxu0 0
      %1087 = vmatpush2.bf16.xpose.msra.mxu0 0
      %1088 = vmatprep.mubr.bf16.mxu0 0
      %1089 = vmatmul.mubr.bf16.gmra.mxu0 %v1051
      %v1090 = vpop.f32.mrf.mxu0
      %v1091 = vadd.f32 0.0, %v1090
      %v1092 = vpop.f32.mrf.mxu0
      %v1093 = vpop.f32.mrf.mxu0
      %v1094 = vadd.f32 0.0, %v1093
      %v1095 = vpop.f32.mrf.mxu0
      %1096 = vdwg.mxu0
      %v1097 = vmul.f32 %v1091, 0.35355338
      %v1098 = vmul.f32 %v1094, 0.35355338
      %v1099 = vsel %vm571, %v1097, -inf
      %1100 = vmax.xlane.f32.xlu0 %v1099
      %v1101 = vpop.xlane.xlu0 %1100
      %v1102 = vsel %vm575, %v1098, -inf
      %1103 = vmax.xlane.f32.xlu0 %v1102
      %v1104 = vpop.xlane.xlu0 %1103
      %v1105 = vsub.f32 %v1097, %v1101
      %v1106 = vsub.f32 %v1098, %v1104
      %v1107 = vmul.f32 %v1105, 1.442695
      %v1108 = vpow.pop %v1107
      %v1109 = vmul.f32 %v1106, 1.442695
      %v1110 = vpow.pop %v1109
      %v1111 = vsel %vm571, %v1108, 0.0
      %1112 = vadd.xlane.f32.xlu0 %v1111
      %v1113 = vpop.xlane.xlu0 %1112
      %v1114 = vsel %vm575, %v1110, 0.0
      %1115 = vadd.xlane.f32.xlu0 %v1114
      %v1116 = vpop.xlane.xlu0 %1115
      %v1117 = vrcp.pop %v1113
      %v1118 = vrcp.pop %v1116
      %v1119 = vmul.f32 %v1108, %v1117
      %v1120 = vmul.f32 %v1110, %v1118
      %v1121 = vpack.c.bf16 %v1120, %v1119
      %1122 = vrot.lane.b32.xlu0 %v517, 40
      %v1123 = vpop.permute.xlu0 %1122
      %v1125 = vsel %vm571, %v1121, 0
      %v1128 = vsel %vm601, %v1123, 0
      %1130 = vmatprep.subr.bf16.mxu0 0
      %1131 = vmatpush1.bf16.msra.mxu0 0
      %1132 = vmatprep.subr.bf16.mxu0 0
      %1133 = vmatpush1.bf16.msra.mxu0 0
      %1134 = vmatprep.subr.bf16.mxu0 0
      %1135 = vmatpush1.bf16.msra.mxu0 0
      %1136 = vmatprep.subr.bf16.mxu0 0
      %1137 = vmatpush1.bf16.msra.mxu0 0
      %1138 = vmatprep.subr.bf16.mxu0 0
      %1139 = vmatpush1.bf16.msra.mxu0 0
      %1140 = vmatprep.subr.bf16.mxu0 0
      %1141 = vmatpush1.bf16.msra.mxu0 0
      %1142 = vmatprep.subr.bf16.mxu0 0
      %1143 = vmatpush1.bf16.msra.mxu0 0
      %1144 = vmatprep.subr.bf16.mxu0 0
      %1145 = vmatpush1.bf16.msra.mxu0 %v1128
      %1146 = vmatprep.subr.bf16.mxu0 0
      %1147 = vmatpush2.bf16.msra.mxu0 0
      %1148 = vmatprep.subr.bf16.mxu0 0
      %1149 = vmatpush2.bf16.msra.mxu0 0
      %1150 = vmatprep.subr.bf16.mxu0 0
      %1151 = vmatpush2.bf16.msra.mxu0 0
      %1152 = vmatprep.subr.bf16.mxu0 0
      %1153 = vmatpush2.bf16.msra.mxu0 0
      %1154 = vmatprep.subr.bf16.mxu0 0
      %1155 = vmatpush2.bf16.msra.mxu0 0
      %1156 = vmatprep.subr.bf16.mxu0 0
      %1157 = vmatpush2.bf16.msra.mxu0 0
      %1158 = vmatprep.subr.bf16.mxu0 0
      %1159 = vmatpush2.bf16.msra.mxu0 0
      %1160 = vmatprep.subr.bf16.mxu0 0
      %1161 = vmatpush2.bf16.msra.mxu0 0
      %1162 = vmatprep.mubr.bf16.mxu0 0
      %1163 = vmatmul.mubr.bf16.gmra.mxu0 %v1125
      %v1164 = vpop.f32.mrf.mxu0
      %v1165 = vadd.f32 0.0, %v1164
      %v1166 = vpop.f32.mrf.mxu0
      %v1167 = vpop.f32.mrf.mxu0
      %v1168 = vadd.f32 0.0, %v1167
      %v1169 = vpop.f32.mrf.mxu0
      %1170 = vdwg.mxu0
      %v1171 = vpack.c.bf16 %v1168, %v1165
      %v1172 = vpack.c.bf16 %v516, %v516
      %v1174 = vsel %vm521, %v1171, 0
      %v1177 = vsel %vm778, %v1172, 0
      %1179 = vmatprep.subr.bf16.mxu0 0
      %1180 = vmatpush1.bf16.msra.mxu0 0
      %1181 = vmatprep.subr.bf16.mxu0 0
      %1182 = vmatpush1.bf16.msra.mxu0 0
      %1183 = vmatprep.subr.bf16.mxu0 0
      %1184 = vmatpush1.bf16.msra.mxu0 0
      %1185 = vmatprep.subr.bf16.mxu0 0
      %1186 = vmatpush1.bf16.msra.mxu0 0
      %1187 = vmatprep.subr.bf16.mxu0 0
      %1188 = vmatpush1.bf16.msra.mxu0 0
      %1189 = vmatprep.subr.bf16.mxu0 0
      %1190 = vmatpush1.bf16.msra.mxu0 0
      %1191 = vmatprep.subr.bf16.mxu0 0
      %1192 = vmatpush1.bf16.msra.mxu0 0
      %1193 = vmatprep.subr.bf16.mxu0 0
      %1194 = vmatpush1.bf16.msra.mxu0 %v1177
      %1195 = vmatprep.subr.bf16.mxu0 0
      %1196 = vmatpush2.bf16.msra.mxu0 0
      %1197 = vmatprep.subr.bf16.mxu0 0
      %1198 = vmatpush2.bf16.msra.mxu0 0
      %1199 = vmatprep.subr.bf16.mxu0 0
      %1200 = vmatpush2.bf16.msra.mxu0 0
      %1201 = vmatprep.subr.bf16.mxu0 0
      %1202 = vmatpush2.bf16.msra.mxu0 0
      %1203 = vmatprep.subr.bf16.mxu0 0
      %1204 = vmatpush2.bf16.msra.mxu0 0
      %1205 = vmatprep.subr.bf16.mxu0 0
      %1206 = vmatpush2.bf16.msra.mxu0 0
      %1207 = vmatprep.subr.bf16.mxu0 0
      %1208 = vmatpush2.bf16.msra.mxu0 0
      %1209 = vmatprep.subr.bf16.mxu0 0
      %1210 = vmatpush2.bf16.msra.mxu0 0
      %1211 = vmatprep.mubr.bf16.mxu0 0
      %1212 = vmatmul.mubr.bf16.gmra.mxu0 %v1174
      %v1213 = vpop.f32.mrf.mxu0
      %v1214 = vadd.f32 0.0, %v1213
      %v1215 = vpop.f32.mrf.mxu0
      %v1216 = vpop.f32.mrf.mxu0
      %v1217 = vadd.f32 0.0, %v1216
      %v1218 = vpop.f32.mrf.mxu0
      %1219 = vdwg.mxu0
      %v1220 = vadd.f32 %v1044, %v1214
      %v1221 = vadd.f32 %v1045, %v1217
      %v1222 = vld [vmem:[%s4] sm:$0x1]
      %v1224 = vlaneseq
      %v1225 = vshrl.u32 %v1224, 7
      %v1226 = vsub.s32 0, %v1225
      %v1227 = vrot.slane %v1222, %v1226
      %v1229 = vadd.f32 %v1220, %v1227
      %v1230 = vadd.f32 %v1221, %v1227
      %v1231 = vadd.f32 %v442, %v1229
      %v1232 = vadd.f32 %v443, %v1230
      %v1233 = vld [vmem:[%s5] sm:$0x1]
      %v1234 = vld [vmem:[%s6] sm:$0x1]
      %v1235 = vsel %vm468, %v1231, 0.0
      %1236 = vadd.xlane.f32.xlu0 %v1235
      %v1237 = vpop.xlane.xlu0 %1236
      %vm1238 = vcmask 257024
      %v1239 = vsel %vm1238, %v1232, 0.0
      %1240 = vadd.xlane.f32.xlu0 %v1239
      %v1241 = vpop.xlane.xlu0 %1240
      %v1242 = vrcp.pop 32.0
      %v1243 = vmul.f32 %v1237, %v1242
      %v1244 = vmul.f32 %v1241, %v1242
      %v1245 = vsub.f32 %v1231, %v1243
      %v1246 = vsub.f32 %v1232, %v1244
      %v1247 = vmul.f32 %v1245, %v1245
      %v1248 = vmul.f32 %v1246, %v1246
      %v1249 = vsel %vm468, %v1247, 0.0
      %1250 = vadd.xlane.f32.xlu0 %v1249
      %v1251 = vpop.xlane.xlu0 %1250
      %v1252 = vsel %vm1238, %v1248, 0.0
      %1253 = vadd.xlane.f32.xlu0 %v1252
      %v1254 = vpop.xlane.xlu0 %1253
      %v1255 = vmul.f32 %v1251, %v1242
      %v1256 = vmul.f32 %v1254, %v1242
      %v1257 = vadd.f32 %v1255, 1e-05
      %v1258 = vadd.f32 %v1256, 1e-05
      %v1259 = vrsqrt.pop %v1257
      %v1260 = vrsqrt.pop %v1258
      %v1261 = vmul.f32 %v1245, %v1259
      %v1262 = vmul.f32 %v1246, %v1260
      %v1264 = vlaneseq
      %v1265 = vshrl.u32 %v1264, 7
      %v1266 = vsub.s32 0, %v1265
      %v1267 = vrot.slane %v1233, %v1266
      %v1269 = vmul.f32 %v1261, %v1267
      %v1270 = vmul.f32 %v1262, %v1267
      %v1272 = vlaneseq
      %v1273 = vshrl.u32 %v1272, 7
      %v1274 = vsub.s32 0, %v1273
      %v1275 = vrot.slane %v1234, %v1274
      %v1277 = vadd.f32 %v1269, %v1275
      %v1278 = vadd.f32 %v1270, %v1275
      %v1279 = vld [vmem:[%s7] sm:$0xf]
      %v1280 = vld [vmem:[%s7 + $0x4] sm:$0xf]
      %v1281 = vld [vmem:[%s7 + $0x8] sm:$0xf]
      %v1282 = vld [vmem:[%s7 + $0xc] sm:$0xf]
      %v1283 = vpack.c.bf16 %v1278, %v1277
      %v1284 = vld [vmem:[%s8] sm:$0x1]
      %v1286 = vlaneseq
      %v1287 = vshrl.u32 %v1286, 7
      %v1288 = vsub.s32 0, %v1287
      %v1289 = vrot.slane %v1284, %v1288
      %v1295 = vunpack.c.l.b16 %v1279
      %v1296 = vunpack.c.l.b16 %v1280
      %v1297 = vunpack.c.l.b16 %v1281
      %v1298 = vunpack.c.l.b16 %v1282
      %v1299 = vpack.c.b16 %v1296, %v1295
      %v1300 = vpack.c.b16 %v1298, %v1297
      %v1304 = vsel %vm468, %v1283, 0
      %1306 = vmatprep.subr.bf16.mxu0 0
      %1307 = vmatpush1.bf16.msra.mxu0 0
      %1308 = vmatprep.subr.bf16.mxu0 0
      %1309 = vmatpush1.bf16.msra.mxu0 0
      %1310 = vmatprep.subr.bf16.mxu0 0
      %1311 = vmatpush1.bf16.msra.mxu0 0
      %1312 = vmatprep.subr.bf16.mxu0 0
      %1313 = vmatpush1.bf16.msra.mxu0 0
      %1314 = vmatprep.subr.bf16.mxu0 0
      %1315 = vmatpush1.bf16.msra.mxu0 0
      %1316 = vmatprep.subr.bf16.mxu0 0
      %1317 = vmatpush1.bf16.msra.mxu0 0
      %1318 = vmatprep.subr.bf16.mxu0 0
      %1319 = vmatpush1.bf16.msra.mxu0 %v1300
      %1320 = vmatprep.subr.bf16.mxu0 0
      %1321 = vmatpush1.bf16.msra.mxu0 %v1299
      %1322 = vmatprep.subr.bf16.mxu0 0
      %1323 = vmatpush2.bf16.msra.mxu0 0
      %1324 = vmatprep.subr.bf16.mxu0 0
      %1325 = vmatpush2.bf16.msra.mxu0 0
      %1326 = vmatprep.subr.bf16.mxu0 0
      %1327 = vmatpush2.bf16.msra.mxu0 0
      %1328 = vmatprep.subr.bf16.mxu0 0
      %1329 = vmatpush2.bf16.msra.mxu0 0
      %1330 = vmatprep.subr.bf16.mxu0 0
      %1331 = vmatpush2.bf16.msra.mxu0 0
      %1332 = vmatprep.subr.bf16.mxu0 0
      %1333 = vmatpush2.bf16.msra.mxu0 0
      %1334 = vmatprep.subr.bf16.mxu0 0
      %1335 = vmatpush2.bf16.msra.mxu0 0
      %1336 = vmatprep.subr.bf16.mxu0 0
      %1337 = vmatpush2.bf16.msra.mxu0 0
      %1338 = vmatprep.mubr.bf16.mxu0 0
      %1339 = vmatmul.mubr.bf16.gmra.mxu0 %v1304
      %v1340 = vpop.f32.mrf.mxu0
      %v1341 = vadd.f32 %v1289, %v1340
      %v1342 = vpop.f32.mrf.mxu0
      %v1343 = vpop.f32.mrf.mxu0
      %v1344 = vadd.f32 %v1289, %v1343
      %v1345 = vpop.f32.mrf.mxu0
      %1346 = vdwg.mxu0
      %v1347 = vmax.f32 %v1341, 0.0
      %v1348 = vmax.f32 %v1344, 0.0
      %v1349 = vld [vmem:[%s9] sm:$0xf]
      %v1350 = vld [vmem:[%s9 + $0x4] sm:$0xf]
      %v1351 = vld [vmem:[%s9 + $0x8] sm:$0xf]
      %v1352 = vld [vmem:[%s9 + $0xc] sm:$0xf]
      %v1353 = vld [vmem:[%s9 + $0x10] sm:$0xf]
      %v1354 = vld [vmem:[%s9 + $0x14] sm:$0xf]
      %v1355 = vld [vmem:[%s9 + $0x18] sm:$0xf]
      %v1356 = vld [vmem:[%s9 + $0x1c] sm:$0xf]
      %v1357 = vpack.c.bf16 %v1348, %v1347
      %v1358 = vld [vmem:[%s10] sm:$0x1]
      %v1360 = vlaneseq
      %v1361 = vshrl.u32 %v1360, 7
      %v1362 = vsub.s32 0, %v1361
      %v1363 = vrot.slane %v1358, %v1362
      %v1373 = vunpack.c.l.b16 %v1349
      %v1374 = vunpack.c.l.b16 %v1350
      %v1375 = vunpack.c.l.b16 %v1351
      %v1376 = vunpack.c.l.b16 %v1352
      %v1377 = vunpack.c.l.b16 %v1353
      %v1378 = vunpack.c.l.b16 %v1354
      %v1379 = vunpack.c.l.b16 %v1355
      %v1380 = vunpack.c.l.b16 %v1356
      %v1381 = vpack.c.b16 %v1374, %v1373
      %v1382 = vpack.c.b16 %v1376, %v1375
      %v1383 = vpack.c.b16 %v1378, %v1377
      %v1384 = vpack.c.b16 %v1380, %v1379
      %vm1389 = vcmask 523264
      %v1391 = vsel %vm1389, %v1357, 0
      %1393 = vmatprep.subr.bf16.mxu0 0
      %1394 = vmatpush1.bf16.msra.mxu0 0
      %1395 = vmatprep.subr.bf16.mxu0 0
      %1396 = vmatpush1.bf16.msra.mxu0 0
      %1397 = vmatprep.subr.bf16.mxu0 0
      %1398 = vmatpush1.bf16.msra.mxu0 0
      %1399 = vmatprep.subr.bf16.mxu0 0
      %1400 = vmatpush1.bf16.msra.mxu0 0
      %1401 = vmatprep.subr.bf16.mxu0 0
      %1402 = vmatpush1.bf16.msra.mxu0 %v1384
      %1403 = vmatprep.subr.bf16.mxu0 0
      %1404 = vmatpush1.bf16.msra.mxu0 %v1383
      %1405 = vmatprep.subr.bf16.mxu0 0
      %1406 = vmatpush1.bf16.msra.mxu0 %v1382
      %1407 = vmatprep.subr.bf16.mxu0 0
      %1408 = vmatpush1.bf16.msra.mxu0 %v1381
      %1409 = vmatprep.subr.bf16.mxu0 0
      %1410 = vmatpush2.bf16.msra.mxu0 0
      %1411 = vmatprep.subr.bf16.mxu0 0
      %1412 = vmatpush2.bf16.msra.mxu0 0
      %1413 = vmatprep.subr.bf16.mxu0 0
      %1414 = vmatpush2.bf16.msra.mxu0 0
      %1415 = vmatprep.subr.bf16.mxu0 0
      %1416 = vmatpush2.bf16.msra.mxu0 0
      %1417 = vmatprep.subr.bf16.mxu0 0
      %1418 = vmatpush2.bf16.msra.mxu0 0
      %1419 = vmatprep.subr.bf16.mxu0 0
      %1420 = vmatpush2.bf16.msra.mxu0 0
      %1421 = vmatprep.subr.bf16.mxu0 0
      %1422 = vmatpush2.bf16.msra.mxu0 0
      %1423 = vmatprep.subr.bf16.mxu0 0
      %1424 = vmatpush2.bf16.msra.mxu0 0
      %1425 = vmatprep.mubr.bf16.mxu0 0
      %1426 = vmatmul.mubr.bf16.gmra.mxu0 %v1391
      %v1427 = vpop.f32.mrf.mxu0
      %v1428 = vadd.f32 %v1363, %v1427
      %v1429 = vpop.f32.mrf.mxu0
      %v1430 = vpop.f32.mrf.mxu0
      %v1431 = vadd.f32 %v1363, %v1430
      %v1432 = vpop.f32.mrf.mxu0
      %1433 = vdwg.mxu0
      %v1434 = vadd.f32 %v1277, %v1428
      %v1435 = vadd.f32 %v1278, %v1431
      %v1436 = vld [vmem:[%s11] sm:$0x1]
      %v1437 = vld [vmem:[%s12] sm:$0x1]
      %v1438 = vsel %vm468, %v1434, 0.0
      %1439 = vadd.xlane.f32.xlu0 %v1438
      %v1440 = vpop.xlane.xlu0 %1439
      %v1441 = vsel %vm1238, %v1435, 0.0
      %1442 = vadd.xlane.f32.xlu0 %v1441
      %v1443 = vpop.xlane.xlu0 %1442
      %v1444 = vmul.f32 %v1440, %v1242
      %v1445 = vmul.f32 %v1443, %v1242
      %v1446 = vsub.f32 %v1434, %v1444
      %v1447 = vsub.f32 %v1435, %v1445
      %v1448 = vmul.f32 %v1446, %v1446
      %v1449 = vmul.f32 %v1447, %v1447
      %v1450 = vsel %vm468, %v1448, 0.0
      %1451 = vadd.xlane.f32.xlu0 %v1450
      %v1452 = vpop.xlane.xlu0 %1451
      %v1453 = vsel %vm1238, %v1449, 0.0
      %1454 = vadd.xlane.f32.xlu0 %v1453
      %v1455 = vpop.xlane.xlu0 %1454
      %v1456 = vmul.f32 %v1452, %v1242
      %v1457 = vmul.f32 %v1455, %v1242
      %v1458 = vadd.f32 %v1456, 1e-05
      %v1459 = vadd.f32 %v1457, 1e-05
      %v1460 = vrsqrt.pop %v1458
      %v1461 = vrsqrt.pop %v1459
      %v1462 = vmul.f32 %v1446, %v1460
      %v1463 = vmul.f32 %v1447, %v1461
      %v1465 = vlaneseq
      %v1466 = vshrl.u32 %v1465, 7
      %v1467 = vsub.s32 0, %v1466
      %v1468 = vrot.slane %v1436, %v1467
      %v1470 = vmul.f32 %v1462, %v1468
      %v1471 = vmul.f32 %v1463, %v1468
      %v1473 = vlaneseq
      %v1474 = vshrl.u32 %v1473, 7
      %v1475 = vsub.s32 0, %v1474
      %v1476 = vrot.slane %v1437, %v1475
      %v1478 = vadd.f32 %v1470, %v1476
      %v1479 = vadd.f32 %v1471, %v1476
      %1480 = vst.msk [vmem:[%s440] sm:$0xff] %vm468, %v1478
      %1481 = vst.msk [vmem:[%s440 + $0x8] sm:$0xf] %vm1238, %v1479
      %p1482 = scmp.lt.s32.totalorder %s24, 1
      %s1483 = scalar_select %p1482, %s24, 1
      %s1484 = smul.addr %s1483, 2
      %s1485 = smul.addr %s1484, 8
      %s1486 = scalar_lea.vmem %s13, %s1485
      // Predicated region
      $region73: #{informer_forward.9} parent=71 // pred_check
        %p1487 = pneg %p320
      $region74: #{informer_forward.9} parent=71 // pred_check_branch
        %1489 = sbr.rel (%p1487) target = $region76
      $region75: #{informer_forward.9} parent=71 // pred_region
        _
      $region76: #{informer_forward.9} parent=71 // pred_fallthru
        _
    $region72: #{informer_forward.9} parent=5 // pred_fallthru
      _
    %p1490 = scmp.le.s32.totalorder 2, %s19
    // Predicated region
    $region77: #{informer_forward.9} parent=5 // pred_check
      %p1491 = pneg %p1490
    $region78: #{informer_forward.9} parent=5 // pred_check_branch
      %1493 = sbr.rel (%p1491) target = $region80
    $region79: #{informer_forward.9} parent=5 // pred_region
      %s1494 = ssub.s32 %s19, 2
      // Predicated region
      $region81: #{informer_forward.9} parent=79 // pred_check
        %p1495 = pneg %p326
      $region82: #{informer_forward.9} parent=79 // pred_check_branch
        %1497 = sbr.rel (%p1495) target = $region84
      $region83: #{informer_forward.9} parent=79 // pred_region
        %p1498 = scmp.lt.s32.totalorder %s25, 1
        %s1499 = scalar_select %p1498, %s25, 1
        %s1500 = smul.addr %s1499, 2
        %s1501 = smul.addr %s1500, 8
        %s1502 = scalar_lea.vmem %s13, %s1501
      $region84: #{informer_forward.9} parent=79 // pred_fallthru
        _
    $region80: #{informer_forward.9} parent=5 // pred_fallthru
      _
  $region6: #{informer_forward.9} parent=0 // loop_footer
    %s23 = sadd.s32 1, %s19
  $region7: #{informer_forward.9} parent=0 // loop_footer_branch
    %18 = sbr.rel target = $region3
  $region8: #{informer_forward.9} parent=0 // loop_exit
    _

// kernel: informer_forward.11
$region0: #{informer_forward.11}
  #allocation0 [shape = 'u32[]', space=smem, size = 0x4, offset = 0x4, fixed_abs, tag = 'smem constant byte address 0x4 - core index']
  #allocation1 [shape = 'u32[144,128]{1,0:T(1,128)}', space=vmem, size = 0x12000, scoped, tag = 'internal scratch']
  %s0 = inlined_call_operand.vmem [shape: f32[2,6,32], index: 0, kind: input, shape index: {}]
  %s1 = inlined_call_operand.vmem [shape: bf16[32,96], index: 1, kind: input, shape index: {}]
  %s2 = inlined_call_operand.vmem [shape: f32[1,96], index: 2, kind: input, shape index: {}]
  %s3 = inlined_call_operand.vmem [shape: f32[32,32], index: 3, kind: input, shape index: {}]
  %s4 = inlined_call_operand.vmem [shape: f32[1,32], index: 4, kind: input, shape index: {}]
  %s5 = inlined_call_operand.vmem [shape: f32[1,32], index: 5, kind: input, shape index: {}]
  %s6 = inlined_call_operand.vmem [shape: f32[1,32], index: 6, kind: input, shape index: {}]
  %s7 = inlined_call_operand.vmem [shape: bf16[32,64], index: 7, kind: input, shape index: {}]
  %s8 = inlined_call_operand.vmem [shape: f32[1,64], index: 8, kind: input, shape index: {}]
  %s9 = inlined_call_operand.vmem [shape: bf16[64,32], index: 9, kind: input, shape index: {}]
  %s10 = inlined_call_operand.vmem [shape: f32[1,32], index: 10, kind: input, shape index: {}]
  %s11 = inlined_call_operand.vmem [shape: f32[1,32], index: 11, kind: input, shape index: {}]
  %s12 = inlined_call_operand.vmem [shape: f32[1,32], index: 12, kind: input, shape index: {}]
  %s13 = inlined_call_operand.vmem [shape: f32[1,32], index: 13, kind: input, shape index: {}]
  %s14 = inlined_call_operand.vmem [shape: f32[1,32], index: 14, kind: input, shape index: {}]
  %s15 = inlined_call_operand.vmem [shape: f32[2,6,32], index: 15, kind: output, shape index: {}]
  %s16 = sld [smem:[#allocation0]]
  $region93: #{informer_forward.11} parent=0
    _
  %s18 = ssub.s32 1, %s16
  %s19 = scalar_select 0, %s18, %s16
  loop: start=0, step=1, limit=4
  $region2: #{informer_forward.11} parent=0 // loop_pre_header
    _
  $region3: #{informer_forward.11} parent=0 // loop_header
    %s21 = sphi 0, %s25
    %p22 = scmp.ge.s32.totalorder %s21, 4
    %s31 = sphi 0, %s33
    %s34 = sphi 0, %s31
    %s35 = sphi 0, %s34
    %s51 = sphi 0, %s35
    %s55 = sphi 0, %s55
    %s57 = sphi 0, %s55
    %s58 = sphi 0, %s57
    %s72 = sphi 0, %s58
    %s76 = sphi 0, %s76
    %s78 = sphi 0, %s76
    %s79 = sphi 0, %s78
    %s93 = sphi 0, %s79
    %s97 = sphi 0, %s97
    %s99 = sphi 0, %s97
    %s100 = sphi 0, %s99
    %s114 = sphi 0, %s100
    %s118 = sphi 0, %s118
    %s120 = sphi 0, %s118
    %s121 = sphi 0, %s120
    %s135 = sphi 0, %s121
    %s139 = sphi 0, %s139
    %s141 = sphi 0, %s139
    %s142 = sphi 0, %s141
    %s156 = sphi 0, %s142
    %s160 = sphi 0, %s160
    %s162 = sphi 0, %s160
    %s163 = sphi 0, %s162
    %s177 = sphi 0, %s163
    %s181 = sphi 0, %s181
    %s183 = sphi 0, %s181
    %s184 = sphi 0, %s183
    %s198 = sphi 0, %s184
    %s202 = sphi 0, %s202
    %s204 = sphi 0, %s202
    %s205 = sphi 0, %s204
    %s219 = sphi 0, %s205
    %s223 = sphi 0, %s223
    %s225 = sphi 0, %s223
    %s226 = sphi 0, %s225
    %s240 = sphi 0, %s226
    %s244 = sphi 0, %s244
    %s246 = sphi 0, %s244
    %s247 = sphi 0, %s246
    %s261 = sphi 0, %s247
    %s265 = sphi 0, %s265
    %s267 = sphi 0, %s265
    %s268 = sphi 0, %s267
    %s282 = sphi 0, %s268
    %s286 = sphi 0, %s286
    %s288 = sphi 0, %s286
    %s289 = sphi 0, %s288
    %s303 = sphi 0, %s289
    %s307 = sphi 0, %s307
    %s309 = sphi 0, %s307
    %s310 = sphi 0, %s309
    %s324 = sphi 0, %s310
    %s328 = sphi 0, %s328
    %s330 = sphi 0, %s328
    %s331 = sphi 0, %s330
    %s345 = sphi 0, %s331
    %s351 = sphi 0, %s353
    %s354 = sphi 0, %s351
    %s355 = sphi 0, %s354
    %s371 = sphi 0, %s355
  $region4: #{informer_forward.11} parent=0 // loop_header_branch
    %24 = sbr.rel (%p22) target = $region8
  $region5: #{informer_forward.11} parent=0 // loop_body
    %s26 = ssub.s32 %s21, 1
    %s27 = ssub.s32 %s21, 2
    %s28 = sadd.s32 %s21, 1
    %s29 = ssub.s32 %s21, %s28
    %p30 = scmp.eq.s32.totalorder %s29, 0
    %s32 = sadd.s32 %s31, 1
    %s33 = scalar_select %p30, %s31, %s32
    %p36 = pneg %p30
    %p37 = scmp.eq.s32.totalorder %s21, 1
    %p38 = por %p36, %p37
    %p39 = scmp.ne.s32.totalorder %s31, %s34
    %p40 = scmp.eq.s32.totalorder %s21, 0
    %p41 = por %p39, %p40
    %p42 = scmp.ne.s32.totalorder %s31, %s34
    %p43 = scmp.eq.s32.totalorder %s26, 1
    %p44 = por %p42, %p43
    %p45 = scmp.ne.s32.totalorder %s34, %s35
    %p46 = scmp.eq.s32.totalorder %s26, 0
    %p47 = por %p45, %p46
    %p48 = scmp.ne.s32.totalorder %s34, %s35
    %p49 = scmp.eq.s32.totalorder %s27, 1
    %p50 = por %p48, %p49
    %p52 = scmp.ne.s32.totalorder %s35, %s51
    %p53 = scmp.eq.s32.totalorder %s27, 0
    %p54 = por %p52, %p53
    %s56 = sadd.s32 %s55, 1
    %p59 = scmp.eq.s32.totalorder %s21, 1
    %p60 = scmp.ne.s32.totalorder %s55, %s57
    %p61 = scmp.eq.s32.totalorder %s21, 0
    %p62 = por %p60, %p61
    %p63 = scmp.ne.s32.totalorder %s55, %s57
    %p64 = scmp.eq.s32.totalorder %s26, 1
    %p65 = por %p63, %p64
    %p66 = scmp.ne.s32.totalorder %s57, %s58
    %p67 = scmp.eq.s32.totalorder %s26, 0
    %p68 = por %p66, %p67
    %p69 = scmp.ne.s32.totalorder %s57, %s58
    %p70 = scmp.eq.s32.totalorder %s27, 1
    %p71 = por %p69, %p70
    %p73 = scmp.ne.s32.totalorder %s58, %s72
    %p74 = scmp.eq.s32.totalorder %s27, 0
    %p75 = por %p73, %p74
    %s77 = sadd.s32 %s76, 1
    %p80 = scmp.eq.s32.totalorder %s21, 1
    %p81 = scmp.ne.s32.totalorder %s76, %s78
    %p82 = scmp.eq.s32.totalorder %s21, 0
    %p83 = por %p81, %p82
    %p84 = scmp.ne.s32.totalorder %s76, %s78
    %p85 = scmp.eq.s32.totalorder %s26, 1
    %p86 = por %p84, %p85
    %p87 = scmp.ne.s32.totalorder %s78, %s79
    %p88 = scmp.eq.s32.totalorder %s26, 0
    %p89 = por %p87, %p88
    %p90 = scmp.ne.s32.totalorder %s78, %s79
    %p91 = scmp.eq.s32.totalorder %s27, 1
    %p92 = por %p90, %p91
    %p94 = scmp.ne.s32.totalorder %s79, %s93
    %p95 = scmp.eq.s32.totalorder %s27, 0
    %p96 = por %p94, %p95
    %s98 = sadd.s32 %s97, 1
    %p101 = scmp.eq.s32.totalorder %s21, 1
    %p102 = scmp.ne.s32.totalorder %s97, %s99
    %p103 = scmp.eq.s32.totalorder %s21, 0
    %p104 = por %p102, %p103
    %p105 = scmp.ne.s32.totalorder %s97, %s99
    %p106 = scmp.eq.s32.totalorder %s26, 1
    %p107 = por %p105, %p106
    %p108 = scmp.ne.s32.totalorder %s99, %s100
    %p109 = scmp.eq.s32.totalorder %s26, 0
    %p110 = por %p108, %p109
    %p111 = scmp.ne.s32.totalorder %s99, %s100
    %p112 = scmp.eq.s32.totalorder %s27, 1
    %p113 = por %p111, %p112
    %p115 = scmp.ne.s32.totalorder %s100, %s114
    %p116 = scmp.eq.s32.totalorder %s27, 0
    %p117 = por %p115, %p116
    %s119 = sadd.s32 %s118, 1
    %p122 = scmp.eq.s32.totalorder %s21, 1
    %p123 = scmp.ne.s32.totalorder %s118, %s120
    %p124 = scmp.eq.s32.totalorder %s21, 0
    %p125 = por %p123, %p124
    %p126 = scmp.ne.s32.totalorder %s118, %s120
    %p127 = scmp.eq.s32.totalorder %s26, 1
    %p128 = por %p126, %p127
    %p129 = scmp.ne.s32.totalorder %s120, %s121
    %p130 = scmp.eq.s32.totalorder %s26, 0
    %p131 = por %p129, %p130
    %p132 = scmp.ne.s32.totalorder %s120, %s121
    %p133 = scmp.eq.s32.totalorder %s27, 1
    %p134 = por %p132, %p133
    %p136 = scmp.ne.s32.totalorder %s121, %s135
    %p137 = scmp.eq.s32.totalorder %s27, 0
    %p138 = por %p136, %p137
    %s140 = sadd.s32 %s139, 1
    %p143 = scmp.eq.s32.totalorder %s21, 1
    %p144 = scmp.ne.s32.totalorder %s139, %s141
    %p145 = scmp.eq.s32.totalorder %s21, 0
    %p146 = por %p144, %p145
    %p147 = scmp.ne.s32.totalorder %s139, %s141
    %p148 = scmp.eq.s32.totalorder %s26, 1
    %p149 = por %p147, %p148
    %p150 = scmp.ne.s32.totalorder %s141, %s142
    %p151 = scmp.eq.s32.totalorder %s26, 0
    %p152 = por %p150, %p151
    %p153 = scmp.ne.s32.totalorder %s141, %s142
    %p154 = scmp.eq.s32.totalorder %s27, 1
    %p155 = por %p153, %p154
    %p157 = scmp.ne.s32.totalorder %s142, %s156
    %p158 = scmp.eq.s32.totalorder %s27, 0
    %p159 = por %p157, %p158
    %s161 = sadd.s32 %s160, 1
    %p164 = scmp.eq.s32.totalorder %s21, 1
    %p165 = scmp.ne.s32.totalorder %s160, %s162
    %p166 = scmp.eq.s32.totalorder %s21, 0
    %p167 = por %p165, %p166
    %p168 = scmp.ne.s32.totalorder %s160, %s162
    %p169 = scmp.eq.s32.totalorder %s26, 1
    %p170 = por %p168, %p169
    %p171 = scmp.ne.s32.totalorder %s162, %s163
    %p172 = scmp.eq.s32.totalorder %s26, 0
    %p173 = por %p171, %p172
    %p174 = scmp.ne.s32.totalorder %s162, %s163
    %p175 = scmp.eq.s32.totalorder %s27, 1
    %p176 = por %p174, %p175
    %p178 = scmp.ne.s32.totalorder %s163, %s177
    %p179 = scmp.eq.s32.totalorder %s27, 0
    %p180 = por %p178, %p179
    %s182 = sadd.s32 %s181, 1
    %p185 = scmp.eq.s32.totalorder %s21, 1
    %p186 = scmp.ne.s32.totalorder %s181, %s183
    %p187 = scmp.eq.s32.totalorder %s21, 0
    %p188 = por %p186, %p187
    %p189 = scmp.ne.s32.totalorder %s181, %s183
    %p190 = scmp.eq.s32.totalorder %s26, 1
    %p191 = por %p189, %p190
    %p192 = scmp.ne.s32.totalorder %s183, %s184
    %p193 = scmp.eq.s32.totalorder %s26, 0
    %p194 = por %p192, %p193
    %p195 = scmp.ne.s32.totalorder %s183, %s184
    %p196 = scmp.eq.s32.totalorder %s27, 1
    %p197 = por %p195, %p196
    %p199 = scmp.ne.s32.totalorder %s184, %s198
    %p200 = scmp.eq.s32.totalorder %s27, 0
    %p201 = por %p199, %p200
    %s203 = sadd.s32 %s202, 1
    %p206 = scmp.eq.s32.totalorder %s21, 1
    %p207 = scmp.ne.s32.totalorder %s202, %s204
    %p208 = scmp.eq.s32.totalorder %s21, 0
    %p209 = por %p207, %p208
    %p210 = scmp.ne.s32.totalorder %s202, %s204
    %p211 = scmp.eq.s32.totalorder %s26, 1
    %p212 = por %p210, %p211
    %p213 = scmp.ne.s32.totalorder %s204, %s205
    %p214 = scmp.eq.s32.totalorder %s26, 0
    %p215 = por %p213, %p214
    %p216 = scmp.ne.s32.totalorder %s204, %s205
    %p217 = scmp.eq.s32.totalorder %s27, 1
    %p218 = por %p216, %p217
    %p220 = scmp.ne.s32.totalorder %s205, %s219
    %p221 = scmp.eq.s32.totalorder %s27, 0
    %p222 = por %p220, %p221
    %s224 = sadd.s32 %s223, 1
    %p227 = scmp.eq.s32.totalorder %s21, 1
    %p228 = scmp.ne.s32.totalorder %s223, %s225
    %p229 = scmp.eq.s32.totalorder %s21, 0
    %p230 = por %p228, %p229
    %p231 = scmp.ne.s32.totalorder %s223, %s225
    %p232 = scmp.eq.s32.totalorder %s26, 1
    %p233 = por %p231, %p232
    %p234 = scmp.ne.s32.totalorder %s225, %s226
    %p235 = scmp.eq.s32.totalorder %s26, 0
    %p236 = por %p234, %p235
    %p237 = scmp.ne.s32.totalorder %s225, %s226
    %p238 = scmp.eq.s32.totalorder %s27, 1
    %p239 = por %p237, %p238
    %p241 = scmp.ne.s32.totalorder %s226, %s240
    %p242 = scmp.eq.s32.totalorder %s27, 0
    %p243 = por %p241, %p242
    %s245 = sadd.s32 %s244, 1
    %p248 = scmp.eq.s32.totalorder %s21, 1
    %p249 = scmp.ne.s32.totalorder %s244, %s246
    %p250 = scmp.eq.s32.totalorder %s21, 0
    %p251 = por %p249, %p250
    %p252 = scmp.ne.s32.totalorder %s244, %s246
    %p253 = scmp.eq.s32.totalorder %s26, 1
    %p254 = por %p252, %p253
    %p255 = scmp.ne.s32.totalorder %s246, %s247
    %p256 = scmp.eq.s32.totalorder %s26, 0
    %p257 = por %p255, %p256
    %p258 = scmp.ne.s32.totalorder %s246, %s247
    %p259 = scmp.eq.s32.totalorder %s27, 1
    %p260 = por %p258, %p259
    %p262 = scmp.ne.s32.totalorder %s247, %s261
    %p263 = scmp.eq.s32.totalorder %s27, 0
    %p264 = por %p262, %p263
    %s266 = sadd.s32 %s265, 1
    %p269 = scmp.eq.s32.totalorder %s21, 1
    %p270 = scmp.ne.s32.totalorder %s265, %s267
    %p271 = scmp.eq.s32.totalorder %s21, 0
    %p272 = por %p270, %p271
    %p273 = scmp.ne.s32.totalorder %s265, %s267
    %p274 = scmp.eq.s32.totalorder %s26, 1
    %p275 = por %p273, %p274
    %p276 = scmp.ne.s32.totalorder %s267, %s268
    %p277 = scmp.eq.s32.totalorder %s26, 0
    %p278 = por %p276, %p277
    %p279 = scmp.ne.s32.totalorder %s267, %s268
    %p280 = scmp.eq.s32.totalorder %s27, 1
    %p281 = por %p279, %p280
    %p283 = scmp.ne.s32.totalorder %s268, %s282
    %p284 = scmp.eq.s32.totalorder %s27, 0
    %p285 = por %p283, %p284
    %s287 = sadd.s32 %s286, 1
    %p290 = scmp.eq.s32.totalorder %s21, 1
    %p291 = scmp.ne.s32.totalorder %s286, %s288
    %p292 = scmp.eq.s32.totalorder %s21, 0
    %p293 = por %p291, %p292
    %p294 = scmp.ne.s32.totalorder %s286, %s288
    %p295 = scmp.eq.s32.totalorder %s26, 1
    %p296 = por %p294, %p295
    %p297 = scmp.ne.s32.totalorder %s288, %s289
    %p298 = scmp.eq.s32.totalorder %s26, 0
    %p299 = por %p297, %p298
    %p300 = scmp.ne.s32.totalorder %s288, %s289
    %p301 = scmp.eq.s32.totalorder %s27, 1
    %p302 = por %p300, %p301
    %p304 = scmp.ne.s32.totalorder %s289, %s303
    %p305 = scmp.eq.s32.totalorder %s27, 0
    %p306 = por %p304, %p305
    %s308 = sadd.s32 %s307, 1
    %p311 = scmp.eq.s32.totalorder %s21, 1
    %p312 = scmp.ne.s32.totalorder %s307, %s309
    %p313 = scmp.eq.s32.totalorder %s21, 0
    %p314 = por %p312, %p313
    %p315 = scmp.ne.s32.totalorder %s307, %s309
    %p316 = scmp.eq.s32.totalorder %s26, 1
    %p317 = por %p315, %p316
    %p318 = scmp.ne.s32.totalorder %s309, %s310
    %p319 = scmp.eq.s32.totalorder %s26, 0
    %p320 = por %p318, %p319
    %p321 = scmp.ne.s32.totalorder %s309, %s310
    %p322 = scmp.eq.s32.totalorder %s27, 1
    %p323 = por %p321, %p322
    %p325 = scmp.ne.s32.totalorder %s310, %s324
    %p326 = scmp.eq.s32.totalorder %s27, 0
    %p327 = por %p325, %p326
    %s329 = sadd.s32 %s328, 1
    %p332 = scmp.eq.s32.totalorder %s21, 1
    %p333 = scmp.ne.s32.totalorder %s328, %s330
    %p334 = scmp.eq.s32.totalorder %s21, 0
    %p335 = por %p333, %p334
    %p336 = scmp.ne.s32.totalorder %s328, %s330
    %p337 = scmp.eq.s32.totalorder %s26, 1
    %p338 = por %p336, %p337
    %p339 = scmp.ne.s32.totalorder %s330, %s331
    %p340 = scmp.eq.s32.totalorder %s26, 0
    %p341 = por %p339, %p340
    %p342 = scmp.ne.s32.totalorder %s330, %s331
    %p343 = scmp.eq.s32.totalorder %s27, 1
    %p344 = por %p342, %p343
    %p346 = scmp.ne.s32.totalorder %s331, %s345
    %p347 = scmp.eq.s32.totalorder %s27, 0
    %p348 = por %p346, %p347
    %s349 = ssub.s32 %s21, %s28
    %p350 = scmp.eq.s32.totalorder %s349, 0
    %s352 = sadd.s32 %s351, 1
    %s353 = scalar_select %p350, %s351, %s352
    %p356 = pneg %p350
    %p357 = scmp.eq.s32.totalorder %s21, 1
    %p358 = por %p356, %p357
    %p359 = scmp.ne.s32.totalorder %s351, %s354
    %p360 = scmp.eq.s32.totalorder %s21, 0
    %p361 = por %p359, %p360
    %p362 = scmp.ne.s32.totalorder %s351, %s354
    %p363 = scmp.eq.s32.totalorder %s26, 1
    %p364 = por %p362, %p363
    %p365 = scmp.ne.s32.totalorder %s354, %s355
    %p366 = scmp.eq.s32.totalorder %s26, 0
    %p367 = por %p365, %p366
    %p368 = scmp.ne.s32.totalorder %s354, %s355
    %p369 = scmp.eq.s32.totalorder %s27, 1
    %p370 = por %p368, %p369
    %p372 = scmp.ne.s32.totalorder %s355, %s371
    %p373 = scmp.eq.s32.totalorder %s27, 0
    %p374 = por %p372, %p373
    %p375 = scmp.le.s32.totalorder 1, %s21
    %p376 = scmp.lt.s32.totalorder %s21, 3
    %p377 = pnand %p375, %p376
    %p378 = pneg %p377
    // Predicated region
    $region9: #{informer_forward.11} parent=5 // pred_check
      _
    $region10: #{informer_forward.11} parent=5 // pred_check_branch
      %380 = sbr.rel (%p377) target = $region12
    $region11: #{informer_forward.11} parent=5 // pred_region
      %s381 = ssub.s32 %s21, 1
      // Predicated region
      $region13: #{informer_forward.11} parent=11 // pred_check
        %p382 = pneg %p68
      $region14: #{informer_forward.11} parent=11 // pred_check_branch
        %384 = sbr.rel (%p382) target = $region16
      $region15: #{informer_forward.11} parent=11 // pred_region
        _
      $region16: #{informer_forward.11} parent=11 // pred_fallthru
        _
      // Predicated region
      $region17: #{informer_forward.11} parent=11 // pred_check
        %p385 = pneg %p89
      $region18: #{informer_forward.11} parent=11 // pred_check_branch
        %387 = sbr.rel (%p385) target = $region20
      $region19: #{informer_forward.11} parent=11 // pred_region
        _
      $region20: #{informer_forward.11} parent=11 // pred_fallthru
        _
      // Predicated region
      $region21: #{informer_forward.11} parent=11 // pred_check
        %p388 = pneg %p110
      $region22: #{informer_forward.11} parent=11 // pred_check_branch
        %390 = sbr.rel (%p388) target = $region24
      $region23: #{informer_forward.11} parent=11 // pred_region
        _
      $region24: #{informer_forward.11} parent=11 // pred_fallthru
        _
      // Predicated region
      $region25: #{informer_forward.11} parent=11 // pred_check
        %p391 = pneg %p131
      $region26: #{informer_forward.11} parent=11 // pred_check_branch
        %393 = sbr.rel (%p391) target = $region28
      $region27: #{informer_forward.11} parent=11 // pred_region
        _
      $region28: #{informer_forward.11} parent=11 // pred_fallthru
        _
      // Predicated region
      $region29: #{informer_forward.11} parent=11 // pred_check
        %p394 = pneg %p152
      $region30: #{informer_forward.11} parent=11 // pred_check_branch
        %396 = sbr.rel (%p394) target = $region32
      $region31: #{informer_forward.11} parent=11 // pred_region
        _
      $region32: #{informer_forward.11} parent=11 // pred_fallthru
        _
      // Predicated region
      $region33: #{informer_forward.11} parent=11 // pred_check
        %p397 = pneg %p173
      $region34: #{informer_forward.11} parent=11 // pred_check_branch
        %399 = sbr.rel (%p397) target = $region36
      $region35: #{informer_forward.11} parent=11 // pred_region
        _
      $region36: #{informer_forward.11} parent=11 // pred_fallthru
        _
      // Predicated region
      $region37: #{informer_forward.11} parent=11 // pred_check
        %p400 = pneg %p194
      $region38: #{informer_forward.11} parent=11 // pred_check_branch
        %402 = sbr.rel (%p400) target = $region40
      $region39: #{informer_forward.11} parent=11 // pred_region
        _
      $region40: #{informer_forward.11} parent=11 // pred_fallthru
        _
      // Predicated region
      $region41: #{informer_forward.11} parent=11 // pred_check
        %p403 = pneg %p215
      $region42: #{informer_forward.11} parent=11 // pred_check_branch
        %405 = sbr.rel (%p403) target = $region44
      $region43: #{informer_forward.11} parent=11 // pred_region
        _
      $region44: #{informer_forward.11} parent=11 // pred_fallthru
        _
      // Predicated region
      $region45: #{informer_forward.11} parent=11 // pred_check
        %p406 = pneg %p236
      $region46: #{informer_forward.11} parent=11 // pred_check_branch
        %408 = sbr.rel (%p406) target = $region48
      $region47: #{informer_forward.11} parent=11 // pred_region
        _
      $region48: #{informer_forward.11} parent=11 // pred_fallthru
        _
      // Predicated region
      $region49: #{informer_forward.11} parent=11 // pred_check
        %p409 = pneg %p257
      $region50: #{informer_forward.11} parent=11 // pred_check_branch
        %411 = sbr.rel (%p409) target = $region52
      $region51: #{informer_forward.11} parent=11 // pred_region
        _
      $region52: #{informer_forward.11} parent=11 // pred_fallthru
        _
      // Predicated region
      $region53: #{informer_forward.11} parent=11 // pred_check
        %p412 = pneg %p278
      $region54: #{informer_forward.11} parent=11 // pred_check_branch
        %414 = sbr.rel (%p412) target = $region56
      $region55: #{informer_forward.11} parent=11 // pred_region
        _
      $region56: #{informer_forward.11} parent=11 // pred_fallthru
        _
      // Predicated region
      $region57: #{informer_forward.11} parent=11 // pred_check
        %p415 = pneg %p299
      $region58: #{informer_forward.11} parent=11 // pred_check_branch
        %417 = sbr.rel (%p415) target = $region60
      $region59: #{informer_forward.11} parent=11 // pred_region
        _
      $region60: #{informer_forward.11} parent=11 // pred_fallthru
        _
      // Predicated region
      $region61: #{informer_forward.11} parent=11 // pred_check
        %p418 = pneg %p320
      $region62: #{informer_forward.11} parent=11 // pred_check_branch
        %420 = sbr.rel (%p418) target = $region64
      $region63: #{informer_forward.11} parent=11 // pred_region
        _
      $region64: #{informer_forward.11} parent=11 // pred_fallthru
        _
      // Predicated region
      $region65: #{informer_forward.11} parent=11 // pred_check
        %p421 = pneg %p341
      $region66: #{informer_forward.11} parent=11 // pred_check_branch
        %423 = sbr.rel (%p421) target = $region68
      $region67: #{informer_forward.11} parent=11 // pred_region
        _
      $region68: #{informer_forward.11} parent=11 // pred_fallthru
        _
    $region12: #{informer_forward.11} parent=5 // pred_fallthru
      _
    %p424 = scmp.lt.s32.totalorder %s21, 2
    // Predicated region
    $region69: #{informer_forward.11} parent=5 // pred_check
      %p425 = pneg %p424
    $region70: #{informer_forward.11} parent=5 // pred_check_branch
      %427 = sbr.rel (%p425) target = $region72
    $region71: #{informer_forward.11} parent=5 // pred_region
      // Predicated region
      $region73: #{informer_forward.11} parent=71 // pred_check
        %p428 = pneg %p41
      $region74: #{informer_forward.11} parent=71 // pred_check_branch
        %430 = sbr.rel (%p428) target = $region76
      $region75: #{informer_forward.11} parent=71 // pred_region
        %p431 = scmp.lt.s32.totalorder %s21, 1
        %s432 = scalar_select %p431, %s21, 1
        %s433 = smul.addr %s432, 8
        %s434 = scalar_lea.vmem %s0, %s433
      $region76: #{informer_forward.11} parent=71 // pred_fallthru
        _
    $region72: #{informer_forward.11} parent=5 // pred_fallthru
      _
    %p435 = scmp.le.s32.totalorder 1, %s21
    %p436 = scmp.lt.s32.totalorder %s21, 3
    %p437 = pnand %p435, %p436
    %p438 = pneg %p437
    // Predicated region
    $region77: #{informer_forward.11} parent=5 // pred_check
      _
    $region78: #{informer_forward.11} parent=5 // pred_check_branch
      %440 = sbr.rel (%p437) target = $region80
    $region79: #{informer_forward.11} parent=5 // pred_region
      %s441 = ssub.s32 %s21, 1
      %p442 = scmp.lt.s32.totalorder %s26, 1
      %s443 = scalar_select %p442, %s26, 1
      %s444 = smul.addr %s443, 8
      %s445 = scalar_lea.vmem %s0, %s444
      %p446 = pneg %p47
      %p447 = pneg %p44
      %p448 = pneg %p68
      %p449 = pneg %p65
      %p450 = pneg %p89
      %p451 = pneg %p86
      %p452 = pneg %p110
      %p453 = pneg %p107
      %p454 = pneg %p131
      %p455 = pneg %p128
      %p456 = pneg %p152
      %p457 = pneg %p149
      %p458 = pneg %p173
      %p459 = pneg %p170
      %p460 = pneg %p194
      %p461 = pneg %p191
      %p462 = pneg %p215
      %p463 = pneg %p212
      %p464 = pneg %p236
      %p465 = pneg %p233
      %p466 = pneg %p257
      %p467 = pneg %p254
      %p468 = pneg %p278
      %p469 = pneg %p275
      %p470 = pneg %p299
      %p471 = pneg %p296
      %p472 = pneg %p320
      %p473 = pneg %p317
      %p474 = pneg %p341
      %p475 = pneg %p338
      %p476 = pneg %p367
      %p477 = pneg %p364
      %p478 = scmp.lt.s32.totalorder %s26, 1
      %s479 = scalar_select %p478, %s26, 1
      %s480 = smul.addr %s479, 8
      %s481 = scalar_lea.vmem %s15, %s480
      %p482 = scmp.lt.s32.totalorder %s26, 1
      %s483 = scalar_select %p482, %s26, 1
      %s484 = smul.addr %s483, 8
      %s485 = scalar_lea.vmem %s0, %s484
      %p486 = scmp.lt.s32.totalorder %s26, 1
      %s487 = scalar_select %p486, %s26, 1
      %s488 = smul.addr %s487, 8
      %s489 = scalar_lea.vmem %s15, %s488
      %v491 = vld [vmem:[%s485] sm:$0x3f]
      %v492 = vld [vmem:[%s1] sm:$0xf]
      %v493 = vld [vmem:[%s1 + $0x4] sm:$0xf]
      %v494 = vld [vmem:[%s1 + $0x8] sm:$0xf]
      %v495 = vld [vmem:[%s1 + $0xc] sm:$0xf]
      %v496 = vpack.c.bf16 %v491, %v491
      %v497 = vld [vmem:[%s2] sm:$0x1]
      %v499 = vlaneseq
      %v500 = vshrl.u32 %v499, 7
      %v501 = vsub.s32 0, %v500
      %v502 = vrot.slane %v497, %v501
      %v508 = vunpack.c.l.b16 %v492
      %v509 = vunpack.c.l.b16 %v493
      %v510 = vunpack.c.l.b16 %v494
      %v511 = vunpack.c.l.b16 %v495
      %v512 = vpack.c.b16 %v509, %v508
      %v513 = vpack.c.b16 %v511, %v510
      %vm516 = vcmask 261120
      %v518 = vsel %vm516, %v496, 0
      %520 = vmatprep.subr.bf16.mxu0 0
      %521 = vmatpush1.bf16.msra.mxu0 0
      %522 = vmatprep.subr.bf16.mxu0 0
      %523 = vmatpush1.bf16.msra.mxu0 0
      %524 = vmatprep.subr.bf16.mxu0 0
      %525 = vmatpush1.bf16.msra.mxu0 0
      %526 = vmatprep.subr.bf16.mxu0 0
      %527 = vmatpush1.bf16.msra.mxu0 0
      %528 = vmatprep.subr.bf16.mxu0 0
      %529 = vmatpush1.bf16.msra.mxu0 0
      %530 = vmatprep.subr.bf16.mxu0 0
      %531 = vmatpush1.bf16.msra.mxu0 0
      %532 = vmatprep.subr.bf16.mxu0 0
      %533 = vmatpush1.bf16.msra.mxu0 %v513
      %534 = vmatprep.subr.bf16.mxu0 0
      %535 = vmatpush1.bf16.msra.mxu0 %v512
      %536 = vmatprep.subr.bf16.mxu0 0
      %537 = vmatpush2.bf16.msra.mxu0 0
      %538 = vmatprep.subr.bf16.mxu0 0
      %539 = vmatpush2.bf16.msra.mxu0 0
      %540 = vmatprep.subr.bf16.mxu0 0
      %541 = vmatpush2.bf16.msra.mxu0 0
      %542 = vmatprep.subr.bf16.mxu0 0
      %543 = vmatpush2.bf16.msra.mxu0 0
      %544 = vmatprep.subr.bf16.mxu0 0
      %545 = vmatpush2.bf16.msra.mxu0 0
      %546 = vmatprep.subr.bf16.mxu0 0
      %547 = vmatpush2.bf16.msra.mxu0 0
      %548 = vmatprep.subr.bf16.mxu0 0
      %549 = vmatpush2.bf16.msra.mxu0 0
      %550 = vmatprep.subr.bf16.mxu0 0
      %551 = vmatpush2.bf16.msra.mxu0 0
      %552 = vmatprep.mubr.bf16.mxu0 0
      %553 = vmatmul.mubr.bf16.gmra.mxu0 %v518
      %v554 = vpop.f32.mrf.mxu0
      %v555 = vadd.f32 %v502, %v554
      %v556 = vpop.f32.mrf.mxu0
      %v557 = vpop.f32.mrf.mxu0
      %v558 = vpop.f32.mrf.mxu0
      %559 = vdwg.mxu0
      %v560 = vld [vmem:[%s3] sm:$0xff]
      %v561 = vld [vmem:[%s3 + $0x8] sm:$0xff]
      %v562 = vld [vmem:[%s3 + $0x10] sm:$0xff]
      %v563 = vld [vmem:[%s3 + $0x18] sm:$0xff]
      %v564 = vpack.c.bf16 %v555, %v555
      %566 = vrot.lane.b32.xlu0 %v564, 96
      %v567 = vpop.permute.xlu0 %566
      %vm568 = vcmask 64512
      %v570 = vsel %vm568, %v564, 0
      %v573 = vsel %vm568, %v567, 0
      %575 = vmatprep.subr.bf16.mxu0 0
      %576 = vmatpush1.bf16.xpose.msra.mxu0 0
      %577 = vmatprep.subr.bf16.mxu0 0
      %578 = vmatpush1.bf16.xpose.msra.mxu0 0
      %579 = vmatprep.subr.bf16.mxu0 0
      %580 = vmatpush1.bf16.xpose.msra.mxu0 0
      %581 = vmatprep.subr.bf16.mxu0 0
      %582 = vmatpush1.bf16.xpose.msra.mxu0 0
      %583 = vmatprep.subr.bf16.mxu0 0
      %584 = vmatpush1.bf16.xpose.msra.mxu0 0
      %585 = vmatprep.subr.bf16.mxu0 0
      %586 = vmatpush1.bf16.xpose.msra.mxu0 0
      %587 = vmatprep.subr.bf16.mxu0 0
      %588 = vmatpush1.bf16.xpose.msra.mxu0 0
      %589 = vmatprep.subr.bf16.mxu0 0
      %590 = vmatpush1.bf16.xpose.msra.mxu0 %v573
      %591 = vmatprep.subr.bf16.mxu0 0
      %592 = vmatpush2.bf16.xpose.msra.mxu0 0
      %593 = vmatprep.subr.bf16.mxu0 0
      %594 = vmatpush2.bf16.xpose.msra.mxu0 0
      %595 = vmatprep.subr.bf16.mxu0 0
      %596 = vmatpush2.bf16.xpose.msra.mxu0 0
      %597 = vmatprep.subr.bf16.mxu0 0
      %598 = vmatpush2.bf16.xpose.msra.mxu0 0
      %599 = vmatprep.subr.bf16.mxu0 0
      %600 = vmatpush2.bf16.xpose.msra.mxu0 0
      %601 = vmatprep.subr.bf16.mxu0 0
      %602 = vmatpush2.bf16.xpose.msra.mxu0 0
      %603 = vmatprep.subr.bf16.mxu0 0
      %604 = vmatpush2.bf16.xpose.msra.mxu0 0
      %605 = vmatprep.subr.bf16.mxu0 0
      %606 = vmatpush2.bf16.xpose.msra.mxu0 0
      %607 = vmatprep.mubr.bf16.mxu0 0
      %608 = vmatmul.mubr.bf16.gmra.mxu0 %v570
      %v609 = vpop.f32.mrf.mxu0
      %v610 = vadd.f32 0.0, %v609
      %v611 = vpop.f32.mrf.mxu0
      %v612 = vpop.f32.mrf.mxu0
      %v613 = vpop.f32.mrf.mxu0
      %614 = vdwg.mxu0
      %v615 = vmul.f32 %v610, 0.35355338
      %vm616 = vcmask 46080
      %v617 = vsel %vm616, %v615, -inf
      %618 = vmax.xlane.f32.xlu0 %v617
      %v619 = vpop.xlane.xlu0 %618
      %v620 = vsub.f32 %v615, %v619
      %v621 = vmul.f32 %v620, 1.442695
      %v622 = vpow.pop %v621
      %v623 = vsel %vm616, %v622, 0.0
      %624 = vadd.xlane.f32.xlu0 %v623
      %v625 = vpop.xlane.xlu0 %624
      %v626 = vrcp.pop %v625
      %v627 = vmul.f32 %v622, %v626
      %v628 = vpack.c.bf16 %v627, %v627
      %629 = vrot.lane.b32.xlu0 %v564, 64
      %v630 = vpop.permute.xlu0 %629
      %vm631 = vcmask 48128
      %v633 = vsel %vm631, %v628, 0
      %vm635 = vcmask 1042432
      %v637 = vsel %vm635, %v630, 0
      %639 = vmatprep.subr.bf16.mxu0 0
      %640 = vmatpush1.bf16.msra.mxu0 0
      %641 = vmatprep.subr.bf16.mxu0 0
      %642 = vmatpush1.bf16.msra.mxu0 0
      %643 = vmatprep.subr.bf16.mxu0 0
      %644 = vmatpush1.bf16.msra.mxu0 0
      %645 = vmatprep.subr.bf16.mxu0 0
      %646 = vmatpush1.bf16.msra.mxu0 0
      %647 = vmatprep.subr.bf16.mxu0 0
      %648 = vmatpush1.bf16.msra.mxu0 0
      %649 = vmatprep.subr.bf16.mxu0 0
      %650 = vmatpush1.bf16.msra.mxu0 0
      %651 = vmatprep.subr.bf16.mxu0 0
      %652 = vmatpush1.bf16.msra.mxu0 0
      %653 = vmatprep.subr.bf16.mxu0 0
      %654 = vmatpush1.bf16.msra.mxu0 %v637
      %655 = vmatprep.subr.bf16.mxu0 0
      %656 = vmatpush2.bf16.msra.mxu0 0
      %657 = vmatprep.subr.bf16.mxu0 0
      %658 = vmatpush2.bf16.msra.mxu0 0
      %659 = vmatprep.subr.bf16.mxu0 0
      %660 = vmatpush2.bf16.msra.mxu0 0
      %661 = vmatprep.subr.bf16.mxu0 0
      %662 = vmatpush2.bf16.msra.mxu0 0
      %663 = vmatprep.subr.bf16.mxu0 0
      %664 = vmatpush2.bf16.msra.mxu0 0
      %665 = vmatprep.subr.bf16.mxu0 0
      %666 = vmatpush2.bf16.msra.mxu0 0
      %667 = vmatprep.subr.bf16.mxu0 0
      %668 = vmatpush2.bf16.msra.mxu0 0
      %669 = vmatprep.subr.bf16.mxu0 0
      %670 = vmatpush2.bf16.msra.mxu0 0
      %671 = vmatprep.mubr.bf16.mxu0 0
      %672 = vmatmul.mubr.bf16.gmra.mxu0 %v633
      %v673 = vpop.f32.mrf.mxu0
      %v674 = vadd.f32 0.0, %v673
      %v675 = vpop.f32.mrf.mxu0
      %v676 = vpop.f32.mrf.mxu0
      %v677 = vpop.f32.mrf.mxu0
      %678 = vdwg.mxu0
      %v679 = vpack.c.bf16 %v674, %v674
      %v680 = vpack.c.bf16 %v560, %v560
      %681 = vrot.lane.b32.xlu0 %v564, 120
      %v682 = vpop.permute.xlu0 %681
      %683 = vrot.lane.b32.xlu0 %v564, 88
      %v684 = vpop.permute.xlu0 %683
      %v686 = vsel %vm568, %v682, 0
      %v689 = vsel %vm568, %v684, 0
      %691 = vmatprep.subr.bf16.mxu0 0
      %692 = vmatpush1.bf16.xpose.msra.mxu0 0
      %693 = vmatprep.subr.bf16.mxu0 0
      %694 = vmatpush1.bf16.xpose.msra.mxu0 0
      %695 = vmatprep.subr.bf16.mxu0 0
      %696 = vmatpush1.bf16.xpose.msra.mxu0 0
      %697 = vmatprep.subr.bf16.mxu0 0
      %698 = vmatpush1.bf16.xpose.msra.mxu0 0
      %699 = vmatprep.subr.bf16.mxu0 0
      %700 = vmatpush1.bf16.xpose.msra.mxu0 0
      %701 = vmatprep.subr.bf16.mxu0 0
      %702 = vmatpush1.bf16.xpose.msra.mxu0 0
      %703 = vmatprep.subr.bf16.mxu0 0
      %704 = vmatpush1.bf16.xpose.msra.mxu0 0
      %705 = vmatprep.subr.bf16.mxu0 0
      %706 = vmatpush1.bf16.xpose.msra.mxu0 %v689
      %707 = vmatprep.subr.bf16.mxu0 0
      %708 = vmatpush2.bf16.xpose.msra.mxu0 0
      %709 = vmatprep.subr.bf16.mxu0 0
      %710 = vmatpush2.bf16.xpose.msra.mxu0 0
      %711 = vmatprep.subr.bf16.mxu0 0
      %712 = vmatpush2.bf16.xpose.msra.mxu0 0
      %713 = vmatprep.subr.bf16.mxu0 0
      %714 = vmatpush2.bf16.xpose.msra.mxu0 0
      %715 = vmatprep.subr.bf16.mxu0 0
      %716 = vmatpush2.bf16.xpose.msra.mxu0 0
      %717 = vmatprep.subr.bf16.mxu0 0
      %718 = vmatpush2.bf16.xpose.msra.mxu0 0
      %719 = vmatprep.subr.bf16.mxu0 0
      %720 = vmatpush2.bf16.xpose.msra.mxu0 0
      %721 = vmatprep.subr.bf16.mxu0 0
      %722 = vmatpush2.bf16.xpose.msra.mxu0 0
      %723 = vmatprep.mubr.bf16.mxu0 0
      %724 = vmatmul.mubr.bf16.gmra.mxu0 %v686
      %v725 = vpop.f32.mrf.mxu0
      %v726 = vadd.f32 0.0, %v725
      %v727 = vpop.f32.mrf.mxu0
      %v728 = vpop.f32.mrf.mxu0
      %v729 = vpop.f32.mrf.mxu0
      %730 = vdwg.mxu0
      %v731 = vmul.f32 %v726, 0.35355338
      %v732 = vsel %vm616, %v731, -inf
      %733 = vmax.xlane.f32.xlu0 %v732
      %v734 = vpop.xlane.xlu0 %733
      %v735 = vsub.f32 %v731, %v734
      %v736 = vmul.f32 %v735, 1.442695
      %v737 = vpow.pop %v736
      %v738 = vsel %vm616, %v737, 0.0
      %739 = vadd.xlane.f32.xlu0 %v738
      %v740 = vpop.xlane.xlu0 %739
      %v741 = vrcp.pop %v740
      %v742 = vmul.f32 %v737, %v741
      %v743 = vpack.c.bf16 %v742, %v742
      %744 = vrot.lane.b32.xlu0 %v564, 56
      %v745 = vpop.permute.xlu0 %744
      %v747 = vsel %vm631, %v743, 0
      %v750 = vsel %vm635, %v745, 0
      %752 = vmatprep.subr.bf16.mxu0 0
      %753 = vmatpush1.bf16.msra.mxu0 0
      %754 = vmatprep.subr.bf16.mxu0 0
      %755 = vmatpush1.bf16.msra.mxu0 0
      %756 = vmatprep.subr.bf16.mxu0 0
      %757 = vmatpush1.bf16.msra.mxu0 0
      %758 = vmatprep.subr.bf16.mxu0 0
      %759 = vmatpush1.bf16.msra.mxu0 0
      %760 = vmatprep.subr.bf16.mxu0 0
      %761 = vmatpush1.bf16.msra.mxu0 0
      %762 = vmatprep.subr.bf16.mxu0 0
      %763 = vmatpush1.bf16.msra.mxu0 0
      %764 = vmatprep.subr.bf16.mxu0 0
      %765 = vmatpush1.bf16.msra.mxu0 0
      %766 = vmatprep.subr.bf16.mxu0 0
      %767 = vmatpush1.bf16.msra.mxu0 %v750
      %768 = vmatprep.subr.bf16.mxu0 0
      %769 = vmatpush2.bf16.msra.mxu0 0
      %770 = vmatprep.subr.bf16.mxu0 0
      %771 = vmatpush2.bf16.msra.mxu0 0
      %772 = vmatprep.subr.bf16.mxu0 0
      %773 = vmatpush2.bf16.msra.mxu0 0
      %774 = vmatprep.subr.bf16.mxu0 0
      %775 = vmatpush2.bf16.msra.mxu0 0
      %776 = vmatprep.subr.bf16.mxu0 0
      %777 = vmatpush2.bf16.msra.mxu0 0
      %778 = vmatprep.subr.bf16.mxu0 0
      %779 = vmatpush2.bf16.msra.mxu0 0
      %780 = vmatprep.subr.bf16.mxu0 0
      %781 = vmatpush2.bf16.msra.mxu0 0
      %782 = vmatprep.subr.bf16.mxu0 0
      %783 = vmatpush2.bf16.msra.mxu0 0
      %784 = vmatprep.mubr.bf16.mxu0 0
      %785 = vmatmul.mubr.bf16.gmra.mxu0 %v747
      %v786 = vpop.f32.mrf.mxu0
      %v787 = vadd.f32 0.0, %v786
      %v788 = vpop.f32.mrf.mxu0
      %v789 = vpop.f32.mrf.mxu0
      %v790 = vpop.f32.mrf.mxu0
      %791 = vdwg.mxu0
      %v792 = vpack.c.bf16 %v787, %v787
      %v793 = vpack.c.bf16 %v561, %v561
      %v795 = vsel %vm568, %v792, 0
      %vm797 = vcmask 1043456
      %v799 = vsel %vm797, %v793, 0
      %801 = vmatprep.subr.bf16.mxu0 0
      %802 = vmatpush1.bf16.msra.mxu0 0
      %803 = vmatprep.subr.bf16.mxu0 0
      %804 = vmatpush1.bf16.msra.mxu0 0
      %805 = vmatprep.subr.bf16.mxu0 0
      %806 = vmatpush1.bf16.msra.mxu0 0
      %807 = vmatprep.subr.bf16.mxu0 0
      %808 = vmatpush1.bf16.msra.mxu0 0
      %809 = vmatprep.subr.bf16.mxu0 0
      %810 = vmatpush1.bf16.msra.mxu0 0
      %811 = vmatprep.subr.bf16.mxu0 0
      %812 = vmatpush1.bf16.msra.mxu0 0
      %813 = vmatprep.subr.bf16.mxu0 0
      %814 = vmatpush1.bf16.msra.mxu0 0
      %815 = vmatprep.subr.bf16.mxu0 0
      %816 = vmatpush1.bf16.msra.mxu0 %v799
      %817 = vmatprep.subr.bf16.mxu0 0
      %818 = vmatpush2.bf16.msra.mxu0 0
      %819 = vmatprep.subr.bf16.mxu0 0
      %820 = vmatpush2.bf16.msra.mxu0 0
      %821 = vmatprep.subr.bf16.mxu0 0
      %822 = vmatpush2.bf16.msra.mxu0 0
      %823 = vmatprep.subr.bf16.mxu0 0
      %824 = vmatpush2.bf16.msra.mxu0 0
      %825 = vmatprep.subr.bf16.mxu0 0
      %826 = vmatpush2.bf16.msra.mxu0 0
      %827 = vmatprep.subr.bf16.mxu0 0
      %828 = vmatpush2.bf16.msra.mxu0 0
      %829 = vmatprep.subr.bf16.mxu0 0
      %830 = vmatpush2.bf16.msra.mxu0 0
      %831 = vmatprep.subr.bf16.mxu0 0
      %832 = vmatpush2.bf16.msra.mxu0 0
      %833 = vmatprep.mubr.bf16.mxu0 0
      %834 = vmatmul.mubr.bf16.gmra.mxu0 %v795
      %v835 = vpop.f32.mrf.mxu0
      %v836 = vadd.f32 0.0, %v835
      %v837 = vpop.f32.mrf.mxu0
      %v838 = vpop.f32.mrf.mxu0
      %v839 = vpop.f32.mrf.mxu0
      %840 = vdwg.mxu0
      %v842 = vsel %vm568, %v679, 0
      %v845 = vsel %vm797, %v680, 0
      %847 = vmatprep.subr.bf16.mxu0 0
      %848 = vmatpush1.bf16.msra.mxu0 0
      %849 = vmatprep.subr.bf16.mxu0 0
      %850 = vmatpush1.bf16.msra.mxu0 0
      %851 = vmatprep.subr.bf16.mxu0 0
      %852 = vmatpush1.bf16.msra.mxu0 0
      %853 = vmatprep.subr.bf16.mxu0 0
      %854 = vmatpush1.bf16.msra.mxu0 0
      %855 = vmatprep.subr.bf16.mxu0 0
      %856 = vmatpush1.bf16.msra.mxu0 0
      %857 = vmatprep.subr.bf16.mxu0 0
      %858 = vmatpush1.bf16.msra.mxu0 0
      %859 = vmatprep.subr.bf16.mxu0 0
      %860 = vmatpush1.bf16.msra.mxu0 0
      %861 = vmatprep.subr.bf16.mxu0 0
      %862 = vmatpush1.bf16.msra.mxu0 %v845
      %863 = vmatprep.subr.bf16.mxu0 0
      %864 = vmatpush2.bf16.msra.mxu0 0
      %865 = vmatprep.subr.bf16.mxu0 0
      %866 = vmatpush2.bf16.msra.mxu0 0
      %867 = vmatprep.subr.bf16.mxu0 0
      %868 = vmatpush2.bf16.msra.mxu0 0
      %869 = vmatprep.subr.bf16.mxu0 0
      %870 = vmatpush2.bf16.msra.mxu0 0
      %871 = vmatprep.subr.bf16.mxu0 0
      %872 = vmatpush2.bf16.msra.mxu0 0
      %873 = vmatprep.subr.bf16.mxu0 0
      %874 = vmatpush2.bf16.msra.mxu0 0
      %875 = vmatprep.subr.bf16.mxu0 0
      %876 = vmatpush2.bf16.msra.mxu0 0
      %877 = vmatprep.subr.bf16.mxu0 0
      %878 = vmatpush2.bf16.msra.mxu0 0
      %879 = vmatprep.mubr.bf16.mxu0 0
      %880 = vmatmul.mubr.bf16.gmra.mxu0 %v842
      %v881 = vpop.f32.mrf.mxu0
      %v882 = vadd.f32 %v836, %v881
      %v883 = vpop.f32.mrf.mxu0
      %v884 = vpop.f32.mrf.mxu0
      %v885 = vpop.f32.mrf.mxu0
      %886 = vdwg.mxu0
      %887 = vrot.lane.b32.xlu0 %v564, 112
      %v888 = vpop.permute.xlu0 %887
      %889 = vrot.lane.b32.xlu0 %v564, 80
      %v890 = vpop.permute.xlu0 %889
      %v892 = vsel %vm568, %v888, 0
      %v895 = vsel %vm568, %v890, 0
      %897 = vmatprep.subr.bf16.mxu0 0
      %898 = vmatpush1.bf16.xpose.msra.mxu0 0
      %899 = vmatprep.subr.bf16.mxu0 0
      %900 = vmatpush1.bf16.xpose.msra.mxu0 0
      %901 = vmatprep.subr.bf16.mxu0 0
      %902 = vmatpush1.bf16.xpose.msra.mxu0 0
      %903 = vmatprep.subr.bf16.mxu0 0
      %904 = vmatpush1.bf16.xpose.msra.mxu0 0
      %905 = vmatprep.subr.bf16.mxu0 0
      %906 = vmatpush1.bf16.xpose.msra.mxu0 0
      %907 = vmatprep.subr.bf16.mxu0 0
      %908 = vmatpush1.bf16.xpose.msra.mxu0 0
      %909 = vmatprep.subr.bf16.mxu0 0
      %910 = vmatpush1.bf16.xpose.msra.mxu0 0
      %911 = vmatprep.subr.bf16.mxu0 0
      %912 = vmatpush1.bf16.xpose.msra.mxu0 %v895
      %913 = vmatprep.subr.bf16.mxu0 0
      %914 = vmatpush2.bf16.xpose.msra.mxu0 0
      %915 = vmatprep.subr.bf16.mxu0 0
      %916 = vmatpush2.bf16.xpose.msra.mxu0 0
      %917 = vmatprep.subr.bf16.mxu0 0
      %918 = vmatpush2.bf16.xpose.msra.mxu0 0
      %919 = vmatprep.subr.bf16.mxu0 0
      %920 = vmatpush2.bf16.xpose.msra.mxu0 0
      %921 = vmatprep.subr.bf16.mxu0 0
      %922 = vmatpush2.bf16.xpose.msra.mxu0 0
      %923 = vmatprep.subr.bf16.mxu0 0
      %924 = vmatpush2.bf16.xpose.msra.mxu0 0
      %925 = vmatprep.subr.bf16.mxu0 0
      %926 = vmatpush2.bf16.xpose.msra.mxu0 0
      %927 = vmatprep.subr.bf16.mxu0 0
      %928 = vmatpush2.bf16.xpose.msra.mxu0 0
      %929 = vmatprep.mubr.bf16.mxu0 0
      %930 = vmatmul.mubr.bf16.gmra.mxu0 %v892
      %v931 = vpop.f32.mrf.mxu0
      %v932 = vadd.f32 0.0, %v931
      %v933 = vpop.f32.mrf.mxu0
      %v934 = vpop.f32.mrf.mxu0
      %v935 = vpop.f32.mrf.mxu0
      %936 = vdwg.mxu0
      %v937 = vmul.f32 %v932, 0.35355338
      %v938 = vsel %vm616, %v937, -inf
      %939 = vmax.xlane.f32.xlu0 %v938
      %v940 = vpop.xlane.xlu0 %939
      %v941 = vsub.f32 %v937, %v940
      %v942 = vmul.f32 %v941, 1.442695
      %v943 = vpow.pop %v942
      %v944 = vsel %vm616, %v943, 0.0
      %945 = vadd.xlane.f32.xlu0 %v944
      %v946 = vpop.xlane.xlu0 %945
      %v947 = vrcp.pop %v946
      %v948 = vmul.f32 %v943, %v947
      %v949 = vpack.c.bf16 %v948, %v948
      %950 = vrot.lane.b32.xlu0 %v564, 48
      %v951 = vpop.permute.xlu0 %950
      %v953 = vsel %vm631, %v949, 0
      %v956 = vsel %vm635, %v951, 0
      %958 = vmatprep.subr.bf16.mxu0 0
      %959 = vmatpush1.bf16.msra.mxu0 0
      %960 = vmatprep.subr.bf16.mxu0 0
      %961 = vmatpush1.bf16.msra.mxu0 0
      %962 = vmatprep.subr.bf16.mxu0 0
      %963 = vmatpush1.bf16.msra.mxu0 0
      %964 = vmatprep.subr.bf16.mxu0 0
      %965 = vmatpush1.bf16.msra.mxu0 0
      %966 = vmatprep.subr.bf16.mxu0 0
      %967 = vmatpush1.bf16.msra.mxu0 0
      %968 = vmatprep.subr.bf16.mxu0 0
      %969 = vmatpush1.bf16.msra.mxu0 0
      %970 = vmatprep.subr.bf16.mxu0 0
      %971 = vmatpush1.bf16.msra.mxu0 0
      %972 = vmatprep.subr.bf16.mxu0 0
      %973 = vmatpush1.bf16.msra.mxu0 %v956
      %974 = vmatprep.subr.bf16.mxu0 0
      %975 = vmatpush2.bf16.msra.mxu0 0
      %976 = vmatprep.subr.bf16.mxu0 0
      %977 = vmatpush2.bf16.msra.mxu0 0
      %978 = vmatprep.subr.bf16.mxu0 0
      %979 = vmatpush2.bf16.msra.mxu0 0
      %980 = vmatprep.subr.bf16.mxu0 0
      %981 = vmatpush2.bf16.msra.mxu0 0
      %982 = vmatprep.subr.bf16.mxu0 0
      %983 = vmatpush2.bf16.msra.mxu0 0
      %984 = vmatprep.subr.bf16.mxu0 0
      %985 = vmatpush2.bf16.msra.mxu0 0
      %986 = vmatprep.subr.bf16.mxu0 0
      %987 = vmatpush2.bf16.msra.mxu0 0
      %988 = vmatprep.subr.bf16.mxu0 0
      %989 = vmatpush2.bf16.msra.mxu0 0
      %990 = vmatprep.mubr.bf16.mxu0 0
      %991 = vmatmul.mubr.bf16.gmra.mxu0 %v953
      %v992 = vpop.f32.mrf.mxu0
      %v993 = vadd.f32 0.0, %v992
      %v994 = vpop.f32.mrf.mxu0
      %v995 = vpop.f32.mrf.mxu0
      %v996 = vpop.f32.mrf.mxu0
      %997 = vdwg.mxu0
      %v998 = vpack.c.bf16 %v993, %v993
      %v999 = vpack.c.bf16 %v562, %v562
      %v1001 = vsel %vm568, %v998, 0
      %v1004 = vsel %vm797, %v999, 0
      %1006 = vmatprep.subr.bf16.mxu0 0
      %1007 = vmatpush1.bf16.msra.mxu0 0
      %1008 = vmatprep.subr.bf16.mxu0 0
      %1009 = vmatpush1.bf16.msra.mxu0 0
      %1010 = vmatprep.subr.bf16.mxu0 0
      %1011 = vmatpush1.bf16.msra.mxu0 0
      %1012 = vmatprep.subr.bf16.mxu0 0
      %1013 = vmatpush1.bf16.msra.mxu0 0
      %1014 = vmatprep.subr.bf16.mxu0 0
      %1015 = vmatpush1.bf16.msra.mxu0 0
      %1016 = vmatprep.subr.bf16.mxu0 0
      %1017 = vmatpush1.bf16.msra.mxu0 0
      %1018 = vmatprep.subr.bf16.mxu0 0
      %1019 = vmatpush1.bf16.msra.mxu0 0
      %1020 = vmatprep.subr.bf16.mxu0 0
      %1021 = vmatpush1.bf16.msra.mxu0 %v1004
      %1022 = vmatprep.subr.bf16.mxu0 0
      %1023 = vmatpush2.bf16.msra.mxu0 0
      %1024 = vmatprep.subr.bf16.mxu0 0
      %1025 = vmatpush2.bf16.msra.mxu0 0
      %1026 = vmatprep.subr.bf16.mxu0 0
      %1027 = vmatpush2.bf16.msra.mxu0 0
      %1028 = vmatprep.subr.bf16.mxu0 0
      %1029 = vmatpush2.bf16.msra.mxu0 0
      %1030 = vmatprep.subr.bf16.mxu0 0
      %1031 = vmatpush2.bf16.msra.mxu0 0
      %1032 = vmatprep.subr.bf16.mxu0 0
      %1033 = vmatpush2.bf16.msra.mxu0 0
      %1034 = vmatprep.subr.bf16.mxu0 0
      %1035 = vmatpush2.bf16.msra.mxu0 0
      %1036 = vmatprep.subr.bf16.mxu0 0
      %1037 = vmatpush2.bf16.msra.mxu0 0
      %1038 = vmatprep.mubr.bf16.mxu0 0
      %1039 = vmatmul.mubr.bf16.gmra.mxu0 %v1001
      %v1040 = vpop.f32.mrf.mxu0
      %v1041 = vadd.f32 0.0, %v1040
      %v1042 = vpop.f32.mrf.mxu0
      %v1043 = vpop.f32.mrf.mxu0
      %v1044 = vpop.f32.mrf.mxu0
      %1045 = vdwg.mxu0
      %v1046 = vadd.f32 %v882, %v1041
      %1047 = vrot.lane.b32.xlu0 %v564, 104
      %v1048 = vpop.permute.xlu0 %1047
      %1049 = vrot.lane.b32.xlu0 %v564, 72
      %v1050 = vpop.permute.xlu0 %1049
      %v1052 = vsel %vm568, %v1048, 0
      %v1055 = vsel %vm568, %v1050, 0
      %1057 = vmatprep.subr.bf16.mxu0 0
      %1058 = vmatpush1.bf16.xpose.msra.mxu0 0
      %1059 = vmatprep.subr.bf16.mxu0 0
      %1060 = vmatpush1.bf16.xpose.msra.mxu0 0
      %1061 = vmatprep.subr.bf16.mxu0 0
      %1062 = vmatpush1.bf16.xpose.msra.mxu0 0
      %1063 = vmatprep.subr.bf16.mxu0 0
      %1064 = vmatpush1.bf16.xpose.msra.mxu0 0
      %1065 = vmatprep.subr.bf16.mxu0 0
      %1066 = vmatpush1.bf16.xpose.msra.mxu0 0
      %1067 = vmatprep.subr.bf16.mxu0 0
      %1068 = vmatpush1.bf16.xpose.msra.mxu0 0
      %1069 = vmatprep.subr.bf16.mxu0 0
      %1070 = vmatpush1.bf16.xpose.msra.mxu0 0
      %1071 = vmatprep.subr.bf16.mxu0 0
      %1072 = vmatpush1.bf16.xpose.msra.mxu0 %v1055
      %1073 = vmatprep.subr.bf16.mxu0 0
      %1074 = vmatpush2.bf16.xpose.msra.mxu0 0
      %1075 = vmatprep.subr.bf16.mxu0 0
      %1076 = vmatpush2.bf16.xpose.msra.mxu0 0
      %1077 = vmatprep.subr.bf16.mxu0 0
      %1078 = vmatpush2.bf16.xpose.msra.mxu0 0
      %1079 = vmatprep.subr.bf16.mxu0 0
      %1080 = vmatpush2.bf16.xpose.msra.mxu0 0
      %1081 = vmatprep.subr.bf16.mxu0 0
      %1082 = vmatpush2.bf16.xpose.msra.mxu0 0
      %1083 = vmatprep.subr.bf16.mxu0 0
      %1084 = vmatpush2.bf16.xpose.msra.mxu0 0
      %1085 = vmatprep.subr.bf16.mxu0 0
      %1086 = vmatpush2.bf16.xpose.msra.mxu0 0
      %1087 = vmatprep.subr.bf16.mxu0 0
      %1088 = vmatpush2.bf16.xpose.msra.mxu0 0
      %1089 = vmatprep.mubr.bf16.mxu0 0
      %1090 = vmatmul.mubr.bf16.gmra.mxu0 %v1052
      %v1091 = vpop.f32.mrf.mxu0
      %v1092 = vadd.f32 0.0, %v1091
      %v1093 = vpop.f32.mrf.mxu0
      %v1094 = vpop.f32.mrf.mxu0
      %v1095 = vpop.f32.mrf.mxu0
      %1096 = vdwg.mxu0
      %v1097 = vmul.f32 %v1092, 0.35355338
      %v1098 = vsel %vm616, %v1097, -inf
      %1099 = vmax.xlane.f32.xlu0 %v1098
      %v1100 = vpop.xlane.xlu0 %1099
      %v1101 = vsub.f32 %v1097, %v1100
      %v1102 = vmul.f32 %v1101, 1.442695
      %v1103 = vpow.pop %v1102
      %v1104 = vsel %vm616, %v1103, 0.0
      %1105 = vadd.xlane.f32.xlu0 %v1104
      %v1106 = vpop.xlane.xlu0 %1105
      %v1107 = vrcp.pop %v1106
      %v1108 = vmul.f32 %v1103, %v1107
      %v1109 = vpack.c.bf16 %v1108, %v1108
      %1110 = vrot.lane.b32.xlu0 %v564, 40
      %v1111 = vpop.permute.xlu0 %1110
      %v1113 = vsel %vm631, %v1109, 0
      %v1116 = vsel %vm635, %v1111, 0
      %1118 = vmatprep.subr.bf16.mxu0 0
      %1119 = vmatpush1.bf16.msra.mxu0 0
      %1120 = vmatprep.subr.bf16.mxu0 0
      %1121 = vmatpush1.bf16.msra.mxu0 0
      %1122 = vmatprep.subr.bf16.mxu0 0
      %1123 = vmatpush1.bf16.msra.mxu0 0
      %1124 = vmatprep.subr.bf16.mxu0 0
      %1125 = vmatpush1.bf16.msra.mxu0 0
      %1126 = vmatprep.subr.bf16.mxu0 0
      %1127 = vmatpush1.bf16.msra.mxu0 0
      %1128 = vmatprep.subr.bf16.mxu0 0
      %1129 = vmatpush1.bf16.msra.mxu0 0
      %1130 = vmatprep.subr.bf16.mxu0 0
      %1131 = vmatpush1.bf16.msra.mxu0 0
      %1132 = vmatprep.subr.bf16.mxu0 0
      %1133 = vmatpush1.bf16.msra.mxu0 %v1116
      %1134 = vmatprep.subr.bf16.mxu0 0
      %1135 = vmatpush2.bf16.msra.mxu0 0
      %1136 = vmatprep.subr.bf16.mxu0 0
      %1137 = vmatpush2.bf16.msra.mxu0 0
      %1138 = vmatprep.subr.bf16.mxu0 0
      %1139 = vmatpush2.bf16.msra.mxu0 0
      %1140 = vmatprep.subr.bf16.mxu0 0
      %1141 = vmatpush2.bf16.msra.mxu0 0
      %1142 = vmatprep.subr.bf16.mxu0 0
      %1143 = vmatpush2.bf16.msra.mxu0 0
      %1144 = vmatprep.subr.bf16.mxu0 0
      %1145 = vmatpush2.bf16.msra.mxu0 0
      %1146 = vmatprep.subr.bf16.mxu0 0
      %1147 = vmatpush2.bf16.msra.mxu0 0
      %1148 = vmatprep.subr.bf16.mxu0 0
      %1149 = vmatpush2.bf16.msra.mxu0 0
      %1150 = vmatprep.mubr.bf16.mxu0 0
      %1151 = vmatmul.mubr.bf16.gmra.mxu0 %v1113
      %v1152 = vpop.f32.mrf.mxu0
      %v1153 = vadd.f32 0.0, %v1152
      %v1154 = vpop.f32.mrf.mxu0
      %v1155 = vpop.f32.mrf.mxu0
      %v1156 = vpop.f32.mrf.mxu0
      %1157 = vdwg.mxu0
      %v1158 = vpack.c.bf16 %v1153, %v1153
      %v1159 = vpack.c.bf16 %v563, %v563
      %v1161 = vsel %vm568, %v1158, 0
      %v1164 = vsel %vm797, %v1159, 0
      %1166 = vmatprep.subr.bf16.mxu0 0
      %1167 = vmatpush1.bf16.msra.mxu0 0
      %1168 = vmatprep.subr.bf16.mxu0 0
      %1169 = vmatpush1.bf16.msra.mxu0 0
      %1170 = vmatprep.subr.bf16.mxu0 0
      %1171 = vmatpush1.bf16.msra.mxu0 0
      %1172 = vmatprep.subr.bf16.mxu0 0
      %1173 = vmatpush1.bf16.msra.mxu0 0
      %1174 = vmatprep.subr.bf16.mxu0 0
      %1175 = vmatpush1.bf16.msra.mxu0 0
      %1176 = vmatprep.subr.bf16.mxu0 0
      %1177 = vmatpush1.bf16.msra.mxu0 0
      %1178 = vmatprep.subr.bf16.mxu0 0
      %1179 = vmatpush1.bf16.msra.mxu0 0
      %1180 = vmatprep.subr.bf16.mxu0 0
      %1181 = vmatpush1.bf16.msra.mxu0 %v1164
      %1182 = vmatprep.subr.bf16.mxu0 0
      %1183 = vmatpush2.bf16.msra.mxu0 0
      %1184 = vmatprep.subr.bf16.mxu0 0
      %1185 = vmatpush2.bf16.msra.mxu0 0
      %1186 = vmatprep.subr.bf16.mxu0 0
      %1187 = vmatpush2.bf16.msra.mxu0 0
      %1188 = vmatprep.subr.bf16.mxu0 0
      %1189 = vmatpush2.bf16.msra.mxu0 0
      %1190 = vmatprep.subr.bf16.mxu0 0
      %1191 = vmatpush2.bf16.msra.mxu0 0
      %1192 = vmatprep.subr.bf16.mxu0 0
      %1193 = vmatpush2.bf16.msra.mxu0 0
      %1194 = vmatprep.subr.bf16.mxu0 0
      %1195 = vmatpush2.bf16.msra.mxu0 0
      %1196 = vmatprep.subr.bf16.mxu0 0
      %1197 = vmatpush2.bf16.msra.mxu0 0
      %1198 = vmatprep.mubr.bf16.mxu0 0
      %1199 = vmatmul.mubr.bf16.gmra.mxu0 %v1161
      %v1200 = vpop.f32.mrf.mxu0
      %v1201 = vadd.f32 0.0, %v1200
      %v1202 = vpop.f32.mrf.mxu0
      %v1203 = vpop.f32.mrf.mxu0
      %v1204 = vpop.f32.mrf.mxu0
      %1205 = vdwg.mxu0
      %v1206 = vadd.f32 %v1046, %v1201
      %v1207 = vld [vmem:[%s4] sm:$0x1]
      %v1209 = vlaneseq
      %v1210 = vshrl.u32 %v1209, 7
      %v1211 = vsub.s32 0, %v1210
      %v1212 = vrot.slane %v1207, %v1211
      %v1214 = vadd.f32 %v1206, %v1212
      %v1215 = vadd.f32 %v491, %v1214
      %v1216 = vld [vmem:[%s5] sm:$0x1]
      %v1217 = vld [vmem:[%s6] sm:$0x1]
      %vm1218 = vcmask 259072
      %v1219 = vsel %vm1218, %v1215, 0.0
      %1220 = vadd.xlane.f32.xlu0 %v1219
      %v1221 = vpop.xlane.xlu0 %1220
      %v1222 = vrcp.pop 32.0
      %v1223 = vmul.f32 %v1221, %v1222
      %v1224 = vsub.f32 %v1215, %v1223
      %v1225 = vmul.f32 %v1224, %v1224
      %v1226 = vsel %vm1218, %v1225, 0.0
      %1227 = vadd.xlane.f32.xlu0 %v1226
      %v1228 = vpop.xlane.xlu0 %1227
      %v1229 = vmul.f32 %v1228, %v1222
      %v1230 = vadd.f32 %v1229, 1e-05
      %v1231 = vrsqrt.pop %v1230
      %v1232 = vmul.f32 %v1224, %v1231
      %v1234 = vlaneseq
      %v1235 = vshrl.u32 %v1234, 7
      %v1236 = vsub.s32 0, %v1235
      %v1237 = vrot.slane %v1216, %v1236
      %v1239 = vmul.f32 %v1232, %v1237
      %v1241 = vlaneseq
      %v1242 = vshrl.u32 %v1241, 7
      %v1243 = vsub.s32 0, %v1242
      %v1244 = vrot.slane %v1217, %v1243
      %v1246 = vadd.f32 %v1239, %v1244
      %v1247 = vld [vmem:[%s7] sm:$0xf]
      %v1248 = vld [vmem:[%s7 + $0x4] sm:$0xf]
      %v1249 = vld [vmem:[%s7 + $0x8] sm:$0xf]
      %v1250 = vld [vmem:[%s7 + $0xc] sm:$0xf]
      %v1251 = vpack.c.bf16 %v1246, %v1246
      %v1252 = vld [vmem:[%s8] sm:$0x1]
      %v1254 = vlaneseq
      %v1255 = vshrl.u32 %v1254, 7
      %v1256 = vsub.s32 0, %v1255
      %v1257 = vrot.slane %v1252, %v1256
      %v1263 = vunpack.c.l.b16 %v1247
      %v1264 = vunpack.c.l.b16 %v1248
      %v1265 = vunpack.c.l.b16 %v1249
      %v1266 = vunpack.c.l.b16 %v1250
      %v1267 = vpack.c.b16 %v1264, %v1263
      %v1268 = vpack.c.b16 %v1266, %v1265
      %v1272 = vsel %vm516, %v1251, 0
      %1274 = vmatprep.subr.bf16.mxu0 0
      %1275 = vmatpush1.bf16.msra.mxu0 0
      %1276 = vmatprep.subr.bf16.mxu0 0
      %1277 = vmatpush1.bf16.msra.mxu0 0
      %1278 = vmatprep.subr.bf16.mxu0 0
      %1279 = vmatpush1.bf16.msra.mxu0 0
      %1280 = vmatprep.subr.bf16.mxu0 0
      %1281 = vmatpush1.bf16.msra.mxu0 0
      %1282 = vmatprep.subr.bf16.mxu0 0
      %1283 = vmatpush1.bf16.msra.mxu0 0
      %1284 = vmatprep.subr.bf16.mxu0 0
      %1285 = vmatpush1.bf16.msra.mxu0 0
      %1286 = vmatprep.subr.bf16.mxu0 0
      %1287 = vmatpush1.bf16.msra.mxu0 %v1268
      %1288 = vmatprep.subr.bf16.mxu0 0
      %1289 = vmatpush1.bf16.msra.mxu0 %v1267
      %1290 = vmatprep.subr.bf16.mxu0 0
      %1291 = vmatpush2.bf16.msra.mxu0 0
      %1292 = vmatprep.subr.bf16.mxu0 0
      %1293 = vmatpush2.bf16.msra.mxu0 0
      %1294 = vmatprep.subr.bf16.mxu0 0
      %1295 = vmatpush2.bf16.msra.mxu0 0
      %1296 = vmatprep.subr.bf16.mxu0 0
      %1297 = vmatpush2.bf16.msra.mxu0 0
      %1298 = vmatprep.subr.bf16.mxu0 0
      %1299 = vmatpush2.bf16.msra.mxu0 0
      %1300 = vmatprep.subr.bf16.mxu0 0
      %1301 = vmatpush2.bf16.msra.mxu0 0
      %1302 = vmatprep.subr.bf16.mxu0 0
      %1303 = vmatpush2.bf16.msra.mxu0 0
      %1304 = vmatprep.subr.bf16.mxu0 0
      %1305 = vmatpush2.bf16.msra.mxu0 0
      %1306 = vmatprep.mubr.bf16.mxu0 0
      %1307 = vmatmul.mubr.bf16.gmra.mxu0 %v1272
      %v1308 = vpop.f32.mrf.mxu0
      %v1309 = vadd.f32 %v1257, %v1308
      %v1310 = vpop.f32.mrf.mxu0
      %v1311 = vpop.f32.mrf.mxu0
      %v1312 = vpop.f32.mrf.mxu0
      %1313 = vdwg.mxu0
      %v1314 = vmax.f32 %v1309, 0.0
      %v1315 = vld [vmem:[%s9] sm:$0xf]
      %v1316 = vld [vmem:[%s9 + $0x4] sm:$0xf]
      %v1317 = vld [vmem:[%s9 + $0x8] sm:$0xf]
      %v1318 = vld [vmem:[%s9 + $0xc] sm:$0xf]
      %v1319 = vld [vmem:[%s9 + $0x10] sm:$0xf]
      %v1320 = vld [vmem:[%s9 + $0x14] sm:$0xf]
      %v1321 = vld [vmem:[%s9 + $0x18] sm:$0xf]
      %v1322 = vld [vmem:[%s9 + $0x1c] sm:$0xf]
      %v1323 = vpack.c.bf16 %v1314, %v1314
      %v1324 = vld [vmem:[%s10] sm:$0x1]
      %v1326 = vlaneseq
      %v1327 = vshrl.u32 %v1326, 7
      %v1328 = vsub.s32 0, %v1327
      %v1329 = vrot.slane %v1324, %v1328
      %v1339 = vunpack.c.l.b16 %v1315
      %v1340 = vunpack.c.l.b16 %v1316
      %v1341 = vunpack.c.l.b16 %v1317
      %v1342 = vunpack.c.l.b16 %v1318
      %v1343 = vunpack.c.l.b16 %v1319
      %v1344 = vunpack.c.l.b16 %v1320
      %v1345 = vunpack.c.l.b16 %v1321
      %v1346 = vunpack.c.l.b16 %v1322
      %v1347 = vpack.c.b16 %v1340, %v1339
      %v1348 = vpack.c.b16 %v1342, %v1341
      %v1349 = vpack.c.b16 %v1344, %v1343
      %v1350 = vpack.c.b16 %v1346, %v1345
      %vm1355 = vcmask 523264
      %v1357 = vsel %vm1355, %v1323, 0
      %1359 = vmatprep.subr.bf16.mxu0 0
      %1360 = vmatpush1.bf16.msra.mxu0 0
      %1361 = vmatprep.subr.bf16.mxu0 0
      %1362 = vmatpush1.bf16.msra.mxu0 0
      %1363 = vmatprep.subr.bf16.mxu0 0
      %1364 = vmatpush1.bf16.msra.mxu0 0
      %1365 = vmatprep.subr.bf16.mxu0 0
      %1366 = vmatpush1.bf16.msra.mxu0 0
      %1367 = vmatprep.subr.bf16.mxu0 0
      %1368 = vmatpush1.bf16.msra.mxu0 %v1350
      %1369 = vmatprep.subr.bf16.mxu0 0
      %1370 = vmatpush1.bf16.msra.mxu0 %v1349
      %1371 = vmatprep.subr.bf16.mxu0 0
      %1372 = vmatpush1.bf16.msra.mxu0 %v1348
      %1373 = vmatprep.subr.bf16.mxu0 0
      %1374 = vmatpush1.bf16.msra.mxu0 %v1347
      %1375 = vmatprep.subr.bf16.mxu0 0
      %1376 = vmatpush2.bf16.msra.mxu0 0
      %1377 = vmatprep.subr.bf16.mxu0 0
      %1378 = vmatpush2.bf16.msra.mxu0 0
      %1379 = vmatprep.subr.bf16.mxu0 0
      %1380 = vmatpush2.bf16.msra.mxu0 0
      %1381 = vmatprep.subr.bf16.mxu0 0
      %1382 = vmatpush2.bf16.msra.mxu0 0
      %1383 = vmatprep.subr.bf16.mxu0 0
      %1384 = vmatpush2.bf16.msra.mxu0 0
      %1385 = vmatprep.subr.bf16.mxu0 0
      %1386 = vmatpush2.bf16.msra.mxu0 0
      %1387 = vmatprep.subr.bf16.mxu0 0
      %1388 = vmatpush2.bf16.msra.mxu0 0
      %1389 = vmatprep.subr.bf16.mxu0 0
      %1390 = vmatpush2.bf16.msra.mxu0 0
      %1391 = vmatprep.mubr.bf16.mxu0 0
      %1392 = vmatmul.mubr.bf16.gmra.mxu0 %v1357
      %v1393 = vpop.f32.mrf.mxu0
      %v1394 = vadd.f32 %v1329, %v1393
      %v1395 = vpop.f32.mrf.mxu0
      %v1396 = vpop.f32.mrf.mxu0
      %v1397 = vpop.f32.mrf.mxu0
      %1398 = vdwg.mxu0
      %v1399 = vadd.f32 %v1246, %v1394
      %v1400 = vld [vmem:[%s11] sm:$0x1]
      %v1401 = vld [vmem:[%s12] sm:$0x1]
      %v1402 = vsel %vm1218, %v1399, 0.0
      %1403 = vadd.xlane.f32.xlu0 %v1402
      %v1404 = vpop.xlane.xlu0 %1403
      %v1405 = vmul.f32 %v1404, %v1222
      %v1406 = vsub.f32 %v1399, %v1405
      %v1407 = vmul.f32 %v1406, %v1406
      %v1408 = vsel %vm1218, %v1407, 0.0
      %1409 = vadd.xlane.f32.xlu0 %v1408
      %v1410 = vpop.xlane.xlu0 %1409
      %v1411 = vmul.f32 %v1410, %v1222
      %v1412 = vadd.f32 %v1411, 1e-05
      %v1413 = vrsqrt.pop %v1412
      %v1414 = vmul.f32 %v1406, %v1413
      %v1416 = vlaneseq
      %v1417 = vshrl.u32 %v1416, 7
      %v1418 = vsub.s32 0, %v1417
      %v1419 = vrot.slane %v1400, %v1418
      %v1421 = vmul.f32 %v1414, %v1419
      %v1423 = vlaneseq
      %v1424 = vshrl.u32 %v1423, 7
      %v1425 = vsub.s32 0, %v1424
      %v1426 = vrot.slane %v1401, %v1425
      %v1428 = vadd.f32 %v1421, %v1426
      %v1429 = vld [vmem:[%s13] sm:$0x1]
      %v1430 = vld [vmem:[%s14] sm:$0x1]
      %v1431 = vsel %vm1218, %v1428, 0.0
      %1432 = vadd.xlane.f32.xlu0 %v1431
      %v1433 = vpop.xlane.xlu0 %1432
      %v1434 = vmul.f32 %v1433, %v1222
      %v1435 = vsub.f32 %v1428, %v1434
      %v1436 = vmul.f32 %v1435, %v1435
      %v1437 = vsel %vm1218, %v1436, 0.0
      %1438 = vadd.xlane.f32.xlu0 %v1437
      %v1439 = vpop.xlane.xlu0 %1438
      %v1440 = vmul.f32 %v1439, %v1222
      %v1441 = vadd.f32 %v1440, 1e-05
      %v1442 = vrsqrt.pop %v1441
      %v1443 = vmul.f32 %v1435, %v1442
      %v1445 = vlaneseq
      %v1446 = vshrl.u32 %v1445, 7
      %v1447 = vsub.s32 0, %v1446
      %v1448 = vrot.slane %v1429, %v1447
      %v1450 = vmul.f32 %v1443, %v1448
      %v1452 = vlaneseq
      %v1453 = vshrl.u32 %v1452, 7
      %v1454 = vsub.s32 0, %v1453
      %v1455 = vrot.slane %v1430, %v1454
      %v1457 = vadd.f32 %v1450, %v1455
      %1458 = vst.msk [vmem:[%s489] sm:$0x3f] %vm1218, %v1457
      %p1459 = scmp.lt.s32.totalorder %s26, 1
      %s1460 = scalar_select %p1459, %s26, 1
      %s1461 = smul.addr %s1460, 8
      %s1462 = scalar_lea.vmem %s15, %s1461
      // Predicated region
      $region81: #{informer_forward.11} parent=79 // pred_check
        %p1463 = pneg %p364
      $region82: #{informer_forward.11} parent=79 // pred_check_branch
        %1465 = sbr.rel (%p1463) target = $region84
      $region83: #{informer_forward.11} parent=79 // pred_region
        _
      $region84: #{informer_forward.11} parent=79 // pred_fallthru
        _
    $region80: #{informer_forward.11} parent=5 // pred_fallthru
      _
    %p1466 = scmp.le.s32.totalorder 2, %s21
    // Predicated region
    $region85: #{informer_forward.11} parent=5 // pred_check
      %p1467 = pneg %p1466
    $region86: #{informer_forward.11} parent=5 // pred_check_branch
      %1469 = sbr.rel (%p1467) target = $region88
    $region87: #{informer_forward.11} parent=5 // pred_region
      %s1470 = ssub.s32 %s21, 2
      // Predicated region
      $region89: #{informer_forward.11} parent=87 // pred_check
        %p1471 = pneg %p370
      $region90: #{informer_forward.11} parent=87 // pred_check_branch
        %1473 = sbr.rel (%p1471) target = $region92
      $region91: #{informer_forward.11} parent=87 // pred_region
        %p1474 = scmp.lt.s32.totalorder %s27, 1
        %s1475 = scalar_select %p1474, %s27, 1
        %s1476 = smul.addr %s1475, 8
        %s1477 = scalar_lea.vmem %s15, %s1476
      $region92: #{informer_forward.11} parent=87 // pred_fallthru
        _
    $region88: #{informer_forward.11} parent=5 // pred_fallthru
      _
  $region6: #{informer_forward.11} parent=0 // loop_footer
    %s25 = sadd.s32 1, %s21
  $region7: #{informer_forward.11} parent=0 // loop_footer_branch
    %20 = sbr.rel target = $region3
  $region8: #{informer_forward.11} parent=0 // loop_exit
    _

// kernel: informer_forward.13
$region0: #{informer_forward.13}
  #allocation0 [shape = 'u32[]', space=smem, size = 0x4, offset = 0x4, fixed_abs, tag = 'smem constant byte address 0x4 - core index']
  #allocation1 [shape = 'u32[144,128]{1,0:T(1,128)}', space=vmem, size = 0x12000, scoped, tag = 'internal scratch']
  %s0 = inlined_call_operand.vmem [shape: f32[2,12,32], index: 0, kind: input, shape index: {}]
  %s1 = inlined_call_operand.vmem [shape: f32[1,32], index: 1, kind: input, shape index: {}]
  %s2 = inlined_call_operand.vmem [shape: f32[1,32], index: 2, kind: input, shape index: {}]
  %s3 = inlined_call_operand.vmem [shape: bf16[32,4], index: 3, kind: input, shape index: {}]
  %s4 = inlined_call_operand.vmem [shape: f32[1,4], index: 4, kind: input, shape index: {}]
  %s5 = inlined_call_operand.vmem [shape: f32[2,12,4], index: 5, kind: output, shape index: {}]
  %s6 = sld [smem:[#allocation0]]
  $region53: #{informer_forward.13} parent=0
    _
  %s8 = ssub.s32 1, %s6
  %s9 = scalar_select 0, %s8, %s6
  loop: start=0, step=1, limit=4
  $region2: #{informer_forward.13} parent=0 // loop_pre_header
    _
  $region3: #{informer_forward.13} parent=0 // loop_header
    %s11 = sphi 0, %s15
    %p12 = scmp.ge.s32.totalorder %s11, 4
    %s21 = sphi 0, %s23
    %s24 = sphi 0, %s21
    %s25 = sphi 0, %s24
    %s41 = sphi 0, %s25
    %s45 = sphi 0, %s45
    %s47 = sphi 0, %s45
    %s48 = sphi 0, %s47
    %s62 = sphi 0, %s48
    %s66 = sphi 0, %s66
    %s68 = sphi 0, %s66
    %s69 = sphi 0, %s68
    %s83 = sphi 0, %s69
    %s87 = sphi 0, %s87
    %s89 = sphi 0, %s87
    %s90 = sphi 0, %s89
    %s104 = sphi 0, %s90
    %s108 = sphi 0, %s108
    %s110 = sphi 0, %s108
    %s111 = sphi 0, %s110
    %s125 = sphi 0, %s111
    %s131 = sphi 0, %s133
    %s134 = sphi 0, %s131
    %s135 = sphi 0, %s134
    %s151 = sphi 0, %s135
  $region4: #{informer_forward.13} parent=0 // loop_header_branch
    %14 = sbr.rel (%p12) target = $region8
  $region5: #{informer_forward.13} parent=0 // loop_body
    %s16 = ssub.s32 %s11, 1
    %s17 = ssub.s32 %s11, 2
    %s18 = sadd.s32 %s11, 1
    %s19 = ssub.s32 %s11, %s18
    %p20 = scmp.eq.s32.totalorder %s19, 0
    %s22 = sadd.s32 %s21, 1
    %s23 = scalar_select %p20, %s21, %s22
    %p26 = pneg %p20
    %p27 = scmp.eq.s32.totalorder %s11, 1
    %p28 = por %p26, %p27
    %p29 = scmp.ne.s32.totalorder %s21, %s24
    %p30 = scmp.eq.s32.totalorder %s11, 0
    %p31 = por %p29, %p30
    %p32 = scmp.ne.s32.totalorder %s21, %s24
    %p33 = scmp.eq.s32.totalorder %s16, 1
    %p34 = por %p32, %p33
    %p35 = scmp.ne.s32.totalorder %s24, %s25
    %p36 = scmp.eq.s32.totalorder %s16, 0
    %p37 = por %p35, %p36
    %p38 = scmp.ne.s32.totalorder %s24, %s25
    %p39 = scmp.eq.s32.totalorder %s17, 1
    %p40 = por %p38, %p39
    %p42 = scmp.ne.s32.totalorder %s25, %s41
    %p43 = scmp.eq.s32.totalorder %s17, 0
    %p44 = por %p42, %p43
    %s46 = sadd.s32 %s45, 1
    %p49 = scmp.eq.s32.totalorder %s11, 1
    %p50 = scmp.ne.s32.totalorder %s45, %s47
    %p51 = scmp.eq.s32.totalorder %s11, 0
    %p52 = por %p50, %p51
    %p53 = scmp.ne.s32.totalorder %s45, %s47
    %p54 = scmp.eq.s32.totalorder %s16, 1
    %p55 = por %p53, %p54
    %p56 = scmp.ne.s32.totalorder %s47, %s48
    %p57 = scmp.eq.s32.totalorder %s16, 0
    %p58 = por %p56, %p57
    %p59 = scmp.ne.s32.totalorder %s47, %s48
    %p60 = scmp.eq.s32.totalorder %s17, 1
    %p61 = por %p59, %p60
    %p63 = scmp.ne.s32.totalorder %s48, %s62
    %p64 = scmp.eq.s32.totalorder %s17, 0
    %p65 = por %p63, %p64
    %s67 = sadd.s32 %s66, 1
    %p70 = scmp.eq.s32.totalorder %s11, 1
    %p71 = scmp.ne.s32.totalorder %s66, %s68
    %p72 = scmp.eq.s32.totalorder %s11, 0
    %p73 = por %p71, %p72
    %p74 = scmp.ne.s32.totalorder %s66, %s68
    %p75 = scmp.eq.s32.totalorder %s16, 1
    %p76 = por %p74, %p75
    %p77 = scmp.ne.s32.totalorder %s68, %s69
    %p78 = scmp.eq.s32.totalorder %s16, 0
    %p79 = por %p77, %p78
    %p80 = scmp.ne.s32.totalorder %s68, %s69
    %p81 = scmp.eq.s32.totalorder %s17, 1
    %p82 = por %p80, %p81
    %p84 = scmp.ne.s32.totalorder %s69, %s83
    %p85 = scmp.eq.s32.totalorder %s17, 0
    %p86 = por %p84, %p85
    %s88 = sadd.s32 %s87, 1
    %p91 = scmp.eq.s32.totalorder %s11, 1
    %p92 = scmp.ne.s32.totalorder %s87, %s89
    %p93 = scmp.eq.s32.totalorder %s11, 0
    %p94 = por %p92, %p93
    %p95 = scmp.ne.s32.totalorder %s87, %s89
    %p96 = scmp.eq.s32.totalorder %s16, 1
    %p97 = por %p95, %p96
    %p98 = scmp.ne.s32.totalorder %s89, %s90
    %p99 = scmp.eq.s32.totalorder %s16, 0
    %p100 = por %p98, %p99
    %p101 = scmp.ne.s32.totalorder %s89, %s90
    %p102 = scmp.eq.s32.totalorder %s17, 1
    %p103 = por %p101, %p102
    %p105 = scmp.ne.s32.totalorder %s90, %s104
    %p106 = scmp.eq.s32.totalorder %s17, 0
    %p107 = por %p105, %p106
    %s109 = sadd.s32 %s108, 1
    %p112 = scmp.eq.s32.totalorder %s11, 1
    %p113 = scmp.ne.s32.totalorder %s108, %s110
    %p114 = scmp.eq.s32.totalorder %s11, 0
    %p115 = por %p113, %p114
    %p116 = scmp.ne.s32.totalorder %s108, %s110
    %p117 = scmp.eq.s32.totalorder %s16, 1
    %p118 = por %p116, %p117
    %p119 = scmp.ne.s32.totalorder %s110, %s111
    %p120 = scmp.eq.s32.totalorder %s16, 0
    %p121 = por %p119, %p120
    %p122 = scmp.ne.s32.totalorder %s110, %s111
    %p123 = scmp.eq.s32.totalorder %s17, 1
    %p124 = por %p122, %p123
    %p126 = scmp.ne.s32.totalorder %s111, %s125
    %p127 = scmp.eq.s32.totalorder %s17, 0
    %p128 = por %p126, %p127
    %s129 = ssub.s32 %s11, %s18
    %p130 = scmp.eq.s32.totalorder %s129, 0
    %s132 = sadd.s32 %s131, 1
    %s133 = scalar_select %p130, %s131, %s132
    %p136 = pneg %p130
    %p137 = scmp.eq.s32.totalorder %s11, 1
    %p138 = por %p136, %p137
    %p139 = scmp.ne.s32.totalorder %s131, %s134
    %p140 = scmp.eq.s32.totalorder %s11, 0
    %p141 = por %p139, %p140
    %p142 = scmp.ne.s32.totalorder %s131, %s134
    %p143 = scmp.eq.s32.totalorder %s16, 1
    %p144 = por %p142, %p143
    %p145 = scmp.ne.s32.totalorder %s134, %s135
    %p146 = scmp.eq.s32.totalorder %s16, 0
    %p147 = por %p145, %p146
    %p148 = scmp.ne.s32.totalorder %s134, %s135
    %p149 = scmp.eq.s32.totalorder %s17, 1
    %p150 = por %p148, %p149
    %p152 = scmp.ne.s32.totalorder %s135, %s151
    %p153 = scmp.eq.s32.totalorder %s17, 0
    %p154 = por %p152, %p153
    %p155 = scmp.le.s32.totalorder 1, %s11
    %p156 = scmp.lt.s32.totalorder %s11, 3
    %p157 = pnand %p155, %p156
    %p158 = pneg %p157
    // Predicated region
    $region9: #{informer_forward.13} parent=5 // pred_check
      _
    $region10: #{informer_forward.13} parent=5 // pred_check_branch
      %160 = sbr.rel (%p157) target = $region12
    $region11: #{informer_forward.13} parent=5 // pred_region
      %s161 = ssub.s32 %s11, 1
      // Predicated region
      $region13: #{informer_forward.13} parent=11 // pred_check
        %p162 = pneg %p58
      $region14: #{informer_forward.13} parent=11 // pred_check_branch
        %164 = sbr.rel (%p162) target = $region16
      $region15: #{informer_forward.13} parent=11 // pred_region
        _
      $region16: #{informer_forward.13} parent=11 // pred_fallthru
        _
      // Predicated region
      $region17: #{informer_forward.13} parent=11 // pred_check
        %p165 = pneg %p79
      $region18: #{informer_forward.13} parent=11 // pred_check_branch
        %167 = sbr.rel (%p165) target = $region20
      $region19: #{informer_forward.13} parent=11 // pred_region
        _
      $region20: #{informer_forward.13} parent=11 // pred_fallthru
        _
      // Predicated region
      $region21: #{informer_forward.13} parent=11 // pred_check
        %p168 = pneg %p100
      $region22: #{informer_forward.13} parent=11 // pred_check_branch
        %170 = sbr.rel (%p168) target = $region24
      $region23: #{informer_forward.13} parent=11 // pred_region
        _
      $region24: #{informer_forward.13} parent=11 // pred_fallthru
        _
      // Predicated region
      $region25: #{informer_forward.13} parent=11 // pred_check
        %p171 = pneg %p121
      $region26: #{informer_forward.13} parent=11 // pred_check_branch
        %173 = sbr.rel (%p171) target = $region28
      $region27: #{informer_forward.13} parent=11 // pred_region
        _
      $region28: #{informer_forward.13} parent=11 // pred_fallthru
        _
    $region12: #{informer_forward.13} parent=5 // pred_fallthru
      _
    %p174 = scmp.lt.s32.totalorder %s11, 2
    // Predicated region
    $region29: #{informer_forward.13} parent=5 // pred_check
      %p175 = pneg %p174
    $region30: #{informer_forward.13} parent=5 // pred_check_branch
      %177 = sbr.rel (%p175) target = $region32
    $region31: #{informer_forward.13} parent=5 // pred_region
      // Predicated region
      $region33: #{informer_forward.13} parent=31 // pred_check
        %p178 = pneg %p31
      $region34: #{informer_forward.13} parent=31 // pred_check_branch
        %180 = sbr.rel (%p178) target = $region36
      $region35: #{informer_forward.13} parent=31 // pred_region
        %p181 = scmp.lt.s32.totalorder %s11, 1
        %s182 = scalar_select %p181, %s11, 1
        %s183 = smul.addr %s182, 2
        %s184 = smul.addr %s183, 8
        %s185 = scalar_lea.vmem %s0, %s184
      $region36: #{informer_forward.13} parent=31 // pred_fallthru
        _
    $region32: #{informer_forward.13} parent=5 // pred_fallthru
      _
    %p186 = scmp.le.s32.totalorder 1, %s11
    %p187 = scmp.lt.s32.totalorder %s11, 3
    %p188 = pnand %p186, %p187
    %p189 = pneg %p188
    // Predicated region
    $region37: #{informer_forward.13} parent=5 // pred_check
      _
    $region38: #{informer_forward.13} parent=5 // pred_check_branch
      %191 = sbr.rel (%p188) target = $region40
    $region39: #{informer_forward.13} parent=5 // pred_region
      %s192 = ssub.s32 %s11, 1
      %p193 = scmp.lt.s32.totalorder %s16, 1
      %s194 = scalar_select %p193, %s16, 1
      %s195 = smul.addr %s194, 2
      %s196 = smul.addr %s195, 8
      %s197 = scalar_lea.vmem %s0, %s196
      %p198 = pneg %p37
      %p199 = pneg %p34
      %p200 = pneg %p58
      %p201 = pneg %p55
      %p202 = pneg %p79
      %p203 = pneg %p76
      %p204 = pneg %p100
      %p205 = pneg %p97
      %p206 = pneg %p121
      %p207 = pneg %p118
      %p208 = pneg %p147
      %p209 = pneg %p144
      %p210 = scmp.lt.s32.totalorder %s16, 1
      %s211 = scalar_select %p210, %s16, 1
      %s212 = smul.addr %s211, 2
      %s213 = smul.addr %s212, 8
      %s214 = scalar_lea.vmem %s5, %s213
      %p215 = scmp.lt.s32.totalorder %s16, 1
      %s216 = scalar_select %p215, %s16, 1
      %s217 = smul.addr %s216, 2
      %s218 = smul.addr %s217, 8
      %s219 = scalar_lea.vmem %s0, %s218
      %p220 = scmp.lt.s32.totalorder %s16, 1
      %s221 = scalar_select %p220, %s16, 1
      %s222 = smul.addr %s221, 2
      %s223 = smul.addr %s222, 8
      %s224 = scalar_lea.vmem %s5, %s223
      %v226 = vld [vmem:[%s219] sm:$0xff]
      %v227 = vld [vmem:[%s219 + $0x8] sm:$0xf]
      %v228 = vld [vmem:[%s1] sm:$0x1]
      %v229 = vld [vmem:[%s2] sm:$0x1]
      %vm230 = vcmask 261120
      %v231 = vsel %vm230, %v226, 0.0
      %232 = vadd.xlane.f32.xlu0 %v231
      %v233 = vpop.xlane.xlu0 %232
      %vm234 = vcmask 257024
      %v235 = vsel %vm234, %v227, 0.0
      %236 = vadd.xlane.f32.xlu0 %v235
      %v237 = vpop.xlane.xlu0 %236
      %v238 = vrcp.pop 32.0
      %v239 = vmul.f32 %v233, %v238
      %v240 = vmul.f32 %v237, %v238
      %v241 = vsub.f32 %v226, %v239
      %v242 = vsub.f32 %v227, %v240
      %v243 = vmul.f32 %v241, %v241
      %v244 = vmul.f32 %v242, %v242
      %v245 = vsel %vm230, %v243, 0.0
      %246 = vadd.xlane.f32.xlu0 %v245
      %v247 = vpop.xlane.xlu0 %246
      %v248 = vsel %vm234, %v244, 0.0
      %249 = vadd.xlane.f32.xlu0 %v248
      %v250 = vpop.xlane.xlu0 %249
      %v251 = vmul.f32 %v247, %v238
      %v252 = vmul.f32 %v250, %v238
      %v253 = vadd.f32 %v251, 1e-05
      %v254 = vadd.f32 %v252, 1e-05
      %v255 = vrsqrt.pop %v253
      %v256 = vrsqrt.pop %v254
      %v257 = vmul.f32 %v241, %v255
      %v258 = vmul.f32 %v242, %v256
      %v260 = vlaneseq
      %v261 = vshrl.u32 %v260, 7
      %v262 = vsub.s32 0, %v261
      %v263 = vrot.slane %v228, %v262
      %v265 = vmul.f32 %v257, %v263
      %v266 = vmul.f32 %v258, %v263
      %v268 = vlaneseq
      %v269 = vshrl.u32 %v268, 7
      %v270 = vsub.s32 0, %v269
      %v271 = vrot.slane %v229, %v270
      %v273 = vadd.f32 %v265, %v271
      %v274 = vadd.f32 %v266, %v271
      %v275 = vld [vmem:[%s3] sm:$0xf]
      %v276 = vld [vmem:[%s3 + $0x4] sm:$0xf]
      %v277 = vld [vmem:[%s3 + $0x8] sm:$0xf]
      %v278 = vld [vmem:[%s3 + $0xc] sm:$0xf]
      %v279 = vpack.c.bf16 %v274, %v273
      %v280 = vld [vmem:[%s4] sm:$0x1]
      %v282 = vlaneseq
      %v283 = vshrl.u32 %v282, 7
      %v284 = vsub.s32 0, %v283
      %v285 = vrot.slane %v280, %v284
      %v291 = vunpack.c.l.b16 %v275
      %v292 = vunpack.c.l.b16 %v276
      %v293 = vunpack.c.l.b16 %v277
      %v294 = vunpack.c.l.b16 %v278
      %v295 = vpack.c.b16 %v292, %v291
      %v296 = vpack.c.b16 %v294, %v293
      %v300 = vsel %vm230, %v279, 0
      %302 = vmatprep.subr.bf16.mxu0 0
      %303 = vmatpush1.bf16.msra.mxu0 0
      %304 = vmatprep.subr.bf16.mxu0 0
      %305 = vmatpush1.bf16.msra.mxu0 0
      %306 = vmatprep.subr.bf16.mxu0 0
      %307 = vmatpush1.bf16.msra.mxu0 0
      %308 = vmatprep.subr.bf16.mxu0 0
      %309 = vmatpush1.bf16.msra.mxu0 0
      %310 = vmatprep.subr.bf16.mxu0 0
      %311 = vmatpush1.bf16.msra.mxu0 0
      %312 = vmatprep.subr.bf16.mxu0 0
      %313 = vmatpush1.bf16.msra.mxu0 0
      %314 = vmatprep.subr.bf16.mxu0 0
      %315 = vmatpush1.bf16.msra.mxu0 %v296
      %316 = vmatprep.subr.bf16.mxu0 0
      %317 = vmatpush1.bf16.msra.mxu0 %v295
      %318 = vmatprep.subr.bf16.mxu0 0
      %319 = vmatpush2.bf16.msra.mxu0 0
      %320 = vmatprep.subr.bf16.mxu0 0
      %321 = vmatpush2.bf16.msra.mxu0 0
      %322 = vmatprep.subr.bf16.mxu0 0
      %323 = vmatpush2.bf16.msra.mxu0 0
      %324 = vmatprep.subr.bf16.mxu0 0
      %325 = vmatpush2.bf16.msra.mxu0 0
      %326 = vmatprep.subr.bf16.mxu0 0
      %327 = vmatpush2.bf16.msra.mxu0 0
      %328 = vmatprep.subr.bf16.mxu0 0
      %329 = vmatpush2.bf16.msra.mxu0 0
      %330 = vmatprep.subr.bf16.mxu0 0
      %331 = vmatpush2.bf16.msra.mxu0 0
      %332 = vmatprep.subr.bf16.mxu0 0
      %333 = vmatpush2.bf16.msra.mxu0 0
      %334 = vmatprep.mubr.bf16.mxu0 0
      %335 = vmatmul.mubr.bf16.gmra.mxu0 %v300
      %v336 = vpop.f32.mrf.mxu0
      %v337 = vadd.f32 %v285, %v336
      %v338 = vpop.f32.mrf.mxu0
      %v339 = vpop.f32.mrf.mxu0
      %v340 = vadd.f32 %v285, %v339
      %v341 = vpop.f32.mrf.mxu0
      %342 = vdwg.mxu0
      %vm343 = vcmask 31744
      %344 = vst.msk [vmem:[%s224] sm:$0xff] %vm343, %v337
      %vm345 = vcmask 27648
      %346 = vst.msk [vmem:[%s224 + $0x8] sm:$0xf] %vm345, %v340
      %p347 = scmp.lt.s32.totalorder %s16, 1
      %s348 = scalar_select %p347, %s16, 1
      %s349 = smul.addr %s348, 2
      %s350 = smul.addr %s349, 8
      %s351 = scalar_lea.vmem %s5, %s350
      // Predicated region
      $region41: #{informer_forward.13} parent=39 // pred_check
        %p352 = pneg %p144
      $region42: #{informer_forward.13} parent=39 // pred_check_branch
        %354 = sbr.rel (%p352) target = $region44
      $region43: #{informer_forward.13} parent=39 // pred_region
        _
      $region44: #{informer_forward.13} parent=39 // pred_fallthru
        _
    $region40: #{informer_forward.13} parent=5 // pred_fallthru
      _
    %p355 = scmp.le.s32.totalorder 2, %s11
    // Predicated region
    $region45: #{informer_forward.13} parent=5 // pred_check
      %p356 = pneg %p355
    $region46: #{informer_forward.13} parent=5 // pred_check_branch
      %358 = sbr.rel (%p356) target = $region48
    $region47: #{informer_forward.13} parent=5 // pred_region
      %s359 = ssub.s32 %s11, 2
      // Predicated region
      $region49: #{informer_forward.13} parent=47 // pred_check
        %p360 = pneg %p150
      $region50: #{informer_forward.13} parent=47 // pred_check_branch
        %362 = sbr.rel (%p360) target = $region52
      $region51: #{informer_forward.13} parent=47 // pred_region
        %p363 = scmp.lt.s32.totalorder %s17, 1
        %s364 = scalar_select %p363, %s17, 1
        %s365 = smul.addr %s364, 2
        %s366 = smul.addr %s365, 8
        %s367 = scalar_lea.vmem %s5, %s366
      $region52: #{informer_forward.13} parent=47 // pred_fallthru
        _
    $region48: #{informer_forward.13} parent=5 // pred_fallthru
      _
  $region6: #{informer_forward.13} parent=0 // loop_footer
    %s15 = sadd.s32 1, %s11
  $region7: #{informer_forward.13} parent=0 // loop_footer_branch
    %10 = sbr.rel target = $region3
  $region8: #{informer_forward.13} parent=0 // loop_exit
    _

// kernel: informer_forward.12
$region0: #{informer_forward.12}
  #allocation0 [shape = 'u32[]', space=smem, size = 0x4, offset = 0x4, fixed_abs, tag = 'smem constant byte address 0x4 - core index']
  #allocation1 [shape = 'u32[144,128]{1,0:T(1,128)}', space=vmem, size = 0x12000, scoped, tag = 'internal scratch']
  %s0 = inlined_call_operand.vmem [shape: f32[2,12,32], index: 0, kind: input, shape index: {}]
  %s1 = inlined_call_operand.vmem [shape: f32[2,6,32], index: 1, kind: input, shape index: {}]
  %s2 = inlined_call_operand.vmem [shape: bf16[32,96], index: 2, kind: input, shape index: {}]
  %s3 = inlined_call_operand.vmem [shape: f32[1,96], index: 3, kind: input, shape index: {}]
  %s4 = inlined_call_operand.vmem [shape: f32[32,32], index: 4, kind: input, shape index: {}]
  %s5 = inlined_call_operand.vmem [shape: f32[1,32], index: 5, kind: input, shape index: {}]
  %s6 = inlined_call_operand.vmem [shape: bf16[32,32], index: 6, kind: input, shape index: {}]
  %s7 = inlined_call_operand.vmem [shape: f32[1,32], index: 7, kind: input, shape index: {}]
  %s8 = inlined_call_operand.vmem [shape: bf16[32,64], index: 8, kind: input, shape index: {}]
  %s9 = inlined_call_operand.vmem [shape: f32[1,64], index: 9, kind: input, shape index: {}]
  %s10 = inlined_call_operand.vmem [shape: f32[32,32], index: 10, kind: input, shape index: {}]
  %s11 = inlined_call_operand.vmem [shape: f32[1,32], index: 11, kind: input, shape index: {}]
  %s12 = inlined_call_operand.vmem [shape: f32[1,32], index: 12, kind: input, shape index: {}]
  %s13 = inlined_call_operand.vmem [shape: f32[1,32], index: 13, kind: input, shape index: {}]
  %s14 = inlined_call_operand.vmem [shape: f32[1,32], index: 14, kind: input, shape index: {}]
  %s15 = inlined_call_operand.vmem [shape: f32[1,32], index: 15, kind: input, shape index: {}]
  %s16 = inlined_call_operand.vmem [shape: bf16[32,64], index: 16, kind: input, shape index: {}]
  %s17 = inlined_call_operand.vmem [shape: f32[1,64], index: 17, kind: input, shape index: {}]
  %s18 = inlined_call_operand.vmem [shape: bf16[64,32], index: 18, kind: input, shape index: {}]
  %s19 = inlined_call_operand.vmem [shape: f32[1,32], index: 19, kind: input, shape index: {}]
  %s20 = inlined_call_operand.vmem [shape: f32[1,32], index: 20, kind: input, shape index: {}]
  %s21 = inlined_call_operand.vmem [shape: f32[1,32], index: 21, kind: input, shape index: {}]
  %s22 = inlined_call_operand.vmem [shape: f32[2,12,32], index: 22, kind: output, shape index: {}]
  %s23 = sld [smem:[#allocation0]]
  $region121: #{informer_forward.12} parent=0
    _
  %s25 = ssub.s32 1, %s23
  %s26 = scalar_select 0, %s25, %s23
  loop: start=0, step=1, limit=4
  $region2: #{informer_forward.12} parent=0 // loop_pre_header
    _
  $region3: #{informer_forward.12} parent=0 // loop_header
    %s28 = sphi 0, %s32
    %p29 = scmp.ge.s32.totalorder %s28, 4
    %s38 = sphi 0, %s40
    %s41 = sphi 0, %s38
    %s42 = sphi 0, %s41
    %s58 = sphi 0, %s42
    %s64 = sphi 0, %s66
    %s67 = sphi 0, %s64
    %s68 = sphi 0, %s67
    %s84 = sphi 0, %s68
    %s88 = sphi 0, %s88
    %s90 = sphi 0, %s88
    %s91 = sphi 0, %s90
    %s105 = sphi 0, %s91
    %s109 = sphi 0, %s109
    %s111 = sphi 0, %s109
    %s112 = sphi 0, %s111
    %s126 = sphi 0, %s112
    %s130 = sphi 0, %s130
    %s132 = sphi 0, %s130
    %s133 = sphi 0, %s132
    %s147 = sphi 0, %s133
    %s151 = sphi 0, %s151
    %s153 = sphi 0, %s151
    %s154 = sphi 0, %s153
    %s168 = sphi 0, %s154
    %s172 = sphi 0, %s172
    %s174 = sphi 0, %s172
    %s175 = sphi 0, %s174
    %s189 = sphi 0, %s175
    %s193 = sphi 0, %s193
    %s195 = sphi 0, %s193
    %s196 = sphi 0, %s195
    %s210 = sphi 0, %s196
    %s214 = sphi 0, %s214
    %s216 = sphi 0, %s214
    %s217 = sphi 0, %s216
    %s231 = sphi 0, %s217
    %s235 = sphi 0, %s235
    %s237 = sphi 0, %s235
    %s238 = sphi 0, %s237
    %s252 = sphi 0, %s238
    %s256 = sphi 0, %s256
    %s258 = sphi 0, %s256
    %s259 = sphi 0, %s258
    %s273 = sphi 0, %s259
    %s277 = sphi 0, %s277
    %s279 = sphi 0, %s277
    %s280 = sphi 0, %s279
    %s294 = sphi 0, %s280
    %s298 = sphi 0, %s298
    %s300 = sphi 0, %s298
    %s301 = sphi 0, %s300
    %s315 = sphi 0, %s301
    %s319 = sphi 0, %s319
    %s321 = sphi 0, %s319
    %s322 = sphi 0, %s321
    %s336 = sphi 0, %s322
    %s340 = sphi 0, %s340
    %s342 = sphi 0, %s340
    %s343 = sphi 0, %s342
    %s357 = sphi 0, %s343
    %s361 = sphi 0, %s361
    %s363 = sphi 0, %s361
    %s364 = sphi 0, %s363
    %s378 = sphi 0, %s364
    %s382 = sphi 0, %s382
    %s384 = sphi 0, %s382
    %s385 = sphi 0, %s384
    %s399 = sphi 0, %s385
    %s403 = sphi 0, %s403
    %s405 = sphi 0, %s403
    %s406 = sphi 0, %s405
    %s420 = sphi 0, %s406
    %s424 = sphi 0, %s424
    %s426 = sphi 0, %s424
    %s427 = sphi 0, %s426
    %s441 = sphi 0, %s427
    %s445 = sphi 0, %s445
    %s447 = sphi 0, %s445
    %s448 = sphi 0, %s447
    %s462 = sphi 0, %s448
    %s466 = sphi 0, %s466
    %s468 = sphi 0, %s466
    %s469 = sphi 0, %s468
    %s483 = sphi 0, %s469
    %s487 = sphi 0, %s487
    %s489 = sphi 0, %s487
    %s490 = sphi 0, %s489
    %s504 = sphi 0, %s490
    %s510 = sphi 0, %s512
    %s513 = sphi 0, %s510
    %s514 = sphi 0, %s513
    %s530 = sphi 0, %s514
  $region4: #{informer_forward.12} parent=0 // loop_header_branch
    %31 = sbr.rel (%p29) target = $region8
  $region5: #{informer_forward.12} parent=0 // loop_body
    %s33 = ssub.s32 %s28, 1
    %s34 = ssub.s32 %s28, 2
    %s35 = sadd.s32 %s28, 1
    %s36 = ssub.s32 %s28, %s35
    %p37 = scmp.eq.s32.totalorder %s36, 0
    %s39 = sadd.s32 %s38, 1
    %s40 = scalar_select %p37, %s38, %s39
    %p43 = pneg %p37
    %p44 = scmp.eq.s32.totalorder %s28, 1
    %p45 = por %p43, %p44
    %p46 = scmp.ne.s32.totalorder %s38, %s41
    %p47 = scmp.eq.s32.totalorder %s28, 0
    %p48 = por %p46, %p47
    %p49 = scmp.ne.s32.totalorder %s38, %s41
    %p50 = scmp.eq.s32.totalorder %s33, 1
    %p51 = por %p49, %p50
    %p52 = scmp.ne.s32.totalorder %s41, %s42
    %p53 = scmp.eq.s32.totalorder %s33, 0
    %p54 = por %p52, %p53
    %p55 = scmp.ne.s32.totalorder %s41, %s42
    %p56 = scmp.eq.s32.totalorder %s34, 1
    %p57 = por %p55, %p56
    %p59 = scmp.ne.s32.totalorder %s42, %s58
    %p60 = scmp.eq.s32.totalorder %s34, 0
    %p61 = por %p59, %p60
    %s62 = ssub.s32 %s28, %s35
    %p63 = scmp.eq.s32.totalorder %s62, 0
    %s65 = sadd.s32 %s64, 1
    %s66 = scalar_select %p63, %s64, %s65
    %p69 = pneg %p63
    %p70 = scmp.eq.s32.totalorder %s28, 1
    %p71 = por %p69, %p70
    %p72 = scmp.ne.s32.totalorder %s64, %s67
    %p73 = scmp.eq.s32.totalorder %s28, 0
    %p74 = por %p72, %p73
    %p75 = scmp.ne.s32.totalorder %s64, %s67
    %p76 = scmp.eq.s32.totalorder %s33, 1
    %p77 = por %p75, %p76
    %p78 = scmp.ne.s32.totalorder %s67, %s68
    %p79 = scmp.eq.s32.totalorder %s33, 0
    %p80 = por %p78, %p79
    %p81 = scmp.ne.s32.totalorder %s67, %s68
    %p82 = scmp.eq.s32.totalorder %s34, 1
    %p83 = por %p81, %p82
    %p85 = scmp.ne.s32.totalorder %s68, %s84
    %p86 = scmp.eq.s32.totalorder %s34, 0
    %p87 = por %p85, %p86
    %s89 = sadd.s32 %s88, 1
    %p92 = scmp.eq.s32.totalorder %s28, 1
    %p93 = scmp.ne.s32.totalorder %s88, %s90
    %p94 = scmp.eq.s32.totalorder %s28, 0
    %p95 = por %p93, %p94
    %p96 = scmp.ne.s32.totalorder %s88, %s90
    %p97 = scmp.eq.s32.totalorder %s33, 1
    %p98 = por %p96, %p97
    %p99 = scmp.ne.s32.totalorder %s90, %s91
    %p100 = scmp.eq.s32.totalorder %s33, 0
    %p101 = por %p99, %p100
    %p102 = scmp.ne.s32.totalorder %s90, %s91
    %p103 = scmp.eq.s32.totalorder %s34, 1
    %p104 = por %p102, %p103
    %p106 = scmp.ne.s32.totalorder %s91, %s105
    %p107 = scmp.eq.s32.totalorder %s34, 0
    %p108 = por %p106, %p107
    %s110 = sadd.s32 %s109, 1
    %p113 = scmp.eq.s32.totalorder %s28, 1
    %p114 = scmp.ne.s32.totalorder %s109, %s111
    %p115 = scmp.eq.s32.totalorder %s28, 0
    %p116 = por %p114, %p115
    %p117 = scmp.ne.s32.totalorder %s109, %s111
    %p118 = scmp.eq.s32.totalorder %s33, 1
    %p119 = por %p117, %p118
    %p120 = scmp.ne.s32.totalorder %s111, %s112
    %p121 = scmp.eq.s32.totalorder %s33, 0
    %p122 = por %p120, %p121
    %p123 = scmp.ne.s32.totalorder %s111, %s112
    %p124 = scmp.eq.s32.totalorder %s34, 1
    %p125 = por %p123, %p124
    %p127 = scmp.ne.s32.totalorder %s112, %s126
    %p128 = scmp.eq.s32.totalorder %s34, 0
    %p129 = por %p127, %p128
    %s131 = sadd.s32 %s130, 1
    %p134 = scmp.eq.s32.totalorder %s28, 1
    %p135 = scmp.ne.s32.totalorder %s130, %s132
    %p136 = scmp.eq.s32.totalorder %s28, 0
    %p137 = por %p135, %p136
    %p138 = scmp.ne.s32.totalorder %s130, %s132
    %p139 = scmp.eq.s32.totalorder %s33, 1
    %p140 = por %p138, %p139
    %p141 = scmp.ne.s32.totalorder %s132, %s133
    %p142 = scmp.eq.s32.totalorder %s33, 0
    %p143 = por %p141, %p142
    %p144 = scmp.ne.s32.totalorder %s132, %s133
    %p145 = scmp.eq.s32.totalorder %s34, 1
    %p146 = por %p144, %p145
    %p148 = scmp.ne.s32.totalorder %s133, %s147
    %p149 = scmp.eq.s32.totalorder %s34, 0
    %p150 = por %p148, %p149
    %s152 = sadd.s32 %s151, 1
    %p155 = scmp.eq.s32.totalorder %s28, 1
    %p156 = scmp.ne.s32.totalorder %s151, %s153
    %p157 = scmp.eq.s32.totalorder %s28, 0
    %p158 = por %p156, %p157
    %p159 = scmp.ne.s32.totalorder %s151, %s153
    %p160 = scmp.eq.s32.totalorder %s33, 1
    %p161 = por %p159, %p160
    %p162 = scmp.ne.s32.totalorder %s153, %s154
    %p163 = scmp.eq.s32.totalorder %s33, 0
    %p164 = por %p162, %p163
    %p165 = scmp.ne.s32.totalorder %s153, %s154
    %p166 = scmp.eq.s32.totalorder %s34, 1
    %p167 = por %p165, %p166
    %p169 = scmp.ne.s32.totalorder %s154, %s168
    %p170 = scmp.eq.s32.totalorder %s34, 0
    %p171 = por %p169, %p170
    %s173 = sadd.s32 %s172, 1
    %p176 = scmp.eq.s32.totalorder %s28, 1
    %p177 = scmp.ne.s32.totalorder %s172, %s174
    %p178 = scmp.eq.s32.totalorder %s28, 0
    %p179 = por %p177, %p178
    %p180 = scmp.ne.s32.totalorder %s172, %s174
    %p181 = scmp.eq.s32.totalorder %s33, 1
    %p182 = por %p180, %p181
    %p183 = scmp.ne.s32.totalorder %s174, %s175
    %p184 = scmp.eq.s32.totalorder %s33, 0
    %p185 = por %p183, %p184
    %p186 = scmp.ne.s32.totalorder %s174, %s175
    %p187 = scmp.eq.s32.totalorder %s34, 1
    %p188 = por %p186, %p187
    %p190 = scmp.ne.s32.totalorder %s175, %s189
    %p191 = scmp.eq.s32.totalorder %s34, 0
    %p192 = por %p190, %p191
    %s194 = sadd.s32 %s193, 1
    %p197 = scmp.eq.s32.totalorder %s28, 1
    %p198 = scmp.ne.s32.totalorder %s193, %s195
    %p199 = scmp.eq.s32.totalorder %s28, 0
    %p200 = por %p198, %p199
    %p201 = scmp.ne.s32.totalorder %s193, %s195
    %p202 = scmp.eq.s32.totalorder %s33, 1
    %p203 = por %p201, %p202
    %p204 = scmp.ne.s32.totalorder %s195, %s196
    %p205 = scmp.eq.s32.totalorder %s33, 0
    %p206 = por %p204, %p205
    %p207 = scmp.ne.s32.totalorder %s195, %s196
    %p208 = scmp.eq.s32.totalorder %s34, 1
    %p209 = por %p207, %p208
    %p211 = scmp.ne.s32.totalorder %s196, %s210
    %p212 = scmp.eq.s32.totalorder %s34, 0
    %p213 = por %p211, %p212
    %s215 = sadd.s32 %s214, 1
    %p218 = scmp.eq.s32.totalorder %s28, 1
    %p219 = scmp.ne.s32.totalorder %s214, %s216
    %p220 = scmp.eq.s32.totalorder %s28, 0
    %p221 = por %p219, %p220
    %p222 = scmp.ne.s32.totalorder %s214, %s216
    %p223 = scmp.eq.s32.totalorder %s33, 1
    %p224 = por %p222, %p223
    %p225 = scmp.ne.s32.totalorder %s216, %s217
    %p226 = scmp.eq.s32.totalorder %s33, 0
    %p227 = por %p225, %p226
    %p228 = scmp.ne.s32.totalorder %s216, %s217
    %p229 = scmp.eq.s32.totalorder %s34, 1
    %p230 = por %p228, %p229
    %p232 = scmp.ne.s32.totalorder %s217, %s231
    %p233 = scmp.eq.s32.totalorder %s34, 0
    %p234 = por %p232, %p233
    %s236 = sadd.s32 %s235, 1
    %p239 = scmp.eq.s32.totalorder %s28, 1
    %p240 = scmp.ne.s32.totalorder %s235, %s237
    %p241 = scmp.eq.s32.totalorder %s28, 0
    %p242 = por %p240, %p241
    %p243 = scmp.ne.s32.totalorder %s235, %s237
    %p244 = scmp.eq.s32.totalorder %s33, 1
    %p245 = por %p243, %p244
    %p246 = scmp.ne.s32.totalorder %s237, %s238
    %p247 = scmp.eq.s32.totalorder %s33, 0
    %p248 = por %p246, %p247
    %p249 = scmp.ne.s32.totalorder %s237, %s238
    %p250 = scmp.eq.s32.totalorder %s34, 1
    %p251 = por %p249, %p250
    %p253 = scmp.ne.s32.totalorder %s238, %s252
    %p254 = scmp.eq.s32.totalorder %s34, 0
    %p255 = por %p253, %p254
    %s257 = sadd.s32 %s256, 1
    %p260 = scmp.eq.s32.totalorder %s28, 1
    %p261 = scmp.ne.s32.totalorder %s256, %s258
    %p262 = scmp.eq.s32.totalorder %s28, 0
    %p263 = por %p261, %p262
    %p264 = scmp.ne.s32.totalorder %s256, %s258
    %p265 = scmp.eq.s32.totalorder %s33, 1
    %p266 = por %p264, %p265
    %p267 = scmp.ne.s32.totalorder %s258, %s259
    %p268 = scmp.eq.s32.totalorder %s33, 0
    %p269 = por %p267, %p268
    %p270 = scmp.ne.s32.totalorder %s258, %s259
    %p271 = scmp.eq.s32.totalorder %s34, 1
    %p272 = por %p270, %p271
    %p274 = scmp.ne.s32.totalorder %s259, %s273
    %p275 = scmp.eq.s32.totalorder %s34, 0
    %p276 = por %p274, %p275
    %s278 = sadd.s32 %s277, 1
    %p281 = scmp.eq.s32.totalorder %s28, 1
    %p282 = scmp.ne.s32.totalorder %s277, %s279
    %p283 = scmp.eq.s32.totalorder %s28, 0
    %p284 = por %p282, %p283
    %p285 = scmp.ne.s32.totalorder %s277, %s279
    %p286 = scmp.eq.s32.totalorder %s33, 1
    %p287 = por %p285, %p286
    %p288 = scmp.ne.s32.totalorder %s279, %s280
    %p289 = scmp.eq.s32.totalorder %s33, 0
    %p290 = por %p288, %p289
    %p291 = scmp.ne.s32.totalorder %s279, %s280
    %p292 = scmp.eq.s32.totalorder %s34, 1
    %p293 = por %p291, %p292
    %p295 = scmp.ne.s32.totalorder %s280, %s294
    %p296 = scmp.eq.s32.totalorder %s34, 0
    %p297 = por %p295, %p296
    %s299 = sadd.s32 %s298, 1
    %p302 = scmp.eq.s32.totalorder %s28, 1
    %p303 = scmp.ne.s32.totalorder %s298, %s300
    %p304 = scmp.eq.s32.totalorder %s28, 0
    %p305 = por %p303, %p304
    %p306 = scmp.ne.s32.totalorder %s298, %s300
    %p307 = scmp.eq.s32.totalorder %s33, 1
    %p308 = por %p306, %p307
    %p309 = scmp.ne.s32.totalorder %s300, %s301
    %p310 = scmp.eq.s32.totalorder %s33, 0
    %p311 = por %p309, %p310
    %p312 = scmp.ne.s32.totalorder %s300, %s301
    %p313 = scmp.eq.s32.totalorder %s34, 1
    %p314 = por %p312, %p313
    %p316 = scmp.ne.s32.totalorder %s301, %s315
    %p317 = scmp.eq.s32.totalorder %s34, 0
    %p318 = por %p316, %p317
    %s320 = sadd.s32 %s319, 1
    %p323 = scmp.eq.s32.totalorder %s28, 1
    %p324 = scmp.ne.s32.totalorder %s319, %s321
    %p325 = scmp.eq.s32.totalorder %s28, 0
    %p326 = por %p324, %p325
    %p327 = scmp.ne.s32.totalorder %s319, %s321
    %p328 = scmp.eq.s32.totalorder %s33, 1
    %p329 = por %p327, %p328
    %p330 = scmp.ne.s32.totalorder %s321, %s322
    %p331 = scmp.eq.s32.totalorder %s33, 0
    %p332 = por %p330, %p331
    %p333 = scmp.ne.s32.totalorder %s321, %s322
    %p334 = scmp.eq.s32.totalorder %s34, 1
    %p335 = por %p333, %p334
    %p337 = scmp.ne.s32.totalorder %s322, %s336
    %p338 = scmp.eq.s32.totalorder %s34, 0
    %p339 = por %p337, %p338
    %s341 = sadd.s32 %s340, 1
    %p344 = scmp.eq.s32.totalorder %s28, 1
    %p345 = scmp.ne.s32.totalorder %s340, %s342
    %p346 = scmp.eq.s32.totalorder %s28, 0
    %p347 = por %p345, %p346
    %p348 = scmp.ne.s32.totalorder %s340, %s342
    %p349 = scmp.eq.s32.totalorder %s33, 1
    %p350 = por %p348, %p349
    %p351 = scmp.ne.s32.totalorder %s342, %s343
    %p352 = scmp.eq.s32.totalorder %s33, 0
    %p353 = por %p351, %p352
    %p354 = scmp.ne.s32.totalorder %s342, %s343
    %p355 = scmp.eq.s32.totalorder %s34, 1
    %p356 = por %p354, %p355
    %p358 = scmp.ne.s32.totalorder %s343, %s357
    %p359 = scmp.eq.s32.totalorder %s34, 0
    %p360 = por %p358, %p359
    %s362 = sadd.s32 %s361, 1
    %p365 = scmp.eq.s32.totalorder %s28, 1
    %p366 = scmp.ne.s32.totalorder %s361, %s363
    %p367 = scmp.eq.s32.totalorder %s28, 0
    %p368 = por %p366, %p367
    %p369 = scmp.ne.s32.totalorder %s361, %s363
    %p370 = scmp.eq.s32.totalorder %s33, 1
    %p371 = por %p369, %p370
    %p372 = scmp.ne.s32.totalorder %s363, %s364
    %p373 = scmp.eq.s32.totalorder %s33, 0
    %p374 = por %p372, %p373
    %p375 = scmp.ne.s32.totalorder %s363, %s364
    %p376 = scmp.eq.s32.totalorder %s34, 1
    %p377 = por %p375, %p376
    %p379 = scmp.ne.s32.totalorder %s364, %s378
    %p380 = scmp.eq.s32.totalorder %s34, 0
    %p381 = por %p379, %p380
    %s383 = sadd.s32 %s382, 1
    %p386 = scmp.eq.s32.totalorder %s28, 1
    %p387 = scmp.ne.s32.totalorder %s382, %s384
    %p388 = scmp.eq.s32.totalorder %s28, 0
    %p389 = por %p387, %p388
    %p390 = scmp.ne.s32.totalorder %s382, %s384
    %p391 = scmp.eq.s32.totalorder %s33, 1
    %p392 = por %p390, %p391
    %p393 = scmp.ne.s32.totalorder %s384, %s385
    %p394 = scmp.eq.s32.totalorder %s33, 0
    %p395 = por %p393, %p394
    %p396 = scmp.ne.s32.totalorder %s384, %s385
    %p397 = scmp.eq.s32.totalorder %s34, 1
    %p398 = por %p396, %p397
    %p400 = scmp.ne.s32.totalorder %s385, %s399
    %p401 = scmp.eq.s32.totalorder %s34, 0
    %p402 = por %p400, %p401
    %s404 = sadd.s32 %s403, 1
    %p407 = scmp.eq.s32.totalorder %s28, 1
    %p408 = scmp.ne.s32.totalorder %s403, %s405
    %p409 = scmp.eq.s32.totalorder %s28, 0
    %p410 = por %p408, %p409
    %p411 = scmp.ne.s32.totalorder %s403, %s405
    %p412 = scmp.eq.s32.totalorder %s33, 1
    %p413 = por %p411, %p412
    %p414 = scmp.ne.s32.totalorder %s405, %s406
    %p415 = scmp.eq.s32.totalorder %s33, 0
    %p416 = por %p414, %p415
    %p417 = scmp.ne.s32.totalorder %s405, %s406
    %p418 = scmp.eq.s32.totalorder %s34, 1
    %p419 = por %p417, %p418
    %p421 = scmp.ne.s32.totalorder %s406, %s420
    %p422 = scmp.eq.s32.totalorder %s34, 0
    %p423 = por %p421, %p422
    %s425 = sadd.s32 %s424, 1
    %p428 = scmp.eq.s32.totalorder %s28, 1
    %p429 = scmp.ne.s32.totalorder %s424, %s426
    %p430 = scmp.eq.s32.totalorder %s28, 0
    %p431 = por %p429, %p430
    %p432 = scmp.ne.s32.totalorder %s424, %s426
    %p433 = scmp.eq.s32.totalorder %s33, 1
    %p434 = por %p432, %p433
    %p435 = scmp.ne.s32.totalorder %s426, %s427
    %p436 = scmp.eq.s32.totalorder %s33, 0
    %p437 = por %p435, %p436
    %p438 = scmp.ne.s32.totalorder %s426, %s427
    %p439 = scmp.eq.s32.totalorder %s34, 1
    %p440 = por %p438, %p439
    %p442 = scmp.ne.s32.totalorder %s427, %s441
    %p443 = scmp.eq.s32.totalorder %s34, 0
    %p444 = por %p442, %p443
    %s446 = sadd.s32 %s445, 1
    %p449 = scmp.eq.s32.totalorder %s28, 1
    %p450 = scmp.ne.s32.totalorder %s445, %s447
    %p451 = scmp.eq.s32.totalorder %s28, 0
    %p452 = por %p450, %p451
    %p453 = scmp.ne.s32.totalorder %s445, %s447
    %p454 = scmp.eq.s32.totalorder %s33, 1
    %p455 = por %p453, %p454
    %p456 = scmp.ne.s32.totalorder %s447, %s448
    %p457 = scmp.eq.s32.totalorder %s33, 0
    %p458 = por %p456, %p457
    %p459 = scmp.ne.s32.totalorder %s447, %s448
    %p460 = scmp.eq.s32.totalorder %s34, 1
    %p461 = por %p459, %p460
    %p463 = scmp.ne.s32.totalorder %s448, %s462
    %p464 = scmp.eq.s32.totalorder %s34, 0
    %p465 = por %p463, %p464
    %s467 = sadd.s32 %s466, 1
    %p470 = scmp.eq.s32.totalorder %s28, 1
    %p471 = scmp.ne.s32.totalorder %s466, %s468
    %p472 = scmp.eq.s32.totalorder %s28, 0
    %p473 = por %p471, %p472
    %p474 = scmp.ne.s32.totalorder %s466, %s468
    %p475 = scmp.eq.s32.totalorder %s33, 1
    %p476 = por %p474, %p475
    %p477 = scmp.ne.s32.totalorder %s468, %s469
    %p478 = scmp.eq.s32.totalorder %s33, 0
    %p479 = por %p477, %p478
    %p480 = scmp.ne.s32.totalorder %s468, %s469
    %p481 = scmp.eq.s32.totalorder %s34, 1
    %p482 = por %p480, %p481
    %p484 = scmp.ne.s32.totalorder %s469, %s483
    %p485 = scmp.eq.s32.totalorder %s34, 0
    %p486 = por %p484, %p485
    %s488 = sadd.s32 %s487, 1
    %p491 = scmp.eq.s32.totalorder %s28, 1
    %p492 = scmp.ne.s32.totalorder %s487, %s489
    %p493 = scmp.eq.s32.totalorder %s28, 0
    %p494 = por %p492, %p493
    %p495 = scmp.ne.s32.totalorder %s487, %s489
    %p496 = scmp.eq.s32.totalorder %s33, 1
    %p497 = por %p495, %p496
    %p498 = scmp.ne.s32.totalorder %s489, %s490
    %p499 = scmp.eq.s32.totalorder %s33, 0
    %p500 = por %p498, %p499
    %p501 = scmp.ne.s32.totalorder %s489, %s490
    %p502 = scmp.eq.s32.totalorder %s34, 1
    %p503 = por %p501, %p502
    %p505 = scmp.ne.s32.totalorder %s490, %s504
    %p506 = scmp.eq.s32.totalorder %s34, 0
    %p507 = por %p505, %p506
    %s508 = ssub.s32 %s28, %s35
    %p509 = scmp.eq.s32.totalorder %s508, 0
    %s511 = sadd.s32 %s510, 1
    %s512 = scalar_select %p509, %s510, %s511
    %p515 = pneg %p509
    %p516 = scmp.eq.s32.totalorder %s28, 1
    %p517 = por %p515, %p516
    %p518 = scmp.ne.s32.totalorder %s510, %s513
    %p519 = scmp.eq.s32.totalorder %s28, 0
    %p520 = por %p518, %p519
    %p521 = scmp.ne.s32.totalorder %s510, %s513
    %p522 = scmp.eq.s32.totalorder %s33, 1
    %p523 = por %p521, %p522
    %p524 = scmp.ne.s32.totalorder %s513, %s514
    %p525 = scmp.eq.s32.totalorder %s33, 0
    %p526 = por %p524, %p525
    %p527 = scmp.ne.s32.totalorder %s513, %s514
    %p528 = scmp.eq.s32.totalorder %s34, 1
    %p529 = por %p527, %p528
    %p531 = scmp.ne.s32.totalorder %s514, %s530
    %p532 = scmp.eq.s32.totalorder %s34, 0
    %p533 = por %p531, %p532
    %p534 = scmp.le.s32.totalorder 1, %s28
    %p535 = scmp.lt.s32.totalorder %s28, 3
    %p536 = pnand %p534, %p535
    %p537 = pneg %p536
    // Predicated region
    $region9: #{informer_forward.12} parent=5 // pred_check
      _
    $region10: #{informer_forward.12} parent=5 // pred_check_branch
      %539 = sbr.rel (%p536) target = $region12
    $region11: #{informer_forward.12} parent=5 // pred_region
      %s540 = ssub.s32 %s28, 1
      // Predicated region
      $region13: #{informer_forward.12} parent=11 // pred_check
        %p541 = pneg %p101
      $region14: #{informer_forward.12} parent=11 // pred_check_branch
        %543 = sbr.rel (%p541) target = $region16
      $region15: #{informer_forward.12} parent=11 // pred_region
        _
      $region16: #{informer_forward.12} parent=11 // pred_fallthru
        _
      // Predicated region
      $region17: #{informer_forward.12} parent=11 // pred_check
        %p544 = pneg %p122
      $region18: #{informer_forward.12} parent=11 // pred_check_branch
        %546 = sbr.rel (%p544) target = $region20
      $region19: #{informer_forward.12} parent=11 // pred_region
        _
      $region20: #{informer_forward.12} parent=11 // pred_fallthru
        _
      // Predicated region
      $region21: #{informer_forward.12} parent=11 // pred_check
        %p547 = pneg %p143
      $region22: #{informer_forward.12} parent=11 // pred_check_branch
        %549 = sbr.rel (%p547) target = $region24
      $region23: #{informer_forward.12} parent=11 // pred_region
        _
      $region24: #{informer_forward.12} parent=11 // pred_fallthru
        _
      // Predicated region
      $region25: #{informer_forward.12} parent=11 // pred_check
        %p550 = pneg %p164
      $region26: #{informer_forward.12} parent=11 // pred_check_branch
        %552 = sbr.rel (%p550) target = $region28
      $region27: #{informer_forward.12} parent=11 // pred_region
        _
      $region28: #{informer_forward.12} parent=11 // pred_fallthru
        _
      // Predicated region
      $region29: #{informer_forward.12} parent=11 // pred_check
        %p553 = pneg %p185
      $region30: #{informer_forward.12} parent=11 // pred_check_branch
        %555 = sbr.rel (%p553) target = $region32
      $region31: #{informer_forward.12} parent=11 // pred_region
        _
      $region32: #{informer_forward.12} parent=11 // pred_fallthru
        _
      // Predicated region
      $region33: #{informer_forward.12} parent=11 // pred_check
        %p556 = pneg %p206
      $region34: #{informer_forward.12} parent=11 // pred_check_branch
        %558 = sbr.rel (%p556) target = $region36
      $region35: #{informer_forward.12} parent=11 // pred_region
        _
      $region36: #{informer_forward.12} parent=11 // pred_fallthru
        _
      // Predicated region
      $region37: #{informer_forward.12} parent=11 // pred_check
        %p559 = pneg %p227
      $region38: #{informer_forward.12} parent=11 // pred_check_branch
        %561 = sbr.rel (%p559) target = $region40
      $region39: #{informer_forward.12} parent=11 // pred_region
        _
      $region40: #{informer_forward.12} parent=11 // pred_fallthru
        _
      // Predicated region
      $region41: #{informer_forward.12} parent=11 // pred_check
        %p562 = pneg %p248
      $region42: #{informer_forward.12} parent=11 // pred_check_branch
        %564 = sbr.rel (%p562) target = $region44
      $region43: #{informer_forward.12} parent=11 // pred_region
        _
      $region44: #{informer_forward.12} parent=11 // pred_fallthru
        _
      // Predicated region
      $region45: #{informer_forward.12} parent=11 // pred_check
        %p565 = pneg %p269
      $region46: #{informer_forward.12} parent=11 // pred_check_branch
        %567 = sbr.rel (%p565) target = $region48
      $region47: #{informer_forward.12} parent=11 // pred_region
        _
      $region48: #{informer_forward.12} parent=11 // pred_fallthru
        _
      // Predicated region
      $region49: #{informer_forward.12} parent=11 // pred_check
        %p568 = pneg %p290
      $region50: #{informer_forward.12} parent=11 // pred_check_branch
        %570 = sbr.rel (%p568) target = $region52
      $region51: #{informer_forward.12} parent=11 // pred_region
        _
      $region52: #{informer_forward.12} parent=11 // pred_fallthru
        _
      // Predicated region
      $region53: #{informer_forward.12} parent=11 // pred_check
        %p571 = pneg %p311
      $region54: #{informer_forward.12} parent=11 // pred_check_branch
        %573 = sbr.rel (%p571) target = $region56
      $region55: #{informer_forward.12} parent=11 // pred_region
        _
      $region56: #{informer_forward.12} parent=11 // pred_fallthru
        _
      // Predicated region
      $region57: #{informer_forward.12} parent=11 // pred_check
        %p574 = pneg %p332
      $region58: #{informer_forward.12} parent=11 // pred_check_branch
        %576 = sbr.rel (%p574) target = $region60
      $region59: #{informer_forward.12} parent=11 // pred_region
        _
      $region60: #{informer_forward.12} parent=11 // pred_fallthru
        _
      // Predicated region
      $region61: #{informer_forward.12} parent=11 // pred_check
        %p577 = pneg %p353
      $region62: #{informer_forward.12} parent=11 // pred_check_branch
        %579 = sbr.rel (%p577) target = $region64
      $region63: #{informer_forward.12} parent=11 // pred_region
        _
      $region64: #{informer_forward.12} parent=11 // pred_fallthru
        _
      // Predicated region
      $region65: #{informer_forward.12} parent=11 // pred_check
        %p580 = pneg %p374
      $region66: #{informer_forward.12} parent=11 // pred_check_branch
        %582 = sbr.rel (%p580) target = $region68
      $region67: #{informer_forward.12} parent=11 // pred_region
        _
      $region68: #{informer_forward.12} parent=11 // pred_fallthru
        _
      // Predicated region
      $region69: #{informer_forward.12} parent=11 // pred_check
        %p583 = pneg %p395
      $region70: #{informer_forward.12} parent=11 // pred_check_branch
        %585 = sbr.rel (%p583) target = $region72
      $region71: #{informer_forward.12} parent=11 // pred_region
        _
      $region72: #{informer_forward.12} parent=11 // pred_fallthru
        _
      // Predicated region
      $region73: #{informer_forward.12} parent=11 // pred_check
        %p586 = pneg %p416
      $region74: #{informer_forward.12} parent=11 // pred_check_branch
        %588 = sbr.rel (%p586) target = $region76
      $region75: #{informer_forward.12} parent=11 // pred_region
        _
      $region76: #{informer_forward.12} parent=11 // pred_fallthru
        _
      // Predicated region
      $region77: #{informer_forward.12} parent=11 // pred_check
        %p589 = pneg %p437
      $region78: #{informer_forward.12} parent=11 // pred_check_branch
        %591 = sbr.rel (%p589) target = $region80
      $region79: #{informer_forward.12} parent=11 // pred_region
        _
      $region80: #{informer_forward.12} parent=11 // pred_fallthru
        _
      // Predicated region
      $region81: #{informer_forward.12} parent=11 // pred_check
        %p592 = pneg %p458
      $region82: #{informer_forward.12} parent=11 // pred_check_branch
        %594 = sbr.rel (%p592) target = $region84
      $region83: #{informer_forward.12} parent=11 // pred_region
        _
      $region84: #{informer_forward.12} parent=11 // pred_fallthru
        _
      // Predicated region
      $region85: #{informer_forward.12} parent=11 // pred_check
        %p595 = pneg %p479
      $region86: #{informer_forward.12} parent=11 // pred_check_branch
        %597 = sbr.rel (%p595) target = $region88
      $region87: #{informer_forward.12} parent=11 // pred_region
        _
      $region88: #{informer_forward.12} parent=11 // pred_fallthru
        _
      // Predicated region
      $region89: #{informer_forward.12} parent=11 // pred_check
        %p598 = pneg %p500
      $region90: #{informer_forward.12} parent=11 // pred_check_branch
        %600 = sbr.rel (%p598) target = $region92
      $region91: #{informer_forward.12} parent=11 // pred_region
        _
      $region92: #{informer_forward.12} parent=11 // pred_fallthru
        _
    $region12: #{informer_forward.12} parent=5 // pred_fallthru
      _
    %p601 = scmp.lt.s32.totalorder %s28, 2
    // Predicated region
    $region93: #{informer_forward.12} parent=5 // pred_check
      %p602 = pneg %p601
    $region94: #{informer_forward.12} parent=5 // pred_check_branch
      %604 = sbr.rel (%p602) target = $region96
    $region95: #{informer_forward.12} parent=5 // pred_region
      // Predicated region
      $region97: #{informer_forward.12} parent=95 // pred_check
        %p605 = pneg %p48
      $region98: #{informer_forward.12} parent=95 // pred_check_branch
        %607 = sbr.rel (%p605) target = $region100
      $region99: #{informer_forward.12} parent=95 // pred_region
        %p608 = scmp.lt.s32.totalorder %s28, 1
        %s609 = scalar_select %p608, %s28, 1
        %s610 = smul.addr %s609, 2
        %s611 = smul.addr %s610, 8
        %s612 = scalar_lea.vmem %s0, %s611
      $region100: #{informer_forward.12} parent=95 // pred_fallthru
        _
      // Predicated region
      $region101: #{informer_forward.12} parent=95 // pred_check
        %p613 = pneg %p74
      $region102: #{informer_forward.12} parent=95 // pred_check_branch
        %615 = sbr.rel (%p613) target = $region104
      $region103: #{informer_forward.12} parent=95 // pred_region
        %p616 = scmp.lt.s32.totalorder %s28, 1
        %s617 = scalar_select %p616, %s28, 1
        %s618 = smul.addr %s617, 8
        %s619 = scalar_lea.vmem %s1, %s618
      $region104: #{informer_forward.12} parent=95 // pred_fallthru
        _
    $region96: #{informer_forward.12} parent=5 // pred_fallthru
      _
    %p620 = scmp.le.s32.totalorder 1, %s28
    %p621 = scmp.lt.s32.totalorder %s28, 3
    %p622 = pnand %p620, %p621
    %p623 = pneg %p622
    // Predicated region
    $region105: #{informer_forward.12} parent=5 // pred_check
      _
    $region106: #{informer_forward.12} parent=5 // pred_check_branch
      %625 = sbr.rel (%p622) target = $region108
    $region107: #{informer_forward.12} parent=5 // pred_region
      %s626 = ssub.s32 %s28, 1
      %p627 = scmp.lt.s32.totalorder %s33, 1
      %s628 = scalar_select %p627, %s33, 1
      %s629 = smul.addr %s628, 2
      %s630 = smul.addr %s629, 8
      %s631 = scalar_lea.vmem %s0, %s630
      %p632 = pneg %p54
      %p633 = pneg %p51
      %p634 = scmp.lt.s32.totalorder %s33, 1
      %s635 = scalar_select %p634, %s33, 1
      %s636 = smul.addr %s635, 8
      %s637 = scalar_lea.vmem %s1, %s636
      %p638 = pneg %p80
      %p639 = pneg %p77
      %p640 = pneg %p101
      %p641 = pneg %p98
      %p642 = pneg %p122
      %p643 = pneg %p119
      %p644 = pneg %p143
      %p645 = pneg %p140
      %p646 = pneg %p164
      %p647 = pneg %p161
      %p648 = pneg %p185
      %p649 = pneg %p182
      %p650 = pneg %p206
      %p651 = pneg %p203
      %p652 = pneg %p227
      %p653 = pneg %p224
      %p654 = pneg %p248
      %p655 = pneg %p245
      %p656 = pneg %p269
      %p657 = pneg %p266
      %p658 = pneg %p290
      %p659 = pneg %p287
      %p660 = pneg %p311
      %p661 = pneg %p308
      %p662 = pneg %p332
      %p663 = pneg %p329
      %p664 = pneg %p353
      %p665 = pneg %p350
      %p666 = pneg %p374
      %p667 = pneg %p371
      %p668 = pneg %p395
      %p669 = pneg %p392
      %p670 = pneg %p416
      %p671 = pneg %p413
      %p672 = pneg %p437
      %p673 = pneg %p434
      %p674 = pneg %p458
      %p675 = pneg %p455
      %p676 = pneg %p479
      %p677 = pneg %p476
      %p678 = pneg %p500
      %p679 = pneg %p497
      %p680 = pneg %p526
      %p681 = pneg %p523
      %p682 = scmp.lt.s32.totalorder %s33, 1
      %s683 = scalar_select %p682, %s33, 1
      %s684 = smul.addr %s683, 2
      %s685 = smul.addr %s684, 8
      %s686 = scalar_lea.vmem %s22, %s685
      %p687 = scmp.lt.s32.totalorder %s33, 1
      %s688 = scalar_select %p687, %s33, 1
      %s689 = smul.addr %s688, 2
      %s690 = smul.addr %s689, 8
      %s691 = scalar_lea.vmem %s0, %s690
      %p692 = scmp.lt.s32.totalorder %s33, 1
      %s693 = scalar_select %p692, %s33, 1
      %s694 = smul.addr %s693, 8
      %s695 = scalar_lea.vmem %s1, %s694
      %p696 = scmp.lt.s32.totalorder %s33, 1
      %s697 = scalar_select %p696, %s33, 1
      %s698 = smul.addr %s697, 2
      %s699 = smul.addr %s698, 8
      %s700 = scalar_lea.vmem %s22, %s699
      %v702 = vld [vmem:[%s691] sm:$0xff]
      %v703 = vld [vmem:[%s691 + $0x8] sm:$0xf]
      %v704 = vld [vmem:[%s695] sm:$0x3f]
      %v705 = vld [vmem:[%s2] sm:$0xf]
      %v706 = vld [vmem:[%s2 + $0x4] sm:$0xf]
      %v707 = vld [vmem:[%s2 + $0x8] sm:$0xf]
      %v708 = vld [vmem:[%s2 + $0xc] sm:$0xf]
      %v709 = vpack.c.bf16 %v703, %v702
      %v710 = vld [vmem:[%s3] sm:$0x1]
      %v712 = vlaneseq
      %v713 = vshrl.u32 %v712, 7
      %v714 = vsub.s32 0, %v713
      %v715 = vrot.slane %v710, %v714
      %v721 = vunpack.c.l.b16 %v705
      %v722 = vunpack.c.l.b16 %v706
      %v723 = vunpack.c.l.b16 %v707
      %v724 = vunpack.c.l.b16 %v708
      %v725 = vpack.c.b16 %v722, %v721
      %v726 = vpack.c.b16 %v724, %v723
      %vm729 = vcmask 261120
      %v731 = vsel %vm729, %v709, 0
      %733 = vmatprep.subr.bf16.mxu0 0
      %734 = vmatpush1.bf16.msra.mxu0 0
      %735 = vmatprep.subr.bf16.mxu0 0
      %736 = vmatpush1.bf16.msra.mxu0 0
      %737 = vmatprep.subr.bf16.mxu0 0
      %738 = vmatpush1.bf16.msra.mxu0 0
      %739 = vmatprep.subr.bf16.mxu0 0
      %740 = vmatpush1.bf16.msra.mxu0 0
      %741 = vmatprep.subr.bf16.mxu0 0
      %742 = vmatpush1.bf16.msra.mxu0 0
      %743 = vmatprep.subr.bf16.mxu0 0
      %744 = vmatpush1.bf16.msra.mxu0 0
      %745 = vmatprep.subr.bf16.mxu0 0
      %746 = vmatpush1.bf16.msra.mxu0 %v726
      %747 = vmatprep.subr.bf16.mxu0 0
      %748 = vmatpush1.bf16.msra.mxu0 %v725
      %749 = vmatprep.subr.bf16.mxu0 0
      %750 = vmatpush2.bf16.msra.mxu0 0
      %751 = vmatprep.subr.bf16.mxu0 0
      %752 = vmatpush2.bf16.msra.mxu0 0
      %753 = vmatprep.subr.bf16.mxu0 0
      %754 = vmatpush2.bf16.msra.mxu0 0
      %755 = vmatprep.subr.bf16.mxu0 0
      %756 = vmatpush2.bf16.msra.mxu0 0
      %757 = vmatprep.subr.bf16.mxu0 0
      %758 = vmatpush2.bf16.msra.mxu0 0
      %759 = vmatprep.subr.bf16.mxu0 0
      %760 = vmatpush2.bf16.msra.mxu0 0
      %761 = vmatprep.subr.bf16.mxu0 0
      %762 = vmatpush2.bf16.msra.mxu0 0
      %763 = vmatprep.subr.bf16.mxu0 0
      %764 = vmatpush2.bf16.msra.mxu0 0
      %765 = vmatprep.mubr.bf16.mxu0 0
      %766 = vmatmul.mubr.bf16.gmra.mxu0 %v731
      %v767 = vpop.f32.mrf.mxu0
      %v768 = vadd.f32 %v715, %v767
      %v769 = vpop.f32.mrf.mxu0
      %v770 = vpop.f32.mrf.mxu0
      %v771 = vadd.f32 %v715, %v770
      %v772 = vpop.f32.mrf.mxu0
      %773 = vdwg.mxu0
      %v774 = vld [vmem:[%s4] sm:$0xff]
      %v775 = vld [vmem:[%s4 + $0x8] sm:$0xff]
      %v776 = vld [vmem:[%s4 + $0x10] sm:$0xff]
      %v777 = vld [vmem:[%s4 + $0x18] sm:$0xff]
      %v778 = vlaneseq
      %v779 = vshrl.u32 %v778, 7
      %v780 = vadd.s32 %v779, 8
      %v781 = vlaneseq
      %v782 = vand.u32 %v781, 127
      %vm783 = vcmp.gt.s32.totalorder %v782, %v779
      %vm784 = vcmp.gt.s32.totalorder %v782, %v780
      %v785 = vpack.c.bf16 %v771, %v768
      %787 = vrot.lane.b32.xlu0 %v785, 96
      %v788 = vpop.permute.xlu0 %787
      %vm789 = vcmask 64512
      %v791 = vsel %vm789, %v785, 0
      %v794 = vsel %vm789, %v788, 0
      %796 = vmatprep.subr.bf16.mxu0 0
      %797 = vmatpush1.bf16.xpose.msra.mxu0 0
      %798 = vmatprep.subr.bf16.mxu0 0
      %799 = vmatpush1.bf16.xpose.msra.mxu0 0
      %800 = vmatprep.subr.bf16.mxu0 0
      %801 = vmatpush1.bf16.xpose.msra.mxu0 0
      %802 = vmatprep.subr.bf16.mxu0 0
      %803 = vmatpush1.bf16.xpose.msra.mxu0 0
      %804 = vmatprep.subr.bf16.mxu0 0
      %805 = vmatpush1.bf16.xpose.msra.mxu0 0
      %806 = vmatprep.subr.bf16.mxu0 0
      %807 = vmatpush1.bf16.xpose.msra.mxu0 0
      %808 = vmatprep.subr.bf16.mxu0 0
      %809 = vmatpush1.bf16.xpose.msra.mxu0 0
      %810 = vmatprep.subr.bf16.mxu0 0
      %811 = vmatpush1.bf16.xpose.msra.mxu0 %v794
      %812 = vmatprep.subr.bf16.mxu0 0
      %813 = vmatpush2.bf16.xpose.msra.mxu0 0
      %814 = vmatprep.subr.bf16.mxu0 0
      %815 = vmatpush2.bf16.xpose.msra.mxu0 0
      %816 = vmatprep.subr.bf16.mxu0 0
      %817 = vmatpush2.bf16.xpose.msra.mxu0 0
      %818 = vmatprep.subr.bf16.mxu0 0
      %819 = vmatpush2.bf16.xpose.msra.mxu0 0
      %820 = vmatprep.subr.bf16.mxu0 0
      %821 = vmatpush2.bf16.xpose.msra.mxu0 0
      %822 = vmatprep.subr.bf16.mxu0 0
      %823 = vmatpush2.bf16.xpose.msra.mxu0 0
      %824 = vmatprep.subr.bf16.mxu0 0
      %825 = vmatpush2.bf16.xpose.msra.mxu0 0
      %826 = vmatprep.subr.bf16.mxu0 0
      %827 = vmatpush2.bf16.xpose.msra.mxu0 0
      %828 = vmatprep.mubr.bf16.mxu0 0
      %829 = vmatmul.mubr.bf16.gmra.mxu0 %v791
      %v830 = vpop.f32.mrf.mxu0
      %v831 = vadd.f32 0.0, %v830
      %v832 = vpop.f32.mrf.mxu0
      %v833 = vpop.f32.mrf.mxu0
      %v834 = vadd.f32 0.0, %v833
      %v835 = vpop.f32.mrf.mxu0
      %836 = vdwg.mxu0
      %v837 = vmul.f32 %v831, 0.35355338
      %v838 = vmul.f32 %v834, 0.35355338
      %v839 = vsel %vm783, -1e+30, %v837
      %v840 = vsel %vm784, -1e+30, %v838
      %vm841 = vcmask 97280
      %v842 = vsel %vm841, %v839, -inf
      %843 = vmax.xlane.f32.xlu0 %v842
      %v844 = vpop.xlane.xlu0 %843
      %vm845 = vcmask 93184
      %v846 = vsel %vm845, %v840, -inf
      %847 = vmax.xlane.f32.xlu0 %v846
      %v848 = vpop.xlane.xlu0 %847
      %v849 = vsub.f32 %v839, %v844
      %v850 = vsub.f32 %v840, %v848
      %v851 = vmul.f32 %v849, 1.442695
      %v852 = vpow.pop %v851
      %v853 = vmul.f32 %v850, 1.442695
      %v854 = vpow.pop %v853
      %v855 = vsel %vm841, %v852, 0.0
      %856 = vadd.xlane.f32.xlu0 %v855
      %v857 = vpop.xlane.xlu0 %856
      %v858 = vsel %vm845, %v854, 0.0
      %859 = vadd.xlane.f32.xlu0 %v858
      %v860 = vpop.xlane.xlu0 %859
      %v861 = vrcp.pop %v857
      %v862 = vrcp.pop %v860
      %v863 = vmul.f32 %v852, %v861
      %v864 = vmul.f32 %v854, %v862
      %v865 = vpack.c.bf16 %v864, %v863
      %866 = vrot.lane.b32.xlu0 %v785, 64
      %v867 = vpop.permute.xlu0 %866
      %v869 = vsel %vm841, %v865, 0
      %vm871 = vcmask 1045504
      %v873 = vsel %vm871, %v867, 0
      %875 = vmatprep.subr.bf16.mxu0 0
      %876 = vmatpush1.bf16.msra.mxu0 0
      %877 = vmatprep.subr.bf16.mxu0 0
      %878 = vmatpush1.bf16.msra.mxu0 0
      %879 = vmatprep.subr.bf16.mxu0 0
      %880 = vmatpush1.bf16.msra.mxu0 0
      %881 = vmatprep.subr.bf16.mxu0 0
      %882 = vmatpush1.bf16.msra.mxu0 0
      %883 = vmatprep.subr.bf16.mxu0 0
      %884 = vmatpush1.bf16.msra.mxu0 0
      %885 = vmatprep.subr.bf16.mxu0 0
      %886 = vmatpush1.bf16.msra.mxu0 0
      %887 = vmatprep.subr.bf16.mxu0 0
      %888 = vmatpush1.bf16.msra.mxu0 0
      %889 = vmatprep.subr.bf16.mxu0 0
      %890 = vmatpush1.bf16.msra.mxu0 %v873
      %891 = vmatprep.subr.bf16.mxu0 0
      %892 = vmatpush2.bf16.msra.mxu0 0
      %893 = vmatprep.subr.bf16.mxu0 0
      %894 = vmatpush2.bf16.msra.mxu0 0
      %895 = vmatprep.subr.bf16.mxu0 0
      %896 = vmatpush2.bf16.msra.mxu0 0
      %897 = vmatprep.subr.bf16.mxu0 0
      %898 = vmatpush2.bf16.msra.mxu0 0
      %899 = vmatprep.subr.bf16.mxu0 0
      %900 = vmatpush2.bf16.msra.mxu0 0
      %901 = vmatprep.subr.bf16.mxu0 0
      %902 = vmatpush2.bf16.msra.mxu0 0
      %903 = vmatprep.subr.bf16.mxu0 0
      %904 = vmatpush2.bf16.msra.mxu0 0
      %905 = vmatprep.subr.bf16.mxu0 0
      %906 = vmatpush2.bf16.msra.mxu0 0
      %907 = vmatprep.mubr.bf16.mxu0 0
      %908 = vmatmul.mubr.bf16.gmra.mxu0 %v869
      %v909 = vpop.f32.mrf.mxu0
      %v910 = vadd.f32 0.0, %v909
      %v911 = vpop.f32.mrf.mxu0
      %v912 = vpop.f32.mrf.mxu0
      %v913 = vadd.f32 0.0, %v912
      %v914 = vpop.f32.mrf.mxu0
      %915 = vdwg.mxu0
      %v916 = vpack.c.bf16 %v913, %v910
      %v917 = vpack.c.bf16 %v774, %v774
      %918 = vrot.lane.b32.xlu0 %v785, 120
      %v919 = vpop.permute.xlu0 %918
      %920 = vrot.lane.b32.xlu0 %v785, 88
      %v921 = vpop.permute.xlu0 %920
      %v923 = vsel %vm789, %v919, 0
      %v926 = vsel %vm789, %v921, 0
      %928 = vmatprep.subr.bf16.mxu0 0
      %929 = vmatpush1.bf16.xpose.msra.mxu0 0
      %930 = vmatprep.subr.bf16.mxu0 0
      %931 = vmatpush1.bf16.xpose.msra.mxu0 0
      %932 = vmatprep.subr.bf16.mxu0 0
      %933 = vmatpush1.bf16.xpose.msra.mxu0 0
      %934 = vmatprep.subr.bf16.mxu0 0
      %935 = vmatpush1.bf16.xpose.msra.mxu0 0
      %936 = vmatprep.subr.bf16.mxu0 0
      %937 = vmatpush1.bf16.xpose.msra.mxu0 0
      %938 = vmatprep.subr.bf16.mxu0 0
      %939 = vmatpush1.bf16.xpose.msra.mxu0 0
      %940 = vmatprep.subr.bf16.mxu0 0
      %941 = vmatpush1.bf16.xpose.msra.mxu0 0
      %942 = vmatprep.subr.bf16.mxu0 0
      %943 = vmatpush1.bf16.xpose.msra.mxu0 %v926
      %944 = vmatprep.subr.bf16.mxu0 0
      %945 = vmatpush2.bf16.xpose.msra.mxu0 0
      %946 = vmatprep.subr.bf16.mxu0 0
      %947 = vmatpush2.bf16.xpose.msra.mxu0 0
      %948 = vmatprep.subr.bf16.mxu0 0
      %949 = vmatpush2.bf16.xpose.msra.mxu0 0
      %950 = vmatprep.subr.bf16.mxu0 0
      %951 = vmatpush2.bf16.xpose.msra.mxu0 0
      %952 = vmatprep.subr.bf16.mxu0 0
      %953 = vmatpush2.bf16.xpose.msra.mxu0 0
      %954 = vmatprep.subr.bf16.mxu0 0
      %955 = vmatpush2.bf16.xpose.msra.mxu0 0
      %956 = vmatprep.subr.bf16.mxu0 0
      %957 = vmatpush2.bf16.xpose.msra.mxu0 0
      %958 = vmatprep.subr.bf16.mxu0 0
      %959 = vmatpush2.bf16.xpose.msra.mxu0 0
      %960 = vmatprep.mubr.bf16.mxu0 0
      %961 = vmatmul.mubr.bf16.gmra.mxu0 %v923
      %v962 = vpop.f32.mrf.mxu0
      %v963 = vadd.f32 0.0, %v962
      %v964 = vpop.f32.mrf.mxu0
      %v965 = vpop.f32.mrf.mxu0
      %v966 = vadd.f32 0.0, %v965
      %v967 = vpop.f32.mrf.mxu0
      %968 = vdwg.mxu0
      %v969 = vmul.f32 %v963, 0.35355338
      %v970 = vmul.f32 %v966, 0.35355338
      %v971 = vsel %vm783, -1e+30, %v969
      %v972 = vsel %vm784, -1e+30, %v970
      %v973 = vsel %vm841, %v971, -inf
      %974 = vmax.xlane.f32.xlu0 %v973
      %v975 = vpop.xlane.xlu0 %974
      %v976 = vsel %vm845, %v972, -inf
      %977 = vmax.xlane.f32.xlu0 %v976
      %v978 = vpop.xlane.xlu0 %977
      %v979 = vsub.f32 %v971, %v975
      %v980 = vsub.f32 %v972, %v978
      %v981 = vmul.f32 %v979, 1.442695
      %v982 = vpow.pop %v981
      %v983 = vmul.f32 %v980, 1.442695
      %v984 = vpow.pop %v983
      %v985 = vsel %vm841, %v982, 0.0
      %986 = vadd.xlane.f32.xlu0 %v985
      %v987 = vpop.xlane.xlu0 %986
      %v988 = vsel %vm845, %v984, 0.0
      %989 = vadd.xlane.f32.xlu0 %v988
      %v990 = vpop.xlane.xlu0 %989
      %v991 = vrcp.pop %v987
      %v992 = vrcp.pop %v990
      %v993 = vmul.f32 %v982, %v991
      %v994 = vmul.f32 %v984, %v992
      %v995 = vpack.c.bf16 %v994, %v993
      %996 = vrot.lane.b32.xlu0 %v785, 56
      %v997 = vpop.permute.xlu0 %996
      %v999 = vsel %vm841, %v995, 0
      %v1002 = vsel %vm871, %v997, 0
      %1004 = vmatprep.subr.bf16.mxu0 0
      %1005 = vmatpush1.bf16.msra.mxu0 0
      %1006 = vmatprep.subr.bf16.mxu0 0
      %1007 = vmatpush1.bf16.msra.mxu0 0
      %1008 = vmatprep.subr.bf16.mxu0 0
      %1009 = vmatpush1.bf16.msra.mxu0 0
      %1010 = vmatprep.subr.bf16.mxu0 0
      %1011 = vmatpush1.bf16.msra.mxu0 0
      %1012 = vmatprep.subr.bf16.mxu0 0
      %1013 = vmatpush1.bf16.msra.mxu0 0
      %1014 = vmatprep.subr.bf16.mxu0 0
      %1015 = vmatpush1.bf16.msra.mxu0 0
      %1016 = vmatprep.subr.bf16.mxu0 0
      %1017 = vmatpush1.bf16.msra.mxu0 0
      %1018 = vmatprep.subr.bf16.mxu0 0
      %1019 = vmatpush1.bf16.msra.mxu0 %v1002
      %1020 = vmatprep.subr.bf16.mxu0 0
      %1021 = vmatpush2.bf16.msra.mxu0 0
      %1022 = vmatprep.subr.bf16.mxu0 0
      %1023 = vmatpush2.bf16.msra.mxu0 0
      %1024 = vmatprep.subr.bf16.mxu0 0
      %1025 = vmatpush2.bf16.msra.mxu0 0
      %1026 = vmatprep.subr.bf16.mxu0 0
      %1027 = vmatpush2.bf16.msra.mxu0 0
      %1028 = vmatprep.subr.bf16.mxu0 0
      %1029 = vmatpush2.bf16.msra.mxu0 0
      %1030 = vmatprep.subr.bf16.mxu0 0
      %1031 = vmatpush2.bf16.msra.mxu0 0
      %1032 = vmatprep.subr.bf16.mxu0 0
      %1033 = vmatpush2.bf16.msra.mxu0 0
      %1034 = vmatprep.subr.bf16.mxu0 0
      %1035 = vmatpush2.bf16.msra.mxu0 0
      %1036 = vmatprep.mubr.bf16.mxu0 0
      %1037 = vmatmul.mubr.bf16.gmra.mxu0 %v999
      %v1038 = vpop.f32.mrf.mxu0
      %v1039 = vadd.f32 0.0, %v1038
      %v1040 = vpop.f32.mrf.mxu0
      %v1041 = vpop.f32.mrf.mxu0
      %v1042 = vadd.f32 0.0, %v1041
      %v1043 = vpop.f32.mrf.mxu0
      %1044 = vdwg.mxu0
      %v1045 = vpack.c.bf16 %v1042, %v1039
      %v1046 = vpack.c.bf16 %v775, %v775
      %v1048 = vsel %vm789, %v1045, 0
      %vm1050 = vcmask 1043456
      %v1052 = vsel %vm1050, %v1046, 0
      %1054 = vmatprep.subr.bf16.mxu0 0
      %1055 = vmatpush1.bf16.msra.mxu0 0
      %1056 = vmatprep.subr.bf16.mxu0 0
      %1057 = vmatpush1.bf16.msra.mxu0 0
      %1058 = vmatprep.subr.bf16.mxu0 0
      %1059 = vmatpush1.bf16.msra.mxu0 0
      %1060 = vmatprep.subr.bf16.mxu0 0
      %1061 = vmatpush1.bf16.msra.mxu0 0
      %1062 = vmatprep.subr.bf16.mxu0 0
      %1063 = vmatpush1.bf16.msra.mxu0 0
      %1064 = vmatprep.subr.bf16.mxu0 0
      %1065 = vmatpush1.bf16.msra.mxu0 0
      %1066 = vmatprep.subr.bf16.mxu0 0
      %1067 = vmatpush1.bf16.msra.mxu0 0
      %1068 = vmatprep.subr.bf16.mxu0 0
      %1069 = vmatpush1.bf16.msra.mxu0 %v1052
      %1070 = vmatprep.subr.bf16.mxu0 0
      %1071 = vmatpush2.bf16.msra.mxu0 0
      %1072 = vmatprep.subr.bf16.mxu0 0
      %1073 = vmatpush2.bf16.msra.mxu0 0
      %1074 = vmatprep.subr.bf16.mxu0 0
      %1075 = vmatpush2.bf16.msra.mxu0 0
      %1076 = vmatprep.subr.bf16.mxu0 0
      %1077 = vmatpush2.bf16.msra.mxu0 0
      %1078 = vmatprep.subr.bf16.mxu0 0
      %1079 = vmatpush2.bf16.msra.mxu0 0
      %1080 = vmatprep.subr.bf16.mxu0 0
      %1081 = vmatpush2.bf16.msra.mxu0 0
      %1082 = vmatprep.subr.bf16.mxu0 0
      %1083 = vmatpush2.bf16.msra.mxu0 0
      %1084 = vmatprep.subr.bf16.mxu0 0
      %1085 = vmatpush2.bf16.msra.mxu0 0
      %1086 = vmatprep.mubr.bf16.mxu0 0
      %1087 = vmatmul.mubr.bf16.gmra.mxu0 %v1048
      %v1088 = vpop.f32.mrf.mxu0
      %v1089 = vadd.f32 0.0, %v1088
      %v1090 = vpop.f32.mrf.mxu0
      %v1091 = vpop.f32.mrf.mxu0
      %v1092 = vadd.f32 0.0, %v1091
      %v1093 = vpop.f32.mrf.mxu0
      %1094 = vdwg.mxu0
      %v1096 = vsel %vm789, %v916, 0
      %v1099 = vsel %vm1050, %v917, 0
      %1101 = vmatprep.subr.bf16.mxu0 0
      %1102 = vmatpush1.bf16.msra.mxu0 0
      %1103 = vmatprep.subr.bf16.mxu0 0
      %1104 = vmatpush1.bf16.msra.mxu0 0
      %1105 = vmatprep.subr.bf16.mxu0 0
      %1106 = vmatpush1.bf16.msra.mxu0 0
      %1107 = vmatprep.subr.bf16.mxu0 0
      %1108 = vmatpush1.bf16.msra.mxu0 0
      %1109 = vmatprep.subr.bf16.mxu0 0
      %1110 = vmatpush1.bf16.msra.mxu0 0
      %1111 = vmatprep.subr.bf16.mxu0 0
      %1112 = vmatpush1.bf16.msra.mxu0 0
      %1113 = vmatprep.subr.bf16.mxu0 0
      %1114 = vmatpush1.bf16.msra.mxu0 0
      %1115 = vmatprep.subr.bf16.mxu0 0
      %1116 = vmatpush1.bf16.msra.mxu0 %v1099
      %1117 = vmatprep.subr.bf16.mxu0 0
      %1118 = vmatpush2.bf16.msra.mxu0 0
      %1119 = vmatprep.subr.bf16.mxu0 0
      %1120 = vmatpush2.bf16.msra.mxu0 0
      %1121 = vmatprep.subr.bf16.mxu0 0
      %1122 = vmatpush2.bf16.msra.mxu0 0
      %1123 = vmatprep.subr.bf16.mxu0 0
      %1124 = vmatpush2.bf16.msra.mxu0 0
      %1125 = vmatprep.subr.bf16.mxu0 0
      %1126 = vmatpush2.bf16.msra.mxu0 0
      %1127 = vmatprep.subr.bf16.mxu0 0
      %1128 = vmatpush2.bf16.msra.mxu0 0
      %1129 = vmatprep.subr.bf16.mxu0 0
      %1130 = vmatpush2.bf16.msra.mxu0 0
      %1131 = vmatprep.subr.bf16.mxu0 0
      %1132 = vmatpush2.bf16.msra.mxu0 0
      %1133 = vmatprep.mubr.bf16.mxu0 0
      %1134 = vmatmul.mubr.bf16.gmra.mxu0 %v1096
      %v1135 = vpop.f32.mrf.mxu0
      %v1136 = vadd.f32 %v1089, %v1135
      %v1137 = vpop.f32.mrf.mxu0
      %v1138 = vpop.f32.mrf.mxu0
      %v1139 = vadd.f32 %v1092, %v1138
      %v1140 = vpop.f32.mrf.mxu0
      %1141 = vdwg.mxu0
      %1142 = vrot.lane.b32.xlu0 %v785, 112
      %v1143 = vpop.permute.xlu0 %1142
      %1144 = vrot.lane.b32.xlu0 %v785, 80
      %v1145 = vpop.permute.xlu0 %1144
      %v1147 = vsel %vm789, %v1143, 0
      %v1150 = vsel %vm789, %v1145, 0
      %1152 = vmatprep.subr.bf16.mxu0 0
      %1153 = vmatpush1.bf16.xpose.msra.mxu0 0
      %1154 = vmatprep.subr.bf16.mxu0 0
      %1155 = vmatpush1.bf16.xpose.msra.mxu0 0
      %1156 = vmatprep.subr.bf16.mxu0 0
      %1157 = vmatpush1.bf16.xpose.msra.mxu0 0
      %1158 = vmatprep.subr.bf16.mxu0 0
      %1159 = vmatpush1.bf16.xpose.msra.mxu0 0
      %1160 = vmatprep.subr.bf16.mxu0 0
      %1161 = vmatpush1.bf16.xpose.msra.mxu0 0
      %1162 = vmatprep.subr.bf16.mxu0 0
      %1163 = vmatpush1.bf16.xpose.msra.mxu0 0
      %1164 = vmatprep.subr.bf16.mxu0 0
      %1165 = vmatpush1.bf16.xpose.msra.mxu0 0
      %1166 = vmatprep.subr.bf16.mxu0 0
      %1167 = vmatpush1.bf16.xpose.msra.mxu0 %v1150
      %1168 = vmatprep.subr.bf16.mxu0 0
      %1169 = vmatpush2.bf16.xpose.msra.mxu0 0
      %1170 = vmatprep.subr.bf16.mxu0 0
      %1171 = vmatpush2.bf16.xpose.msra.mxu0 0
      %1172 = vmatprep.subr.bf16.mxu0 0
      %1173 = vmatpush2.bf16.xpose.msra.mxu0 0
      %1174 = vmatprep.subr.bf16.mxu0 0
      %1175 = vmatpush2.bf16.xpose.msra.mxu0 0
      %1176 = vmatprep.subr.bf16.mxu0 0
      %1177 = vmatpush2.bf16.xpose.msra.mxu0 0
      %1178 = vmatprep.subr.bf16.mxu0 0
      %1179 = vmatpush2.bf16.xpose.msra.mxu0 0
      %1180 = vmatprep.subr.bf16.mxu0 0
      %1181 = vmatpush2.bf16.xpose.msra.mxu0 0
      %1182 = vmatprep.subr.bf16.mxu0 0
      %1183 = vmatpush2.bf16.xpose.msra.mxu0 0
      %1184 = vmatprep.mubr.bf16.mxu0 0
      %1185 = vmatmul.mubr.bf16.gmra.mxu0 %v1147
      %v1186 = vpop.f32.mrf.mxu0
      %v1187 = vadd.f32 0.0, %v1186
      %v1188 = vpop.f32.mrf.mxu0
      %v1189 = vpop.f32.mrf.mxu0
      %v1190 = vadd.f32 0.0, %v1189
      %v1191 = vpop.f32.mrf.mxu0
      %1192 = vdwg.mxu0
      %v1193 = vmul.f32 %v1187, 0.35355338
      %v1194 = vmul.f32 %v1190, 0.35355338
      %v1195 = vsel %vm783, -1e+30, %v1193
      %v1196 = vsel %vm784, -1e+30, %v1194
      %v1197 = vsel %vm841, %v1195, -inf
      %1198 = vmax.xlane.f32.xlu0 %v1197
      %v1199 = vpop.xlane.xlu0 %1198
      %v1200 = vsel %vm845, %v1196, -inf
      %1201 = vmax.xlane.f32.xlu0 %v1200
      %v1202 = vpop.xlane.xlu0 %1201
      %v1203 = vsub.f32 %v1195, %v1199
      %v1204 = vsub.f32 %v1196, %v1202
      %v1205 = vmul.f32 %v1203, 1.442695
      %v1206 = vpow.pop %v1205
      %v1207 = vmul.f32 %v1204, 1.442695
      %v1208 = vpow.pop %v1207
      %v1209 = vsel %vm841, %v1206, 0.0
      %1210 = vadd.xlane.f32.xlu0 %v1209
      %v1211 = vpop.xlane.xlu0 %1210
      %v1212 = vsel %vm845, %v1208, 0.0
      %1213 = vadd.xlane.f32.xlu0 %v1212
      %v1214 = vpop.xlane.xlu0 %1213
      %v1215 = vrcp.pop %v1211
      %v1216 = vrcp.pop %v1214
      %v1217 = vmul.f32 %v1206, %v1215
      %v1218 = vmul.f32 %v1208, %v1216
      %v1219 = vpack.c.bf16 %v1218, %v1217
      %1220 = vrot.lane.b32.xlu0 %v785, 48
      %v1221 = vpop.permute.xlu0 %1220
      %v1223 = vsel %vm841, %v1219, 0
      %v1226 = vsel %vm871, %v1221, 0
      %1228 = vmatprep.subr.bf16.mxu0 0
      %1229 = vmatpush1.bf16.msra.mxu0 0
      %1230 = vmatprep.subr.bf16.mxu0 0
      %1231 = vmatpush1.bf16.msra.mxu0 0
      %1232 = vmatprep.subr.bf16.mxu0 0
      %1233 = vmatpush1.bf16.msra.mxu0 0
      %1234 = vmatprep.subr.bf16.mxu0 0
      %1235 = vmatpush1.bf16.msra.mxu0 0
      %1236 = vmatprep.subr.bf16.mxu0 0
      %1237 = vmatpush1.bf16.msra.mxu0 0
      %1238 = vmatprep.subr.bf16.mxu0 0
      %1239 = vmatpush1.bf16.msra.mxu0 0
      %1240 = vmatprep.subr.bf16.mxu0 0
      %1241 = vmatpush1.bf16.msra.mxu0 0
      %1242 = vmatprep.subr.bf16.mxu0 0
      %1243 = vmatpush1.bf16.msra.mxu0 %v1226
      %1244 = vmatprep.subr.bf16.mxu0 0
      %1245 = vmatpush2.bf16.msra.mxu0 0
      %1246 = vmatprep.subr.bf16.mxu0 0
      %1247 = vmatpush2.bf16.msra.mxu0 0
      %1248 = vmatprep.subr.bf16.mxu0 0
      %1249 = vmatpush2.bf16.msra.mxu0 0
      %1250 = vmatprep.subr.bf16.mxu0 0
      %1251 = vmatpush2.bf16.msra.mxu0 0
      %1252 = vmatprep.subr.bf16.mxu0 0
      %1253 = vmatpush2.bf16.msra.mxu0 0
      %1254 = vmatprep.subr.bf16.mxu0 0
      %1255 = vmatpush2.bf16.msra.mxu0 0
      %1256 = vmatprep.subr.bf16.mxu0 0
      %1257 = vmatpush2.bf16.msra.mxu0 0
      %1258 = vmatprep.subr.bf16.mxu0 0
      %1259 = vmatpush2.bf16.msra.mxu0 0
      %1260 = vmatprep.mubr.bf16.mxu0 0
      %1261 = vmatmul.mubr.bf16.gmra.mxu0 %v1223
      %v1262 = vpop.f32.mrf.mxu0
      %v1263 = vadd.f32 0.0, %v1262
      %v1264 = vpop.f32.mrf.mxu0
      %v1265 = vpop.f32.mrf.mxu0
      %v1266 = vadd.f32 0.0, %v1265
      %v1267 = vpop.f32.mrf.mxu0
      %1268 = vdwg.mxu0
      %v1269 = vpack.c.bf16 %v1266, %v1263
      %v1270 = vpack.c.bf16 %v776, %v776
      %v1272 = vsel %vm789, %v1269, 0
      %v1275 = vsel %vm1050, %v1270, 0
      %1277 = vmatprep.subr.bf16.mxu0 0
      %1278 = vmatpush1.bf16.msra.mxu0 0
      %1279 = vmatprep.subr.bf16.mxu0 0
      %1280 = vmatpush1.bf16.msra.mxu0 0
      %1281 = vmatprep.subr.bf16.mxu0 0
      %1282 = vmatpush1.bf16.msra.mxu0 0
      %1283 = vmatprep.subr.bf16.mxu0 0
      %1284 = vmatpush1.bf16.msra.mxu0 0
      %1285 = vmatprep.subr.bf16.mxu0 0
      %1286 = vmatpush1.bf16.msra.mxu0 0
      %1287 = vmatprep.subr.bf16.mxu0 0
      %1288 = vmatpush1.bf16.msra.mxu0 0
      %1289 = vmatprep.subr.bf16.mxu0 0
      %1290 = vmatpush1.bf16.msra.mxu0 0
      %1291 = vmatprep.subr.bf16.mxu0 0
      %1292 = vmatpush1.bf16.msra.mxu0 %v1275
      %1293 = vmatprep.subr.bf16.mxu0 0
      %1294 = vmatpush2.bf16.msra.mxu0 0
      %1295 = vmatprep.subr.bf16.mxu0 0
      %1296 = vmatpush2.bf16.msra.mxu0 0
      %1297 = vmatprep.subr.bf16.mxu0 0
      %1298 = vmatpush2.bf16.msra.mxu0 0
      %1299 = vmatprep.subr.bf16.mxu0 0
      %1300 = vmatpush2.bf16.msra.mxu0 0
      %1301 = vmatprep.subr.bf16.mxu0 0
      %1302 = vmatpush2.bf16.msra.mxu0 0
      %1303 = vmatprep.subr.bf16.mxu0 0
      %1304 = vmatpush2.bf16.msra.mxu0 0
      %1305 = vmatprep.subr.bf16.mxu0 0
      %1306 = vmatpush2.bf16.msra.mxu0 0
      %1307 = vmatprep.subr.bf16.mxu0 0
      %1308 = vmatpush2.bf16.msra.mxu0 0
      %1309 = vmatprep.mubr.bf16.mxu0 0
      %1310 = vmatmul.mubr.bf16.gmra.mxu0 %v1272
      %v1311 = vpop.f32.mrf.mxu0
      %v1312 = vadd.f32 0.0, %v1311
      %v1313 = vpop.f32.mrf.mxu0
      %v1314 = vpop.f32.mrf.mxu0
      %v1315 = vadd.f32 0.0, %v1314
      %v1316 = vpop.f32.mrf.mxu0
      %1317 = vdwg.mxu0
      %v1318 = vadd.f32 %v1136, %v1312
      %v1319 = vadd.f32 %v1139, %v1315
      %1320 = vrot.lane.b32.xlu0 %v785, 104
      %v1321 = vpop.permute.xlu0 %1320
      %1322 = vrot.lane.b32.xlu0 %v785, 72
      %v1323 = vpop.permute.xlu0 %1322
      %v1325 = vsel %vm789, %v1321, 0
      %v1328 = vsel %vm789, %v1323, 0
      %1330 = vmatprep.subr.bf16.mxu0 0
      %1331 = vmatpush1.bf16.xpose.msra.mxu0 0
      %1332 = vmatprep.subr.bf16.mxu0 0
      %1333 = vmatpush1.bf16.xpose.msra.mxu0 0
      %1334 = vmatprep.subr.bf16.mxu0 0
      %1335 = vmatpush1.bf16.xpose.msra.mxu0 0
      %1336 = vmatprep.subr.bf16.mxu0 0
      %1337 = vmatpush1.bf16.xpose.msra.mxu0 0
      %1338 = vmatprep.subr.bf16.mxu0 0
      %1339 = vmatpush1.bf16.xpose.msra.mxu0 0
      %1340 = vmatprep.subr.bf16.mxu0 0
      %1341 = vmatpush1.bf16.xpose.msra.mxu0 0
      %1342 = vmatprep.subr.bf16.mxu0 0
      %1343 = vmatpush1.bf16.xpose.msra.mxu0 0
      %1344 = vmatprep.subr.bf16.mxu0 0
      %1345 = vmatpush1.bf16.xpose.msra.mxu0 %v1328
      %1346 = vmatprep.subr.bf16.mxu0 0
      %1347 = vmatpush2.bf16.xpose.msra.mxu0 0
      %1348 = vmatprep.subr.bf16.mxu0 0
      %1349 = vmatpush2.bf16.xpose.msra.mxu0 0
      %1350 = vmatprep.subr.bf16.mxu0 0
      %1351 = vmatpush2.bf16.xpose.msra.mxu0 0
      %1352 = vmatprep.subr.bf16.mxu0 0
      %1353 = vmatpush2.bf16.xpose.msra.mxu0 0
      %1354 = vmatprep.subr.bf16.mxu0 0
      %1355 = vmatpush2.bf16.xpose.msra.mxu0 0
      %1356 = vmatprep.subr.bf16.mxu0 0
      %1357 = vmatpush2.bf16.xpose.msra.mxu0 0
      %1358 = vmatprep.subr.bf16.mxu0 0
      %1359 = vmatpush2.bf16.xpose.msra.mxu0 0
      %1360 = vmatprep.subr.bf16.mxu0 0
      %1361 = vmatpush2.bf16.xpose.msra.mxu0 0
      %1362 = vmatprep.mubr.bf16.mxu0 0
      %1363 = vmatmul.mubr.bf16.gmra.mxu0 %v1325
      %v1364 = vpop.f32.mrf.mxu0
      %v1365 = vadd.f32 0.0, %v1364
      %v1366 = vpop.f32.mrf.mxu0
      %v1367 = vpop.f32.mrf.mxu0
      %v1368 = vadd.f32 0.0, %v1367
      %v1369 = vpop.f32.mrf.mxu0
      %1370 = vdwg.mxu0
      %v1371 = vmul.f32 %v1365, 0.35355338
      %v1372 = vmul.f32 %v1368, 0.35355338
      %v1373 = vsel %vm783, -1e+30, %v1371
      %v1374 = vsel %vm784, -1e+30, %v1372
      %v1375 = vsel %vm841, %v1373, -inf
      %1376 = vmax.xlane.f32.xlu0 %v1375
      %v1377 = vpop.xlane.xlu0 %1376
      %v1378 = vsel %vm845, %v1374, -inf
      %1379 = vmax.xlane.f32.xlu0 %v1378
      %v1380 = vpop.xlane.xlu0 %1379
      %v1381 = vsub.f32 %v1373, %v1377
      %v1382 = vsub.f32 %v1374, %v1380
      %v1383 = vmul.f32 %v1381, 1.442695
      %v1384 = vpow.pop %v1383
      %v1385 = vmul.f32 %v1382, 1.442695
      %v1386 = vpow.pop %v1385
      %v1387 = vsel %vm841, %v1384, 0.0
      %1388 = vadd.xlane.f32.xlu0 %v1387
      %v1389 = vpop.xlane.xlu0 %1388
      %v1390 = vsel %vm845, %v1386, 0.0
      %1391 = vadd.xlane.f32.xlu0 %v1390
      %v1392 = vpop.xlane.xlu0 %1391
      %v1393 = vrcp.pop %v1389
      %v1394 = vrcp.pop %v1392
      %v1395 = vmul.f32 %v1384, %v1393
      %v1396 = vmul.f32 %v1386, %v1394
      %v1397 = vpack.c.bf16 %v1396, %v1395
      %1398 = vrot.lane.b32.xlu0 %v785, 40
      %v1399 = vpop.permute.xlu0 %1398
      %v1401 = vsel %vm841, %v1397, 0
      %v1404 = vsel %vm871, %v1399, 0
      %1406 = vmatprep.subr.bf16.mxu0 0
      %1407 = vmatpush1.bf16.msra.mxu0 0
      %1408 = vmatprep.subr.bf16.mxu0 0
      %1409 = vmatpush1.bf16.msra.mxu0 0
      %1410 = vmatprep.subr.bf16.mxu0 0
      %1411 = vmatpush1.bf16.msra.mxu0 0
      %1412 = vmatprep.subr.bf16.mxu0 0
      %1413 = vmatpush1.bf16.msra.mxu0 0
      %1414 = vmatprep.subr.bf16.mxu0 0
      %1415 = vmatpush1.bf16.msra.mxu0 0
      %1416 = vmatprep.subr.bf16.mxu0 0
      %1417 = vmatpush1.bf16.msra.mxu0 0
      %1418 = vmatprep.subr.bf16.mxu0 0
      %1419 = vmatpush1.bf16.msra.mxu0 0
      %1420 = vmatprep.subr.bf16.mxu0 0
      %1421 = vmatpush1.bf16.msra.mxu0 %v1404
      %1422 = vmatprep.subr.bf16.mxu0 0
      %1423 = vmatpush2.bf16.msra.mxu0 0
      %1424 = vmatprep.subr.bf16.mxu0 0
      %1425 = vmatpush2.bf16.msra.mxu0 0
      %1426 = vmatprep.subr.bf16.mxu0 0
      %1427 = vmatpush2.bf16.msra.mxu0 0
      %1428 = vmatprep.subr.bf16.mxu0 0
      %1429 = vmatpush2.bf16.msra.mxu0 0
      %1430 = vmatprep.subr.bf16.mxu0 0
      %1431 = vmatpush2.bf16.msra.mxu0 0
      %1432 = vmatprep.subr.bf16.mxu0 0
      %1433 = vmatpush2.bf16.msra.mxu0 0
      %1434 = vmatprep.subr.bf16.mxu0 0
      %1435 = vmatpush2.bf16.msra.mxu0 0
      %1436 = vmatprep.subr.bf16.mxu0 0
      %1437 = vmatpush2.bf16.msra.mxu0 0
      %1438 = vmatprep.mubr.bf16.mxu0 0
      %1439 = vmatmul.mubr.bf16.gmra.mxu0 %v1401
      %v1440 = vpop.f32.mrf.mxu0
      %v1441 = vadd.f32 0.0, %v1440
      %v1442 = vpop.f32.mrf.mxu0
      %v1443 = vpop.f32.mrf.mxu0
      %v1444 = vadd.f32 0.0, %v1443
      %v1445 = vpop.f32.mrf.mxu0
      %1446 = vdwg.mxu0
      %v1447 = vpack.c.bf16 %v1444, %v1441
      %v1448 = vpack.c.bf16 %v777, %v777
      %v1450 = vsel %vm789, %v1447, 0
      %v1453 = vsel %vm1050, %v1448, 0
      %1455 = vmatprep.subr.bf16.mxu0 0
      %1456 = vmatpush1.bf16.msra.mxu0 0
      %1457 = vmatprep.subr.bf16.mxu0 0
      %1458 = vmatpush1.bf16.msra.mxu0 0
      %1459 = vmatprep.subr.bf16.mxu0 0
      %1460 = vmatpush1.bf16.msra.mxu0 0
      %1461 = vmatprep.subr.bf16.mxu0 0
      %1462 = vmatpush1.bf16.msra.mxu0 0
      %1463 = vmatprep.subr.bf16.mxu0 0
      %1464 = vmatpush1.bf16.msra.mxu0 0
      %1465 = vmatprep.subr.bf16.mxu0 0
      %1466 = vmatpush1.bf16.msra.mxu0 0
      %1467 = vmatprep.subr.bf16.mxu0 0
      %1468 = vmatpush1.bf16.msra.mxu0 0
      %1469 = vmatprep.subr.bf16.mxu0 0
      %1470 = vmatpush1.bf16.msra.mxu0 %v1453
      %1471 = vmatprep.subr.bf16.mxu0 0
      %1472 = vmatpush2.bf16.msra.mxu0 0
      %1473 = vmatprep.subr.bf16.mxu0 0
      %1474 = vmatpush2.bf16.msra.mxu0 0
      %1475 = vmatprep.subr.bf16.mxu0 0
      %1476 = vmatpush2.bf16.msra.mxu0 0
      %1477 = vmatprep.subr.bf16.mxu0 0
      %1478 = vmatpush2.bf16.msra.mxu0 0
      %1479 = vmatprep.subr.bf16.mxu0 0
      %1480 = vmatpush2.bf16.msra.mxu0 0
      %1481 = vmatprep.subr.bf16.mxu0 0
      %1482 = vmatpush2.bf16.msra.mxu0 0
      %1483 = vmatprep.subr.bf16.mxu0 0
      %1484 = vmatpush2.bf16.msra.mxu0 0
      %1485 = vmatprep.subr.bf16.mxu0 0
      %1486 = vmatpush2.bf16.msra.mxu0 0
      %1487 = vmatprep.mubr.bf16.mxu0 0
      %1488 = vmatmul.mubr.bf16.gmra.mxu0 %v1450
      %v1489 = vpop.f32.mrf.mxu0
      %v1490 = vadd.f32 0.0, %v1489
      %v1491 = vpop.f32.mrf.mxu0
      %v1492 = vpop.f32.mrf.mxu0
      %v1493 = vadd.f32 0.0, %v1492
      %v1494 = vpop.f32.mrf.mxu0
      %1495 = vdwg.mxu0
      %v1496 = vadd.f32 %v1318, %v1490
      %v1497 = vadd.f32 %v1319, %v1493
      %v1498 = vld [vmem:[%s5] sm:$0x1]
      %v1500 = vlaneseq
      %v1501 = vshrl.u32 %v1500, 7
      %v1502 = vsub.s32 0, %v1501
      %v1503 = vrot.slane %v1498, %v1502
      %v1505 = vadd.f32 %v1496, %v1503
      %v1506 = vadd.f32 %v1497, %v1503
      %v1507 = vadd.f32 %v702, %v1505
      %v1508 = vadd.f32 %v703, %v1506
      %v1509 = vld [vmem:[%s12] sm:$0x1]
      %v1510 = vld [vmem:[%s13] sm:$0x1]
      %v1511 = vsel %vm729, %v1507, 0.0
      %1512 = vadd.xlane.f32.xlu0 %v1511
      %v1513 = vpop.xlane.xlu0 %1512
      %vm1514 = vcmask 257024
      %v1515 = vsel %vm1514, %v1508, 0.0
      %1516 = vadd.xlane.f32.xlu0 %v1515
      %v1517 = vpop.xlane.xlu0 %1516
      %v1518 = vrcp.pop 32.0
      %v1519 = vmul.f32 %v1513, %v1518
      %v1520 = vmul.f32 %v1517, %v1518
      %v1521 = vsub.f32 %v1507, %v1519
      %v1522 = vsub.f32 %v1508, %v1520
      %v1523 = vmul.f32 %v1521, %v1521
      %v1524 = vmul.f32 %v1522, %v1522
      %v1525 = vsel %vm729, %v1523, 0.0
      %1526 = vadd.xlane.f32.xlu0 %v1525
      %v1527 = vpop.xlane.xlu0 %1526
      %v1528 = vsel %vm1514, %v1524, 0.0
      %1529 = vadd.xlane.f32.xlu0 %v1528
      %v1530 = vpop.xlane.xlu0 %1529
      %v1531 = vmul.f32 %v1527, %v1518
      %v1532 = vmul.f32 %v1530, %v1518
      %v1533 = vadd.f32 %v1531, 1e-05
      %v1534 = vadd.f32 %v1532, 1e-05
      %v1535 = vrsqrt.pop %v1533
      %v1536 = vrsqrt.pop %v1534
      %v1537 = vmul.f32 %v1521, %v1535
      %v1538 = vmul.f32 %v1522, %v1536
      %v1540 = vlaneseq
      %v1541 = vshrl.u32 %v1540, 7
      %v1542 = vsub.s32 0, %v1541
      %v1543 = vrot.slane %v1509, %v1542
      %v1545 = vmul.f32 %v1537, %v1543
      %v1546 = vmul.f32 %v1538, %v1543
      %v1548 = vlaneseq
      %v1549 = vshrl.u32 %v1548, 7
      %v1550 = vsub.s32 0, %v1549
      %v1551 = vrot.slane %v1510, %v1550
      %v1553 = vadd.f32 %v1545, %v1551
      %v1554 = vadd.f32 %v1546, %v1551
      %v1555 = vld [vmem:[%s6] sm:$0xf]
      %v1556 = vld [vmem:[%s6 + $0x4] sm:$0xf]
      %v1557 = vld [vmem:[%s6 + $0x8] sm:$0xf]
      %v1558 = vld [vmem:[%s6 + $0xc] sm:$0xf]
      %v1559 = vpack.c.bf16 %v1554, %v1553
      %v1560 = vld [vmem:[%s7] sm:$0x1]
      %v1562 = vlaneseq
      %v1563 = vshrl.u32 %v1562, 7
      %v1564 = vsub.s32 0, %v1563
      %v1565 = vrot.slane %v1560, %v1564
      %v1571 = vunpack.c.l.b16 %v1555
      %v1572 = vunpack.c.l.b16 %v1556
      %v1573 = vunpack.c.l.b16 %v1557
      %v1574 = vunpack.c.l.b16 %v1558
      %v1575 = vpack.c.b16 %v1572, %v1571
      %v1576 = vpack.c.b16 %v1574, %v1573
      %v1580 = vsel %vm729, %v1559, 0
      %1582 = vmatprep.subr.bf16.mxu0 0
      %1583 = vmatpush1.bf16.msra.mxu0 0
      %1584 = vmatprep.subr.bf16.mxu0 0
      %1585 = vmatpush1.bf16.msra.mxu0 0
      %1586 = vmatprep.subr.bf16.mxu0 0
      %1587 = vmatpush1.bf16.msra.mxu0 0
      %1588 = vmatprep.subr.bf16.mxu0 0
      %1589 = vmatpush1.bf16.msra.mxu0 0
      %1590 = vmatprep.subr.bf16.mxu0 0
      %1591 = vmatpush1.bf16.msra.mxu0 0
      %1592 = vmatprep.subr.bf16.mxu0 0
      %1593 = vmatpush1.bf16.msra.mxu0 0
      %1594 = vmatprep.subr.bf16.mxu0 0
      %1595 = vmatpush1.bf16.msra.mxu0 %v1576
      %1596 = vmatprep.subr.bf16.mxu0 0
      %1597 = vmatpush1.bf16.msra.mxu0 %v1575
      %1598 = vmatprep.subr.bf16.mxu0 0
      %1599 = vmatpush2.bf16.msra.mxu0 0
      %1600 = vmatprep.subr.bf16.mxu0 0
      %1601 = vmatpush2.bf16.msra.mxu0 0
      %1602 = vmatprep.subr.bf16.mxu0 0
      %1603 = vmatpush2.bf16.msra.mxu0 0
      %1604 = vmatprep.subr.bf16.mxu0 0
      %1605 = vmatpush2.bf16.msra.mxu0 0
      %1606 = vmatprep.subr.bf16.mxu0 0
      %1607 = vmatpush2.bf16.msra.mxu0 0
      %1608 = vmatprep.subr.bf16.mxu0 0
      %1609 = vmatpush2.bf16.msra.mxu0 0
      %1610 = vmatprep.subr.bf16.mxu0 0
      %1611 = vmatpush2.bf16.msra.mxu0 0
      %1612 = vmatprep.subr.bf16.mxu0 0
      %1613 = vmatpush2.bf16.msra.mxu0 0
      %1614 = vmatprep.mubr.bf16.mxu0 0
      %1615 = vmatmul.mubr.bf16.gmra.mxu0 %v1580
      %v1616 = vpop.f32.mrf.mxu0
      %v1617 = vadd.f32 %v1565, %v1616
      %v1618 = vpop.f32.mrf.mxu0
      %v1619 = vpop.f32.mrf.mxu0
      %v1620 = vadd.f32 %v1565, %v1619
      %v1621 = vpop.f32.mrf.mxu0
      %1622 = vdwg.mxu0
      %v1623 = vld [vmem:[%s8] sm:$0xf]
      %v1624 = vld [vmem:[%s8 + $0x4] sm:$0xf]
      %v1625 = vld [vmem:[%s8 + $0x8] sm:$0xf]
      %v1626 = vld [vmem:[%s8 + $0xc] sm:$0xf]
      %v1627 = vpack.c.bf16 %v704, %v704
      %v1628 = vld [vmem:[%s9] sm:$0x1]
      %v1630 = vlaneseq
      %v1631 = vshrl.u32 %v1630, 7
      %v1632 = vsub.s32 0, %v1631
      %v1633 = vrot.slane %v1628, %v1632
      %v1639 = vunpack.c.l.b16 %v1623
      %v1640 = vunpack.c.l.b16 %v1624
      %v1641 = vunpack.c.l.b16 %v1625
      %v1642 = vunpack.c.l.b16 %v1626
      %v1643 = vpack.c.b16 %v1640, %v1639
      %v1644 = vpack.c.b16 %v1642, %v1641
      %v1648 = vsel %vm729, %v1627, 0
      %1650 = vmatprep.subr.bf16.mxu0 0
      %1651 = vmatpush1.bf16.msra.mxu0 0
      %1652 = vmatprep.subr.bf16.mxu0 0
      %1653 = vmatpush1.bf16.msra.mxu0 0
      %1654 = vmatprep.subr.bf16.mxu0 0
      %1655 = vmatpush1.bf16.msra.mxu0 0
      %1656 = vmatprep.subr.bf16.mxu0 0
      %1657 = vmatpush1.bf16.msra.mxu0 0
      %1658 = vmatprep.subr.bf16.mxu0 0
      %1659 = vmatpush1.bf16.msra.mxu0 0
      %1660 = vmatprep.subr.bf16.mxu0 0
      %1661 = vmatpush1.bf16.msra.mxu0 0
      %1662 = vmatprep.subr.bf16.mxu0 0
      %1663 = vmatpush1.bf16.msra.mxu0 %v1644
      %1664 = vmatprep.subr.bf16.mxu0 0
      %1665 = vmatpush1.bf16.msra.mxu0 %v1643
      %1666 = vmatprep.subr.bf16.mxu0 0
      %1667 = vmatpush2.bf16.msra.mxu0 0
      %1668 = vmatprep.subr.bf16.mxu0 0
      %1669 = vmatpush2.bf16.msra.mxu0 0
      %1670 = vmatprep.subr.bf16.mxu0 0
      %1671 = vmatpush2.bf16.msra.mxu0 0
      %1672 = vmatprep.subr.bf16.mxu0 0
      %1673 = vmatpush2.bf16.msra.mxu0 0
      %1674 = vmatprep.subr.bf16.mxu0 0
      %1675 = vmatpush2.bf16.msra.mxu0 0
      %1676 = vmatprep.subr.bf16.mxu0 0
      %1677 = vmatpush2.bf16.msra.mxu0 0
      %1678 = vmatprep.subr.bf16.mxu0 0
      %1679 = vmatpush2.bf16.msra.mxu0 0
      %1680 = vmatprep.subr.bf16.mxu0 0
      %1681 = vmatpush2.bf16.msra.mxu0 0
      %1682 = vmatprep.mubr.bf16.mxu0 0
      %1683 = vmatmul.mubr.bf16.gmra.mxu0 %v1648
      %v1684 = vpop.f32.mrf.mxu0
      %v1685 = vadd.f32 %v1633, %v1684
      %v1686 = vpop.f32.mrf.mxu0
      %v1687 = vpop.f32.mrf.mxu0
      %v1688 = vpop.f32.mrf.mxu0
      %1689 = vdwg.mxu0
      %v1690 = vld [vmem:[%s10] sm:$0xff]
      %v1691 = vld [vmem:[%s10 + $0x8] sm:$0xff]
      %v1692 = vld [vmem:[%s10 + $0x10] sm:$0xff]
      %v1693 = vld [vmem:[%s10 + $0x18] sm:$0xff]
      %v1694 = vpack.c.bf16 %v1620, %v1617
      %v1695 = vpack.c.bf16 %v1685, %v1685
      %v1697 = vsel %vm789, %v1694, 0
      %v1700 = vsel %vm789, %v1695, 0
      %1702 = vmatprep.subr.bf16.mxu0 0
      %1703 = vmatpush1.bf16.xpose.msra.mxu0 0
      %1704 = vmatprep.subr.bf16.mxu0 0
      %1705 = vmatpush1.bf16.xpose.msra.mxu0 0
      %1706 = vmatprep.subr.bf16.mxu0 0
      %1707 = vmatpush1.bf16.xpose.msra.mxu0 0
      %1708 = vmatprep.subr.bf16.mxu0 0
      %1709 = vmatpush1.bf16.xpose.msra.mxu0 0
      %1710 = vmatprep.subr.bf16.mxu0 0
      %1711 = vmatpush1.bf16.xpose.msra.mxu0 0
      %1712 = vmatprep.subr.bf16.mxu0 0
      %1713 = vmatpush1.bf16.xpose.msra.mxu0 0
      %1714 = vmatprep.subr.bf16.mxu0 0
      %1715 = vmatpush1.bf16.xpose.msra.mxu0 0
      %1716 = vmatprep.subr.bf16.mxu0 0
      %1717 = vmatpush1.bf16.xpose.msra.mxu0 %v1700
      %1718 = vmatprep.subr.bf16.mxu0 0
      %1719 = vmatpush2.bf16.xpose.msra.mxu0 0
      %1720 = vmatprep.subr.bf16.mxu0 0
      %1721 = vmatpush2.bf16.xpose.msra.mxu0 0
      %1722 = vmatprep.subr.bf16.mxu0 0
      %1723 = vmatpush2.bf16.xpose.msra.mxu0 0
      %1724 = vmatprep.subr.bf16.mxu0 0
      %1725 = vmatpush2.bf16.xpose.msra.mxu0 0
      %1726 = vmatprep.subr.bf16.mxu0 0
      %1727 = vmatpush2.bf16.xpose.msra.mxu0 0
      %1728 = vmatprep.subr.bf16.mxu0 0
      %1729 = vmatpush2.bf16.xpose.msra.mxu0 0
      %1730 = vmatprep.subr.bf16.mxu0 0
      %1731 = vmatpush2.bf16.xpose.msra.mxu0 0
      %1732 = vmatprep.subr.bf16.mxu0 0
      %1733 = vmatpush2.bf16.xpose.msra.mxu0 0
      %1734 = vmatprep.mubr.bf16.mxu0 0
      %1735 = vmatmul.mubr.bf16.gmra.mxu0 %v1697
      %v1736 = vpop.f32.mrf.mxu0
      %v1737 = vadd.f32 0.0, %v1736
      %v1738 = vpop.f32.mrf.mxu0
      %v1739 = vpop.f32.mrf.mxu0
      %v1740 = vadd.f32 0.0, %v1739
      %v1741 = vpop.f32.mrf.mxu0
      %1742 = vdwg.mxu0
      %v1743 = vmul.f32 %v1737, 0.35355338
      %v1744 = vmul.f32 %v1740, 0.35355338
      %vm1745 = vcmask 48128
      %v1746 = vsel %vm1745, %v1743, -inf
      %1747 = vmax.xlane.f32.xlu0 %v1746
      %v1748 = vpop.xlane.xlu0 %1747
      %vm1749 = vcmask 44032
      %v1750 = vsel %vm1749, %v1744, -inf
      %1751 = vmax.xlane.f32.xlu0 %v1750
      %v1752 = vpop.xlane.xlu0 %1751
      %v1753 = vsub.f32 %v1743, %v1748
      %v1754 = vsub.f32 %v1744, %v1752
      %v1755 = vmul.f32 %v1753, 1.442695
      %v1756 = vpow.pop %v1755
      %v1757 = vmul.f32 %v1754, 1.442695
      %v1758 = vpow.pop %v1757
      %v1759 = vsel %vm1745, %v1756, 0.0
      %1760 = vadd.xlane.f32.xlu0 %v1759
      %v1761 = vpop.xlane.xlu0 %1760
      %v1762 = vsel %vm1749, %v1758, 0.0
      %1763 = vadd.xlane.f32.xlu0 %v1762
      %v1764 = vpop.xlane.xlu0 %1763
      %v1765 = vrcp.pop %v1761
      %v1766 = vrcp.pop %v1764
      %v1767 = vmul.f32 %v1756, %v1765
      %v1768 = vmul.f32 %v1758, %v1766
      %v1769 = vpack.c.bf16 %v1768, %v1767
      %1771 = vrot.lane.b32.xlu0 %v1695, 96
      %v1772 = vpop.permute.xlu0 %1771
      %v1774 = vsel %vm1745, %v1769, 0
      %vm1776 = vcmask 1042432
      %v1778 = vsel %vm1776, %v1772, 0
      %1780 = vmatprep.subr.bf16.mxu0 0
      %1781 = vmatpush1.bf16.msra.mxu0 0
      %1782 = vmatprep.subr.bf16.mxu0 0
      %1783 = vmatpush1.bf16.msra.mxu0 0
      %1784 = vmatprep.subr.bf16.mxu0 0
      %1785 = vmatpush1.bf16.msra.mxu0 0
      %1786 = vmatprep.subr.bf16.mxu0 0
      %1787 = vmatpush1.bf16.msra.mxu0 0
      %1788 = vmatprep.subr.bf16.mxu0 0
      %1789 = vmatpush1.bf16.msra.mxu0 0
      %1790 = vmatprep.subr.bf16.mxu0 0
      %1791 = vmatpush1.bf16.msra.mxu0 0
      %1792 = vmatprep.subr.bf16.mxu0 0
      %1793 = vmatpush1.bf16.msra.mxu0 0
      %1794 = vmatprep.subr.bf16.mxu0 0
      %1795 = vmatpush1.bf16.msra.mxu0 %v1778
      %1796 = vmatprep.subr.bf16.mxu0 0
      %1797 = vmatpush2.bf16.msra.mxu0 0
      %1798 = vmatprep.subr.bf16.mxu0 0
      %1799 = vmatpush2.bf16.msra.mxu0 0
      %1800 = vmatprep.subr.bf16.mxu0 0
      %1801 = vmatpush2.bf16.msra.mxu0 0
      %1802 = vmatprep.subr.bf16.mxu0 0
      %1803 = vmatpush2.bf16.msra.mxu0 0
      %1804 = vmatprep.subr.bf16.mxu0 0
      %1805 = vmatpush2.bf16.msra.mxu0 0
      %1806 = vmatprep.subr.bf16.mxu0 0
      %1807 = vmatpush2.bf16.msra.mxu0 0
      %1808 = vmatprep.subr.bf16.mxu0 0
      %1809 = vmatpush2.bf16.msra.mxu0 0
      %1810 = vmatprep.subr.bf16.mxu0 0
      %1811 = vmatpush2.bf16.msra.mxu0 0
      %1812 = vmatprep.mubr.bf16.mxu0 0
      %1813 = vmatmul.mubr.bf16.gmra.mxu0 %v1774
      %v1814 = vpop.f32.mrf.mxu0
      %v1815 = vadd.f32 0.0, %v1814
      %v1816 = vpop.f32.mrf.mxu0
      %v1817 = vpop.f32.mrf.mxu0
      %v1818 = vadd.f32 0.0, %v1817
      %v1819 = vpop.f32.mrf.mxu0
      %1820 = vdwg.mxu0
      %v1821 = vpack.c.bf16 %v1818, %v1815
      %v1822 = vpack.c.bf16 %v1690, %v1690
      %1824 = vrot.lane.b32.xlu0 %v1694, 120
      %v1825 = vpop.permute.xlu0 %1824
      %1826 = vrot.lane.b32.xlu0 %v1695, 120
      %v1827 = vpop.permute.xlu0 %1826
      %v1829 = vsel %vm789, %v1825, 0
      %v1832 = vsel %vm789, %v1827, 0
      %1834 = vmatprep.subr.bf16.mxu0 0
      %1835 = vmatpush1.bf16.xpose.msra.mxu0 0
      %1836 = vmatprep.subr.bf16.mxu0 0
      %1837 = vmatpush1.bf16.xpose.msra.mxu0 0
      %1838 = vmatprep.subr.bf16.mxu0 0
      %1839 = vmatpush1.bf16.xpose.msra.mxu0 0
      %1840 = vmatprep.subr.bf16.mxu0 0
      %1841 = vmatpush1.bf16.xpose.msra.mxu0 0
      %1842 = vmatprep.subr.bf16.mxu0 0
      %1843 = vmatpush1.bf16.xpose.msra.mxu0 0
      %1844 = vmatprep.subr.bf16.mxu0 0
      %1845 = vmatpush1.bf16.xpose.msra.mxu0 0
      %1846 = vmatprep.subr.bf16.mxu0 0
      %1847 = vmatpush1.bf16.xpose.msra.mxu0 0
      %1848 = vmatprep.subr.bf16.mxu0 0
      %1849 = vmatpush1.bf16.xpose.msra.mxu0 %v1832
      %1850 = vmatprep.subr.bf16.mxu0 0
      %1851 = vmatpush2.bf16.xpose.msra.mxu0 0
      %1852 = vmatprep.subr.bf16.mxu0 0
      %1853 = vmatpush2.bf16.xpose.msra.mxu0 0
      %1854 = vmatprep.subr.bf16.mxu0 0
      %1855 = vmatpush2.bf16.xpose.msra.mxu0 0
      %1856 = vmatprep.subr.bf16.mxu0 0
      %1857 = vmatpush2.bf16.xpose.msra.mxu0 0
      %1858 = vmatprep.subr.bf16.mxu0 0
      %1859 = vmatpush2.bf16.xpose.msra.mxu0 0
      %1860 = vmatprep.subr.bf16.mxu0 0
      %1861 = vmatpush2.bf16.xpose.msra.mxu0 0
      %1862 = vmatprep.subr.bf16.mxu0 0
      %1863 = vmatpush2.bf16.xpose.msra.mxu0 0
      %1864 = vmatprep.subr.bf16.mxu0 0
      %1865 = vmatpush2.bf16.xpose.msra.mxu0 0
      %1866 = vmatprep.mubr.bf16.mxu0 0
      %1867 = vmatmul.mubr.bf16.gmra.mxu0 %v1829
      %v1868 = vpop.f32.mrf.mxu0
      %v1869 = vadd.f32 0.0, %v1868
      %v1870 = vpop.f32.mrf.mxu0
      %v1871 = vpop.f32.mrf.mxu0
      %v1872 = vadd.f32 0.0, %v1871
      %v1873 = vpop.f32.mrf.mxu0
      %1874 = vdwg.mxu0
      %v1875 = vmul.f32 %v1869, 0.35355338
      %v1876 = vmul.f32 %v1872, 0.35355338
      %v1877 = vsel %vm1745, %v1875, -inf
      %1878 = vmax.xlane.f32.xlu0 %v1877
      %v1879 = vpop.xlane.xlu0 %1878
      %v1880 = vsel %vm1749, %v1876, -inf
      %1881 = vmax.xlane.f32.xlu0 %v1880
      %v1882 = vpop.xlane.xlu0 %1881
      %v1883 = vsub.f32 %v1875, %v1879
      %v1884 = vsub.f32 %v1876, %v1882
      %v1885 = vmul.f32 %v1883, 1.442695
      %v1886 = vpow.pop %v1885
      %v1887 = vmul.f32 %v1884, 1.442695
      %v1888 = vpow.pop %v1887
      %v1889 = vsel %vm1745, %v1886, 0.0
      %1890 = vadd.xlane.f32.xlu0 %v1889
      %v1891 = vpop.xlane.xlu0 %1890
      %v1892 = vsel %vm1749, %v1888, 0.0
      %1893 = vadd.xlane.f32.xlu0 %v1892
      %v1894 = vpop.xlane.xlu0 %1893
      %v1895 = vrcp.pop %v1891
      %v1896 = vrcp.pop %v1894
      %v1897 = vmul.f32 %v1886, %v1895
      %v1898 = vmul.f32 %v1888, %v1896
      %v1899 = vpack.c.bf16 %v1898, %v1897
      %1900 = vrot.lane.b32.xlu0 %v1695, 88
      %v1901 = vpop.permute.xlu0 %1900
      %v1903 = vsel %vm1745, %v1899, 0
      %v1906 = vsel %vm1776, %v1901, 0
      %1908 = vmatprep.subr.bf16.mxu0 0
      %1909 = vmatpush1.bf16.msra.mxu0 0
      %1910 = vmatprep.subr.bf16.mxu0 0
      %1911 = vmatpush1.bf16.msra.mxu0 0
      %1912 = vmatprep.subr.bf16.mxu0 0
      %1913 = vmatpush1.bf16.msra.mxu0 0
      %1914 = vmatprep.subr.bf16.mxu0 0
      %1915 = vmatpush1.bf16.msra.mxu0 0
      %1916 = vmatprep.subr.bf16.mxu0 0
      %1917 = vmatpush1.bf16.msra.mxu0 0
      %1918 = vmatprep.subr.bf16.mxu0 0
      %1919 = vmatpush1.bf16.msra.mxu0 0
      %1920 = vmatprep.subr.bf16.mxu0 0
      %1921 = vmatpush1.bf16.msra.mxu0 0
      %1922 = vmatprep.subr.bf16.mxu0 0
      %1923 = vmatpush1.bf16.msra.mxu0 %v1906
      %1924 = vmatprep.subr.bf16.mxu0 0
      %1925 = vmatpush2.bf16.msra.mxu0 0
      %1926 = vmatprep.subr.bf16.mxu0 0
      %1927 = vmatpush2.bf16.msra.mxu0 0
      %1928 = vmatprep.subr.bf16.mxu0 0
      %1929 = vmatpush2.bf16.msra.mxu0 0
      %1930 = vmatprep.subr.bf16.mxu0 0
      %1931 = vmatpush2.bf16.msra.mxu0 0
      %1932 = vmatprep.subr.bf16.mxu0 0
      %1933 = vmatpush2.bf16.msra.mxu0 0
      %1934 = vmatprep.subr.bf16.mxu0 0
      %1935 = vmatpush2.bf16.msra.mxu0 0
      %1936 = vmatprep.subr.bf16.mxu0 0
      %1937 = vmatpush2.bf16.msra.mxu0 0
      %1938 = vmatprep.subr.bf16.mxu0 0
      %1939 = vmatpush2.bf16.msra.mxu0 0
      %1940 = vmatprep.mubr.bf16.mxu0 0
      %1941 = vmatmul.mubr.bf16.gmra.mxu0 %v1903
      %v1942 = vpop.f32.mrf.mxu0
      %v1943 = vadd.f32 0.0, %v1942
      %v1944 = vpop.f32.mrf.mxu0
      %v1945 = vpop.f32.mrf.mxu0
      %v1946 = vadd.f32 0.0, %v1945
      %v1947 = vpop.f32.mrf.mxu0
      %1948 = vdwg.mxu0
      %v1949 = vpack.c.bf16 %v1946, %v1943
      %v1950 = vpack.c.bf16 %v1691, %v1691
      %v1952 = vsel %vm789, %v1949, 0
      %v1955 = vsel %vm1050, %v1950, 0
      %1957 = vmatprep.subr.bf16.mxu0 0
      %1958 = vmatpush1.bf16.msra.mxu0 0
      %1959 = vmatprep.subr.bf16.mxu0 0
      %1960 = vmatpush1.bf16.msra.mxu0 0
      %1961 = vmatprep.subr.bf16.mxu0 0
      %1962 = vmatpush1.bf16.msra.mxu0 0
      %1963 = vmatprep.subr.bf16.mxu0 0
      %1964 = vmatpush1.bf16.msra.mxu0 0
      %1965 = vmatprep.subr.bf16.mxu0 0
      %1966 = vmatpush1.bf16.msra.mxu0 0
      %1967 = vmatprep.subr.bf16.mxu0 0
      %1968 = vmatpush1.bf16.msra.mxu0 0
      %1969 = vmatprep.subr.bf16.mxu0 0
      %1970 = vmatpush1.bf16.msra.mxu0 0
      %1971 = vmatprep.subr.bf16.mxu0 0
      %1972 = vmatpush1.bf16.msra.mxu0 %v1955
      %1973 = vmatprep.subr.bf16.mxu0 0
      %1974 = vmatpush2.bf16.msra.mxu0 0
      %1975 = vmatprep.subr.bf16.mxu0 0
      %1976 = vmatpush2.bf16.msra.mxu0 0
      %1977 = vmatprep.subr.bf16.mxu0 0
      %1978 = vmatpush2.bf16.msra.mxu0 0
      %1979 = vmatprep.subr.bf16.mxu0 0
      %1980 = vmatpush2.bf16.msra.mxu0 0
      %1981 = vmatprep.subr.bf16.mxu0 0
      %1982 = vmatpush2.bf16.msra.mxu0 0
      %1983 = vmatprep.subr.bf16.mxu0 0
      %1984 = vmatpush2.bf16.msra.mxu0 0
      %1985 = vmatprep.subr.bf16.mxu0 0
      %1986 = vmatpush2.bf16.msra.mxu0 0
      %1987 = vmatprep.subr.bf16.mxu0 0
      %1988 = vmatpush2.bf16.msra.mxu0 0
      %1989 = vmatprep.mubr.bf16.mxu0 0
      %1990 = vmatmul.mubr.bf16.gmra.mxu0 %v1952
      %v1991 = vpop.f32.mrf.mxu0
      %v1992 = vadd.f32 0.0, %v1991
      %v1993 = vpop.f32.mrf.mxu0
      %v1994 = vpop.f32.mrf.mxu0
      %v1995 = vadd.f32 0.0, %v1994
      %v1996 = vpop.f32.mrf.mxu0
      %1997 = vdwg.mxu0
      %v1999 = vsel %vm789, %v1821, 0
      %v2002 = vsel %vm1050, %v1822, 0
      %2004 = vmatprep.subr.bf16.mxu0 0
      %2005 = vmatpush1.bf16.msra.mxu0 0
      %2006 = vmatprep.subr.bf16.mxu0 0
      %2007 = vmatpush1.bf16.msra.mxu0 0
      %2008 = vmatprep.subr.bf16.mxu0 0
      %2009 = vmatpush1.bf16.msra.mxu0 0
      %2010 = vmatprep.subr.bf16.mxu0 0
      %2011 = vmatpush1.bf16.msra.mxu0 0
      %2012 = vmatprep.subr.bf16.mxu0 0
      %2013 = vmatpush1.bf16.msra.mxu0 0
      %2014 = vmatprep.subr.bf16.mxu0 0
      %2015 = vmatpush1.bf16.msra.mxu0 0
      %2016 = vmatprep.subr.bf16.mxu0 0
      %2017 = vmatpush1.bf16.msra.mxu0 0
      %2018 = vmatprep.subr.bf16.mxu0 0
      %2019 = vmatpush1.bf16.msra.mxu0 %v2002
      %2020 = vmatprep.subr.bf16.mxu0 0
      %2021 = vmatpush2.bf16.msra.mxu0 0
      %2022 = vmatprep.subr.bf16.mxu0 0
      %2023 = vmatpush2.bf16.msra.mxu0 0
      %2024 = vmatprep.subr.bf16.mxu0 0
      %2025 = vmatpush2.bf16.msra.mxu0 0
      %2026 = vmatprep.subr.bf16.mxu0 0
      %2027 = vmatpush2.bf16.msra.mxu0 0
      %2028 = vmatprep.subr.bf16.mxu0 0
      %2029 = vmatpush2.bf16.msra.mxu0 0
      %2030 = vmatprep.subr.bf16.mxu0 0
      %2031 = vmatpush2.bf16.msra.mxu0 0
      %2032 = vmatprep.subr.bf16.mxu0 0
      %2033 = vmatpush2.bf16.msra.mxu0 0
      %2034 = vmatprep.subr.bf16.mxu0 0
      %2035 = vmatpush2.bf16.msra.mxu0 0
      %2036 = vmatprep.mubr.bf16.mxu0 0
      %2037 = vmatmul.mubr.bf16.gmra.mxu0 %v1999
      %v2038 = vpop.f32.mrf.mxu0
      %v2039 = vadd.f32 %v1992, %v2038
      %v2040 = vpop.f32.mrf.mxu0
      %v2041 = vpop.f32.mrf.mxu0
      %v2042 = vadd.f32 %v1995, %v2041
      %v2043 = vpop.f32.mrf.mxu0
      %2044 = vdwg.mxu0
      %2045 = vrot.lane.b32.xlu0 %v1694, 112
      %v2046 = vpop.permute.xlu0 %2045
      %2047 = vrot.lane.b32.xlu0 %v1695, 112
      %v2048 = vpop.permute.xlu0 %2047
      %v2050 = vsel %vm789, %v2046, 0
      %v2053 = vsel %vm789, %v2048, 0
      %2055 = vmatprep.subr.bf16.mxu0 0
      %2056 = vmatpush1.bf16.xpose.msra.mxu0 0
      %2057 = vmatprep.subr.bf16.mxu0 0
      %2058 = vmatpush1.bf16.xpose.msra.mxu0 0
      %2059 = vmatprep.subr.bf16.mxu0 0
      %2060 = vmatpush1.bf16.xpose.msra.mxu0 0
      %2061 = vmatprep.subr.bf16.mxu0 0
      %2062 = vmatpush1.bf16.xpose.msra.mxu0 0
      %2063 = vmatprep.subr.bf16.mxu0 0
      %2064 = vmatpush1.bf16.xpose.msra.mxu0 0
      %2065 = vmatprep.subr.bf16.mxu0 0
      %2066 = vmatpush1.bf16.xpose.msra.mxu0 0
      %2067 = vmatprep.subr.bf16.mxu0 0
      %2068 = vmatpush1.bf16.xpose.msra.mxu0 0
      %2069 = vmatprep.subr.bf16.mxu0 0
      %2070 = vmatpush1.bf16.xpose.msra.mxu0 %v2053
      %2071 = vmatprep.subr.bf16.mxu0 0
      %2072 = vmatpush2.bf16.xpose.msra.mxu0 0
      %2073 = vmatprep.subr.bf16.mxu0 0
      %2074 = vmatpush2.bf16.xpose.msra.mxu0 0
      %2075 = vmatprep.subr.bf16.mxu0 0
      %2076 = vmatpush2.bf16.xpose.msra.mxu0 0
      %2077 = vmatprep.subr.bf16.mxu0 0
      %2078 = vmatpush2.bf16.xpose.msra.mxu0 0
      %2079 = vmatprep.subr.bf16.mxu0 0
      %2080 = vmatpush2.bf16.xpose.msra.mxu0 0
      %2081 = vmatprep.subr.bf16.mxu0 0
      %2082 = vmatpush2.bf16.xpose.msra.mxu0 0
      %2083 = vmatprep.subr.bf16.mxu0 0
      %2084 = vmatpush2.bf16.xpose.msra.mxu0 0
      %2085 = vmatprep.subr.bf16.mxu0 0
      %2086 = vmatpush2.bf16.xpose.msra.mxu0 0
      %2087 = vmatprep.mubr.bf16.mxu0 0
      %2088 = vmatmul.mubr.bf16.gmra.mxu0 %v2050
      %v2089 = vpop.f32.mrf.mxu0
      %v2090 = vadd.f32 0.0, %v2089
      %v2091 = vpop.f32.mrf.mxu0
      %v2092 = vpop.f32.mrf.mxu0
      %v2093 = vadd.f32 0.0, %v2092
      %v2094 = vpop.f32.mrf.mxu0
      %2095 = vdwg.mxu0
      %v2096 = vmul.f32 %v2090, 0.35355338
      %v2097 = vmul.f32 %v2093, 0.35355338
      %v2098 = vsel %vm1745, %v2096, -inf
      %2099 = vmax.xlane.f32.xlu0 %v2098
      %v2100 = vpop.xlane.xlu0 %2099
      %v2101 = vsel %vm1749, %v2097, -inf
      %2102 = vmax.xlane.f32.xlu0 %v2101
      %v2103 = vpop.xlane.xlu0 %2102
      %v2104 = vsub.f32 %v2096, %v2100
      %v2105 = vsub.f32 %v2097, %v2103
      %v2106 = vmul.f32 %v2104, 1.442695
      %v2107 = vpow.pop %v2106
      %v2108 = vmul.f32 %v2105, 1.442695
      %v2109 = vpow.pop %v2108
      %v2110 = vsel %vm1745, %v2107, 0.0
      %2111 = vadd.xlane.f32.xlu0 %v2110
      %v2112 = vpop.xlane.xlu0 %2111
      %v2113 = vsel %vm1749, %v2109, 0.0
      %2114 = vadd.xlane.f32.xlu0 %v2113
      %v2115 = vpop.xlane.xlu0 %2114
      %v2116 = vrcp.pop %v2112
      %v2117 = vrcp.pop %v2115
      %v2118 = vmul.f32 %v2107, %v2116
      %v2119 = vmul.f32 %v2109, %v2117
      %v2120 = vpack.c.bf16 %v2119, %v2118
      %2121 = vrot.lane.b32.xlu0 %v1695, 80
      %v2122 = vpop.permute.xlu0 %2121
      %v2124 = vsel %vm1745, %v2120, 0
      %v2127 = vsel %vm1776, %v2122, 0
      %2129 = vmatprep.subr.bf16.mxu0 0
      %2130 = vmatpush1.bf16.msra.mxu0 0
      %2131 = vmatprep.subr.bf16.mxu0 0
      %2132 = vmatpush1.bf16.msra.mxu0 0
      %2133 = vmatprep.subr.bf16.mxu0 0
      %2134 = vmatpush1.bf16.msra.mxu0 0
      %2135 = vmatprep.subr.bf16.mxu0 0
      %2136 = vmatpush1.bf16.msra.mxu0 0
      %2137 = vmatprep.subr.bf16.mxu0 0
      %2138 = vmatpush1.bf16.msra.mxu0 0
      %2139 = vmatprep.subr.bf16.mxu0 0
      %2140 = vmatpush1.bf16.msra.mxu0 0
      %2141 = vmatprep.subr.bf16.mxu0 0
      %2142 = vmatpush1.bf16.msra.mxu0 0
      %2143 = vmatprep.subr.bf16.mxu0 0
      %2144 = vmatpush1.bf16.msra.mxu0 %v2127
      %2145 = vmatprep.subr.bf16.mxu0 0
      %2146 = vmatpush2.bf16.msra.mxu0 0
      %2147 = vmatprep.subr.bf16.mxu0 0
      %2148 = vmatpush2.bf16.msra.mxu0 0
      %2149 = vmatprep.subr.bf16.mxu0 0
      %2150 = vmatpush2.bf16.msra.mxu0 0
      %2151 = vmatprep.subr.bf16.mxu0 0
      %2152 = vmatpush2.bf16.msra.mxu0 0
      %2153 = vmatprep.subr.bf16.mxu0 0
      %2154 = vmatpush2.bf16.msra.mxu0 0
      %2155 = vmatprep.subr.bf16.mxu0 0
      %2156 = vmatpush2.bf16.msra.mxu0 0
      %2157 = vmatprep.subr.bf16.mxu0 0
      %2158 = vmatpush2.bf16.msra.mxu0 0
      %2159 = vmatprep.subr.bf16.mxu0 0
      %2160 = vmatpush2.bf16.msra.mxu0 0
      %2161 = vmatprep.mubr.bf16.mxu0 0
      %2162 = vmatmul.mubr.bf16.gmra.mxu0 %v2124
      %v2163 = vpop.f32.mrf.mxu0
      %v2164 = vadd.f32 0.0, %v2163
      %v2165 = vpop.f32.mrf.mxu0
      %v2166 = vpop.f32.mrf.mxu0
      %v2167 = vadd.f32 0.0, %v2166
      %v2168 = vpop.f32.mrf.mxu0
      %2169 = vdwg.mxu0
      %v2170 = vpack.c.bf16 %v2167, %v2164
      %v2171 = vpack.c.bf16 %v1692, %v1692
      %v2173 = vsel %vm789, %v2170, 0
      %v2176 = vsel %vm1050, %v2171, 0
      %2178 = vmatprep.subr.bf16.mxu0 0
      %2179 = vmatpush1.bf16.msra.mxu0 0
      %2180 = vmatprep.subr.bf16.mxu0 0
      %2181 = vmatpush1.bf16.msra.mxu0 0
      %2182 = vmatprep.subr.bf16.mxu0 0
      %2183 = vmatpush1.bf16.msra.mxu0 0
      %2184 = vmatprep.subr.bf16.mxu0 0
      %2185 = vmatpush1.bf16.msra.mxu0 0
      %2186 = vmatprep.subr.bf16.mxu0 0
      %2187 = vmatpush1.bf16.msra.mxu0 0
      %2188 = vmatprep.subr.bf16.mxu0 0
      %2189 = vmatpush1.bf16.msra.mxu0 0
      %2190 = vmatprep.subr.bf16.mxu0 0
      %2191 = vmatpush1.bf16.msra.mxu0 0
      %2192 = vmatprep.subr.bf16.mxu0 0
      %2193 = vmatpush1.bf16.msra.mxu0 %v2176
      %2194 = vmatprep.subr.bf16.mxu0 0
      %2195 = vmatpush2.bf16.msra.mxu0 0
      %2196 = vmatprep.subr.bf16.mxu0 0
      %2197 = vmatpush2.bf16.msra.mxu0 0
      %2198 = vmatprep.subr.bf16.mxu0 0
      %2199 = vmatpush2.bf16.msra.mxu0 0
      %2200 = vmatprep.subr.bf16.mxu0 0
      %2201 = vmatpush2.bf16.msra.mxu0 0
      %2202 = vmatprep.subr.bf16.mxu0 0
      %2203 = vmatpush2.bf16.msra.mxu0 0
      %2204 = vmatprep.subr.bf16.mxu0 0
      %2205 = vmatpush2.bf16.msra.mxu0 0
      %2206 = vmatprep.subr.bf16.mxu0 0
      %2207 = vmatpush2.bf16.msra.mxu0 0
      %2208 = vmatprep.subr.bf16.mxu0 0
      %2209 = vmatpush2.bf16.msra.mxu0 0
      %2210 = vmatprep.mubr.bf16.mxu0 0
      %2211 = vmatmul.mubr.bf16.gmra.mxu0 %v2173
      %v2212 = vpop.f32.mrf.mxu0
      %v2213 = vadd.f32 0.0, %v2212
      %v2214 = vpop.f32.mrf.mxu0
      %v2215 = vpop.f32.mrf.mxu0
      %v2216 = vadd.f32 0.0, %v2215
      %v2217 = vpop.f32.mrf.mxu0
      %2218 = vdwg.mxu0
      %v2219 = vadd.f32 %v2039, %v2213
      %v2220 = vadd.f32 %v2042, %v2216
      %2221 = vrot.lane.b32.xlu0 %v1694, 104
      %v2222 = vpop.permute.xlu0 %2221
      %2223 = vrot.lane.b32.xlu0 %v1695, 104
      %v2224 = vpop.permute.xlu0 %2223
      %v2226 = vsel %vm789, %v2222, 0
      %v2229 = vsel %vm789, %v2224, 0
      %2231 = vmatprep.subr.bf16.mxu0 0
      %2232 = vmatpush1.bf16.xpose.msra.mxu0 0
      %2233 = vmatprep.subr.bf16.mxu0 0
      %2234 = vmatpush1.bf16.xpose.msra.mxu0 0
      %2235 = vmatprep.subr.bf16.mxu0 0
      %2236 = vmatpush1.bf16.xpose.msra.mxu0 0
      %2237 = vmatprep.subr.bf16.mxu0 0
      %2238 = vmatpush1.bf16.xpose.msra.mxu0 0
      %2239 = vmatprep.subr.bf16.mxu0 0
      %2240 = vmatpush1.bf16.xpose.msra.mxu0 0
      %2241 = vmatprep.subr.bf16.mxu0 0
      %2242 = vmatpush1.bf16.xpose.msra.mxu0 0
      %2243 = vmatprep.subr.bf16.mxu0 0
      %2244 = vmatpush1.bf16.xpose.msra.mxu0 0
      %2245 = vmatprep.subr.bf16.mxu0 0
      %2246 = vmatpush1.bf16.xpose.msra.mxu0 %v2229
      %2247 = vmatprep.subr.bf16.mxu0 0
      %2248 = vmatpush2.bf16.xpose.msra.mxu0 0
      %2249 = vmatprep.subr.bf16.mxu0 0
      %2250 = vmatpush2.bf16.xpose.msra.mxu0 0
      %2251 = vmatprep.subr.bf16.mxu0 0
      %2252 = vmatpush2.bf16.xpose.msra.mxu0 0
      %2253 = vmatprep.subr.bf16.mxu0 0
      %2254 = vmatpush2.bf16.xpose.msra.mxu0 0
      %2255 = vmatprep.subr.bf16.mxu0 0
      %2256 = vmatpush2.bf16.xpose.msra.mxu0 0
      %2257 = vmatprep.subr.bf16.mxu0 0
      %2258 = vmatpush2.bf16.xpose.msra.mxu0 0
      %2259 = vmatprep.subr.bf16.mxu0 0
      %2260 = vmatpush2.bf16.xpose.msra.mxu0 0
      %2261 = vmatprep.subr.bf16.mxu0 0
      %2262 = vmatpush2.bf16.xpose.msra.mxu0 0
      %2263 = vmatprep.mubr.bf16.mxu0 0
      %2264 = vmatmul.mubr.bf16.gmra.mxu0 %v2226
      %v2265 = vpop.f32.mrf.mxu0
      %v2266 = vadd.f32 0.0, %v2265
      %v2267 = vpop.f32.mrf.mxu0
      %v2268 = vpop.f32.mrf.mxu0
      %v2269 = vadd.f32 0.0, %v2268
      %v2270 = vpop.f32.mrf.mxu0
      %2271 = vdwg.mxu0
      %v2272 = vmul.f32 %v2266, 0.35355338
      %v2273 = vmul.f32 %v2269, 0.35355338
      %v2274 = vsel %vm1745, %v2272, -inf
      %2275 = vmax.xlane.f32.xlu0 %v2274
      %v2276 = vpop.xlane.xlu0 %2275
      %v2277 = vsel %vm1749, %v2273, -inf
      %2278 = vmax.xlane.f32.xlu0 %v2277
      %v2279 = vpop.xlane.xlu0 %2278
      %v2280 = vsub.f32 %v2272, %v2276
      %v2281 = vsub.f32 %v2273, %v2279
      %v2282 = vmul.f32 %v2280, 1.442695
      %v2283 = vpow.pop %v2282
      %v2284 = vmul.f32 %v2281, 1.442695
      %v2285 = vpow.pop %v2284
      %v2286 = vsel %vm1745, %v2283, 0.0
      %2287 = vadd.xlane.f32.xlu0 %v2286
      %v2288 = vpop.xlane.xlu0 %2287
      %v2289 = vsel %vm1749, %v2285, 0.0
      %2290 = vadd.xlane.f32.xlu0 %v2289
      %v2291 = vpop.xlane.xlu0 %2290
      %v2292 = vrcp.pop %v2288
      %v2293 = vrcp.pop %v2291
      %v2294 = vmul.f32 %v2283, %v2292
      %v2295 = vmul.f32 %v2285, %v2293
      %v2296 = vpack.c.bf16 %v2295, %v2294
      %2297 = vrot.lane.b32.xlu0 %v1695, 72
      %v2298 = vpop.permute.xlu0 %2297
      %v2300 = vsel %vm1745, %v2296, 0
      %v2303 = vsel %vm1776, %v2298, 0
      %2305 = vmatprep.subr.bf16.mxu0 0
      %2306 = vmatpush1.bf16.msra.mxu0 0
      %2307 = vmatprep.subr.bf16.mxu0 0
      %2308 = vmatpush1.bf16.msra.mxu0 0
      %2309 = vmatprep.subr.bf16.mxu0 0
      %2310 = vmatpush1.bf16.msra.mxu0 0
      %2311 = vmatprep.subr.bf16.mxu0 0
      %2312 = vmatpush1.bf16.msra.mxu0 0
      %2313 = vmatprep.subr.bf16.mxu0 0
      %2314 = vmatpush1.bf16.msra.mxu0 0
      %2315 = vmatprep.subr.bf16.mxu0 0
      %2316 = vmatpush1.bf16.msra.mxu0 0
      %2317 = vmatprep.subr.bf16.mxu0 0
      %2318 = vmatpush1.bf16.msra.mxu0 0
      %2319 = vmatprep.subr.bf16.mxu0 0
      %2320 = vmatpush1.bf16.msra.mxu0 %v2303
      %2321 = vmatprep.subr.bf16.mxu0 0
      %2322 = vmatpush2.bf16.msra.mxu0 0
      %2323 = vmatprep.subr.bf16.mxu0 0
      %2324 = vmatpush2.bf16.msra.mxu0 0
      %2325 = vmatprep.subr.bf16.mxu0 0
      %2326 = vmatpush2.bf16.msra.mxu0 0
      %2327 = vmatprep.subr.bf16.mxu0 0
      %2328 = vmatpush2.bf16.msra.mxu0 0
      %2329 = vmatprep.subr.bf16.mxu0 0
      %2330 = vmatpush2.bf16.msra.mxu0 0
      %2331 = vmatprep.subr.bf16.mxu0 0
      %2332 = vmatpush2.bf16.msra.mxu0 0
      %2333 = vmatprep.subr.bf16.mxu0 0
      %2334 = vmatpush2.bf16.msra.mxu0 0
      %2335 = vmatprep.subr.bf16.mxu0 0
      %2336 = vmatpush2.bf16.msra.mxu0 0
      %2337 = vmatprep.mubr.bf16.mxu0 0
      %2338 = vmatmul.mubr.bf16.gmra.mxu0 %v2300
      %v2339 = vpop.f32.mrf.mxu0
      %v2340 = vadd.f32 0.0, %v2339
      %v2341 = vpop.f32.mrf.mxu0
      %v2342 = vpop.f32.mrf.mxu0
      %v2343 = vadd.f32 0.0, %v2342
      %v2344 = vpop.f32.mrf.mxu0
      %2345 = vdwg.mxu0
      %v2346 = vpack.c.bf16 %v2343, %v2340
      %v2347 = vpack.c.bf16 %v1693, %v1693
      %v2349 = vsel %vm789, %v2346, 0
      %v2352 = vsel %vm1050, %v2347, 0
      %2354 = vmatprep.subr.bf16.mxu0 0
      %2355 = vmatpush1.bf16.msra.mxu0 0
      %2356 = vmatprep.subr.bf16.mxu0 0
      %2357 = vmatpush1.bf16.msra.mxu0 0
      %2358 = vmatprep.subr.bf16.mxu0 0
      %2359 = vmatpush1.bf16.msra.mxu0 0
      %2360 = vmatprep.subr.bf16.mxu0 0
      %2361 = vmatpush1.bf16.msra.mxu0 0
      %2362 = vmatprep.subr.bf16.mxu0 0
      %2363 = vmatpush1.bf16.msra.mxu0 0
      %2364 = vmatprep.subr.bf16.mxu0 0
      %2365 = vmatpush1.bf16.msra.mxu0 0
      %2366 = vmatprep.subr.bf16.mxu0 0
      %2367 = vmatpush1.bf16.msra.mxu0 0
      %2368 = vmatprep.subr.bf16.mxu0 0
      %2369 = vmatpush1.bf16.msra.mxu0 %v2352
      %2370 = vmatprep.subr.bf16.mxu0 0
      %2371 = vmatpush2.bf16.msra.mxu0 0
      %2372 = vmatprep.subr.bf16.mxu0 0
      %2373 = vmatpush2.bf16.msra.mxu0 0
      %2374 = vmatprep.subr.bf16.mxu0 0
      %2375 = vmatpush2.bf16.msra.mxu0 0
      %2376 = vmatprep.subr.bf16.mxu0 0
      %2377 = vmatpush2.bf16.msra.mxu0 0
      %2378 = vmatprep.subr.bf16.mxu0 0
      %2379 = vmatpush2.bf16.msra.mxu0 0
      %2380 = vmatprep.subr.bf16.mxu0 0
      %2381 = vmatpush2.bf16.msra.mxu0 0
      %2382 = vmatprep.subr.bf16.mxu0 0
      %2383 = vmatpush2.bf16.msra.mxu0 0
      %2384 = vmatprep.subr.bf16.mxu0 0
      %2385 = vmatpush2.bf16.msra.mxu0 0
      %2386 = vmatprep.mubr.bf16.mxu0 0
      %2387 = vmatmul.mubr.bf16.gmra.mxu0 %v2349
      %v2388 = vpop.f32.mrf.mxu0
      %v2389 = vadd.f32 0.0, %v2388
      %v2390 = vpop.f32.mrf.mxu0
      %v2391 = vpop.f32.mrf.mxu0
      %v2392 = vadd.f32 0.0, %v2391
      %v2393 = vpop.f32.mrf.mxu0
      %2394 = vdwg.mxu0
      %v2395 = vadd.f32 %v2219, %v2389
      %v2396 = vadd.f32 %v2220, %v2392
      %v2397 = vld [vmem:[%s11] sm:$0x1]
      %v2399 = vlaneseq
      %v2400 = vshrl.u32 %v2399, 7
      %v2401 = vsub.s32 0, %v2400
      %v2402 = vrot.slane %v2397, %v2401
      %v2404 = vadd.f32 %v2395, %v2402
      %v2405 = vadd.f32 %v2396, %v2402
      %v2406 = vadd.f32 %v1553, %v2404
      %v2407 = vadd.f32 %v1554, %v2405
      %v2408 = vld [vmem:[%s14] sm:$0x1]
      %v2409 = vld [vmem:[%s15] sm:$0x1]
      %v2410 = vsel %vm729, %v2406, 0.0
      %2411 = vadd.xlane.f32.xlu0 %v2410
      %v2412 = vpop.xlane.xlu0 %2411
      %v2413 = vsel %vm1514, %v2407, 0.0
      %2414 = vadd.xlane.f32.xlu0 %v2413
      %v2415 = vpop.xlane.xlu0 %2414
      %v2416 = vmul.f32 %v2412, %v1518
      %v2417 = vmul.f32 %v2415, %v1518
      %v2418 = vsub.f32 %v2406, %v2416
      %v2419 = vsub.f32 %v2407, %v2417
      %v2420 = vmul.f32 %v2418, %v2418
      %v2421 = vmul.f32 %v2419, %v2419
      %v2422 = vsel %vm729, %v2420, 0.0
      %2423 = vadd.xlane.f32.xlu0 %v2422
      %v2424 = vpop.xlane.xlu0 %2423
      %v2425 = vsel %vm1514, %v2421, 0.0
      %2426 = vadd.xlane.f32.xlu0 %v2425
      %v2427 = vpop.xlane.xlu0 %2426
      %v2428 = vmul.f32 %v2424, %v1518
      %v2429 = vmul.f32 %v2427, %v1518
      %v2430 = vadd.f32 %v2428, 1e-05
      %v2431 = vadd.f32 %v2429, 1e-05
      %v2432 = vrsqrt.pop %v2430
      %v2433 = vrsqrt.pop %v2431
      %v2434 = vmul.f32 %v2418, %v2432
      %v2435 = vmul.f32 %v2419, %v2433
      %v2437 = vlaneseq
      %v2438 = vshrl.u32 %v2437, 7
      %v2439 = vsub.s32 0, %v2438
      %v2440 = vrot.slane %v2408, %v2439
      %v2442 = vmul.f32 %v2434, %v2440
      %v2443 = vmul.f32 %v2435, %v2440
      %v2445 = vlaneseq
      %v2446 = vshrl.u32 %v2445, 7
      %v2447 = vsub.s32 0, %v2446
      %v2448 = vrot.slane %v2409, %v2447
      %v2450 = vadd.f32 %v2442, %v2448
      %v2451 = vadd.f32 %v2443, %v2448
      %v2452 = vld [vmem:[%s16] sm:$0xf]
      %v2453 = vld [vmem:[%s16 + $0x4] sm:$0xf]
      %v2454 = vld [vmem:[%s16 + $0x8] sm:$0xf]
      %v2455 = vld [vmem:[%s16 + $0xc] sm:$0xf]
      %v2456 = vpack.c.bf16 %v2451, %v2450
      %v2457 = vld [vmem:[%s17] sm:$0x1]
      %v2459 = vlaneseq
      %v2460 = vshrl.u32 %v2459, 7
      %v2461 = vsub.s32 0, %v2460
      %v2462 = vrot.slane %v2457, %v2461
      %v2468 = vunpack.c.l.b16 %v2452
      %v2469 = vunpack.c.l.b16 %v2453
      %v2470 = vunpack.c.l.b16 %v2454
      %v2471 = vunpack.c.l.b16 %v2455
      %v2472 = vpack.c.b16 %v2469, %v2468
      %v2473 = vpack.c.b16 %v2471, %v2470
      %v2477 = vsel %vm729, %v2456, 0
      %2479 = vmatprep.subr.bf16.mxu0 0
      %2480 = vmatpush1.bf16.msra.mxu0 0
      %2481 = vmatprep.subr.bf16.mxu0 0
      %2482 = vmatpush1.bf16.msra.mxu0 0
      %2483 = vmatprep.subr.bf16.mxu0 0
      %2484 = vmatpush1.bf16.msra.mxu0 0
      %2485 = vmatprep.subr.bf16.mxu0 0
      %2486 = vmatpush1.bf16.msra.mxu0 0
      %2487 = vmatprep.subr.bf16.mxu0 0
      %2488 = vmatpush1.bf16.msra.mxu0 0
      %2489 = vmatprep.subr.bf16.mxu0 0
      %2490 = vmatpush1.bf16.msra.mxu0 0
      %2491 = vmatprep.subr.bf16.mxu0 0
      %2492 = vmatpush1.bf16.msra.mxu0 %v2473
      %2493 = vmatprep.subr.bf16.mxu0 0
      %2494 = vmatpush1.bf16.msra.mxu0 %v2472
      %2495 = vmatprep.subr.bf16.mxu0 0
      %2496 = vmatpush2.bf16.msra.mxu0 0
      %2497 = vmatprep.subr.bf16.mxu0 0
      %2498 = vmatpush2.bf16.msra.mxu0 0
      %2499 = vmatprep.subr.bf16.mxu0 0
      %2500 = vmatpush2.bf16.msra.mxu0 0
      %2501 = vmatprep.subr.bf16.mxu0 0
      %2502 = vmatpush2.bf16.msra.mxu0 0
      %2503 = vmatprep.subr.bf16.mxu0 0
      %2504 = vmatpush2.bf16.msra.mxu0 0
      %2505 = vmatprep.subr.bf16.mxu0 0
      %2506 = vmatpush2.bf16.msra.mxu0 0
      %2507 = vmatprep.subr.bf16.mxu0 0
      %2508 = vmatpush2.bf16.msra.mxu0 0
      %2509 = vmatprep.subr.bf16.mxu0 0
      %2510 = vmatpush2.bf16.msra.mxu0 0
      %2511 = vmatprep.mubr.bf16.mxu0 0
      %2512 = vmatmul.mubr.bf16.gmra.mxu0 %v2477
      %v2513 = vpop.f32.mrf.mxu0
      %v2514 = vadd.f32 %v2462, %v2513
      %v2515 = vpop.f32.mrf.mxu0
      %v2516 = vpop.f32.mrf.mxu0
      %v2517 = vadd.f32 %v2462, %v2516
      %v2518 = vpop.f32.mrf.mxu0
      %2519 = vdwg.mxu0
      %v2520 = vmax.f32 %v2514, 0.0
      %v2521 = vmax.f32 %v2517, 0.0
      %v2522 = vld [vmem:[%s18] sm:$0xf]
      %v2523 = vld [vmem:[%s18 + $0x4] sm:$0xf]
      %v2524 = vld [vmem:[%s18 + $0x8] sm:$0xf]
      %v2525 = vld [vmem:[%s18 + $0xc] sm:$0xf]
      %v2526 = vld [vmem:[%s18 + $0x10] sm:$0xf]
      %v2527 = vld [vmem:[%s18 + $0x14] sm:$0xf]
      %v2528 = vld [vmem:[%s18 + $0x18] sm:$0xf]
      %v2529 = vld [vmem:[%s18 + $0x1c] sm:$0xf]
      %v2530 = vpack.c.bf16 %v2521, %v2520
      %v2531 = vld [vmem:[%s19] sm:$0x1]
      %v2533 = vlaneseq
      %v2534 = vshrl.u32 %v2533, 7
      %v2535 = vsub.s32 0, %v2534
      %v2536 = vrot.slane %v2531, %v2535
      %v2546 = vunpack.c.l.b16 %v2522
      %v2547 = vunpack.c.l.b16 %v2523
      %v2548 = vunpack.c.l.b16 %v2524
      %v2549 = vunpack.c.l.b16 %v2525
      %v2550 = vunpack.c.l.b16 %v2526
      %v2551 = vunpack.c.l.b16 %v2527
      %v2552 = vunpack.c.l.b16 %v2528
      %v2553 = vunpack.c.l.b16 %v2529
      %v2554 = vpack.c.b16 %v2547, %v2546
      %v2555 = vpack.c.b16 %v2549, %v2548
      %v2556 = vpack.c.b16 %v2551, %v2550
      %v2557 = vpack.c.b16 %v2553, %v2552
      %vm2562 = vcmask 523264
      %v2564 = vsel %vm2562, %v2530, 0
      %2566 = vmatprep.subr.bf16.mxu0 0
      %2567 = vmatpush1.bf16.msra.mxu0 0
      %2568 = vmatprep.subr.bf16.mxu0 0
      %2569 = vmatpush1.bf16.msra.mxu0 0
      %2570 = vmatprep.subr.bf16.mxu0 0
      %2571 = vmatpush1.bf16.msra.mxu0 0
      %2572 = vmatprep.subr.bf16.mxu0 0
      %2573 = vmatpush1.bf16.msra.mxu0 0
      %2574 = vmatprep.subr.bf16.mxu0 0
      %2575 = vmatpush1.bf16.msra.mxu0 %v2557
      %2576 = vmatprep.subr.bf16.mxu0 0
      %2577 = vmatpush1.bf16.msra.mxu0 %v2556
      %2578 = vmatprep.subr.bf16.mxu0 0
      %2579 = vmatpush1.bf16.msra.mxu0 %v2555
      %2580 = vmatprep.subr.bf16.mxu0 0
      %2581 = vmatpush1.bf16.msra.mxu0 %v2554
      %2582 = vmatprep.subr.bf16.mxu0 0
      %2583 = vmatpush2.bf16.msra.mxu0 0
      %2584 = vmatprep.subr.bf16.mxu0 0
      %2585 = vmatpush2.bf16.msra.mxu0 0
      %2586 = vmatprep.subr.bf16.mxu0 0
      %2587 = vmatpush2.bf16.msra.mxu0 0
      %2588 = vmatprep.subr.bf16.mxu0 0
      %2589 = vmatpush2.bf16.msra.mxu0 0
      %2590 = vmatprep.subr.bf16.mxu0 0
      %2591 = vmatpush2.bf16.msra.mxu0 0
      %2592 = vmatprep.subr.bf16.mxu0 0
      %2593 = vmatpush2.bf16.msra.mxu0 0
      %2594 = vmatprep.subr.bf16.mxu0 0
      %2595 = vmatpush2.bf16.msra.mxu0 0
      %2596 = vmatprep.subr.bf16.mxu0 0
      %2597 = vmatpush2.bf16.msra.mxu0 0
      %2598 = vmatprep.mubr.bf16.mxu0 0
      %2599 = vmatmul.mubr.bf16.gmra.mxu0 %v2564
      %v2600 = vpop.f32.mrf.mxu0
      %v2601 = vadd.f32 %v2536, %v2600
      %v2602 = vpop.f32.mrf.mxu0
      %v2603 = vpop.f32.mrf.mxu0
      %v2604 = vadd.f32 %v2536, %v2603
      %v2605 = vpop.f32.mrf.mxu0
      %2606 = vdwg.mxu0
      %v2607 = vadd.f32 %v2450, %v2601
      %v2608 = vadd.f32 %v2451, %v2604
      %v2609 = vld [vmem:[%s20] sm:$0x1]
      %v2610 = vld [vmem:[%s21] sm:$0x1]
      %v2611 = vsel %vm729, %v2607, 0.0
      %2612 = vadd.xlane.f32.xlu0 %v2611
      %v2613 = vpop.xlane.xlu0 %2612
      %v2614 = vsel %vm1514, %v2608, 0.0
      %2615 = vadd.xlane.f32.xlu0 %v2614
      %v2616 = vpop.xlane.xlu0 %2615
      %v2617 = vmul.f32 %v2613, %v1518
      %v2618 = vmul.f32 %v2616, %v1518
      %v2619 = vsub.f32 %v2607, %v2617
      %v2620 = vsub.f32 %v2608, %v2618
      %v2621 = vmul.f32 %v2619, %v2619
      %v2622 = vmul.f32 %v2620, %v2620
      %v2623 = vsel %vm729, %v2621, 0.0
      %2624 = vadd.xlane.f32.xlu0 %v2623
      %v2625 = vpop.xlane.xlu0 %2624
      %v2626 = vsel %vm1514, %v2622, 0.0
      %2627 = vadd.xlane.f32.xlu0 %v2626
      %v2628 = vpop.xlane.xlu0 %2627
      %v2629 = vmul.f32 %v2625, %v1518
      %v2630 = vmul.f32 %v2628, %v1518
      %v2631 = vadd.f32 %v2629, 1e-05
      %v2632 = vadd.f32 %v2630, 1e-05
      %v2633 = vrsqrt.pop %v2631
      %v2634 = vrsqrt.pop %v2632
      %v2635 = vmul.f32 %v2619, %v2633
      %v2636 = vmul.f32 %v2620, %v2634
      %v2638 = vlaneseq
      %v2639 = vshrl.u32 %v2638, 7
      %v2640 = vsub.s32 0, %v2639
      %v2641 = vrot.slane %v2609, %v2640
      %v2643 = vmul.f32 %v2635, %v2641
      %v2644 = vmul.f32 %v2636, %v2641
      %v2646 = vlaneseq
      %v2647 = vshrl.u32 %v2646, 7
      %v2648 = vsub.s32 0, %v2647
      %v2649 = vrot.slane %v2610, %v2648
      %v2651 = vadd.f32 %v2643, %v2649
      %v2652 = vadd.f32 %v2644, %v2649
      %2653 = vst.msk [vmem:[%s700] sm:$0xff] %vm729, %v2651
      %2654 = vst.msk [vmem:[%s700 + $0x8] sm:$0xf] %vm1514, %v2652
      %p2655 = scmp.lt.s32.totalorder %s33, 1
      %s2656 = scalar_select %p2655, %s33, 1
      %s2657 = smul.addr %s2656, 2
      %s2658 = smul.addr %s2657, 8
      %s2659 = scalar_lea.vmem %s22, %s2658
      // Predicated region
      $region109: #{informer_forward.12} parent=107 // pred_check
        %p2660 = pneg %p523
      $region110: #{informer_forward.12} parent=107 // pred_check_branch
        %2662 = sbr.rel (%p2660) target = $region112
      $region111: #{informer_forward.12} parent=107 // pred_region
        _
      $region112: #{informer_forward.12} parent=107 // pred_fallthru
        _
    $region108: #{informer_forward.12} parent=5 // pred_fallthru
      _
    %p2663 = scmp.le.s32.totalorder 2, %s28
    // Predicated region
    $region113: #{informer_forward.12} parent=5 // pred_check
      %p2664 = pneg %p2663
    $region114: #{informer_forward.12} parent=5 // pred_check_branch
      %2666 = sbr.rel (%p2664) target = $region116
    $region115: #{informer_forward.12} parent=5 // pred_region
      %s2667 = ssub.s32 %s28, 2
      // Predicated region
      $region117: #{informer_forward.12} parent=115 // pred_check
        %p2668 = pneg %p529
      $region118: #{informer_forward.12} parent=115 // pred_check_branch
        %2670 = sbr.rel (%p2668) target = $region120
      $region119: #{informer_forward.12} parent=115 // pred_region
        %p2671 = scmp.lt.s32.totalorder %s34, 1
        %s2672 = scalar_select %p2671, %s34, 1
        %s2673 = smul.addr %s2672, 2
        %s2674 = smul.addr %s2673, 8
        %s2675 = scalar_lea.vmem %s22, %s2674
      $region120: #{informer_forward.12} parent=115 // pred_fallthru
        _
    $region116: #{informer_forward.12} parent=5 // pred_fallthru
      _
  $region6: #{informer_forward.12} parent=0 // loop_footer
    %s32 = sadd.s32 1, %s28
  $region7: #{informer_forward.12} parent=0 // loop_footer_branch
    %27 = sbr.rel target = $region3
  $region8: #{informer_forward.12} parent=0 // loop_exit
    _

</llo_original>
